<compile_context>
chip_gen: v7x
topology: tpu7x:2x2x1
jax: 0.10.0
libtpu: 0.0.40
codegen_flags: <defaults>
</compile_context>

<pallas_src>
import functools

import jax
import jax.numpy as jnp
from jax.experimental import pallas as pl
from jax.experimental.pallas import tpu as pltpu


# ----------------------------------------------------------------------------
# Fused RDB kernel.
# ----------------------------------------------------------------------------
def _rdb_fused_kernel(*args, H, W, ks, G, C, im2col_cin_max):
    # args = (x_ref, w1,b1, ..., wC,bC, wf,bf, o_ref, feat_ref)
    #   x_ref   : (1, H*W, G)                 RDB input (residual source, f32)
    #   w_j     : (ks*ks*G*j, G)              dense conv j weights, im2col
    #                                         layout, matmul dtype
    #   b_j     : (1, G)                      f32
    #   wf, bf  : (G*(C+1), G), (1, G)        1x1 fusion conv
    #   o_ref   : (1, H*W, G)                 RDB output (new rdb_in)
    #   feat_ref: (H+2p, W+2p, G*(C+1))       VMEM scratch, matmul dtype
    p = (ks - 1) // 2
    Ctot = G * (C + 1)
    HW = H * W
    Hp, Wp = H + 2 * p, W + 2 * p

    x_ref = args[0]
    dense_refs = [(args[1 + 2 * j], args[2 + 2 * j]) for j in range(C)]
    wf_ref = args[1 + 2 * C]
    bf_ref = args[2 + 2 * C]
    o_ref = args[3 + 2 * C]
    feat_ref = args[4 + 2 * C]
    fdt = feat_ref.dtype

    # Zero ONLY the halo ("same"-conv zero padding).  The interior is fully
    # overwritten below.  Unconditional: cheap, and correct per-TensorCore.
    if p > 0:
        feat_ref[0:p, :, :] = jnp.zeros((p, Wp, Ctot), fdt)
        feat_ref[H + p:Hp, :, :] = jnp.zeros((p, Wp, Ctot), fdt)
        feat_ref[:, 0:p, :] = jnp.zeros((Hp, p, Ctot), fdt)
        feat_ref[:, W + p:Wp, :] = jnp.zeros((Hp, p, Ctot), fdt)

    # Channel slot 0 <- RDB input (cast to compute dtype).
    feat_ref[p:p + H, p:p + W, 0:G] = x_ref[0].astype(fdt).reshape(H, W, G)

    # Dense block: layer j reads the first G*j channels of the padded scratch
    # and writes its ReLU output into slot j (in-place "concat").
    for j in range(1, C + 1):
        cin = G * j
        w_ref, b_ref = dense_refs[j - 1]

        if cin <= im2col_cin_max:
            # Tiny cin: one im2col matmul (K = ks*ks*cin) — better MXU shape.
            taps = []
            for dy in range(ks):
                for dx in range(ks):
                    taps.append(feat_ref[dy:dy + H, dx:dx + W, 0:cin])
            patch = jnp.concatenate(taps, axis=-1).reshape(HW, ks * ks * cin)
            acc = jnp.dot(patch, w_ref[...],
                          preferred_element_type=jnp.float32)
        else:
            # Large cin: per-tap accumulating matmuls — no ks*ks-times-larger
            # materialized im2col copy in VMEM.
            acc = jnp.zeros((HW, G), jnp.float32)
            for dy in range(ks):
                for dx in range(ks):
                    t = dy * ks + dx
                    tap = feat_ref[dy:dy + H, dx:dx + W, 0:cin]
                    acc = acc + jnp.dot(
                        tap.reshape(HW, cin),
                        w_ref[t * cin:(t + 1) * cin, :],
                        preferred_element_type=jnp.float32)

        y = jnp.maximum(acc + b_ref[...], 0.0)           # f32 bias + ReLU
        feat_ref[p:p + H, p:p + W, G * j:G * (j + 1)] = (
            y.astype(fdt).reshape(H, W, G))

    # 1x1 local-feature fusion as per-slot accumulation (no big reshape copy),
    # then the residual add from the f32 input ref (re-read at point of use).
    acc = jnp.zeros((HW, G), jnp.float32)
    for j in range(C + 1):
        slot = feat_ref[p:p + H, p:p + W, G * j:G * (j + 1)].reshape(HW, G)
        acc = acc + jnp.dot(slot, wf_ref[G * j:G * (j + 1), :],
                            preferred_element_type=jnp.float32)
    z = acc + bf_ref[...] + x_ref[0].astype(jnp.float32)
    o_ref[...] = z[None].astype(o_ref.dtype)


# ----------------------------------------------------------------------------
# One full RDB.  x_flat: (N, H*W, G).  Returns the new rdb_in (N, H*W, G).
# ----------------------------------------------------------------------------
def rdb_block_forward(x_flat, dense_params, fuse_params, *, H, W, ks,
                      matmul_dtype=jnp.bfloat16, im2col_cin_max=128):
    N, HW, G = x_flat.shape
    assert HW == H * W
    C = len(dense_params)
    Ctot = G * (C + 1)
    p = (ks - 1) // 2
    Hp, Wp = H + 2 * p, W + 2 * p

    in_specs = [pl.BlockSpec((1, HW, G), lambda n: (n, 0, 0))]
    operands = [x_flat]
    weight_bytes = 0
    flops = 0
    for j, (w, b) in enumerate(dense_params, start=1):
        cin = G * j
        k2 = ks * ks * cin
        w2 = w.reshape(k2, G).astype(matmul_dtype)   # im2col layout, pre-cast
        b2 = b.reshape(1, G).astype(jnp.float32)
        operands += [w2, b2]
        in_specs += [pl.BlockSpec((k2, G), lambda n: (0, 0)),
                     pl.BlockSpec((1, G), lambda n: (0, 0))]
        weight_bytes += w2.size * w2.dtype.itemsize + b2.size * 4
        flops += 2 * HW * k2 * G
    wf, bf = fuse_params
    wf2 = wf.astype(matmul_dtype)
    bf2 = bf.reshape(1, G).astype(jnp.float32)
    operands += [wf2, bf2]
    in_specs += [pl.BlockSpec((Ctot, G), lambda n: (0, 0)),
                 pl.BlockSpec((1, G), lambda n: (0, 0))]
    weight_bytes += wf2.size * wf2.dtype.itemsize + bf2.size * 4
    flops += 2 * HW * Ctot * G

    # VMEM budget: scratch + double-buffered x/out blocks + weight blocks,
    # with headroom for in-kernel temporaries.
    feat_bytes = Hp * Wp * Ctot * jnp.dtype(matmul_dtype).itemsize
    io_bytes = 4 * HW * G * x_flat.dtype.itemsize
    need = feat_bytes + io_bytes + 2 * weight_bytes
    vmem_limit = int(min(max(3 * need, 32 * 1024 * 1024), 100 * 1024 * 1024))

    cost = pl.CostEstimate(
        flops=N * flops,
        transcendentals=0,
        bytes_accessed=2 * x_flat.size * x_flat.dtype.itemsize + weight_bytes)

    kern = functools.partial(_rdb_fused_kernel, H=H, W=W, ks=ks, G=G, C=C,
                             im2col_cin_max=im2col_cin_max)
    return pl.pallas_call(
        kern,
        out_shape=jax.ShapeDtypeStruct((N, HW, G), x_flat.dtype),
        grid=(N,),
        in_specs=in_specs,
        out_specs=pl.BlockSpec((1, HW, G), lambda n: (n, 0, 0)),
        scratch_shapes=[pltpu.VMEM((Hp, Wp, Ctot), matmul_dtype)],
        compiler_params=pltpu.CompilerParams(
            dimension_semantics=("parallel",),
            vmem_limit_bytes=vmem_limit),
        cost_estimate=cost,
    )(*operands)


# ----------------------------------------------------------------------------
# Parameter construction (kaiming-normal style as in initialize_weight; zero
# bias).  Dense conv weights (ks, ks, cin, G) (HWIO); 1x1 fusion (cin, G).
# ----------------------------------------------------------------------------
def init_params(key, C, D, ks, G, dtype=jnp.float32):
    params = []
    for _ in range(D):
        dense = []
        for j in range(1, C + 1):
            cin = G * j
            key, wk = jax.random.split(key)
            std = (2.0 / (cin * ks * ks)) ** 0.5
            w = jax.random.normal(wk, (ks, ks, cin, G), dtype) * std
            b = jnp.zeros((G,), dtype)
            dense.append((w, b))
        cin = G * (C + 1)
        key, wk = jax.random.split(key)
        std = (2.0 / cin) ** 0.5
        w1 = jax.random.normal(wk, (cin, G), dtype) * std
        b1 = jnp.zeros((G,), dtype)
        params.append((dense, (w1, b1)))
    return params


# ----------------------------------------------------------------------------
# RDBs.forward — mirrors the PyTorch control flow (one fused kernel per RDB).
# ----------------------------------------------------------------------------
def rdbs_forward(x_nchw, params, *, ks, matmul_dtype=jnp.bfloat16,
                 im2col_cin_max=128):
    assert ks % 2 == 1, "only odd kernel sizes give a 'same'-sized output"
    N, G, H, W = x_nchw.shape
    # TODO(synk): keep the surrounding model NHWC end-to-end and have each RDB
    #             write directly into its D*G channel slice of the final
    #             buffer to drop these boundary transposes and the concat.
    x = jnp.transpose(x_nchw, (0, 2, 3, 1)).reshape(N, H * W, G)
    rdb_in = x
    outs = []
    for dense, fuse in params:
        rdb_in = rdb_block_forward(rdb_in, dense, fuse, H=H, W=W, ks=ks,
                                   matmul_dtype=matmul_dtype,
                                   im2col_cin_max=im2col_cin_max)
        outs.append(rdb_in)
    out = jnp.concatenate(outs, axis=-1)                  # (N, H*W, D*G)
    out = out.reshape(N, H, W, out.shape[-1])
    return jnp.transpose(out, (0, 3, 1, 2))               # NHWC -> NCHW


# ----------------------------------------------------------------------------
# Pure-JAX reference (same math, via lax.conv) for the correctness check.
# ----------------------------------------------------------------------------
def _conv_ref(x_nhwc, w_hwio, b):
    y = jax.lax.conv_general_dilated(
        x_nhwc, w_hwio, window_strides=(1, 1), padding="SAME",
        dimension_numbers=("NHWC", "HWIO", "NHWC"))
    return y + b


def rdbs_reference(x_nchw, params, *, ks):
    x = jnp.transpose(x_nchw, (0, 2, 3, 1))
    rdb_in = x
    outs = []
    for dense, (wf, bf) in params:
        feat = rdb_in
        for (w, b) in dense:
            tmp = jax.nn.relu(_conv_ref(feat, w, b))
            feat = jnp.concatenate([feat, tmp], axis=-1)
        fused = jnp.einsum("nhwc,cg->nhwg", feat, wf) + bf
        rdb_in = fused + rdb_in
        outs.append(rdb_in)
    out = jnp.concatenate(outs, axis=-1)
    return jnp.transpose(out, (0, 3, 1, 2))


if __name__ == "__main__":
    # RDBs(C=3, D=2, ks=3, G=8); the module implies input channels == G.
    C, D, ks, G = 3, 2, 3, 8
    N, H, W = 2, 16, 16

    key = jax.random.PRNGKey(0)
    key, xk = jax.random.split(key)
    x = jax.random.normal(xk, (N, G, H, W), jnp.float32)   # NCHW, like PyTorch
    params = init_params(key, C, D, ks, G)

    ref = rdbs_reference(x, params, ks=ks)

    # f32 MXU path, single-im2col-matmul-per-layer branch (tight check).
    out_f32 = rdbs_forward(x, params, ks=ks, matmul_dtype=jnp.float32)
    # f32, per-tap accumulating-matmul branch forced (exercises the large-cin
    # code path even though the toy cin is small).
    out_tap = rdbs_forward(x, params, ks=ks, matmul_dtype=jnp.float32,
                           im2col_cin_max=0)
    # Default bf16 fast-MXU path (f32 accumulate, f32 elementwise/residual).
    out_b16 = rdbs_forward(x, params, ks=ks)

    ref, out_f32, out_tap, out_b16 = jax.block_until_ready(
        (ref, out_f32, out_tap, out_b16))

    assert out_b16.shape == (N, D * G, H, W), out_b16.shape
    assert bool(jnp.all(jnp.isfinite(out_b16)))

    err_f32 = float(jnp.max(jnp.abs(out_f32 - ref)))
    err_tap = float(jnp.max(jnp.abs(out_tap - ref)))
    err_b16 = float(jnp.max(jnp.abs(out_b16 - ref)))
    scale = float(jnp.max(jnp.abs(ref)))
    assert err_f32 < 1e-2, f"f32 path max abs err: {err_f32}"
    assert err_tap < 1e-2, f"per-tap path max abs err: {err_tap}"
    assert err_b16 < 0.05 * max(scale, 1.0) + 0.05, \
        f"bf16 path max abs err: {err_b16} (scale {scale})"
    print("KERNEL_OK")
</pallas_src>

<mosaic_0001>
module attributes {stable_mosaic.version = 11 : i64} {
  func.func @_rdb_fused_kernel(%arg0: i32, %arg1: memref<1x256x8xf32, #tpu.memory_space<vmem>>, %arg2: memref<72x8xf32, #tpu.memory_space<vmem>>, %arg3: memref<1x8xf32, #tpu.memory_space<vmem>>, %arg4: memref<144x8xf32, #tpu.memory_space<vmem>>, %arg5: memref<1x8xf32, #tpu.memory_space<vmem>>, %arg6: memref<216x8xf32, #tpu.memory_space<vmem>>, %arg7: memref<1x8xf32, #tpu.memory_space<vmem>>, %arg8: memref<32x8xf32, #tpu.memory_space<vmem>>, %arg9: memref<1x8xf32, #tpu.memory_space<vmem>>, %arg10: memref<1x256x8xf32, #tpu.memory_space<vmem>>, %arg11: memref<18x18x32xf32, #tpu.memory_space<vmem>>) attributes {dimension_semantics = [#tpu.dimension_semantics<parallel>], iteration_bounds = array<i64: 2>, scalar_prefetch = 0 : i64, scratch_operands = 1 : i64, tpu.core_type = #tpu.core_type<tc>, window_params = [{transform_indices = @transform_0, window_bounds = array<i64: 1, 256, 8>}, {pipeline_mode = #tpu.pipeline_mode<synchronous>, transform_indices = @transform_1, window_bounds = array<i64: 72, 8>}, {pipeline_mode = #tpu.pipeline_mode<synchronous>, transform_indices = @transform_2, window_bounds = array<i64: 1, 8>}, {pipeline_mode = #tpu.pipeline_mode<synchronous>, transform_indices = @transform_3, window_bounds = array<i64: 144, 8>}, {pipeline_mode = #tpu.pipeline_mode<synchronous>, transform_indices = @transform_4, window_bounds = array<i64: 1, 8>}, {pipeline_mode = #tpu.pipeline_mode<synchronous>, transform_indices = @transform_5, window_bounds = array<i64: 216, 8>}, {pipeline_mode = #tpu.pipeline_mode<synchronous>, transform_indices = @transform_6, window_bounds = array<i64: 1, 8>}, {pipeline_mode = #tpu.pipeline_mode<synchronous>, transform_indices = @transform_7, window_bounds = array<i64: 32, 8>}, {pipeline_mode = #tpu.pipeline_mode<synchronous>, transform_indices = @transform_8, window_bounds = array<i64: 1, 8>}, {transform_indices = @transform_9, window_bounds = array<i64: 1, 256, 8>}]} {
    %cst = arith.constant 0.000000e+00 : f32
    %0 = vector.broadcast %cst : f32 to vector<1x18x32xf32>
    %c0 = arith.constant 0 : index
    %c0_0 = arith.constant 0 : index
    %c0_1 = arith.constant 0 : index
    %1 = vector.load %arg11[%c0, %c0_0, %c0_1] : memref<18x18x32xf32, #tpu.memory_space<vmem>>, vector<1x18x32xf32>
    tpu.vector_store %arg11[%c0, %c0_0, %c0_1], %0 {strides = array<i32>} : memref<18x18x32xf32, #tpu.memory_space<vmem>>, vector<1x18x32xf32>,
    %cst_2 = arith.constant 0.000000e+00 : f32
    %2 = vector.broadcast %cst_2 : f32 to vector<1x18x32xf32>
    %c17 = arith.constant 17 : index
    %c0_3 = arith.constant 0 : index
    %c0_4 = arith.constant 0 : index
    %3 = vector.load %arg11[%c17, %c0_3, %c0_4] : memref<18x18x32xf32, #tpu.memory_space<vmem>>, vector<1x18x32xf32>
    tpu.vector_store %arg11[%c17, %c0_3, %c0_4], %2 {strides = array<i32>} : memref<18x18x32xf32, #tpu.memory_space<vmem>>, vector<1x18x32xf32>,
    %cst_5 = arith.constant 0.000000e+00 : f32
    %4 = vector.broadcast %cst_5 : f32 to vector<18x1x32xf32>
    %c0_6 = arith.constant 0 : index
    %c0_7 = arith.constant 0 : index
    %c0_8 = arith.constant 0 : index
    %5 = vector.load %arg11[%c0_6, %c0_7, %c0_8] : memref<18x18x32xf32, #tpu.memory_space<vmem>>, vector<18x1x32xf32>
    tpu.vector_store %arg11[%c0_6, %c0_7, %c0_8], %4 {strides = array<i32>} : memref<18x18x32xf32, #tpu.memory_space<vmem>>, vector<18x1x32xf32>,
    %cst_9 = arith.constant 0.000000e+00 : f32
    %6 = vector.broadcast %cst_9 : f32 to vector<18x1x32xf32>
    %c0_10 = arith.constant 0 : index
    %c17_11 = arith.constant 17 : index
    %c0_12 = arith.constant 0 : index
    %7 = vector.load %arg11[%c0_10, %c17_11, %c0_12] : memref<18x18x32xf32, #tpu.memory_space<vmem>>, vector<18x1x32xf32>
    tpu.vector_store %arg11[%c0_10, %c17_11, %c0_12], %6 {strides = array<i32>} : memref<18x18x32xf32, #tpu.memory_space<vmem>>, vector<18x1x32xf32>,
    %c0_13 = arith.constant 0 : index
    %c0_14 = arith.constant 0 : index
    %c0_15 = arith.constant 0 : index
    %8 = vector.load %arg1[%c0_13, %c0_14, %c0_15] : memref<1x256x8xf32, #tpu.memory_space<vmem>>, vector<1x256x8xf32>
    %9 = vector.shape_cast %8 : vector<1x256x8xf32> to vector<256x8xf32>
    %10 = vector.shape_cast %9 : vector<256x8xf32> to vector<16x16x8xf32>
    %c1 = arith.constant 1 : index
    %c1_16 = arith.constant 1 : index
    %c0_17 = arith.constant 0 : index
    %11 = vector.load %arg11[%c1, %c1_16, %c0_17] : memref<18x18x32xf32, #tpu.memory_space<vmem>>, vector<16x16x8xf32>
    tpu.vector_store %arg11[%c1, %c1_16, %c0_17], %10 {strides = array<i32>} : memref<18x18x32xf32, #tpu.memory_space<vmem>>, vector<16x16x8xf32>,
    %c0_18 = arith.constant 0 : index
    %c0_19 = arith.constant 0 : index
    %c0_20 = arith.constant 0 : index
    %12 = vector.load %arg11[%c0_18, %c0_19, %c0_20] : memref<18x18x32xf32, #tpu.memory_space<vmem>>, vector<16x16x8xf32>
    %c0_21 = arith.constant 0 : index
    %c1_22 = arith.constant 1 : index
    %c0_23 = arith.constant 0 : index
    %13 = vector.load %arg11[%c0_21, %c1_22, %c0_23] : memref<18x18x32xf32, #tpu.memory_space<vmem>>, vector<16x16x8xf32>
    %c0_24 = arith.constant 0 : index
    %c2 = arith.constant 2 : index
    %c0_25 = arith.constant 0 : index
    %14 = vector.load %arg11[%c0_24, %c2, %c0_25] : memref<18x18x32xf32, #tpu.memory_space<vmem>>, vector<16x16x8xf32>
    %c1_26 = arith.constant 1 : index
    %c0_27 = arith.constant 0 : index
    %c0_28 = arith.constant 0 : index
    %15 = vector.load %arg11[%c1_26, %c0_27, %c0_28] : memref<18x18x32xf32, #tpu.memory_space<vmem>>, vector<16x16x8xf32>
    %c1_29 = arith.constant 1 : index
    %c1_30 = arith.constant 1 : index
    %c0_31 = arith.constant 0 : index
    %16 = vector.load %arg11[%c1_29, %c1_30, %c0_31] : memref<18x18x32xf32, #tpu.memory_space<vmem>>, vector<16x16x8xf32>
    %c1_32 = arith.constant 1 : index
    %c2_33 = arith.constant 2 : index
    %c0_34 = arith.constant 0 : index
    %17 = vector.load %arg11[%c1_32, %c2_33, %c0_34] : memref<18x18x32xf32, #tpu.memory_space<vmem>>, vector<16x16x8xf32>
    %c2_35 = arith.constant 2 : index
    %c0_36 = arith.constant 0 : index
    %c0_37 = arith.constant 0 : index
    %18 = vector.load %arg11[%c2_35, %c0_36, %c0_37] : memref<18x18x32xf32, #tpu.memory_space<vmem>>, vector<16x16x8xf32>
    %c2_38 = arith.constant 2 : index
    %c1_39 = arith.constant 1 : index
    %c0_40 = arith.constant 0 : index
    %19 = vector.load %arg11[%c2_38, %c1_39, %c0_40] : memref<18x18x32xf32, #tpu.memory_space<vmem>>, vector<16x16x8xf32>
    %c2_41 = arith.constant 2 : index
    %c2_42 = arith.constant 2 : index
    %c0_43 = arith.constant 0 : index
    %20 = vector.load %arg11[%c2_41, %c2_42, %c0_43] : memref<18x18x32xf32, #tpu.memory_space<vmem>>, vector<16x16x8xf32>
    %21 = tpu.concatenate %12, %13, %14, %15, %16, %17, %18, %19, %20 in 2 : vector<16x16x8xf32>, vector<16x16x8xf32>, vector<16x16x8xf32>, vector<16x16x8xf32>, vector<16x16x8xf32>, vector<16x16x8xf32>, vector<16x16x8xf32>, vector<16x16x8xf32>, vector<16x16x8xf32> -> vector<16x16x72xf32>
    %22 = vector.shape_cast %21 : vector<16x16x72xf32> to vector<256x72xf32>
    %c0_44 = arith.constant 0 : index
    %c0_45 = arith.constant 0 : index
    %23 = vector.load %arg2[%c0_44, %c0_45] : memref<72x8xf32, #tpu.memory_space<vmem>>, vector<72x8xf32>
    %cst_46 = arith.constant dense<0.000000e+00> : vector<256x8xf32>
    %24 = tpu.matmul %22, %23, %cst_46 {dimension_numbers = #tpu.dot_dimension_numbers<[1], [0], [0], [1], [0, 0, 1, 1], [], []>} : vector<256x72xf32>, vector<72x8xf32>, vector<256x8xf32> -> vector<256x8xf32>
    %c0_47 = arith.constant 0 : index
    %c0_48 = arith.constant 0 : index
    %25 = vector.load %arg3[%c0_47, %c0_48] : memref<1x8xf32, #tpu.memory_space<vmem>>, vector<1x8xf32>
    %26 = vector.broadcast %25 : vector<1x8xf32> to vector<256x8xf32>
    %27 = arith.addf %24, %26 : vector<256x8xf32>
    %cst_49 = arith.constant 0.000000e+00 : f32
    %28 = vector.broadcast %cst_49 : f32 to vector<256x8xf32>
    %29 = arith.maximumf %27, %28 : vector<256x8xf32>
    %30 = vector.shape_cast %29 : vector<256x8xf32> to vector<16x16x8xf32>
    %c1_50 = arith.constant 1 : index
    %c1_51 = arith.constant 1 : index
    %c8 = arith.constant 8 : index
    %31 = vector.load %arg11[%c1_50, %c1_51, %c8] : memref<18x18x32xf32, #tpu.memory_space<vmem>>, vector<16x16x8xf32>
    tpu.vector_store %arg11[%c1_50, %c1_51, %c8], %30 {strides = array<i32>} : memref<18x18x32xf32, #tpu.memory_space<vmem>>, vector<16x16x8xf32>,
    %c0_52 = arith.constant 0 : index
    %c0_53 = arith.constant 0 : index
    %c0_54 = arith.constant 0 : index
    %32 = vector.load %arg11[%c0_52, %c0_53, %c0_54] : memref<18x18x32xf32, #tpu.memory_space<vmem>>, vector<16x16x16xf32>
    %c0_55 = arith.constant 0 : index
    %c1_56 = arith.constant 1 : index
    %c0_57 = arith.constant 0 : index
    %33 = vector.load %arg11[%c0_55, %c1_56, %c0_57] : memref<18x18x32xf32, #tpu.memory_space<vmem>>, vector<16x16x16xf32>
    %c0_58 = arith.constant 0 : index
    %c2_59 = arith.constant 2 : index
    %c0_60 = arith.constant 0 : index
    %34 = vector.load %arg11[%c0_58, %c2_59, %c0_60] : memref<18x18x32xf32, #tpu.memory_space<vmem>>, vector<16x16x16xf32>
    %c1_61 = arith.constant 1 : index
    %c0_62 = arith.constant 0 : index
    %c0_63 = arith.constant 0 : index
    %35 = vector.load %arg11[%c1_61, %c0_62, %c0_63] : memref<18x18x32xf32, #tpu.memory_space<vmem>>, vector<16x16x16xf32>
    %c1_64 = arith.constant 1 : index
    %c1_65 = arith.constant 1 : index
    %c0_66 = arith.constant 0 : index
    %36 = vector.load %arg11[%c1_64, %c1_65, %c0_66] : memref<18x18x32xf32, #tpu.memory_space<vmem>>, vector<16x16x16xf32>
    %c1_67 = arith.constant 1 : index
    %c2_68 = arith.constant 2 : index
    %c0_69 = arith.constant 0 : index
    %37 = vector.load %arg11[%c1_67, %c2_68, %c0_69] : memref<18x18x32xf32, #tpu.memory_space<vmem>>, vector<16x16x16xf32>
    %c2_70 = arith.constant 2 : index
    %c0_71 = arith.constant 0 : index
    %c0_72 = arith.constant 0 : index
    %38 = vector.load %arg11[%c2_70, %c0_71, %c0_72] : memref<18x18x32xf32, #tpu.memory_space<vmem>>, vector<16x16x16xf32>
    %c2_73 = arith.constant 2 : index
    %c1_74 = arith.constant 1 : index
    %c0_75 = arith.constant 0 : index
    %39 = vector.load %arg11[%c2_73, %c1_74, %c0_75] : memref<18x18x32xf32, #tpu.memory_space<vmem>>, vector<16x16x16xf32>
    %c2_76 = arith.constant 2 : index
    %c2_77 = arith.constant 2 : index
    %c0_78 = arith.constant 0 : index
    %40 = vector.load %arg11[%c2_76, %c2_77, %c0_78] : memref<18x18x32xf32, #tpu.memory_space<vmem>>, vector<16x16x16xf32>
    %41 = tpu.concatenate %32, %33, %34, %35, %36, %37, %38, %39, %40 in 2 : vector<16x16x16xf32>, vector<16x16x16xf32>, vector<16x16x16xf32>, vector<16x16x16xf32>, vector<16x16x16xf32>, vector<16x16x16xf32>, vector<16x16x16xf32>, vector<16x16x16xf32>, vector<16x16x16xf32> -> vector<16x16x144xf32>
    %42 = vector.shape_cast %41 : vector<16x16x144xf32> to vector<256x144xf32>
    %c0_79 = arith.constant 0 : index
    %c0_80 = arith.constant 0 : index
    %43 = vector.load %arg4[%c0_79, %c0_80] : memref<144x8xf32, #tpu.memory_space<vmem>>, vector<144x8xf32>
    %cst_81 = arith.constant dense<0.000000e+00> : vector<256x8xf32>
    %44 = tpu.matmul %42, %43, %cst_81 {dimension_numbers = #tpu.dot_dimension_numbers<[1], [0], [0], [1], [0, 0, 1, 1], [], []>} : vector<256x144xf32>, vector<144x8xf32>, vector<256x8xf32> -> vector<256x8xf32>
    %c0_82 = arith.constant 0 : index
    %c0_83 = arith.constant 0 : index
    %45 = vector.load %arg5[%c0_82, %c0_83] : memref<1x8xf32, #tpu.memory_space<vmem>>, vector<1x8xf32>
    %46 = vector.broadcast %45 : vector<1x8xf32> to vector<256x8xf32>
    %47 = arith.addf %44, %46 : vector<256x8xf32>
    %cst_84 = arith.constant 0.000000e+00 : f32
    %48 = vector.broadcast %cst_84 : f32 to vector<256x8xf32>
    %49 = arith.maximumf %47, %48 : vector<256x8xf32>
    %50 = vector.shape_cast %49 : vector<256x8xf32> to vector<16x16x8xf32>
    %c1_85 = arith.constant 1 : index
    %c1_86 = arith.constant 1 : index
    %c16 = arith.constant 16 : index
    %51 = vector.load %arg11[%c1_85, %c1_86, %c16] : memref<18x18x32xf32, #tpu.memory_space<vmem>>, vector<16x16x8xf32>
    tpu.vector_store %arg11[%c1_85, %c1_86, %c16], %50 {strides = array<i32>} : memref<18x18x32xf32, #tpu.memory_space<vmem>>, vector<16x16x8xf32>,
    %c0_87 = arith.constant 0 : index
    %c0_88 = arith.constant 0 : index
    %c0_89 = arith.constant 0 : index
    %52 = vector.load %arg11[%c0_87, %c0_88, %c0_89] : memref<18x18x32xf32, #tpu.memory_space<vmem>>, vector<16x16x24xf32>
    %c0_90 = arith.constant 0 : index
    %c1_91 = arith.constant 1 : index
    %c0_92 = arith.constant 0 : index
    %53 = vector.load %arg11[%c0_90, %c1_91, %c0_92] : memref<18x18x32xf32, #tpu.memory_space<vmem>>, vector<16x16x24xf32>
    %c0_93 = arith.constant 0 : index
    %c2_94 = arith.constant 2 : index
    %c0_95 = arith.constant 0 : index
    %54 = vector.load %arg11[%c0_93, %c2_94, %c0_95] : memref<18x18x32xf32, #tpu.memory_space<vmem>>, vector<16x16x24xf32>
    %c1_96 = arith.constant 1 : index
    %c0_97 = arith.constant 0 : index
    %c0_98 = arith.constant 0 : index
    %55 = vector.load %arg11[%c1_96, %c0_97, %c0_98] : memref<18x18x32xf32, #tpu.memory_space<vmem>>, vector<16x16x24xf32>
    %c1_99 = arith.constant 1 : index
    %c1_100 = arith.constant 1 : index
    %c0_101 = arith.constant 0 : index
    %56 = vector.load %arg11[%c1_99, %c1_100, %c0_101] : memref<18x18x32xf32, #tpu.memory_space<vmem>>, vector<16x16x24xf32>
    %c1_102 = arith.constant 1 : index
    %c2_103 = arith.constant 2 : index
    %c0_104 = arith.constant 0 : index
    %57 = vector.load %arg11[%c1_102, %c2_103, %c0_104] : memref<18x18x32xf32, #tpu.memory_space<vmem>>, vector<16x16x24xf32>
    %c2_105 = arith.constant 2 : index
    %c0_106 = arith.constant 0 : index
    %c0_107 = arith.constant 0 : index
    %58 = vector.load %arg11[%c2_105, %c0_106, %c0_107] : memref<18x18x32xf32, #tpu.memory_space<vmem>>, vector<16x16x24xf32>
    %c2_108 = arith.constant 2 : index
    %c1_109 = arith.constant 1 : index
    %c0_110 = arith.constant 0 : index
    %59 = vector.load %arg11[%c2_108, %c1_109, %c0_110] : memref<18x18x32xf32, #tpu.memory_space<vmem>>, vector<16x16x24xf32>
    %c2_111 = arith.constant 2 : index
    %c2_112 = arith.constant 2 : index
    %c0_113 = arith.constant 0 : index
    %60 = vector.load %arg11[%c2_111, %c2_112, %c0_113] : memref<18x18x32xf32, #tpu.memory_space<vmem>>, vector<16x16x24xf32>
    %61 = tpu.concatenate %52, %53, %54, %55, %56, %57, %58, %59, %60 in 2 : vector<16x16x24xf32>, vector<16x16x24xf32>, vector<16x16x24xf32>, vector<16x16x24xf32>, vector<16x16x24xf32>, vector<16x16x24xf32>, vector<16x16x24xf32>, vector<16x16x24xf32>, vector<16x16x24xf32> -> vector<16x16x216xf32>
    %62 = vector.shape_cast %61 : vector<16x16x216xf32> to vector<256x216xf32>
    %c0_114 = arith.constant 0 : index
    %c0_115 = arith.constant 0 : index
    %63 = vector.load %arg6[%c0_114, %c0_115] : memref<216x8xf32, #tpu.memory_space<vmem>>, vector<216x8xf32>
    %cst_116 = arith.constant dense<0.000000e+00> : vector<256x8xf32>
    %64 = tpu.matmul %62, %63, %cst_116 {dimension_numbers = #tpu.dot_dimension_numbers<[1], [0], [0], [1], [0, 0, 1, 1], [], []>} : vector<256x216xf32>, vector<216x8xf32>, vector<256x8xf32> -> vector<256x8xf32>
    %c0_117 = arith.constant 0 : index
    %c0_118 = arith.constant 0 : index
    %65 = vector.load %arg7[%c0_117, %c0_118] : memref<1x8xf32, #tpu.memory_space<vmem>>, vector<1x8xf32>
    %66 = vector.broadcast %65 : vector<1x8xf32> to vector<256x8xf32>
    %67 = arith.addf %64, %66 : vector<256x8xf32>
    %cst_119 = arith.constant 0.000000e+00 : f32
    %68 = vector.broadcast %cst_119 : f32 to vector<256x8xf32>
    %69 = arith.maximumf %67, %68 : vector<256x8xf32>
    %70 = vector.shape_cast %69 : vector<256x8xf32> to vector<16x16x8xf32>
    %c1_120 = arith.constant 1 : index
    %c1_121 = arith.constant 1 : index
    %c24 = arith.constant 24 : index
    %71 = vector.load %arg11[%c1_120, %c1_121, %c24] : memref<18x18x32xf32, #tpu.memory_space<vmem>>, vector<16x16x8xf32>
    tpu.vector_store %arg11[%c1_120, %c1_121, %c24], %70 {strides = array<i32>} : memref<18x18x32xf32, #tpu.memory_space<vmem>>, vector<16x16x8xf32>,
    %cst_122 = arith.constant 0.000000e+00 : f32
    %72 = vector.broadcast %cst_122 : f32 to vector<256x8xf32>
    %c1_123 = arith.constant 1 : index
    %c1_124 = arith.constant 1 : index
    %c0_125 = arith.constant 0 : index
    %73 = vector.load %arg11[%c1_123, %c1_124, %c0_125] : memref<18x18x32xf32, #tpu.memory_space<vmem>>, vector<16x16x8xf32>
    %74 = vector.shape_cast %73 : vector<16x16x8xf32> to vector<256x8xf32>
    %c0_126 = arith.constant 0 : index
    %c0_127 = arith.constant 0 : index
    %75 = vector.load %arg8[%c0_126, %c0_127] : memref<32x8xf32, #tpu.memory_space<vmem>>, vector<8x8xf32>
    %cst_128 = arith.constant dense<0.000000e+00> : vector<256x8xf32>
    %76 = tpu.matmul %74, %75, %cst_128 {dimension_numbers = #tpu.dot_dimension_numbers<[1], [0], [0], [1], [0, 0, 1, 1], [], []>} : vector<256x8xf32>, vector<8x8xf32>, vector<256x8xf32> -> vector<256x8xf32>
    %77 = arith.addf %72, %76 : vector<256x8xf32>
    %c1_129 = arith.constant 1 : index
    %c1_130 = arith.constant 1 : index
    %c8_131 = arith.constant 8 : index
    %78 = vector.load %arg11[%c1_129, %c1_130, %c8_131] : memref<18x18x32xf32, #tpu.memory_space<vmem>>, vector<16x16x8xf32>
    %79 = vector.shape_cast %78 : vector<16x16x8xf32> to vector<256x8xf32>
    %c8_132 = arith.constant 8 : index
    %c0_133 = arith.constant 0 : index
    %80 = vector.load %arg8[%c8_132, %c0_133] : memref<32x8xf32, #tpu.memory_space<vmem>>, vector<8x8xf32>
    %cst_134 = arith.constant dense<0.000000e+00> : vector<256x8xf32>
    %81 = tpu.matmul %79, %80, %cst_134 {dimension_numbers = #tpu.dot_dimension_numbers<[1], [0], [0], [1], [0, 0, 1, 1], [], []>} : vector<256x8xf32>, vector<8x8xf32>, vector<256x8xf32> -> vector<256x8xf32>
    %82 = arith.addf %77, %81 : vector<256x8xf32>
    %c1_135 = arith.constant 1 : index
    %c1_136 = arith.constant 1 : index
    %c16_137 = arith.constant 16 : index
    %83 = vector.load %arg11[%c1_135, %c1_136, %c16_137] : memref<18x18x32xf32, #tpu.memory_space<vmem>>, vector<16x16x8xf32>
    %84 = vector.shape_cast %83 : vector<16x16x8xf32> to vector<256x8xf32>
    %c16_138 = arith.constant 16 : index
    %c0_139 = arith.constant 0 : index
    %85 = vector.load %arg8[%c16_138, %c0_139] : memref<32x8xf32, #tpu.memory_space<vmem>>, vector<8x8xf32>
    %cst_140 = arith.constant dense<0.000000e+00> : vector<256x8xf32>
    %86 = tpu.matmul %84, %85, %cst_140 {dimension_numbers = #tpu.dot_dimension_numbers<[1], [0], [0], [1], [0, 0, 1, 1], [], []>} : vector<256x8xf32>, vector<8x8xf32>, vector<256x8xf32> -> vector<256x8xf32>
    %87 = arith.addf %82, %86 : vector<256x8xf32>
    %c1_141 = arith.constant 1 : index
    %c1_142 = arith.constant 1 : index
    %c24_143 = arith.constant 24 : index
    %88 = vector.load %arg11[%c1_141, %c1_142, %c24_143] : memref<18x18x32xf32, #tpu.memory_space<vmem>>, vector<16x16x8xf32>
    %89 = vector.shape_cast %88 : vector<16x16x8xf32> to vector<256x8xf32>
    %c24_144 = arith.constant 24 : index
    %c0_145 = arith.constant 0 : index
    %90 = vector.load %arg8[%c24_144, %c0_145] : memref<32x8xf32, #tpu.memory_space<vmem>>, vector<8x8xf32>
    %cst_146 = arith.constant dense<0.000000e+00> : vector<256x8xf32>
    %91 = tpu.matmul %89, %90, %cst_146 {dimension_numbers = #tpu.dot_dimension_numbers<[1], [0], [0], [1], [0, 0, 1, 1], [], []>} : vector<256x8xf32>, vector<8x8xf32>, vector<256x8xf32> -> vector<256x8xf32>
    %92 = arith.addf %87, %91 : vector<256x8xf32>
    %c0_147 = arith.constant 0 : index
    %c0_148 = arith.constant 0 : index
    %93 = vector.load %arg9[%c0_147, %c0_148] : memref<1x8xf32, #tpu.memory_space<vmem>>, vector<1x8xf32>
    %94 = vector.broadcast %93 : vector<1x8xf32> to vector<256x8xf32>
    %95 = arith.addf %92, %94 : vector<256x8xf32>
    %c0_149 = arith.constant 0 : index
    %c0_150 = arith.constant 0 : index
    %c0_151 = arith.constant 0 : index
    %96 = vector.load %arg1[%c0_149, %c0_150, %c0_151] : memref<1x256x8xf32, #tpu.memory_space<vmem>>, vector<1x256x8xf32>
    %97 = vector.shape_cast %96 : vector<1x256x8xf32> to vector<256x8xf32>
    %98 = arith.addf %95, %97 : vector<256x8xf32>
    %99 = vector.shape_cast %98 : vector<256x8xf32> to vector<1x256x8xf32>
    %c0_152 = arith.constant 0 : index
    %c0_153 = arith.constant 0 : index
    %c0_154 = arith.constant 0 : index
    %100 = vector.load %arg10[%c0_152, %c0_153, %c0_154] : memref<1x256x8xf32, #tpu.memory_space<vmem>>, vector<1x256x8xf32>
    tpu.vector_store %arg10[%c0_152, %c0_153, %c0_154], %99 {strides = array<i32>} : memref<1x256x8xf32, #tpu.memory_space<vmem>>, vector<1x256x8xf32>,
    return
  }
  func.func @transform_0(%arg0: i32) -> (i32, i32, i32) {
    %c0_i32 = arith.constant 0 : i32
    %c0_i32_0 = arith.constant 0 : i32
    %c0_i32_1 = arith.constant 0 : i32
    return %arg0, %c0_i32, %c0_i32_0 : i32, i32, i32
  }
  func.func @transform_1(%arg0: i32) -> (i32, i32) {
    %c0_i32 = arith.constant 0 : i32
    %c0_i32_0 = arith.constant 0 : i32
    %c0_i32_1 = arith.constant 0 : i32
    return %c0_i32, %c0_i32_0 : i32, i32
  }
  func.func @transform_2(%arg0: i32) -> (i32, i32) {
    %c0_i32 = arith.constant 0 : i32
    %c0_i32_0 = arith.constant 0 : i32
    %c0_i32_1 = arith.constant 0 : i32
    return %c0_i32, %c0_i32_0 : i32, i32
  }
  func.func @transform_3(%arg0: i32) -> (i32, i32) {
    %c0_i32 = arith.constant 0 : i32
    %c0_i32_0 = arith.constant 0 : i32
    %c0_i32_1 = arith.constant 0 : i32
    return %c0_i32, %c0_i32_0 : i32, i32
  }
  func.func @transform_4(%arg0: i32) -> (i32, i32) {
    %c0_i32 = arith.constant 0 : i32
    %c0_i32_0 = arith.constant 0 : i32
    %c0_i32_1 = arith.constant 0 : i32
    return %c0_i32, %c0_i32_0 : i32, i32
  }
  func.func @transform_5(%arg0: i32) -> (i32, i32) {
    %c0_i32 = arith.constant 0 : i32
    %c0_i32_0 = arith.constant 0 : i32
    %c0_i32_1 = arith.constant 0 : i32
    return %c0_i32, %c0_i32_0 : i32, i32
  }
  func.func @transform_6(%arg0: i32) -> (i32, i32) {
    %c0_i32 = arith.constant 0 : i32
    %c0_i32_0 = arith.constant 0 : i32
    %c0_i32_1 = arith.constant 0 : i32
    return %c0_i32, %c0_i32_0 : i32, i32
  }
  func.func @transform_7(%arg0: i32) -> (i32, i32) {
    %c0_i32 = arith.constant 0 : i32
    %c0_i32_0 = arith.constant 0 : i32
    %c0_i32_1 = arith.constant 0 : i32
    return %c0_i32, %c0_i32_0 : i32, i32
  }
  func.func @transform_8(%arg0: i32) -> (i32, i32) {
    %c0_i32 = arith.constant 0 : i32
    %c0_i32_0 = arith.constant 0 : i32
    %c0_i32_1 = arith.constant 0 : i32
    return %c0_i32, %c0_i32_0 : i32, i32
  }
  func.func @transform_9(%arg0: i32) -> (i32, i32, i32) {
    %c0_i32 = arith.constant 0 : i32
    %c0_i32_0 = arith.constant 0 : i32
    %c0_i32_1 = arith.constant 0 : i32
    return %arg0, %c0_i32, %c0_i32_0 : i32, i32, i32
  }
}

</mosaic_0001>

<llo_original>
// kernel: tpu_custom_call.1
$region0: #{tpu_custom_call.1}
  #allocation0 [shape = 'u32[]', space=smem, size = 0x4, offset = 0x4, fixed_abs, tag = 'smem constant byte address 0x4 - core index']
  #allocation1 [shape = 'u32[144,128]{1,0:T(1,128)}', space=vmem, size = 0x12000, scoped, tag = 'internal scratch']
  #allocation2 [shape = 'f32[18,18,32]{2,1,0:T(8,128)}', space=vmem, size = 0x36000, scoped, tag = 'scratch operand']
  %s0 = inlined_call_operand.vmem [shape: f32[2,256,8], index: 0, kind: input, shape index: {}]
  %s1 = inlined_call_operand.vmem [shape: f32[72,8], index: 1, kind: input, shape index: {}]
  %s2 = inlined_call_operand.vmem [shape: f32[1,8], index: 2, kind: input, shape index: {}]
  %s3 = inlined_call_operand.vmem [shape: f32[144,8], index: 3, kind: input, shape index: {}]
  %s4 = inlined_call_operand.vmem [shape: f32[1,8], index: 4, kind: input, shape index: {}]
  %s5 = inlined_call_operand.vmem [shape: f32[216,8], index: 5, kind: input, shape index: {}]
  %s6 = inlined_call_operand.vmem [shape: f32[1,8], index: 6, kind: input, shape index: {}]
  %s7 = inlined_call_operand.vmem [shape: f32[32,8], index: 7, kind: input, shape index: {}]
  %s8 = inlined_call_operand.vmem [shape: f32[1,8], index: 8, kind: input, shape index: {}]
  %s9 = inlined_call_operand.vmem [shape: f32[2,256,8], index: 9, kind: output, shape index: {}]
  %s10 = sld [smem:[#allocation0]]
  $region69: #{tpu_custom_call.1} parent=0
    _
  %s12 = ssub.s32 1, %s10
  %s13 = scalar_select 0, %s12, %s10
  loop: start=0, step=1, limit=4
  $region2: #{tpu_custom_call.1} parent=0 // loop_pre_header
    _
  $region3: #{tpu_custom_call.1} parent=0 // loop_header
    %s15 = sphi 0, %s19
    %p16 = scmp.ge.s32.totalorder %s15, 4
    %s25 = sphi 0, %s27
    %s28 = sphi 0, %s25
    %s29 = sphi 0, %s28
    %s45 = sphi 0, %s29
    %s49 = sphi 0, %s49
    %s51 = sphi 0, %s49
    %s52 = sphi 0, %s51
    %s66 = sphi 0, %s52
    %s70 = sphi 0, %s70
    %s72 = sphi 0, %s70
    %s73 = sphi 0, %s72
    %s87 = sphi 0, %s73
    %s91 = sphi 0, %s91
    %s93 = sphi 0, %s91
    %s94 = sphi 0, %s93
    %s108 = sphi 0, %s94
    %s112 = sphi 0, %s112
    %s114 = sphi 0, %s112
    %s115 = sphi 0, %s114
    %s129 = sphi 0, %s115
    %s133 = sphi 0, %s133
    %s135 = sphi 0, %s133
    %s136 = sphi 0, %s135
    %s150 = sphi 0, %s136
    %s154 = sphi 0, %s154
    %s156 = sphi 0, %s154
    %s157 = sphi 0, %s156
    %s171 = sphi 0, %s157
    %s175 = sphi 0, %s175
    %s177 = sphi 0, %s175
    %s178 = sphi 0, %s177
    %s192 = sphi 0, %s178
    %s196 = sphi 0, %s196
    %s198 = sphi 0, %s196
    %s199 = sphi 0, %s198
    %s213 = sphi 0, %s199
    %s219 = sphi 0, %s221
    %s222 = sphi 0, %s219
    %s223 = sphi 0, %s222
    %s239 = sphi 0, %s223
  $region4: #{tpu_custom_call.1} parent=0 // loop_header_branch
    %18 = sbr.rel (%p16) target = $region8
  $region5: #{tpu_custom_call.1} parent=0 // loop_body
    %s20 = ssub.s32 %s15, 1
    %s21 = ssub.s32 %s15, 2
    %s22 = sadd.s32 %s15, 1
    %s23 = ssub.s32 %s15, %s22
    %p24 = scmp.eq.s32.totalorder %s23, 0
    %s26 = sadd.s32 %s25, 1
    %s27 = scalar_select %p24, %s25, %s26
    %p30 = pneg %p24
    %p31 = scmp.eq.s32.totalorder %s15, 1
    %p32 = por %p30, %p31
    %p33 = scmp.ne.s32.totalorder %s25, %s28
    %p34 = scmp.eq.s32.totalorder %s15, 0
    %p35 = por %p33, %p34
    %p36 = scmp.ne.s32.totalorder %s25, %s28
    %p37 = scmp.eq.s32.totalorder %s20, 1
    %p38 = por %p36, %p37
    %p39 = scmp.ne.s32.totalorder %s28, %s29
    %p40 = scmp.eq.s32.totalorder %s20, 0
    %p41 = por %p39, %p40
    %p42 = scmp.ne.s32.totalorder %s28, %s29
    %p43 = scmp.eq.s32.totalorder %s21, 1
    %p44 = por %p42, %p43
    %p46 = scmp.ne.s32.totalorder %s29, %s45
    %p47 = scmp.eq.s32.totalorder %s21, 0
    %p48 = por %p46, %p47
    %s50 = sadd.s32 %s49, 1
    %p53 = scmp.eq.s32.totalorder %s15, 1
    %p54 = scmp.ne.s32.totalorder %s49, %s51
    %p55 = scmp.eq.s32.totalorder %s15, 0
    %p56 = por %p54, %p55
    %p57 = scmp.ne.s32.totalorder %s49, %s51
    %p58 = scmp.eq.s32.totalorder %s20, 1
    %p59 = por %p57, %p58
    %p60 = scmp.ne.s32.totalorder %s51, %s52
    %p61 = scmp.eq.s32.totalorder %s20, 0
    %p62 = por %p60, %p61
    %p63 = scmp.ne.s32.totalorder %s51, %s52
    %p64 = scmp.eq.s32.totalorder %s21, 1
    %p65 = por %p63, %p64
    %p67 = scmp.ne.s32.totalorder %s52, %s66
    %p68 = scmp.eq.s32.totalorder %s21, 0
    %p69 = por %p67, %p68
    %s71 = sadd.s32 %s70, 1
    %p74 = scmp.eq.s32.totalorder %s15, 1
    %p75 = scmp.ne.s32.totalorder %s70, %s72
    %p76 = scmp.eq.s32.totalorder %s15, 0
    %p77 = por %p75, %p76
    %p78 = scmp.ne.s32.totalorder %s70, %s72
    %p79 = scmp.eq.s32.totalorder %s20, 1
    %p80 = por %p78, %p79
    %p81 = scmp.ne.s32.totalorder %s72, %s73
    %p82 = scmp.eq.s32.totalorder %s20, 0
    %p83 = por %p81, %p82
    %p84 = scmp.ne.s32.totalorder %s72, %s73
    %p85 = scmp.eq.s32.totalorder %s21, 1
    %p86 = por %p84, %p85
    %p88 = scmp.ne.s32.totalorder %s73, %s87
    %p89 = scmp.eq.s32.totalorder %s21, 0
    %p90 = por %p88, %p89
    %s92 = sadd.s32 %s91, 1
    %p95 = scmp.eq.s32.totalorder %s15, 1
    %p96 = scmp.ne.s32.totalorder %s91, %s93
    %p97 = scmp.eq.s32.totalorder %s15, 0
    %p98 = por %p96, %p97
    %p99 = scmp.ne.s32.totalorder %s91, %s93
    %p100 = scmp.eq.s32.totalorder %s20, 1
    %p101 = por %p99, %p100
    %p102 = scmp.ne.s32.totalorder %s93, %s94
    %p103 = scmp.eq.s32.totalorder %s20, 0
    %p104 = por %p102, %p103
    %p105 = scmp.ne.s32.totalorder %s93, %s94
    %p106 = scmp.eq.s32.totalorder %s21, 1
    %p107 = por %p105, %p106
    %p109 = scmp.ne.s32.totalorder %s94, %s108
    %p110 = scmp.eq.s32.totalorder %s21, 0
    %p111 = por %p109, %p110
    %s113 = sadd.s32 %s112, 1
    %p116 = scmp.eq.s32.totalorder %s15, 1
    %p117 = scmp.ne.s32.totalorder %s112, %s114
    %p118 = scmp.eq.s32.totalorder %s15, 0
    %p119 = por %p117, %p118
    %p120 = scmp.ne.s32.totalorder %s112, %s114
    %p121 = scmp.eq.s32.totalorder %s20, 1
    %p122 = por %p120, %p121
    %p123 = scmp.ne.s32.totalorder %s114, %s115
    %p124 = scmp.eq.s32.totalorder %s20, 0
    %p125 = por %p123, %p124
    %p126 = scmp.ne.s32.totalorder %s114, %s115
    %p127 = scmp.eq.s32.totalorder %s21, 1
    %p128 = por %p126, %p127
    %p130 = scmp.ne.s32.totalorder %s115, %s129
    %p131 = scmp.eq.s32.totalorder %s21, 0
    %p132 = por %p130, %p131
    %s134 = sadd.s32 %s133, 1
    %p137 = scmp.eq.s32.totalorder %s15, 1
    %p138 = scmp.ne.s32.totalorder %s133, %s135
    %p139 = scmp.eq.s32.totalorder %s15, 0
    %p140 = por %p138, %p139
    %p141 = scmp.ne.s32.totalorder %s133, %s135
    %p142 = scmp.eq.s32.totalorder %s20, 1
    %p143 = por %p141, %p142
    %p144 = scmp.ne.s32.totalorder %s135, %s136
    %p145 = scmp.eq.s32.totalorder %s20, 0
    %p146 = por %p144, %p145
    %p147 = scmp.ne.s32.totalorder %s135, %s136
    %p148 = scmp.eq.s32.totalorder %s21, 1
    %p149 = por %p147, %p148
    %p151 = scmp.ne.s32.totalorder %s136, %s150
    %p152 = scmp.eq.s32.totalorder %s21, 0
    %p153 = por %p151, %p152
    %s155 = sadd.s32 %s154, 1
    %p158 = scmp.eq.s32.totalorder %s15, 1
    %p159 = scmp.ne.s32.totalorder %s154, %s156
    %p160 = scmp.eq.s32.totalorder %s15, 0
    %p161 = por %p159, %p160
    %p162 = scmp.ne.s32.totalorder %s154, %s156
    %p163 = scmp.eq.s32.totalorder %s20, 1
    %p164 = por %p162, %p163
    %p165 = scmp.ne.s32.totalorder %s156, %s157
    %p166 = scmp.eq.s32.totalorder %s20, 0
    %p167 = por %p165, %p166
    %p168 = scmp.ne.s32.totalorder %s156, %s157
    %p169 = scmp.eq.s32.totalorder %s21, 1
    %p170 = por %p168, %p169
    %p172 = scmp.ne.s32.totalorder %s157, %s171
    %p173 = scmp.eq.s32.totalorder %s21, 0
    %p174 = por %p172, %p173
    %s176 = sadd.s32 %s175, 1
    %p179 = scmp.eq.s32.totalorder %s15, 1
    %p180 = scmp.ne.s32.totalorder %s175, %s177
    %p181 = scmp.eq.s32.totalorder %s15, 0
    %p182 = por %p180, %p181
    %p183 = scmp.ne.s32.totalorder %s175, %s177
    %p184 = scmp.eq.s32.totalorder %s20, 1
    %p185 = por %p183, %p184
    %p186 = scmp.ne.s32.totalorder %s177, %s178
    %p187 = scmp.eq.s32.totalorder %s20, 0
    %p188 = por %p186, %p187
    %p189 = scmp.ne.s32.totalorder %s177, %s178
    %p190 = scmp.eq.s32.totalorder %s21, 1
    %p191 = por %p189, %p190
    %p193 = scmp.ne.s32.totalorder %s178, %s192
    %p194 = scmp.eq.s32.totalorder %s21, 0
    %p195 = por %p193, %p194
    %s197 = sadd.s32 %s196, 1
    %p200 = scmp.eq.s32.totalorder %s15, 1
    %p201 = scmp.ne.s32.totalorder %s196, %s198
    %p202 = scmp.eq.s32.totalorder %s15, 0
    %p203 = por %p201, %p202
    %p204 = scmp.ne.s32.totalorder %s196, %s198
    %p205 = scmp.eq.s32.totalorder %s20, 1
    %p206 = por %p204, %p205
    %p207 = scmp.ne.s32.totalorder %s198, %s199
    %p208 = scmp.eq.s32.totalorder %s20, 0
    %p209 = por %p207, %p208
    %p210 = scmp.ne.s32.totalorder %s198, %s199
    %p211 = scmp.eq.s32.totalorder %s21, 1
    %p212 = por %p210, %p211
    %p214 = scmp.ne.s32.totalorder %s199, %s213
    %p215 = scmp.eq.s32.totalorder %s21, 0
    %p216 = por %p214, %p215
    %s217 = ssub.s32 %s15, %s22
    %p218 = scmp.eq.s32.totalorder %s217, 0
    %s220 = sadd.s32 %s219, 1
    %s221 = scalar_select %p218, %s219, %s220
    %p224 = pneg %p218
    %p225 = scmp.eq.s32.totalorder %s15, 1
    %p226 = por %p224, %p225
    %p227 = scmp.ne.s32.totalorder %s219, %s222
    %p228 = scmp.eq.s32.totalorder %s15, 0
    %p229 = por %p227, %p228
    %p230 = scmp.ne.s32.totalorder %s219, %s222
    %p231 = scmp.eq.s32.totalorder %s20, 1
    %p232 = por %p230, %p231
    %p233 = scmp.ne.s32.totalorder %s222, %s223
    %p234 = scmp.eq.s32.totalorder %s20, 0
    %p235 = por %p233, %p234
    %p236 = scmp.ne.s32.totalorder %s222, %s223
    %p237 = scmp.eq.s32.totalorder %s21, 1
    %p238 = por %p236, %p237
    %p240 = scmp.ne.s32.totalorder %s223, %s239
    %p241 = scmp.eq.s32.totalorder %s21, 0
    %p242 = por %p240, %p241
    %p243 = scmp.le.s32.totalorder 1, %s15
    %p244 = scmp.lt.s32.totalorder %s15, 3
    %p245 = pnand %p243, %p244
    %p246 = pneg %p245
    // Predicated region
    $region9: #{tpu_custom_call.1} parent=5 // pred_check
      _
    $region10: #{tpu_custom_call.1} parent=5 // pred_check_branch
      %248 = sbr.rel (%p245) target = $region12
    $region11: #{tpu_custom_call.1} parent=5 // pred_region
      %s249 = ssub.s32 %s15, 1
      // Predicated region
      $region13: #{tpu_custom_call.1} parent=11 // pred_check
        %p250 = pneg %p62
      $region14: #{tpu_custom_call.1} parent=11 // pred_check_branch
        %252 = sbr.rel (%p250) target = $region16
      $region15: #{tpu_custom_call.1} parent=11 // pred_region
        _
      $region16: #{tpu_custom_call.1} parent=11 // pred_fallthru
        _
      // Predicated region
      $region17: #{tpu_custom_call.1} parent=11 // pred_check
        %p253 = pneg %p83
      $region18: #{tpu_custom_call.1} parent=11 // pred_check_branch
        %255 = sbr.rel (%p253) target = $region20
      $region19: #{tpu_custom_call.1} parent=11 // pred_region
        _
      $region20: #{tpu_custom_call.1} parent=11 // pred_fallthru
        _
      // Predicated region
      $region21: #{tpu_custom_call.1} parent=11 // pred_check
        %p256 = pneg %p104
      $region22: #{tpu_custom_call.1} parent=11 // pred_check_branch
        %258 = sbr.rel (%p256) target = $region24
      $region23: #{tpu_custom_call.1} parent=11 // pred_region
        _
      $region24: #{tpu_custom_call.1} parent=11 // pred_fallthru
        _
      // Predicated region
      $region25: #{tpu_custom_call.1} parent=11 // pred_check
        %p259 = pneg %p125
      $region26: #{tpu_custom_call.1} parent=11 // pred_check_branch
        %261 = sbr.rel (%p259) target = $region28
      $region27: #{tpu_custom_call.1} parent=11 // pred_region
        _
      $region28: #{tpu_custom_call.1} parent=11 // pred_fallthru
        _
      // Predicated region
      $region29: #{tpu_custom_call.1} parent=11 // pred_check
        %p262 = pneg %p146
      $region30: #{tpu_custom_call.1} parent=11 // pred_check_branch
        %264 = sbr.rel (%p262) target = $region32
      $region31: #{tpu_custom_call.1} parent=11 // pred_region
        _
      $region32: #{tpu_custom_call.1} parent=11 // pred_fallthru
        _
      // Predicated region
      $region33: #{tpu_custom_call.1} parent=11 // pred_check
        %p265 = pneg %p167
      $region34: #{tpu_custom_call.1} parent=11 // pred_check_branch
        %267 = sbr.rel (%p265) target = $region36
      $region35: #{tpu_custom_call.1} parent=11 // pred_region
        _
      $region36: #{tpu_custom_call.1} parent=11 // pred_fallthru
        _
      // Predicated region
      $region37: #{tpu_custom_call.1} parent=11 // pred_check
        %p268 = pneg %p188
      $region38: #{tpu_custom_call.1} parent=11 // pred_check_branch
        %270 = sbr.rel (%p268) target = $region40
      $region39: #{tpu_custom_call.1} parent=11 // pred_region
        _
      $region40: #{tpu_custom_call.1} parent=11 // pred_fallthru
        _
      // Predicated region
      $region41: #{tpu_custom_call.1} parent=11 // pred_check
        %p271 = pneg %p209
      $region42: #{tpu_custom_call.1} parent=11 // pred_check_branch
        %273 = sbr.rel (%p271) target = $region44
      $region43: #{tpu_custom_call.1} parent=11 // pred_region
        _
      $region44: #{tpu_custom_call.1} parent=11 // pred_fallthru
        _
    $region12: #{tpu_custom_call.1} parent=5 // pred_fallthru
      _
    %p274 = scmp.lt.s32.totalorder %s15, 2
    // Predicated region
    $region45: #{tpu_custom_call.1} parent=5 // pred_check
      %p275 = pneg %p274
    $region46: #{tpu_custom_call.1} parent=5 // pred_check_branch
      %277 = sbr.rel (%p275) target = $region48
    $region47: #{tpu_custom_call.1} parent=5 // pred_region
      // Predicated region
      $region49: #{tpu_custom_call.1} parent=47 // pred_check
        %p278 = pneg %p35
      $region50: #{tpu_custom_call.1} parent=47 // pred_check_branch
        %280 = sbr.rel (%p278) target = $region52
      $region51: #{tpu_custom_call.1} parent=47 // pred_region
        %p281 = scmp.lt.s32.totalorder %s15, 1
        %s282 = scalar_select %p281, %s15, 1
        %s283 = smul.addr %s282, 32
        %s284 = smul.addr %s283, 8
        %s285 = scalar_lea.vmem %s0, %s284
      $region52: #{tpu_custom_call.1} parent=47 // pred_fallthru
        _
    $region48: #{tpu_custom_call.1} parent=5 // pred_fallthru
      _
    %p286 = scmp.le.s32.totalorder 1, %s15
    %p287 = scmp.lt.s32.totalorder %s15, 3
    %p288 = pnand %p286, %p287
    %p289 = pneg %p288
    // Predicated region
    $region53: #{tpu_custom_call.1} parent=5 // pred_check
      _
    $region54: #{tpu_custom_call.1} parent=5 // pred_check_branch
      %291 = sbr.rel (%p288) target = $region56
    $region55: #{tpu_custom_call.1} parent=5 // pred_region
      %s292 = ssub.s32 %s15, 1
      %p293 = scmp.lt.s32.totalorder %s20, 1
      %s294 = scalar_select %p293, %s20, 1
      %s295 = smul.addr %s294, 32
      %s296 = smul.addr %s295, 8
      %s297 = scalar_lea.vmem %s0, %s296
      %p298 = pneg %p41
      %p299 = pneg %p38
      %p300 = pneg %p62
      %p301 = pneg %p59
      %p302 = pneg %p83
      %p303 = pneg %p80
      %p304 = pneg %p104
      %p305 = pneg %p101
      %p306 = pneg %p125
      %p307 = pneg %p122
      %p308 = pneg %p146
      %p309 = pneg %p143
      %p310 = pneg %p167
      %p311 = pneg %p164
      %p312 = pneg %p188
      %p313 = pneg %p185
      %p314 = pneg %p209
      %p315 = pneg %p206
      %p316 = pneg %p235
      %p317 = pneg %p232
      %p318 = scmp.lt.s32.totalorder %s20, 1
      %s319 = scalar_select %p318, %s20, 1
      %s320 = smul.addr %s319, 32
      %s321 = smul.addr %s320, 8
      %s322 = scalar_lea.vmem %s9, %s321
      %p323 = scmp.lt.s32.totalorder %s20, 1
      %s324 = scalar_select %p323, %s20, 1
      %s325 = smul.addr %s324, 32
      %s326 = smul.addr %s325, 8
      %s327 = scalar_lea.vmem %s0, %s326
      %p328 = scmp.lt.s32.totalorder %s20, 1
      %s329 = scalar_select %p328, %s20, 1
      %s330 = smul.addr %s329, 32
      %s331 = smul.addr %s330, 8
      %s332 = scalar_lea.vmem %s9, %s331
      %vm333 = vcmask 261120
      %334 = vst.msk [vmem:[#allocation2] sm:$0xff] %vm333, 0.0
      %335 = vst.msk [vmem:[#allocation2 + $0x8] sm:$0xff] %vm333, 0.0
      %vm336 = vcmask 254976
      %337 = vst.msk [vmem:[#allocation2 + $0x10] sm:$0x3] %vm336, 0.0
      %s338 = scalar_lea.vmem [#allocation2], 408
      %339 = vst.msk [vmem:[%s338] sm:$0xff] %vm333, 0.0
      %340 = vst.msk [vmem:[%s338 + $0x8] sm:$0xff] %vm333, 0.0
      %341 = vst.msk [vmem:[%s338 + $0x10] sm:$0x3] %vm336, 0.0
      %vm342 = vcmask 253952
      %343 = vst.msk [vmem:[#allocation2] sm:$0x1] %vm342, 0.0
      %344 = vst.msk [vmem:[#allocation2 + $0x18] sm:$0x1] %vm342, 0.0
      %345 = vst.msk [vmem:[#allocation2 + $0x30] sm:$0x1] %vm342, 0.0
      %346 = vst.msk [vmem:[#allocation2 + $0x48] sm:$0x1] %vm342, 0.0
      %347 = vst.msk [vmem:[#allocation2 + $0x60] sm:$0x1] %vm342, 0.0
      %348 = vst.msk [vmem:[#allocation2 + $0x78] sm:$0x1] %vm342, 0.0
      %349 = vst.msk [vmem:[#allocation2 + $0x90] sm:$0x1] %vm342, 0.0
      %350 = vst.msk [vmem:[#allocation2 + $0xa8] sm:$0x1] %vm342, 0.0
      %351 = vst.msk [vmem:[#allocation2 + $0xc0] sm:$0x1] %vm342, 0.0
      %352 = vst.msk [vmem:[#allocation2 + $0xd8] sm:$0x1] %vm342, 0.0
      %353 = vst.msk [vmem:[#allocation2 + $0xf0] sm:$0x1] %vm342, 0.0
      %354 = vst.msk [vmem:[#allocation2 + $0x108] sm:$0x1] %vm342, 0.0
      %355 = vst.msk [vmem:[#allocation2 + $0x120] sm:$0x1] %vm342, 0.0
      %356 = vst.msk [vmem:[#allocation2 + $0x138] sm:$0x1] %vm342, 0.0
      %357 = vst.msk [vmem:[#allocation2 + $0x150] sm:$0x1] %vm342, 0.0
      %358 = vst.msk [vmem:[#allocation2 + $0x168] sm:$0x1] %vm342, 0.0
      %359 = vst.msk [vmem:[#allocation2 + $0x180] sm:$0x1] %vm342, 0.0
      %360 = vst.msk [vmem:[#allocation2 + $0x198] sm:$0x1] %vm342, 0.0
      %361 = vst.msk [vmem:[#allocation2 + $0x11] sm:$0x1] %vm342, 0.0
      %362 = vst.msk [vmem:[#allocation2 + $0x29] sm:$0x1] %vm342, 0.0
      %363 = vst.msk [vmem:[#allocation2 + $0x41] sm:$0x1] %vm342, 0.0
      %364 = vst.msk [vmem:[#allocation2 + $0x59] sm:$0x1] %vm342, 0.0
      %365 = vst.msk [vmem:[#allocation2 + $0x71] sm:$0x1] %vm342, 0.0
      %366 = vst.msk [vmem:[#allocation2 + $0x89] sm:$0x1] %vm342, 0.0
      %367 = vst.msk [vmem:[#allocation2 + $0xa1] sm:$0x1] %vm342, 0.0
      %368 = vst.msk [vmem:[#allocation2 + $0xb9] sm:$0x1] %vm342, 0.0
      %369 = vst.msk [vmem:[#allocation2 + $0xd1] sm:$0x1] %vm342, 0.0
      %370 = vst.msk [vmem:[#allocation2 + $0xe9] sm:$0x1] %vm342, 0.0
      %371 = vst.msk [vmem:[#allocation2 + $0x101] sm:$0x1] %vm342, 0.0
      %372 = vst.msk [vmem:[#allocation2 + $0x119] sm:$0x1] %vm342, 0.0
      %373 = vst.msk [vmem:[#allocation2 + $0x131] sm:$0x1] %vm342, 0.0
      %374 = vst.msk [vmem:[#allocation2 + $0x149] sm:$0x1] %vm342, 0.0
      %375 = vst.msk [vmem:[#allocation2 + $0x161] sm:$0x1] %vm342, 0.0
      %376 = vst.msk [vmem:[#allocation2 + $0x179] sm:$0x1] %vm342, 0.0
      %377 = vst.msk [vmem:[#allocation2 + $0x191] sm:$0x1] %vm342, 0.0
      %378 = vst.msk [vmem:[#allocation2 + $0x1a9] sm:$0x1] %vm342, 0.0
      %v379 = vld [vmem:[%s327] sm:$0xff]
      %v380 = vld [vmem:[%s327 + $0x8] sm:$0xff]
      %v381 = vld [vmem:[%s327 + $0x10] sm:$0xff]
      %v382 = vld [vmem:[%s327 + $0x18] sm:$0xff]
      %v383 = vld [vmem:[%s327 + $0x20] sm:$0xff]
      %v384 = vld [vmem:[%s327 + $0x28] sm:$0xff]
      %v385 = vld [vmem:[%s327 + $0x30] sm:$0xff]
      %v386 = vld [vmem:[%s327 + $0x38] sm:$0xff]
      %v387 = vld [vmem:[%s327 + $0x40] sm:$0xff]
      %v388 = vld [vmem:[%s327 + $0x48] sm:$0xff]
      %v389 = vld [vmem:[%s327 + $0x50] sm:$0xff]
      %v390 = vld [vmem:[%s327 + $0x58] sm:$0xff]
      %v391 = vld [vmem:[%s327 + $0x60] sm:$0xff]
      %v392 = vld [vmem:[%s327 + $0x68] sm:$0xff]
      %v393 = vld [vmem:[%s327 + $0x70] sm:$0xff]
      %v394 = vld [vmem:[%s327 + $0x78] sm:$0xff]
      %v395 = vld [vmem:[%s327 + $0x80] sm:$0xff]
      %v396 = vld [vmem:[%s327 + $0x88] sm:$0xff]
      %v397 = vld [vmem:[%s327 + $0x90] sm:$0xff]
      %v398 = vld [vmem:[%s327 + $0x98] sm:$0xff]
      %v399 = vld [vmem:[%s327 + $0xa0] sm:$0xff]
      %v400 = vld [vmem:[%s327 + $0xa8] sm:$0xff]
      %v401 = vld [vmem:[%s327 + $0xb0] sm:$0xff]
      %v402 = vld [vmem:[%s327 + $0xb8] sm:$0xff]
      %v403 = vld [vmem:[%s327 + $0xc0] sm:$0xff]
      %v404 = vld [vmem:[%s327 + $0xc8] sm:$0xff]
      %v405 = vld [vmem:[%s327 + $0xd0] sm:$0xff]
      %v406 = vld [vmem:[%s327 + $0xd8] sm:$0xff]
      %v407 = vld [vmem:[%s327 + $0xe0] sm:$0xff]
      %v408 = vld [vmem:[%s327 + $0xe8] sm:$0xff]
      %v409 = vld [vmem:[%s327 + $0xf0] sm:$0xff]
      %v410 = vld [vmem:[%s327 + $0xf8] sm:$0xff]
      %s411 = scalar_lea.vmem [#allocation2], 24
      %vm412 = vcmask 64512
      %413 = vst.msk [vmem:[%s411 + $0x1] sm:$0xff] %vm412, %v379
      %414 = vst.msk [vmem:[%s411 + $0x9] sm:$0xff] %vm412, %v380
      %415 = vst.msk [vmem:[%s411 + $0x19] sm:$0xff] %vm412, %v381
      %416 = vst.msk [vmem:[%s411 + $0x21] sm:$0xff] %vm412, %v382
      %417 = vst.msk [vmem:[%s411 + $0x31] sm:$0xff] %vm412, %v383
      %418 = vst.msk [vmem:[%s411 + $0x39] sm:$0xff] %vm412, %v384
      %419 = vst.msk [vmem:[%s411 + $0x49] sm:$0xff] %vm412, %v385
      %420 = vst.msk [vmem:[%s411 + $0x51] sm:$0xff] %vm412, %v386
      %421 = vst.msk [vmem:[%s411 + $0x61] sm:$0xff] %vm412, %v387
      %422 = vst.msk [vmem:[%s411 + $0x69] sm:$0xff] %vm412, %v388
      %423 = vst.msk [vmem:[%s411 + $0x79] sm:$0xff] %vm412, %v389
      %424 = vst.msk [vmem:[%s411 + $0x81] sm:$0xff] %vm412, %v390
      %425 = vst.msk [vmem:[%s411 + $0x91] sm:$0xff] %vm412, %v391
      %426 = vst.msk [vmem:[%s411 + $0x99] sm:$0xff] %vm412, %v392
      %427 = vst.msk [vmem:[%s411 + $0xa9] sm:$0xff] %vm412, %v393
      %428 = vst.msk [vmem:[%s411 + $0xb1] sm:$0xff] %vm412, %v394
      %429 = vst.msk [vmem:[%s411 + $0xc1] sm:$0xff] %vm412, %v395
      %430 = vst.msk [vmem:[%s411 + $0xc9] sm:$0xff] %vm412, %v396
      %431 = vst.msk [vmem:[%s411 + $0xd9] sm:$0xff] %vm412, %v397
      %432 = vst.msk [vmem:[%s411 + $0xe1] sm:$0xff] %vm412, %v398
      %433 = vst.msk [vmem:[%s411 + $0xf1] sm:$0xff] %vm412, %v399
      %434 = vst.msk [vmem:[%s411 + $0xf9] sm:$0xff] %vm412, %v400
      %435 = vst.msk [vmem:[%s411 + $0x109] sm:$0xff] %vm412, %v401
      %436 = vst.msk [vmem:[%s411 + $0x111] sm:$0xff] %vm412, %v402
      %437 = vst.msk [vmem:[%s411 + $0x121] sm:$0xff] %vm412, %v403
      %438 = vst.msk [vmem:[%s411 + $0x129] sm:$0xff] %vm412, %v404
      %439 = vst.msk [vmem:[%s411 + $0x139] sm:$0xff] %vm412, %v405
      %440 = vst.msk [vmem:[%s411 + $0x141] sm:$0xff] %vm412, %v406
      %441 = vst.msk [vmem:[%s411 + $0x151] sm:$0xff] %vm412, %v407
      %442 = vst.msk [vmem:[%s411 + $0x159] sm:$0xff] %vm412, %v408
      %443 = vst.msk [vmem:[%s411 + $0x169] sm:$0xff] %vm412, %v409
      %444 = vst.msk [vmem:[%s411 + $0x171] sm:$0xff] %vm412, %v410
      %v445 = vld [vmem:[#allocation2] sm:$0xff]
      %v446 = vld [vmem:[#allocation2 + $0x8] sm:$0xff]
      %v447 = vld [vmem:[#allocation2 + $0x18] sm:$0xff]
      %v448 = vld [vmem:[#allocation2 + $0x20] sm:$0xff]
      %v449 = vld [vmem:[#allocation2 + $0x30] sm:$0xff]
      %v450 = vld [vmem:[#allocation2 + $0x38] sm:$0xff]
      %v451 = vld [vmem:[#allocation2 + $0x48] sm:$0xff]
      %v452 = vld [vmem:[#allocation2 + $0x50] sm:$0xff]
      %v453 = vld [vmem:[#allocation2 + $0x60] sm:$0xff]
      %v454 = vld [vmem:[#allocation2 + $0x68] sm:$0xff]
      %v455 = vld [vmem:[#allocation2 + $0x78] sm:$0xff]
      %v456 = vld [vmem:[#allocation2 + $0x80] sm:$0xff]
      %v457 = vld [vmem:[#allocation2 + $0x90] sm:$0xff]
      %v458 = vld [vmem:[#allocation2 + $0x98] sm:$0xff]
      %v459 = vld [vmem:[#allocation2 + $0xa8] sm:$0xff]
      %v460 = vld [vmem:[#allocation2 + $0xb0] sm:$0xff]
      %v461 = vld [vmem:[#allocation2 + $0xc0] sm:$0xff]
      %v462 = vld [vmem:[#allocation2 + $0xc8] sm:$0xff]
      %v463 = vld [vmem:[#allocation2 + $0xd8] sm:$0xff]
      %v464 = vld [vmem:[#allocation2 + $0xe0] sm:$0xff]
      %v465 = vld [vmem:[#allocation2 + $0xf0] sm:$0xff]
      %v466 = vld [vmem:[#allocation2 + $0xf8] sm:$0xff]
      %v467 = vld [vmem:[#allocation2 + $0x108] sm:$0xff]
      %v468 = vld [vmem:[#allocation2 + $0x110] sm:$0xff]
      %v469 = vld [vmem:[#allocation2 + $0x120] sm:$0xff]
      %v470 = vld [vmem:[#allocation2 + $0x128] sm:$0xff]
      %v471 = vld [vmem:[#allocation2 + $0x138] sm:$0xff]
      %v472 = vld [vmem:[#allocation2 + $0x140] sm:$0xff]
      %v473 = vld [vmem:[#allocation2 + $0x150] sm:$0xff]
      %v474 = vld [vmem:[#allocation2 + $0x158] sm:$0xff]
      %v475 = vld [vmem:[#allocation2 + $0x168] sm:$0xff]
      %v476 = vld [vmem:[#allocation2 + $0x170] sm:$0xff]
      %v477 = vld [vmem:[#allocation2 + $0x1] sm:$0xff]
      %v478 = vld [vmem:[#allocation2 + $0x9] sm:$0xff]
      %v479 = vld [vmem:[#allocation2 + $0x19] sm:$0xff]
      %v480 = vld [vmem:[#allocation2 + $0x21] sm:$0xff]
      %v481 = vld [vmem:[#allocation2 + $0x31] sm:$0xff]
      %v482 = vld [vmem:[#allocation2 + $0x39] sm:$0xff]
      %v483 = vld [vmem:[#allocation2 + $0x49] sm:$0xff]
      %v484 = vld [vmem:[#allocation2 + $0x51] sm:$0xff]
      %v485 = vld [vmem:[#allocation2 + $0x61] sm:$0xff]
      %v486 = vld [vmem:[#allocation2 + $0x69] sm:$0xff]
      %v487 = vld [vmem:[#allocation2 + $0x79] sm:$0xff]
      %v488 = vld [vmem:[#allocation2 + $0x81] sm:$0xff]
      %v489 = vld [vmem:[#allocation2 + $0x91] sm:$0xff]
      %v490 = vld [vmem:[#allocation2 + $0x99] sm:$0xff]
      %v491 = vld [vmem:[#allocation2 + $0xa9] sm:$0xff]
      %v492 = vld [vmem:[#allocation2 + $0xb1] sm:$0xff]
      %v493 = vld [vmem:[#allocation2 + $0xc1] sm:$0xff]
      %v494 = vld [vmem:[#allocation2 + $0xc9] sm:$0xff]
      %v495 = vld [vmem:[#allocation2 + $0xd9] sm:$0xff]
      %v496 = vld [vmem:[#allocation2 + $0xe1] sm:$0xff]
      %v497 = vld [vmem:[#allocation2 + $0xf1] sm:$0xff]
      %v498 = vld [vmem:[#allocation2 + $0xf9] sm:$0xff]
      %v499 = vld [vmem:[#allocation2 + $0x109] sm:$0xff]
      %v500 = vld [vmem:[#allocation2 + $0x111] sm:$0xff]
      %v501 = vld [vmem:[#allocation2 + $0x121] sm:$0xff]
      %v502 = vld [vmem:[#allocation2 + $0x129] sm:$0xff]
      %v503 = vld [vmem:[#allocation2 + $0x139] sm:$0xff]
      %v504 = vld [vmem:[#allocation2 + $0x141] sm:$0xff]
      %v505 = vld [vmem:[#allocation2 + $0x151] sm:$0xff]
      %v506 = vld [vmem:[#allocation2 + $0x159] sm:$0xff]
      %v507 = vld [vmem:[#allocation2 + $0x169] sm:$0xff]
      %v508 = vld [vmem:[#allocation2 + $0x171] sm:$0xff]
      %v509 = vld [vmem:[#allocation2 + $0x2] sm:$0xff]
      %v510 = vld [vmem:[#allocation2 + $0xa] sm:$0xff]
      %v511 = vld [vmem:[#allocation2 + $0x1a] sm:$0xff]
      %v512 = vld [vmem:[#allocation2 + $0x22] sm:$0xff]
      %v513 = vld [vmem:[#allocation2 + $0x32] sm:$0xff]
      %v514 = vld [vmem:[#allocation2 + $0x3a] sm:$0xff]
      %v515 = vld [vmem:[#allocation2 + $0x4a] sm:$0xff]
      %v516 = vld [vmem:[#allocation2 + $0x52] sm:$0xff]
      %v517 = vld [vmem:[#allocation2 + $0x62] sm:$0xff]
      %v518 = vld [vmem:[#allocation2 + $0x6a] sm:$0xff]
      %v519 = vld [vmem:[#allocation2 + $0x7a] sm:$0xff]
      %v520 = vld [vmem:[#allocation2 + $0x82] sm:$0xff]
      %v521 = vld [vmem:[#allocation2 + $0x92] sm:$0xff]
      %v522 = vld [vmem:[#allocation2 + $0x9a] sm:$0xff]
      %v523 = vld [vmem:[#allocation2 + $0xaa] sm:$0xff]
      %v524 = vld [vmem:[#allocation2 + $0xb2] sm:$0xff]
      %v525 = vld [vmem:[#allocation2 + $0xc2] sm:$0xff]
      %v526 = vld [vmem:[#allocation2 + $0xca] sm:$0xff]
      %v527 = vld [vmem:[#allocation2 + $0xda] sm:$0xff]
      %v528 = vld [vmem:[#allocation2 + $0xe2] sm:$0xff]
      %v529 = vld [vmem:[#allocation2 + $0xf2] sm:$0xff]
      %v530 = vld [vmem:[#allocation2 + $0xfa] sm:$0xff]
      %v531 = vld [vmem:[#allocation2 + $0x10a] sm:$0xff]
      %v532 = vld [vmem:[#allocation2 + $0x112] sm:$0xff]
      %v533 = vld [vmem:[#allocation2 + $0x122] sm:$0xff]
      %v534 = vld [vmem:[#allocation2 + $0x12a] sm:$0xff]
      %v535 = vld [vmem:[#allocation2 + $0x13a] sm:$0xff]
      %v536 = vld [vmem:[#allocation2 + $0x142] sm:$0xff]
      %v537 = vld [vmem:[#allocation2 + $0x152] sm:$0xff]
      %v538 = vld [vmem:[#allocation2 + $0x15a] sm:$0xff]
      %v539 = vld [vmem:[#allocation2 + $0x16a] sm:$0xff]
      %v540 = vld [vmem:[#allocation2 + $0x172] sm:$0xff]
      %v541 = vld [vmem:[%s411] sm:$0xff]
      %v542 = vld [vmem:[%s411 + $0x8] sm:$0xff]
      %v543 = vld [vmem:[%s411 + $0x18] sm:$0xff]
      %v544 = vld [vmem:[%s411 + $0x20] sm:$0xff]
      %v545 = vld [vmem:[%s411 + $0x30] sm:$0xff]
      %v546 = vld [vmem:[%s411 + $0x38] sm:$0xff]
      %v547 = vld [vmem:[%s411 + $0x48] sm:$0xff]
      %v548 = vld [vmem:[%s411 + $0x50] sm:$0xff]
      %v549 = vld [vmem:[%s411 + $0x60] sm:$0xff]
      %v550 = vld [vmem:[%s411 + $0x68] sm:$0xff]
      %v551 = vld [vmem:[%s411 + $0x78] sm:$0xff]
      %v552 = vld [vmem:[%s411 + $0x80] sm:$0xff]
      %v553 = vld [vmem:[%s411 + $0x90] sm:$0xff]
      %v554 = vld [vmem:[%s411 + $0x98] sm:$0xff]
      %v555 = vld [vmem:[%s411 + $0xa8] sm:$0xff]
      %v556 = vld [vmem:[%s411 + $0xb0] sm:$0xff]
      %v557 = vld [vmem:[%s411 + $0xc0] sm:$0xff]
      %v558 = vld [vmem:[%s411 + $0xc8] sm:$0xff]
      %v559 = vld [vmem:[%s411 + $0xd8] sm:$0xff]
      %v560 = vld [vmem:[%s411 + $0xe0] sm:$0xff]
      %v561 = vld [vmem:[%s411 + $0xf0] sm:$0xff]
      %v562 = vld [vmem:[%s411 + $0xf8] sm:$0xff]
      %v563 = vld [vmem:[%s411 + $0x108] sm:$0xff]
      %v564 = vld [vmem:[%s411 + $0x110] sm:$0xff]
      %v565 = vld [vmem:[%s411 + $0x120] sm:$0xff]
      %v566 = vld [vmem:[%s411 + $0x128] sm:$0xff]
      %v567 = vld [vmem:[%s411 + $0x138] sm:$0xff]
      %v568 = vld [vmem:[%s411 + $0x140] sm:$0xff]
      %v569 = vld [vmem:[%s411 + $0x150] sm:$0xff]
      %v570 = vld [vmem:[%s411 + $0x158] sm:$0xff]
      %v571 = vld [vmem:[%s411 + $0x168] sm:$0xff]
      %v572 = vld [vmem:[%s411 + $0x170] sm:$0xff]
      %v573 = vld [vmem:[%s411 + $0x1] sm:$0xff]
      %v574 = vld [vmem:[%s411 + $0x9] sm:$0xff]
      %v575 = vld [vmem:[%s411 + $0x19] sm:$0xff]
      %v576 = vld [vmem:[%s411 + $0x21] sm:$0xff]
      %v577 = vld [vmem:[%s411 + $0x31] sm:$0xff]
      %v578 = vld [vmem:[%s411 + $0x39] sm:$0xff]
      %v579 = vld [vmem:[%s411 + $0x49] sm:$0xff]
      %v580 = vld [vmem:[%s411 + $0x51] sm:$0xff]
      %v581 = vld [vmem:[%s411 + $0x61] sm:$0xff]
      %v582 = vld [vmem:[%s411 + $0x69] sm:$0xff]
      %v583 = vld [vmem:[%s411 + $0x79] sm:$0xff]
      %v584 = vld [vmem:[%s411 + $0x81] sm:$0xff]
      %v585 = vld [vmem:[%s411 + $0x91] sm:$0xff]
      %v586 = vld [vmem:[%s411 + $0x99] sm:$0xff]
      %v587 = vld [vmem:[%s411 + $0xa9] sm:$0xff]
      %v588 = vld [vmem:[%s411 + $0xb1] sm:$0xff]
      %v589 = vld [vmem:[%s411 + $0xc1] sm:$0xff]
      %v590 = vld [vmem:[%s411 + $0xc9] sm:$0xff]
      %v591 = vld [vmem:[%s411 + $0xd9] sm:$0xff]
      %v592 = vld [vmem:[%s411 + $0xe1] sm:$0xff]
      %v593 = vld [vmem:[%s411 + $0xf1] sm:$0xff]
      %v594 = vld [vmem:[%s411 + $0xf9] sm:$0xff]
      %v595 = vld [vmem:[%s411 + $0x109] sm:$0xff]
      %v596 = vld [vmem:[%s411 + $0x111] sm:$0xff]
      %v597 = vld [vmem:[%s411 + $0x121] sm:$0xff]
      %v598 = vld [vmem:[%s411 + $0x129] sm:$0xff]
      %v599 = vld [vmem:[%s411 + $0x139] sm:$0xff]
      %v600 = vld [vmem:[%s411 + $0x141] sm:$0xff]
      %v601 = vld [vmem:[%s411 + $0x151] sm:$0xff]
      %v602 = vld [vmem:[%s411 + $0x159] sm:$0xff]
      %v603 = vld [vmem:[%s411 + $0x169] sm:$0xff]
      %v604 = vld [vmem:[%s411 + $0x171] sm:$0xff]
      %v605 = vld [vmem:[%s411 + $0x2] sm:$0xff]
      %v606 = vld [vmem:[%s411 + $0xa] sm:$0xff]
      %v607 = vld [vmem:[%s411 + $0x1a] sm:$0xff]
      %v608 = vld [vmem:[%s411 + $0x22] sm:$0xff]
      %v609 = vld [vmem:[%s411 + $0x32] sm:$0xff]
      %v610 = vld [vmem:[%s411 + $0x3a] sm:$0xff]
      %v611 = vld [vmem:[%s411 + $0x4a] sm:$0xff]
      %v612 = vld [vmem:[%s411 + $0x52] sm:$0xff]
      %v613 = vld [vmem:[%s411 + $0x62] sm:$0xff]
      %v614 = vld [vmem:[%s411 + $0x6a] sm:$0xff]
      %v615 = vld [vmem:[%s411 + $0x7a] sm:$0xff]
      %v616 = vld [vmem:[%s411 + $0x82] sm:$0xff]
      %v617 = vld [vmem:[%s411 + $0x92] sm:$0xff]
      %v618 = vld [vmem:[%s411 + $0x9a] sm:$0xff]
      %v619 = vld [vmem:[%s411 + $0xaa] sm:$0xff]
      %v620 = vld [vmem:[%s411 + $0xb2] sm:$0xff]
      %v621 = vld [vmem:[%s411 + $0xc2] sm:$0xff]
      %v622 = vld [vmem:[%s411 + $0xca] sm:$0xff]
      %v623 = vld [vmem:[%s411 + $0xda] sm:$0xff]
      %v624 = vld [vmem:[%s411 + $0xe2] sm:$0xff]
      %v625 = vld [vmem:[%s411 + $0xf2] sm:$0xff]
      %v626 = vld [vmem:[%s411 + $0xfa] sm:$0xff]
      %v627 = vld [vmem:[%s411 + $0x10a] sm:$0xff]
      %v628 = vld [vmem:[%s411 + $0x112] sm:$0xff]
      %v629 = vld [vmem:[%s411 + $0x122] sm:$0xff]
      %v630 = vld [vmem:[%s411 + $0x12a] sm:$0xff]
      %v631 = vld [vmem:[%s411 + $0x13a] sm:$0xff]
      %v632 = vld [vmem:[%s411 + $0x142] sm:$0xff]
      %v633 = vld [vmem:[%s411 + $0x152] sm:$0xff]
      %v634 = vld [vmem:[%s411 + $0x15a] sm:$0xff]
      %v635 = vld [vmem:[%s411 + $0x16a] sm:$0xff]
      %v636 = vld [vmem:[%s411 + $0x172] sm:$0xff]
      %s637 = scalar_lea.vmem [#allocation2], 48
      %v638 = vld [vmem:[%s637] sm:$0xff]
      %v639 = vld [vmem:[%s637 + $0x8] sm:$0xff]
      %v640 = vld [vmem:[%s637 + $0x18] sm:$0xff]
      %v641 = vld [vmem:[%s637 + $0x20] sm:$0xff]
      %v642 = vld [vmem:[%s637 + $0x30] sm:$0xff]
      %v643 = vld [vmem:[%s637 + $0x38] sm:$0xff]
      %v644 = vld [vmem:[%s637 + $0x48] sm:$0xff]
      %v645 = vld [vmem:[%s637 + $0x50] sm:$0xff]
      %v646 = vld [vmem:[%s637 + $0x60] sm:$0xff]
      %v647 = vld [vmem:[%s637 + $0x68] sm:$0xff]
      %v648 = vld [vmem:[%s637 + $0x78] sm:$0xff]
      %v649 = vld [vmem:[%s637 + $0x80] sm:$0xff]
      %v650 = vld [vmem:[%s637 + $0x90] sm:$0xff]
      %v651 = vld [vmem:[%s637 + $0x98] sm:$0xff]
      %v652 = vld [vmem:[%s637 + $0xa8] sm:$0xff]
      %v653 = vld [vmem:[%s637 + $0xb0] sm:$0xff]
      %v654 = vld [vmem:[%s637 + $0xc0] sm:$0xff]
      %v655 = vld [vmem:[%s637 + $0xc8] sm:$0xff]
      %v656 = vld [vmem:[%s637 + $0xd8] sm:$0xff]
      %v657 = vld [vmem:[%s637 + $0xe0] sm:$0xff]
      %v658 = vld [vmem:[%s637 + $0xf0] sm:$0xff]
      %v659 = vld [vmem:[%s637 + $0xf8] sm:$0xff]
      %v660 = vld [vmem:[%s637 + $0x108] sm:$0xff]
      %v661 = vld [vmem:[%s637 + $0x110] sm:$0xff]
      %v662 = vld [vmem:[%s637 + $0x120] sm:$0xff]
      %v663 = vld [vmem:[%s637 + $0x128] sm:$0xff]
      %v664 = vld [vmem:[%s637 + $0x138] sm:$0xff]
      %v665 = vld [vmem:[%s637 + $0x140] sm:$0xff]
      %v666 = vld [vmem:[%s637 + $0x150] sm:$0xff]
      %v667 = vld [vmem:[%s637 + $0x158] sm:$0xff]
      %v668 = vld [vmem:[%s637 + $0x168] sm:$0xff]
      %v669 = vld [vmem:[%s637 + $0x170] sm:$0xff]
      %v670 = vld [vmem:[%s637 + $0x1] sm:$0xff]
      %v671 = vld [vmem:[%s637 + $0x9] sm:$0xff]
      %v672 = vld [vmem:[%s637 + $0x19] sm:$0xff]
      %v673 = vld [vmem:[%s637 + $0x21] sm:$0xff]
      %v674 = vld [vmem:[%s637 + $0x31] sm:$0xff]
      %v675 = vld [vmem:[%s637 + $0x39] sm:$0xff]
      %v676 = vld [vmem:[%s637 + $0x49] sm:$0xff]
      %v677 = vld [vmem:[%s637 + $0x51] sm:$0xff]
      %v678 = vld [vmem:[%s637 + $0x61] sm:$0xff]
      %v679 = vld [vmem:[%s637 + $0x69] sm:$0xff]
      %v680 = vld [vmem:[%s637 + $0x79] sm:$0xff]
      %v681 = vld [vmem:[%s637 + $0x81] sm:$0xff]
      %v682 = vld [vmem:[%s637 + $0x91] sm:$0xff]
      %v683 = vld [vmem:[%s637 + $0x99] sm:$0xff]
      %v684 = vld [vmem:[%s637 + $0xa9] sm:$0xff]
      %v685 = vld [vmem:[%s637 + $0xb1] sm:$0xff]
      %v686 = vld [vmem:[%s637 + $0xc1] sm:$0xff]
      %v687 = vld [vmem:[%s637 + $0xc9] sm:$0xff]
      %v688 = vld [vmem:[%s637 + $0xd9] sm:$0xff]
      %v689 = vld [vmem:[%s637 + $0xe1] sm:$0xff]
      %v690 = vld [vmem:[%s637 + $0xf1] sm:$0xff]
      %v691 = vld [vmem:[%s637 + $0xf9] sm:$0xff]
      %v692 = vld [vmem:[%s637 + $0x109] sm:$0xff]
      %v693 = vld [vmem:[%s637 + $0x111] sm:$0xff]
      %v694 = vld [vmem:[%s637 + $0x121] sm:$0xff]
      %v695 = vld [vmem:[%s637 + $0x129] sm:$0xff]
      %v696 = vld [vmem:[%s637 + $0x139] sm:$0xff]
      %v697 = vld [vmem:[%s637 + $0x141] sm:$0xff]
      %v698 = vld [vmem:[%s637 + $0x151] sm:$0xff]
      %v699 = vld [vmem:[%s637 + $0x159] sm:$0xff]
      %v700 = vld [vmem:[%s637 + $0x169] sm:$0xff]
      %v701 = vld [vmem:[%s637 + $0x171] sm:$0xff]
      %v702 = vld [vmem:[%s637 + $0x2] sm:$0xff]
      %v703 = vld [vmem:[%s637 + $0xa] sm:$0xff]
      %v704 = vld [vmem:[%s637 + $0x1a] sm:$0xff]
      %v705 = vld [vmem:[%s637 + $0x22] sm:$0xff]
      %v706 = vld [vmem:[%s637 + $0x32] sm:$0xff]
      %v707 = vld [vmem:[%s637 + $0x3a] sm:$0xff]
      %v708 = vld [vmem:[%s637 + $0x4a] sm:$0xff]
      %v709 = vld [vmem:[%s637 + $0x52] sm:$0xff]
      %v710 = vld [vmem:[%s637 + $0x62] sm:$0xff]
      %v711 = vld [vmem:[%s637 + $0x6a] sm:$0xff]
      %v712 = vld [vmem:[%s637 + $0x7a] sm:$0xff]
      %v713 = vld [vmem:[%s637 + $0x82] sm:$0xff]
      %v714 = vld [vmem:[%s637 + $0x92] sm:$0xff]
      %v715 = vld [vmem:[%s637 + $0x9a] sm:$0xff]
      %v716 = vld [vmem:[%s637 + $0xaa] sm:$0xff]
      %v717 = vld [vmem:[%s637 + $0xb2] sm:$0xff]
      %v718 = vld [vmem:[%s637 + $0xc2] sm:$0xff]
      %v719 = vld [vmem:[%s637 + $0xca] sm:$0xff]
      %v720 = vld [vmem:[%s637 + $0xda] sm:$0xff]
      %v721 = vld [vmem:[%s637 + $0xe2] sm:$0xff]
      %v722 = vld [vmem:[%s637 + $0xf2] sm:$0xff]
      %v723 = vld [vmem:[%s637 + $0xfa] sm:$0xff]
      %v724 = vld [vmem:[%s637 + $0x10a] sm:$0xff]
      %v725 = vld [vmem:[%s637 + $0x112] sm:$0xff]
      %v726 = vld [vmem:[%s637 + $0x122] sm:$0xff]
      %v727 = vld [vmem:[%s637 + $0x12a] sm:$0xff]
      %v728 = vld [vmem:[%s637 + $0x13a] sm:$0xff]
      %v729 = vld [vmem:[%s637 + $0x142] sm:$0xff]
      %v730 = vld [vmem:[%s637 + $0x152] sm:$0xff]
      %v731 = vld [vmem:[%s637 + $0x15a] sm:$0xff]
      %v732 = vld [vmem:[%s637 + $0x16a] sm:$0xff]
      %v733 = vld [vmem:[%s637 + $0x172] sm:$0xff]
      %766 = vrot.lane.b32.xlu0 %v477, 8
      %v767 = vpop.permute.xlu0 %766
      %768 = vrot.lane.b32.xlu0 %v478, 8
      %v769 = vpop.permute.xlu0 %768
      %770 = vrot.lane.b32.xlu0 %v479, 8
      %v771 = vpop.permute.xlu0 %770
      %772 = vrot.lane.b32.xlu0 %v480, 8
      %v773 = vpop.permute.xlu0 %772
      %774 = vrot.lane.b32.xlu0 %v481, 8
      %v775 = vpop.permute.xlu0 %774
      %776 = vrot.lane.b32.xlu0 %v482, 8
      %v777 = vpop.permute.xlu0 %776
      %778 = vrot.lane.b32.xlu0 %v483, 8
      %v779 = vpop.permute.xlu0 %778
      %780 = vrot.lane.b32.xlu0 %v484, 8
      %v781 = vpop.permute.xlu0 %780
      %782 = vrot.lane.b32.xlu0 %v485, 8
      %v783 = vpop.permute.xlu0 %782
      %784 = vrot.lane.b32.xlu0 %v486, 8
      %v785 = vpop.permute.xlu0 %784
      %786 = vrot.lane.b32.xlu0 %v487, 8
      %v787 = vpop.permute.xlu0 %786
      %788 = vrot.lane.b32.xlu0 %v488, 8
      %v789 = vpop.permute.xlu0 %788
      %790 = vrot.lane.b32.xlu0 %v489, 8
      %v791 = vpop.permute.xlu0 %790
      %792 = vrot.lane.b32.xlu0 %v490, 8
      %v793 = vpop.permute.xlu0 %792
      %794 = vrot.lane.b32.xlu0 %v491, 8
      %v795 = vpop.permute.xlu0 %794
      %796 = vrot.lane.b32.xlu0 %v492, 8
      %v797 = vpop.permute.xlu0 %796
      %798 = vrot.lane.b32.xlu0 %v493, 8
      %v799 = vpop.permute.xlu0 %798
      %800 = vrot.lane.b32.xlu0 %v494, 8
      %v801 = vpop.permute.xlu0 %800
      %802 = vrot.lane.b32.xlu0 %v495, 8
      %v803 = vpop.permute.xlu0 %802
      %804 = vrot.lane.b32.xlu0 %v496, 8
      %v805 = vpop.permute.xlu0 %804
      %806 = vrot.lane.b32.xlu0 %v497, 8
      %v807 = vpop.permute.xlu0 %806
      %808 = vrot.lane.b32.xlu0 %v498, 8
      %v809 = vpop.permute.xlu0 %808
      %810 = vrot.lane.b32.xlu0 %v499, 8
      %v811 = vpop.permute.xlu0 %810
      %812 = vrot.lane.b32.xlu0 %v500, 8
      %v813 = vpop.permute.xlu0 %812
      %814 = vrot.lane.b32.xlu0 %v501, 8
      %v815 = vpop.permute.xlu0 %814
      %816 = vrot.lane.b32.xlu0 %v502, 8
      %v817 = vpop.permute.xlu0 %816
      %818 = vrot.lane.b32.xlu0 %v503, 8
      %v819 = vpop.permute.xlu0 %818
      %820 = vrot.lane.b32.xlu0 %v504, 8
      %v821 = vpop.permute.xlu0 %820
      %822 = vrot.lane.b32.xlu0 %v505, 8
      %v823 = vpop.permute.xlu0 %822
      %824 = vrot.lane.b32.xlu0 %v506, 8
      %v825 = vpop.permute.xlu0 %824
      %826 = vrot.lane.b32.xlu0 %v507, 8
      %v827 = vpop.permute.xlu0 %826
      %828 = vrot.lane.b32.xlu0 %v508, 8
      %v829 = vpop.permute.xlu0 %828
      %894 = vrot.lane.b32.xlu0 %v509, 16
      %v895 = vpop.permute.xlu0 %894
      %896 = vrot.lane.b32.xlu0 %v510, 16
      %v897 = vpop.permute.xlu0 %896
      %898 = vrot.lane.b32.xlu0 %v511, 16
      %v899 = vpop.permute.xlu0 %898
      %900 = vrot.lane.b32.xlu0 %v512, 16
      %v901 = vpop.permute.xlu0 %900
      %902 = vrot.lane.b32.xlu0 %v513, 16
      %v903 = vpop.permute.xlu0 %902
      %904 = vrot.lane.b32.xlu0 %v514, 16
      %v905 = vpop.permute.xlu0 %904
      %906 = vrot.lane.b32.xlu0 %v515, 16
      %v907 = vpop.permute.xlu0 %906
      %908 = vrot.lane.b32.xlu0 %v516, 16
      %v909 = vpop.permute.xlu0 %908
      %910 = vrot.lane.b32.xlu0 %v517, 16
      %v911 = vpop.permute.xlu0 %910
      %912 = vrot.lane.b32.xlu0 %v518, 16
      %v913 = vpop.permute.xlu0 %912
      %914 = vrot.lane.b32.xlu0 %v519, 16
      %v915 = vpop.permute.xlu0 %914
      %916 = vrot.lane.b32.xlu0 %v520, 16
      %v917 = vpop.permute.xlu0 %916
      %918 = vrot.lane.b32.xlu0 %v521, 16
      %v919 = vpop.permute.xlu0 %918
      %920 = vrot.lane.b32.xlu0 %v522, 16
      %v921 = vpop.permute.xlu0 %920
      %922 = vrot.lane.b32.xlu0 %v523, 16
      %v923 = vpop.permute.xlu0 %922
      %924 = vrot.lane.b32.xlu0 %v524, 16
      %v925 = vpop.permute.xlu0 %924
      %926 = vrot.lane.b32.xlu0 %v525, 16
      %v927 = vpop.permute.xlu0 %926
      %928 = vrot.lane.b32.xlu0 %v526, 16
      %v929 = vpop.permute.xlu0 %928
      %930 = vrot.lane.b32.xlu0 %v527, 16
      %v931 = vpop.permute.xlu0 %930
      %932 = vrot.lane.b32.xlu0 %v528, 16
      %v933 = vpop.permute.xlu0 %932
      %934 = vrot.lane.b32.xlu0 %v529, 16
      %v935 = vpop.permute.xlu0 %934
      %936 = vrot.lane.b32.xlu0 %v530, 16
      %v937 = vpop.permute.xlu0 %936
      %938 = vrot.lane.b32.xlu0 %v531, 16
      %v939 = vpop.permute.xlu0 %938
      %940 = vrot.lane.b32.xlu0 %v532, 16
      %v941 = vpop.permute.xlu0 %940
      %942 = vrot.lane.b32.xlu0 %v533, 16
      %v943 = vpop.permute.xlu0 %942
      %944 = vrot.lane.b32.xlu0 %v534, 16
      %v945 = vpop.permute.xlu0 %944
      %946 = vrot.lane.b32.xlu0 %v535, 16
      %v947 = vpop.permute.xlu0 %946
      %948 = vrot.lane.b32.xlu0 %v536, 16
      %v949 = vpop.permute.xlu0 %948
      %950 = vrot.lane.b32.xlu0 %v537, 16
      %v951 = vpop.permute.xlu0 %950
      %952 = vrot.lane.b32.xlu0 %v538, 16
      %v953 = vpop.permute.xlu0 %952
      %954 = vrot.lane.b32.xlu0 %v539, 16
      %v955 = vpop.permute.xlu0 %954
      %956 = vrot.lane.b32.xlu0 %v540, 16
      %v957 = vpop.permute.xlu0 %956
      %1022 = vrot.lane.b32.xlu0 %v541, 24
      %v1023 = vpop.permute.xlu0 %1022
      %1024 = vrot.lane.b32.xlu0 %v542, 24
      %v1025 = vpop.permute.xlu0 %1024
      %1026 = vrot.lane.b32.xlu0 %v543, 24
      %v1027 = vpop.permute.xlu0 %1026
      %1028 = vrot.lane.b32.xlu0 %v544, 24
      %v1029 = vpop.permute.xlu0 %1028
      %1030 = vrot.lane.b32.xlu0 %v545, 24
      %v1031 = vpop.permute.xlu0 %1030
      %1032 = vrot.lane.b32.xlu0 %v546, 24
      %v1033 = vpop.permute.xlu0 %1032
      %1034 = vrot.lane.b32.xlu0 %v547, 24
      %v1035 = vpop.permute.xlu0 %1034
      %1036 = vrot.lane.b32.xlu0 %v548, 24
      %v1037 = vpop.permute.xlu0 %1036
      %1038 = vrot.lane.b32.xlu0 %v549, 24
      %v1039 = vpop.permute.xlu0 %1038
      %1040 = vrot.lane.b32.xlu0 %v550, 24
      %v1041 = vpop.permute.xlu0 %1040
      %1042 = vrot.lane.b32.xlu0 %v551, 24
      %v1043 = vpop.permute.xlu0 %1042
      %1044 = vrot.lane.b32.xlu0 %v552, 24
      %v1045 = vpop.permute.xlu0 %1044
      %1046 = vrot.lane.b32.xlu0 %v553, 24
      %v1047 = vpop.permute.xlu0 %1046
      %1048 = vrot.lane.b32.xlu0 %v554, 24
      %v1049 = vpop.permute.xlu0 %1048
      %1050 = vrot.lane.b32.xlu0 %v555, 24
      %v1051 = vpop.permute.xlu0 %1050
      %1052 = vrot.lane.b32.xlu0 %v556, 24
      %v1053 = vpop.permute.xlu0 %1052
      %1054 = vrot.lane.b32.xlu0 %v557, 24
      %v1055 = vpop.permute.xlu0 %1054
      %1056 = vrot.lane.b32.xlu0 %v558, 24
      %v1057 = vpop.permute.xlu0 %1056
      %1058 = vrot.lane.b32.xlu0 %v559, 24
      %v1059 = vpop.permute.xlu0 %1058
      %1060 = vrot.lane.b32.xlu0 %v560, 24
      %v1061 = vpop.permute.xlu0 %1060
      %1062 = vrot.lane.b32.xlu0 %v561, 24
      %v1063 = vpop.permute.xlu0 %1062
      %1064 = vrot.lane.b32.xlu0 %v562, 24
      %v1065 = vpop.permute.xlu0 %1064
      %1066 = vrot.lane.b32.xlu0 %v563, 24
      %v1067 = vpop.permute.xlu0 %1066
      %1068 = vrot.lane.b32.xlu0 %v564, 24
      %v1069 = vpop.permute.xlu0 %1068
      %1070 = vrot.lane.b32.xlu0 %v565, 24
      %v1071 = vpop.permute.xlu0 %1070
      %1072 = vrot.lane.b32.xlu0 %v566, 24
      %v1073 = vpop.permute.xlu0 %1072
      %1074 = vrot.lane.b32.xlu0 %v567, 24
      %v1075 = vpop.permute.xlu0 %1074
      %1076 = vrot.lane.b32.xlu0 %v568, 24
      %v1077 = vpop.permute.xlu0 %1076
      %1078 = vrot.lane.b32.xlu0 %v569, 24
      %v1079 = vpop.permute.xlu0 %1078
      %1080 = vrot.lane.b32.xlu0 %v570, 24
      %v1081 = vpop.permute.xlu0 %1080
      %1082 = vrot.lane.b32.xlu0 %v571, 24
      %v1083 = vpop.permute.xlu0 %1082
      %1084 = vrot.lane.b32.xlu0 %v572, 24
      %v1085 = vpop.permute.xlu0 %1084
      %1150 = vrot.lane.b32.xlu0 %v573, 32
      %v1151 = vpop.permute.xlu0 %1150
      %1152 = vrot.lane.b32.xlu0 %v574, 32
      %v1153 = vpop.permute.xlu0 %1152
      %1154 = vrot.lane.b32.xlu0 %v575, 32
      %v1155 = vpop.permute.xlu0 %1154
      %1156 = vrot.lane.b32.xlu0 %v576, 32
      %v1157 = vpop.permute.xlu0 %1156
      %1158 = vrot.lane.b32.xlu0 %v577, 32
      %v1159 = vpop.permute.xlu0 %1158
      %1160 = vrot.lane.b32.xlu0 %v578, 32
      %v1161 = vpop.permute.xlu0 %1160
      %1162 = vrot.lane.b32.xlu0 %v579, 32
      %v1163 = vpop.permute.xlu0 %1162
      %1164 = vrot.lane.b32.xlu0 %v580, 32
      %v1165 = vpop.permute.xlu0 %1164
      %1166 = vrot.lane.b32.xlu0 %v581, 32
      %v1167 = vpop.permute.xlu0 %1166
      %1168 = vrot.lane.b32.xlu0 %v582, 32
      %v1169 = vpop.permute.xlu0 %1168
      %1170 = vrot.lane.b32.xlu0 %v583, 32
      %v1171 = vpop.permute.xlu0 %1170
      %1172 = vrot.lane.b32.xlu0 %v584, 32
      %v1173 = vpop.permute.xlu0 %1172
      %1174 = vrot.lane.b32.xlu0 %v585, 32
      %v1175 = vpop.permute.xlu0 %1174
      %1176 = vrot.lane.b32.xlu0 %v586, 32
      %v1177 = vpop.permute.xlu0 %1176
      %1178 = vrot.lane.b32.xlu0 %v587, 32
      %v1179 = vpop.permute.xlu0 %1178
      %1180 = vrot.lane.b32.xlu0 %v588, 32
      %v1181 = vpop.permute.xlu0 %1180
      %1182 = vrot.lane.b32.xlu0 %v589, 32
      %v1183 = vpop.permute.xlu0 %1182
      %1184 = vrot.lane.b32.xlu0 %v590, 32
      %v1185 = vpop.permute.xlu0 %1184
      %1186 = vrot.lane.b32.xlu0 %v591, 32
      %v1187 = vpop.permute.xlu0 %1186
      %1188 = vrot.lane.b32.xlu0 %v592, 32
      %v1189 = vpop.permute.xlu0 %1188
      %1190 = vrot.lane.b32.xlu0 %v593, 32
      %v1191 = vpop.permute.xlu0 %1190
      %1192 = vrot.lane.b32.xlu0 %v594, 32
      %v1193 = vpop.permute.xlu0 %1192
      %1194 = vrot.lane.b32.xlu0 %v595, 32
      %v1195 = vpop.permute.xlu0 %1194
      %1196 = vrot.lane.b32.xlu0 %v596, 32
      %v1197 = vpop.permute.xlu0 %1196
      %1198 = vrot.lane.b32.xlu0 %v597, 32
      %v1199 = vpop.permute.xlu0 %1198
      %1200 = vrot.lane.b32.xlu0 %v598, 32
      %v1201 = vpop.permute.xlu0 %1200
      %1202 = vrot.lane.b32.xlu0 %v599, 32
      %v1203 = vpop.permute.xlu0 %1202
      %1204 = vrot.lane.b32.xlu0 %v600, 32
      %v1205 = vpop.permute.xlu0 %1204
      %1206 = vrot.lane.b32.xlu0 %v601, 32
      %v1207 = vpop.permute.xlu0 %1206
      %1208 = vrot.lane.b32.xlu0 %v602, 32
      %v1209 = vpop.permute.xlu0 %1208
      %1210 = vrot.lane.b32.xlu0 %v603, 32
      %v1211 = vpop.permute.xlu0 %1210
      %1212 = vrot.lane.b32.xlu0 %v604, 32
      %v1213 = vpop.permute.xlu0 %1212
      %1278 = vrot.lane.b32.xlu0 %v605, 40
      %v1279 = vpop.permute.xlu0 %1278
      %1280 = vrot.lane.b32.xlu0 %v606, 40
      %v1281 = vpop.permute.xlu0 %1280
      %1282 = vrot.lane.b32.xlu0 %v607, 40
      %v1283 = vpop.permute.xlu0 %1282
      %1284 = vrot.lane.b32.xlu0 %v608, 40
      %v1285 = vpop.permute.xlu0 %1284
      %1286 = vrot.lane.b32.xlu0 %v609, 40
      %v1287 = vpop.permute.xlu0 %1286
      %1288 = vrot.lane.b32.xlu0 %v610, 40
      %v1289 = vpop.permute.xlu0 %1288
      %1290 = vrot.lane.b32.xlu0 %v611, 40
      %v1291 = vpop.permute.xlu0 %1290
      %1292 = vrot.lane.b32.xlu0 %v612, 40
      %v1293 = vpop.permute.xlu0 %1292
      %1294 = vrot.lane.b32.xlu0 %v613, 40
      %v1295 = vpop.permute.xlu0 %1294
      %1296 = vrot.lane.b32.xlu0 %v614, 40
      %v1297 = vpop.permute.xlu0 %1296
      %1298 = vrot.lane.b32.xlu0 %v615, 40
      %v1299 = vpop.permute.xlu0 %1298
      %1300 = vrot.lane.b32.xlu0 %v616, 40
      %v1301 = vpop.permute.xlu0 %1300
      %1302 = vrot.lane.b32.xlu0 %v617, 40
      %v1303 = vpop.permute.xlu0 %1302
      %1304 = vrot.lane.b32.xlu0 %v618, 40
      %v1305 = vpop.permute.xlu0 %1304
      %1306 = vrot.lane.b32.xlu0 %v619, 40
      %v1307 = vpop.permute.xlu0 %1306
      %1308 = vrot.lane.b32.xlu0 %v620, 40
      %v1309 = vpop.permute.xlu0 %1308
      %1310 = vrot.lane.b32.xlu0 %v621, 40
      %v1311 = vpop.permute.xlu0 %1310
      %1312 = vrot.lane.b32.xlu0 %v622, 40
      %v1313 = vpop.permute.xlu0 %1312
      %1314 = vrot.lane.b32.xlu0 %v623, 40
      %v1315 = vpop.permute.xlu0 %1314
      %1316 = vrot.lane.b32.xlu0 %v624, 40
      %v1317 = vpop.permute.xlu0 %1316
      %1318 = vrot.lane.b32.xlu0 %v625, 40
      %v1319 = vpop.permute.xlu0 %1318
      %1320 = vrot.lane.b32.xlu0 %v626, 40
      %v1321 = vpop.permute.xlu0 %1320
      %1322 = vrot.lane.b32.xlu0 %v627, 40
      %v1323 = vpop.permute.xlu0 %1322
      %1324 = vrot.lane.b32.xlu0 %v628, 40
      %v1325 = vpop.permute.xlu0 %1324
      %1326 = vrot.lane.b32.xlu0 %v629, 40
      %v1327 = vpop.permute.xlu0 %1326
      %1328 = vrot.lane.b32.xlu0 %v630, 40
      %v1329 = vpop.permute.xlu0 %1328
      %1330 = vrot.lane.b32.xlu0 %v631, 40
      %v1331 = vpop.permute.xlu0 %1330
      %1332 = vrot.lane.b32.xlu0 %v632, 40
      %v1333 = vpop.permute.xlu0 %1332
      %1334 = vrot.lane.b32.xlu0 %v633, 40
      %v1335 = vpop.permute.xlu0 %1334
      %1336 = vrot.lane.b32.xlu0 %v634, 40
      %v1337 = vpop.permute.xlu0 %1336
      %1338 = vrot.lane.b32.xlu0 %v635, 40
      %v1339 = vpop.permute.xlu0 %1338
      %1340 = vrot.lane.b32.xlu0 %v636, 40
      %v1341 = vpop.permute.xlu0 %1340
      %1406 = vrot.lane.b32.xlu0 %v638, 48
      %v1407 = vpop.permute.xlu0 %1406
      %1408 = vrot.lane.b32.xlu0 %v639, 48
      %v1409 = vpop.permute.xlu0 %1408
      %1410 = vrot.lane.b32.xlu0 %v640, 48
      %v1411 = vpop.permute.xlu0 %1410
      %1412 = vrot.lane.b32.xlu0 %v641, 48
      %v1413 = vpop.permute.xlu0 %1412
      %1414 = vrot.lane.b32.xlu0 %v642, 48
      %v1415 = vpop.permute.xlu0 %1414
      %1416 = vrot.lane.b32.xlu0 %v643, 48
      %v1417 = vpop.permute.xlu0 %1416
      %1418 = vrot.lane.b32.xlu0 %v644, 48
      %v1419 = vpop.permute.xlu0 %1418
      %1420 = vrot.lane.b32.xlu0 %v645, 48
      %v1421 = vpop.permute.xlu0 %1420
      %1422 = vrot.lane.b32.xlu0 %v646, 48
      %v1423 = vpop.permute.xlu0 %1422
      %1424 = vrot.lane.b32.xlu0 %v647, 48
      %v1425 = vpop.permute.xlu0 %1424
      %1426 = vrot.lane.b32.xlu0 %v648, 48
      %v1427 = vpop.permute.xlu0 %1426
      %1428 = vrot.lane.b32.xlu0 %v649, 48
      %v1429 = vpop.permute.xlu0 %1428
      %1430 = vrot.lane.b32.xlu0 %v650, 48
      %v1431 = vpop.permute.xlu0 %1430
      %1432 = vrot.lane.b32.xlu0 %v651, 48
      %v1433 = vpop.permute.xlu0 %1432
      %1434 = vrot.lane.b32.xlu0 %v652, 48
      %v1435 = vpop.permute.xlu0 %1434
      %1436 = vrot.lane.b32.xlu0 %v653, 48
      %v1437 = vpop.permute.xlu0 %1436
      %1438 = vrot.lane.b32.xlu0 %v654, 48
      %v1439 = vpop.permute.xlu0 %1438
      %1440 = vrot.lane.b32.xlu0 %v655, 48
      %v1441 = vpop.permute.xlu0 %1440
      %1442 = vrot.lane.b32.xlu0 %v656, 48
      %v1443 = vpop.permute.xlu0 %1442
      %1444 = vrot.lane.b32.xlu0 %v657, 48
      %v1445 = vpop.permute.xlu0 %1444
      %1446 = vrot.lane.b32.xlu0 %v658, 48
      %v1447 = vpop.permute.xlu0 %1446
      %1448 = vrot.lane.b32.xlu0 %v659, 48
      %v1449 = vpop.permute.xlu0 %1448
      %1450 = vrot.lane.b32.xlu0 %v660, 48
      %v1451 = vpop.permute.xlu0 %1450
      %1452 = vrot.lane.b32.xlu0 %v661, 48
      %v1453 = vpop.permute.xlu0 %1452
      %1454 = vrot.lane.b32.xlu0 %v662, 48
      %v1455 = vpop.permute.xlu0 %1454
      %1456 = vrot.lane.b32.xlu0 %v663, 48
      %v1457 = vpop.permute.xlu0 %1456
      %1458 = vrot.lane.b32.xlu0 %v664, 48
      %v1459 = vpop.permute.xlu0 %1458
      %1460 = vrot.lane.b32.xlu0 %v665, 48
      %v1461 = vpop.permute.xlu0 %1460
      %1462 = vrot.lane.b32.xlu0 %v666, 48
      %v1463 = vpop.permute.xlu0 %1462
      %1464 = vrot.lane.b32.xlu0 %v667, 48
      %v1465 = vpop.permute.xlu0 %1464
      %1466 = vrot.lane.b32.xlu0 %v668, 48
      %v1467 = vpop.permute.xlu0 %1466
      %1468 = vrot.lane.b32.xlu0 %v669, 48
      %v1469 = vpop.permute.xlu0 %1468
      %1534 = vrot.lane.b32.xlu0 %v670, 56
      %v1535 = vpop.permute.xlu0 %1534
      %1536 = vrot.lane.b32.xlu0 %v671, 56
      %v1537 = vpop.permute.xlu0 %1536
      %1538 = vrot.lane.b32.xlu0 %v672, 56
      %v1539 = vpop.permute.xlu0 %1538
      %1540 = vrot.lane.b32.xlu0 %v673, 56
      %v1541 = vpop.permute.xlu0 %1540
      %1542 = vrot.lane.b32.xlu0 %v674, 56
      %v1543 = vpop.permute.xlu0 %1542
      %1544 = vrot.lane.b32.xlu0 %v675, 56
      %v1545 = vpop.permute.xlu0 %1544
      %1546 = vrot.lane.b32.xlu0 %v676, 56
      %v1547 = vpop.permute.xlu0 %1546
      %1548 = vrot.lane.b32.xlu0 %v677, 56
      %v1549 = vpop.permute.xlu0 %1548
      %1550 = vrot.lane.b32.xlu0 %v678, 56
      %v1551 = vpop.permute.xlu0 %1550
      %1552 = vrot.lane.b32.xlu0 %v679, 56
      %v1553 = vpop.permute.xlu0 %1552
      %1554 = vrot.lane.b32.xlu0 %v680, 56
      %v1555 = vpop.permute.xlu0 %1554
      %1556 = vrot.lane.b32.xlu0 %v681, 56
      %v1557 = vpop.permute.xlu0 %1556
      %1558 = vrot.lane.b32.xlu0 %v682, 56
      %v1559 = vpop.permute.xlu0 %1558
      %1560 = vrot.lane.b32.xlu0 %v683, 56
      %v1561 = vpop.permute.xlu0 %1560
      %1562 = vrot.lane.b32.xlu0 %v684, 56
      %v1563 = vpop.permute.xlu0 %1562
      %1564 = vrot.lane.b32.xlu0 %v685, 56
      %v1565 = vpop.permute.xlu0 %1564
      %1566 = vrot.lane.b32.xlu0 %v686, 56
      %v1567 = vpop.permute.xlu0 %1566
      %1568 = vrot.lane.b32.xlu0 %v687, 56
      %v1569 = vpop.permute.xlu0 %1568
      %1570 = vrot.lane.b32.xlu0 %v688, 56
      %v1571 = vpop.permute.xlu0 %1570
      %1572 = vrot.lane.b32.xlu0 %v689, 56
      %v1573 = vpop.permute.xlu0 %1572
      %1574 = vrot.lane.b32.xlu0 %v690, 56
      %v1575 = vpop.permute.xlu0 %1574
      %1576 = vrot.lane.b32.xlu0 %v691, 56
      %v1577 = vpop.permute.xlu0 %1576
      %1578 = vrot.lane.b32.xlu0 %v692, 56
      %v1579 = vpop.permute.xlu0 %1578
      %1580 = vrot.lane.b32.xlu0 %v693, 56
      %v1581 = vpop.permute.xlu0 %1580
      %1582 = vrot.lane.b32.xlu0 %v694, 56
      %v1583 = vpop.permute.xlu0 %1582
      %1584 = vrot.lane.b32.xlu0 %v695, 56
      %v1585 = vpop.permute.xlu0 %1584
      %1586 = vrot.lane.b32.xlu0 %v696, 56
      %v1587 = vpop.permute.xlu0 %1586
      %1588 = vrot.lane.b32.xlu0 %v697, 56
      %v1589 = vpop.permute.xlu0 %1588
      %1590 = vrot.lane.b32.xlu0 %v698, 56
      %v1591 = vpop.permute.xlu0 %1590
      %1592 = vrot.lane.b32.xlu0 %v699, 56
      %v1593 = vpop.permute.xlu0 %1592
      %1594 = vrot.lane.b32.xlu0 %v700, 56
      %v1595 = vpop.permute.xlu0 %1594
      %1596 = vrot.lane.b32.xlu0 %v701, 56
      %v1597 = vpop.permute.xlu0 %1596
      %1662 = vrot.lane.b32.xlu0 %v702, 64
      %v1663 = vpop.permute.xlu0 %1662
      %1664 = vrot.lane.b32.xlu0 %v703, 64
      %v1665 = vpop.permute.xlu0 %1664
      %1666 = vrot.lane.b32.xlu0 %v704, 64
      %v1667 = vpop.permute.xlu0 %1666
      %1668 = vrot.lane.b32.xlu0 %v705, 64
      %v1669 = vpop.permute.xlu0 %1668
      %1670 = vrot.lane.b32.xlu0 %v706, 64
      %v1671 = vpop.permute.xlu0 %1670
      %1672 = vrot.lane.b32.xlu0 %v707, 64
      %v1673 = vpop.permute.xlu0 %1672
      %1674 = vrot.lane.b32.xlu0 %v708, 64
      %v1675 = vpop.permute.xlu0 %1674
      %1676 = vrot.lane.b32.xlu0 %v709, 64
      %v1677 = vpop.permute.xlu0 %1676
      %1678 = vrot.lane.b32.xlu0 %v710, 64
      %v1679 = vpop.permute.xlu0 %1678
      %1680 = vrot.lane.b32.xlu0 %v711, 64
      %v1681 = vpop.permute.xlu0 %1680
      %1682 = vrot.lane.b32.xlu0 %v712, 64
      %v1683 = vpop.permute.xlu0 %1682
      %1684 = vrot.lane.b32.xlu0 %v713, 64
      %v1685 = vpop.permute.xlu0 %1684
      %1686 = vrot.lane.b32.xlu0 %v714, 64
      %v1687 = vpop.permute.xlu0 %1686
      %1688 = vrot.lane.b32.xlu0 %v715, 64
      %v1689 = vpop.permute.xlu0 %1688
      %1690 = vrot.lane.b32.xlu0 %v716, 64
      %v1691 = vpop.permute.xlu0 %1690
      %1692 = vrot.lane.b32.xlu0 %v717, 64
      %v1693 = vpop.permute.xlu0 %1692
      %1694 = vrot.lane.b32.xlu0 %v718, 64
      %v1695 = vpop.permute.xlu0 %1694
      %1696 = vrot.lane.b32.xlu0 %v719, 64
      %v1697 = vpop.permute.xlu0 %1696
      %1698 = vrot.lane.b32.xlu0 %v720, 64
      %v1699 = vpop.permute.xlu0 %1698
      %1700 = vrot.lane.b32.xlu0 %v721, 64
      %v1701 = vpop.permute.xlu0 %1700
      %1702 = vrot.lane.b32.xlu0 %v722, 64
      %v1703 = vpop.permute.xlu0 %1702
      %1704 = vrot.lane.b32.xlu0 %v723, 64
      %v1705 = vpop.permute.xlu0 %1704
      %1706 = vrot.lane.b32.xlu0 %v724, 64
      %v1707 = vpop.permute.xlu0 %1706
      %1708 = vrot.lane.b32.xlu0 %v725, 64
      %v1709 = vpop.permute.xlu0 %1708
      %1710 = vrot.lane.b32.xlu0 %v726, 64
      %v1711 = vpop.permute.xlu0 %1710
      %1712 = vrot.lane.b32.xlu0 %v727, 64
      %v1713 = vpop.permute.xlu0 %1712
      %1714 = vrot.lane.b32.xlu0 %v728, 64
      %v1715 = vpop.permute.xlu0 %1714
      %1716 = vrot.lane.b32.xlu0 %v729, 64
      %v1717 = vpop.permute.xlu0 %1716
      %1718 = vrot.lane.b32.xlu0 %v730, 64
      %v1719 = vpop.permute.xlu0 %1718
      %1720 = vrot.lane.b32.xlu0 %v731, 64
      %v1721 = vpop.permute.xlu0 %1720
      %1722 = vrot.lane.b32.xlu0 %v732, 64
      %v1723 = vpop.permute.xlu0 %1722
      %1724 = vrot.lane.b32.xlu0 %v733, 64
      %v1725 = vpop.permute.xlu0 %1724
      %v1758 = vsel %vm412, %v445, %v767
      %v1759 = vsel %vm412, %v446, %v769
      %v1760 = vsel %vm412, %v447, %v771
      %v1761 = vsel %vm412, %v448, %v773
      %v1762 = vsel %vm412, %v449, %v775
      %v1763 = vsel %vm412, %v450, %v777
      %v1764 = vsel %vm412, %v451, %v779
      %v1765 = vsel %vm412, %v452, %v781
      %v1766 = vsel %vm412, %v453, %v783
      %v1767 = vsel %vm412, %v454, %v785
      %v1768 = vsel %vm412, %v455, %v787
      %v1769 = vsel %vm412, %v456, %v789
      %v1770 = vsel %vm412, %v457, %v791
      %v1771 = vsel %vm412, %v458, %v793
      %v1772 = vsel %vm412, %v459, %v795
      %v1773 = vsel %vm412, %v460, %v797
      %v1774 = vsel %vm412, %v461, %v799
      %v1775 = vsel %vm412, %v462, %v801
      %v1776 = vsel %vm412, %v463, %v803
      %v1777 = vsel %vm412, %v464, %v805
      %v1778 = vsel %vm412, %v465, %v807
      %v1779 = vsel %vm412, %v466, %v809
      %v1780 = vsel %vm412, %v467, %v811
      %v1781 = vsel %vm412, %v468, %v813
      %v1782 = vsel %vm412, %v469, %v815
      %v1783 = vsel %vm412, %v470, %v817
      %v1784 = vsel %vm412, %v471, %v819
      %v1785 = vsel %vm412, %v472, %v821
      %v1786 = vsel %vm412, %v473, %v823
      %v1787 = vsel %vm412, %v474, %v825
      %v1788 = vsel %vm412, %v475, %v827
      %v1789 = vsel %vm412, %v476, %v829
      %vm1790 = vcmask 130048
      %v1791 = vsel %vm1790, %v1758, %v895
      %v1792 = vsel %vm1790, %v1759, %v897
      %v1793 = vsel %vm1790, %v1760, %v899
      %v1794 = vsel %vm1790, %v1761, %v901
      %v1795 = vsel %vm1790, %v1762, %v903
      %v1796 = vsel %vm1790, %v1763, %v905
      %v1797 = vsel %vm1790, %v1764, %v907
      %v1798 = vsel %vm1790, %v1765, %v909
      %v1799 = vsel %vm1790, %v1766, %v911
      %v1800 = vsel %vm1790, %v1767, %v913
      %v1801 = vsel %vm1790, %v1768, %v915
      %v1802 = vsel %vm1790, %v1769, %v917
      %v1803 = vsel %vm1790, %v1770, %v919
      %v1804 = vsel %vm1790, %v1771, %v921
      %v1805 = vsel %vm1790, %v1772, %v923
      %v1806 = vsel %vm1790, %v1773, %v925
      %v1807 = vsel %vm1790, %v1774, %v927
      %v1808 = vsel %vm1790, %v1775, %v929
      %v1809 = vsel %vm1790, %v1776, %v931
      %v1810 = vsel %vm1790, %v1777, %v933
      %v1811 = vsel %vm1790, %v1778, %v935
      %v1812 = vsel %vm1790, %v1779, %v937
      %v1813 = vsel %vm1790, %v1780, %v939
      %v1814 = vsel %vm1790, %v1781, %v941
      %v1815 = vsel %vm1790, %v1782, %v943
      %v1816 = vsel %vm1790, %v1783, %v945
      %v1817 = vsel %vm1790, %v1784, %v947
      %v1818 = vsel %vm1790, %v1785, %v949
      %v1819 = vsel %vm1790, %v1786, %v951
      %v1820 = vsel %vm1790, %v1787, %v953
      %v1821 = vsel %vm1790, %v1788, %v955
      %v1822 = vsel %vm1790, %v1789, %v957
      %vm1823 = vcmask 195584
      %v1824 = vsel %vm1823, %v1791, %v1023
      %v1825 = vsel %vm1823, %v1792, %v1025
      %v1826 = vsel %vm1823, %v1793, %v1027
      %v1827 = vsel %vm1823, %v1794, %v1029
      %v1828 = vsel %vm1823, %v1795, %v1031
      %v1829 = vsel %vm1823, %v1796, %v1033
      %v1830 = vsel %vm1823, %v1797, %v1035
      %v1831 = vsel %vm1823, %v1798, %v1037
      %v1832 = vsel %vm1823, %v1799, %v1039
      %v1833 = vsel %vm1823, %v1800, %v1041
      %v1834 = vsel %vm1823, %v1801, %v1043
      %v1835 = vsel %vm1823, %v1802, %v1045
      %v1836 = vsel %vm1823, %v1803, %v1047
      %v1837 = vsel %vm1823, %v1804, %v1049
      %v1838 = vsel %vm1823, %v1805, %v1051
      %v1839 = vsel %vm1823, %v1806, %v1053
      %v1840 = vsel %vm1823, %v1807, %v1055
      %v1841 = vsel %vm1823, %v1808, %v1057
      %v1842 = vsel %vm1823, %v1809, %v1059
      %v1843 = vsel %vm1823, %v1810, %v1061
      %v1844 = vsel %vm1823, %v1811, %v1063
      %v1845 = vsel %vm1823, %v1812, %v1065
      %v1846 = vsel %vm1823, %v1813, %v1067
      %v1847 = vsel %vm1823, %v1814, %v1069
      %v1848 = vsel %vm1823, %v1815, %v1071
      %v1849 = vsel %vm1823, %v1816, %v1073
      %v1850 = vsel %vm1823, %v1817, %v1075
      %v1851 = vsel %vm1823, %v1818, %v1077
      %v1852 = vsel %vm1823, %v1819, %v1079
      %v1853 = vsel %vm1823, %v1820, %v1081
      %v1854 = vsel %vm1823, %v1821, %v1083
      %v1855 = vsel %vm1823, %v1822, %v1085
      %v1856 = vsel %vm333, %v1824, %v1151
      %v1857 = vsel %vm333, %v1825, %v1153
      %v1858 = vsel %vm333, %v1826, %v1155
      %v1859 = vsel %vm333, %v1827, %v1157
      %v1860 = vsel %vm333, %v1828, %v1159
      %v1861 = vsel %vm333, %v1829, %v1161
      %v1862 = vsel %vm333, %v1830, %v1163
      %v1863 = vsel %vm333, %v1831, %v1165
      %v1864 = vsel %vm333, %v1832, %v1167
      %v1865 = vsel %vm333, %v1833, %v1169
      %v1866 = vsel %vm333, %v1834, %v1171
      %v1867 = vsel %vm333, %v1835, %v1173
      %v1868 = vsel %vm333, %v1836, %v1175
      %v1869 = vsel %vm333, %v1837, %v1177
      %v1870 = vsel %vm333, %v1838, %v1179
      %v1871 = vsel %vm333, %v1839, %v1181
      %v1872 = vsel %vm333, %v1840, %v1183
      %v1873 = vsel %vm333, %v1841, %v1185
      %v1874 = vsel %vm333, %v1842, %v1187
      %v1875 = vsel %vm333, %v1843, %v1189
      %v1876 = vsel %vm333, %v1844, %v1191
      %v1877 = vsel %vm333, %v1845, %v1193
      %v1878 = vsel %vm333, %v1846, %v1195
      %v1879 = vsel %vm333, %v1847, %v1197
      %v1880 = vsel %vm333, %v1848, %v1199
      %v1881 = vsel %vm333, %v1849, %v1201
      %v1882 = vsel %vm333, %v1850, %v1203
      %v1883 = vsel %vm333, %v1851, %v1205
      %v1884 = vsel %vm333, %v1852, %v1207
      %v1885 = vsel %vm333, %v1853, %v1209
      %v1886 = vsel %vm333, %v1854, %v1211
      %v1887 = vsel %vm333, %v1855, %v1213
      %vm1888 = vcmask 326656
      %v1889 = vsel %vm1888, %v1856, %v1279
      %v1890 = vsel %vm1888, %v1857, %v1281
      %v1891 = vsel %vm1888, %v1858, %v1283
      %v1892 = vsel %vm1888, %v1859, %v1285
      %v1893 = vsel %vm1888, %v1860, %v1287
      %v1894 = vsel %vm1888, %v1861, %v1289
      %v1895 = vsel %vm1888, %v1862, %v1291
      %v1896 = vsel %vm1888, %v1863, %v1293
      %v1897 = vsel %vm1888, %v1864, %v1295
      %v1898 = vsel %vm1888, %v1865, %v1297
      %v1899 = vsel %vm1888, %v1866, %v1299
      %v1900 = vsel %vm1888, %v1867, %v1301
      %v1901 = vsel %vm1888, %v1868, %v1303
      %v1902 = vsel %vm1888, %v1869, %v1305
      %v1903 = vsel %vm1888, %v1870, %v1307
      %v1904 = vsel %vm1888, %v1871, %v1309
      %v1905 = vsel %vm1888, %v1872, %v1311
      %v1906 = vsel %vm1888, %v1873, %v1313
      %v1907 = vsel %vm1888, %v1874, %v1315
      %v1908 = vsel %vm1888, %v1875, %v1317
      %v1909 = vsel %vm1888, %v1876, %v1319
      %v1910 = vsel %vm1888, %v1877, %v1321
      %v1911 = vsel %vm1888, %v1878, %v1323
      %v1912 = vsel %vm1888, %v1879, %v1325
      %v1913 = vsel %vm1888, %v1880, %v1327
      %v1914 = vsel %vm1888, %v1881, %v1329
      %v1915 = vsel %vm1888, %v1882, %v1331
      %v1916 = vsel %vm1888, %v1883, %v1333
      %v1917 = vsel %vm1888, %v1884, %v1335
      %v1918 = vsel %vm1888, %v1885, %v1337
      %v1919 = vsel %vm1888, %v1886, %v1339
      %v1920 = vsel %vm1888, %v1887, %v1341
      %vm1921 = vcmask 392192
      %v1922 = vsel %vm1921, %v1889, %v1407
      %v1923 = vsel %vm1921, %v1890, %v1409
      %v1924 = vsel %vm1921, %v1891, %v1411
      %v1925 = vsel %vm1921, %v1892, %v1413
      %v1926 = vsel %vm1921, %v1893, %v1415
      %v1927 = vsel %vm1921, %v1894, %v1417
      %v1928 = vsel %vm1921, %v1895, %v1419
      %v1929 = vsel %vm1921, %v1896, %v1421
      %v1930 = vsel %vm1921, %v1897, %v1423
      %v1931 = vsel %vm1921, %v1898, %v1425
      %v1932 = vsel %vm1921, %v1899, %v1427
      %v1933 = vsel %vm1921, %v1900, %v1429
      %v1934 = vsel %vm1921, %v1901, %v1431
      %v1935 = vsel %vm1921, %v1902, %v1433
      %v1936 = vsel %vm1921, %v1903, %v1435
      %v1937 = vsel %vm1921, %v1904, %v1437
      %v1938 = vsel %vm1921, %v1905, %v1439
      %v1939 = vsel %vm1921, %v1906, %v1441
      %v1940 = vsel %vm1921, %v1907, %v1443
      %v1941 = vsel %vm1921, %v1908, %v1445
      %v1942 = vsel %vm1921, %v1909, %v1447
      %v1943 = vsel %vm1921, %v1910, %v1449
      %v1944 = vsel %vm1921, %v1911, %v1451
      %v1945 = vsel %vm1921, %v1912, %v1453
      %v1946 = vsel %vm1921, %v1913, %v1455
      %v1947 = vsel %vm1921, %v1914, %v1457
      %v1948 = vsel %vm1921, %v1915, %v1459
      %v1949 = vsel %vm1921, %v1916, %v1461
      %v1950 = vsel %vm1921, %v1917, %v1463
      %v1951 = vsel %vm1921, %v1918, %v1465
      %v1952 = vsel %vm1921, %v1919, %v1467
      %v1953 = vsel %vm1921, %v1920, %v1469
      %vm1954 = vcmask 457728
      %v1955 = vsel %vm1954, %v1922, %v1535
      %v1956 = vsel %vm1954, %v1923, %v1537
      %v1957 = vsel %vm1954, %v1924, %v1539
      %v1958 = vsel %vm1954, %v1925, %v1541
      %v1959 = vsel %vm1954, %v1926, %v1543
      %v1960 = vsel %vm1954, %v1927, %v1545
      %v1961 = vsel %vm1954, %v1928, %v1547
      %v1962 = vsel %vm1954, %v1929, %v1549
      %v1963 = vsel %vm1954, %v1930, %v1551
      %v1964 = vsel %vm1954, %v1931, %v1553
      %v1965 = vsel %vm1954, %v1932, %v1555
      %v1966 = vsel %vm1954, %v1933, %v1557
      %v1967 = vsel %vm1954, %v1934, %v1559
      %v1968 = vsel %vm1954, %v1935, %v1561
      %v1969 = vsel %vm1954, %v1936, %v1563
      %v1970 = vsel %vm1954, %v1937, %v1565
      %v1971 = vsel %vm1954, %v1938, %v1567
      %v1972 = vsel %vm1954, %v1939, %v1569
      %v1973 = vsel %vm1954, %v1940, %v1571
      %v1974 = vsel %vm1954, %v1941, %v1573
      %v1975 = vsel %vm1954, %v1942, %v1575
      %v1976 = vsel %vm1954, %v1943, %v1577
      %v1977 = vsel %vm1954, %v1944, %v1579
      %v1978 = vsel %vm1954, %v1945, %v1581
      %v1979 = vsel %vm1954, %v1946, %v1583
      %v1980 = vsel %vm1954, %v1947, %v1585
      %v1981 = vsel %vm1954, %v1948, %v1587
      %v1982 = vsel %vm1954, %v1949, %v1589
      %v1983 = vsel %vm1954, %v1950, %v1591
      %v1984 = vsel %vm1954, %v1951, %v1593
      %v1985 = vsel %vm1954, %v1952, %v1595
      %v1986 = vsel %vm1954, %v1953, %v1597
      %vm1987 = vcmask 523264
      %v1988 = vsel %vm1987, %v1955, %v1663
      %v1989 = vsel %vm1987, %v1956, %v1665
      %v1990 = vsel %vm1987, %v1957, %v1667
      %v1991 = vsel %vm1987, %v1958, %v1669
      %v1992 = vsel %vm1987, %v1959, %v1671
      %v1993 = vsel %vm1987, %v1960, %v1673
      %v1994 = vsel %vm1987, %v1961, %v1675
      %v1995 = vsel %vm1987, %v1962, %v1677
      %v1996 = vsel %vm1987, %v1963, %v1679
      %v1997 = vsel %vm1987, %v1964, %v1681
      %v1998 = vsel %vm1987, %v1965, %v1683
      %v1999 = vsel %vm1987, %v1966, %v1685
      %v2000 = vsel %vm1987, %v1967, %v1687
      %v2001 = vsel %vm1987, %v1968, %v1689
      %v2002 = vsel %vm1987, %v1969, %v1691
      %v2003 = vsel %vm1987, %v1970, %v1693
      %v2004 = vsel %vm1987, %v1971, %v1695
      %v2005 = vsel %vm1987, %v1972, %v1697
      %v2006 = vsel %vm1987, %v1973, %v1699
      %v2007 = vsel %vm1987, %v1974, %v1701
      %v2008 = vsel %vm1987, %v1975, %v1703
      %v2009 = vsel %vm1987, %v1976, %v1705
      %v2010 = vsel %vm1987, %v1977, %v1707
      %v2011 = vsel %vm1987, %v1978, %v1709
      %v2012 = vsel %vm1987, %v1979, %v1711
      %v2013 = vsel %vm1987, %v1980, %v1713
      %v2014 = vsel %vm1987, %v1981, %v1715
      %v2015 = vsel %vm1987, %v1982, %v1717
      %v2016 = vsel %vm1987, %v1983, %v1719
      %v2017 = vsel %vm1987, %v1984, %v1721
      %v2018 = vsel %vm1987, %v1985, %v1723
      %v2019 = vsel %vm1987, %v1986, %v1725
      %v2020 = vld [vmem:[%s1] sm:$0xff]
      %v2021 = vld [vmem:[%s1 + $0x8] sm:$0xff]
      %v2022 = vld [vmem:[%s1 + $0x10] sm:$0xff]
      %v2023 = vld [vmem:[%s1 + $0x18] sm:$0xff]
      %v2024 = vld [vmem:[%s1 + $0x20] sm:$0xff]
      %v2025 = vld [vmem:[%s1 + $0x28] sm:$0xff]
      %v2026 = vld [vmem:[%s1 + $0x30] sm:$0xff]
      %v2027 = vld [vmem:[%s1 + $0x38] sm:$0xff]
      %v2028 = vld [vmem:[%s1 + $0x40] sm:$0xff]
      %v2029 = vld [vmem:[%s2] sm:$0x1]
      %v2031 = vlaneseq
      %v2032 = vshrl.u32 %v2031, 7
      %v2033 = vsub.s32 0, %v2032
      %v2034 = vrot.slane %v2029, %v2033
      %vm2036 = vcmask 588800
      %v2038 = vsel %vm2036, %v1988, 0
      %v2041 = vsel %vm2036, %v1989, 0
      %v2044 = vsel %vm2036, %v1990, 0
      %v2047 = vsel %vm2036, %v1991, 0
      %v2050 = vsel %vm2036, %v1992, 0
      %v2053 = vsel %vm2036, %v1993, 0
      %v2056 = vsel %vm2036, %v1994, 0
      %v2059 = vsel %vm2036, %v1995, 0
      %v2062 = vsel %vm2036, %v1996, 0
      %v2065 = vsel %vm2036, %v1997, 0
      %v2068 = vsel %vm2036, %v1998, 0
      %v2071 = vsel %vm2036, %v1999, 0
      %v2074 = vsel %vm2036, %v2000, 0
      %v2077 = vsel %vm2036, %v2001, 0
      %v2080 = vsel %vm2036, %v2002, 0
      %v2083 = vsel %vm2036, %v2003, 0
      %v2086 = vsel %vm2036, %v2004, 0
      %v2089 = vsel %vm2036, %v2005, 0
      %v2092 = vsel %vm2036, %v2006, 0
      %v2095 = vsel %vm2036, %v2007, 0
      %v2098 = vsel %vm2036, %v2008, 0
      %v2101 = vsel %vm2036, %v2009, 0
      %v2104 = vsel %vm2036, %v2010, 0
      %v2107 = vsel %vm2036, %v2011, 0
      %v2110 = vsel %vm2036, %v2012, 0
      %v2113 = vsel %vm2036, %v2013, 0
      %v2116 = vsel %vm2036, %v2014, 0
      %v2119 = vsel %vm2036, %v2015, 0
      %v2122 = vsel %vm2036, %v2016, 0
      %v2125 = vsel %vm2036, %v2017, 0
      %v2128 = vsel %vm2036, %v2018, 0
      %v2131 = vsel %vm2036, %v2019, 0
      %2133 = vmatprep.subr.mxu0 0.0
      %2134 = vmatpush1.msra.mxu0 %v2020
      %2135 = vmatprep.subr.mxu0 0.0
      %2136 = vmatpush1.msra.mxu0 %v2021
      %2137 = vmatprep.subr.mxu0 0.0
      %2138 = vmatpush1.msra.mxu0 %v2022
      %2139 = vmatprep.subr.mxu0 0.0
      %2140 = vmatpush1.msra.mxu0 %v2023
      %2141 = vmatprep.subr.mxu0 0.0
      %2142 = vmatpush1.msra.mxu0 %v2024
      %2143 = vmatprep.subr.mxu0 0.0
      %2144 = vmatpush1.msra.mxu0 %v2025
      %2145 = vmatprep.subr.mxu0 0.0
      %2146 = vmatpush1.msra.mxu0 %v2026
      %2147 = vmatprep.subr.mxu0 0.0
      %2148 = vmatpush1.msra.mxu0 %v2027
      %2149 = vmatprep.subr.mxu0 0.0
      %2150 = vmatpush1.msra.mxu0 %v2028
      %2151 = vmatprep.subr.mxu0 0.0
      %2152 = vmatpush1.msra.mxu0 0.0
      %2153 = vmatprep.subr.mxu0 0.0
      %2154 = vmatpush1.msra.mxu0 0.0
      %2155 = vmatprep.subr.mxu0 0.0
      %2156 = vmatpush1.msra.mxu0 0.0
      %2157 = vmatprep.subr.mxu0 0.0
      %2158 = vmatpush1.msra.mxu0 0.0
      %2159 = vmatprep.subr.mxu0 0.0
      %2160 = vmatpush1.msra.mxu0 0.0
      %2161 = vmatprep.subr.mxu0 0.0
      %2162 = vmatpush1.msra.mxu0 0.0
      %2163 = vmatprep.subr.mxu0 0.0
      %2164 = vmatpush1.msra.mxu0 0.0
      %2165 = vmatprep.subr.mxu0 0.0
      %2166 = vmatpush1.msra.mxu0 0.0
      %2167 = vmatprep.subr.mxu0 0.0
      %2168 = vmatpush1.msra.mxu0 0.0
      %2169 = vmatprep.subr.mxu0 0.0
      %2170 = vmatpush1.msra.mxu0 0.0
      %2171 = vmatprep.subr.mxu0 0.0
      %2172 = vmatpush1.msra.mxu0 0.0
      %2173 = vmatprep.subr.mxu0 0.0
      %2174 = vmatpush1.msra.mxu0 0.0
      %2175 = vmatprep.subr.mxu0 0.0
      %2176 = vmatpush1.msra.mxu0 0.0
      %2177 = vmatprep.subr.mxu0 0.0
      %2178 = vmatpush1.msra.mxu0 0.0
      %2179 = vmatprep.subr.mxu0 0.0
      %2180 = vmatpush1.msra.mxu0 0.0
      %2181 = vmatprep.subr.mxu0 0.0
      %2182 = vmatpush1.msra.mxu0 0.0
      %2183 = vmatprep.subr.mxu0 0.0
      %2184 = vmatpush1.msra.mxu0 0.0
      %2185 = vmatprep.subr.mxu0 0.0
      %2186 = vmatpush1.msra.mxu0 0.0
      %2187 = vmatprep.subr.mxu0 0.0
      %2188 = vmatpush1.msra.mxu0 0.0
      %2189 = vmatprep.subr.mxu0 0.0
      %2190 = vmatpush1.msra.mxu0 0.0
      %2191 = vmatprep.subr.mxu0 0.0
      %2192 = vmatpush1.msra.mxu0 0.0
      %2193 = vmatprep.subr.mxu0 0.0
      %2194 = vmatpush1.msra.mxu0 0.0
      %2195 = vmatprep.subr.mxu0 0.0
      %2196 = vmatpush1.msra.mxu0 0.0
      %2197 = vmatprep.mubr.f32.mxu0 0.0
      %2198 = vmatmul.mubr.f32.gmra.mrb[0].mxu0 %v2038
      %v2199 = vpop.f32.mrb[0].mxu0
      %v2200 = vadd.f32 %v2034, %v2199
      %v2201 = vpop.f32.mrb[0].mxu0
      %2202 = vmatprep.mubr.f32.mxu0 0.0
      %2203 = vmatmul.mubr.f32.gmra.mrb[0].mxu0 %v2041
      %v2204 = vpop.f32.mrb[0].mxu0
      %v2205 = vadd.f32 %v2034, %v2204
      %v2206 = vpop.f32.mrb[0].mxu0
      %2207 = vmatprep.mubr.f32.mxu0 0.0
      %2208 = vmatmul.mubr.f32.gmra.mrb[0].mxu0 %v2044
      %v2209 = vpop.f32.mrb[0].mxu0
      %v2210 = vadd.f32 %v2034, %v2209
      %v2211 = vpop.f32.mrb[0].mxu0
      %2212 = vmatprep.mubr.f32.mxu0 0.0
      %2213 = vmatmul.mubr.f32.gmra.mrb[0].mxu0 %v2047
      %v2214 = vpop.f32.mrb[0].mxu0
      %v2215 = vadd.f32 %v2034, %v2214
      %v2216 = vpop.f32.mrb[0].mxu0
      %2217 = vmatprep.mubr.f32.mxu0 0.0
      %2218 = vmatmul.mubr.f32.gmra.mrb[0].mxu0 %v2050
      %v2219 = vpop.f32.mrb[0].mxu0
      %v2220 = vadd.f32 %v2034, %v2219
      %v2221 = vpop.f32.mrb[0].mxu0
      %2222 = vmatprep.mubr.f32.mxu0 0.0
      %2223 = vmatmul.mubr.f32.gmra.mrb[0].mxu0 %v2053
      %v2224 = vpop.f32.mrb[0].mxu0
      %v2225 = vadd.f32 %v2034, %v2224
      %v2226 = vpop.f32.mrb[0].mxu0
      %2227 = vmatprep.mubr.f32.mxu0 0.0
      %2228 = vmatmul.mubr.f32.gmra.mrb[0].mxu0 %v2056
      %v2229 = vpop.f32.mrb[0].mxu0
      %v2230 = vadd.f32 %v2034, %v2229
      %v2231 = vpop.f32.mrb[0].mxu0
      %2232 = vmatprep.mubr.f32.mxu0 0.0
      %2233 = vmatmul.mubr.f32.gmra.mrb[0].mxu0 %v2059
      %v2234 = vpop.f32.mrb[0].mxu0
      %v2235 = vadd.f32 %v2034, %v2234
      %v2236 = vpop.f32.mrb[0].mxu0
      %2237 = vmatprep.mubr.f32.mxu0 0.0
      %2238 = vmatmul.mubr.f32.gmra.mrb[0].mxu0 %v2062
      %v2239 = vpop.f32.mrb[0].mxu0
      %v2240 = vadd.f32 %v2034, %v2239
      %v2241 = vpop.f32.mrb[0].mxu0
      %2242 = vmatprep.mubr.f32.mxu0 0.0
      %2243 = vmatmul.mubr.f32.gmra.mrb[0].mxu0 %v2065
      %v2244 = vpop.f32.mrb[0].mxu0
      %v2245 = vadd.f32 %v2034, %v2244
      %v2246 = vpop.f32.mrb[0].mxu0
      %2247 = vmatprep.mubr.f32.mxu0 0.0
      %2248 = vmatmul.mubr.f32.gmra.mrb[0].mxu0 %v2068
      %v2249 = vpop.f32.mrb[0].mxu0
      %v2250 = vadd.f32 %v2034, %v2249
      %v2251 = vpop.f32.mrb[0].mxu0
      %2252 = vmatprep.mubr.f32.mxu0 0.0
      %2253 = vmatmul.mubr.f32.gmra.mrb[0].mxu0 %v2071
      %v2254 = vpop.f32.mrb[0].mxu0
      %v2255 = vadd.f32 %v2034, %v2254
      %v2256 = vpop.f32.mrb[0].mxu0
      %2257 = vmatprep.mubr.f32.mxu0 0.0
      %2258 = vmatmul.mubr.f32.gmra.mrb[0].mxu0 %v2074
      %v2259 = vpop.f32.mrb[0].mxu0
      %v2260 = vadd.f32 %v2034, %v2259
      %v2261 = vpop.f32.mrb[0].mxu0
      %2262 = vmatprep.mubr.f32.mxu0 0.0
      %2263 = vmatmul.mubr.f32.gmra.mrb[0].mxu0 %v2077
      %v2264 = vpop.f32.mrb[0].mxu0
      %v2265 = vadd.f32 %v2034, %v2264
      %v2266 = vpop.f32.mrb[0].mxu0
      %2267 = vmatprep.mubr.f32.mxu0 0.0
      %2268 = vmatmul.mubr.f32.gmra.mrb[0].mxu0 %v2080
      %v2269 = vpop.f32.mrb[0].mxu0
      %v2270 = vadd.f32 %v2034, %v2269
      %v2271 = vpop.f32.mrb[0].mxu0
      %2272 = vmatprep.mubr.f32.mxu0 0.0
      %2273 = vmatmul.mubr.f32.gmra.mrb[0].mxu0 %v2083
      %v2274 = vpop.f32.mrb[0].mxu0
      %v2275 = vadd.f32 %v2034, %v2274
      %v2276 = vpop.f32.mrb[0].mxu0
      %2277 = vmatprep.mubr.f32.mxu0 0.0
      %2278 = vmatmul.mubr.f32.gmra.mrb[0].mxu0 %v2086
      %v2279 = vpop.f32.mrb[0].mxu0
      %v2280 = vadd.f32 %v2034, %v2279
      %v2281 = vpop.f32.mrb[0].mxu0
      %2282 = vmatprep.mubr.f32.mxu0 0.0
      %2283 = vmatmul.mubr.f32.gmra.mrb[0].mxu0 %v2089
      %v2284 = vpop.f32.mrb[0].mxu0
      %v2285 = vadd.f32 %v2034, %v2284
      %v2286 = vpop.f32.mrb[0].mxu0
      %2287 = vmatprep.mubr.f32.mxu0 0.0
      %2288 = vmatmul.mubr.f32.gmra.mrb[0].mxu0 %v2092
      %v2289 = vpop.f32.mrb[0].mxu0
      %v2290 = vadd.f32 %v2034, %v2289
      %v2291 = vpop.f32.mrb[0].mxu0
      %2292 = vmatprep.mubr.f32.mxu0 0.0
      %2293 = vmatmul.mubr.f32.gmra.mrb[0].mxu0 %v2095
      %v2294 = vpop.f32.mrb[0].mxu0
      %v2295 = vadd.f32 %v2034, %v2294
      %v2296 = vpop.f32.mrb[0].mxu0
      %2297 = vmatprep.mubr.f32.mxu0 0.0
      %2298 = vmatmul.mubr.f32.gmra.mrb[0].mxu0 %v2098
      %v2299 = vpop.f32.mrb[0].mxu0
      %v2300 = vadd.f32 %v2034, %v2299
      %v2301 = vpop.f32.mrb[0].mxu0
      %2302 = vmatprep.mubr.f32.mxu0 0.0
      %2303 = vmatmul.mubr.f32.gmra.mrb[0].mxu0 %v2101
      %v2304 = vpop.f32.mrb[0].mxu0
      %v2305 = vadd.f32 %v2034, %v2304
      %v2306 = vpop.f32.mrb[0].mxu0
      %2307 = vmatprep.mubr.f32.mxu0 0.0
      %2308 = vmatmul.mubr.f32.gmra.mrb[0].mxu0 %v2104
      %v2309 = vpop.f32.mrb[0].mxu0
      %v2310 = vadd.f32 %v2034, %v2309
      %v2311 = vpop.f32.mrb[0].mxu0
      %2312 = vmatprep.mubr.f32.mxu0 0.0
      %2313 = vmatmul.mubr.f32.gmra.mrb[0].mxu0 %v2107
      %v2314 = vpop.f32.mrb[0].mxu0
      %v2315 = vadd.f32 %v2034, %v2314
      %v2316 = vpop.f32.mrb[0].mxu0
      %2317 = vmatprep.mubr.f32.mxu0 0.0
      %2318 = vmatmul.mubr.f32.gmra.mrb[0].mxu0 %v2110
      %v2319 = vpop.f32.mrb[0].mxu0
      %v2320 = vadd.f32 %v2034, %v2319
      %v2321 = vpop.f32.mrb[0].mxu0
      %2322 = vmatprep.mubr.f32.mxu0 0.0
      %2323 = vmatmul.mubr.f32.gmra.mrb[0].mxu0 %v2113
      %v2324 = vpop.f32.mrb[0].mxu0
      %v2325 = vadd.f32 %v2034, %v2324
      %v2326 = vpop.f32.mrb[0].mxu0
      %2327 = vmatprep.mubr.f32.mxu0 0.0
      %2328 = vmatmul.mubr.f32.gmra.mrb[0].mxu0 %v2116
      %v2329 = vpop.f32.mrb[0].mxu0
      %v2330 = vadd.f32 %v2034, %v2329
      %v2331 = vpop.f32.mrb[0].mxu0
      %2332 = vmatprep.mubr.f32.mxu0 0.0
      %2333 = vmatmul.mubr.f32.gmra.mrb[0].mxu0 %v2119
      %v2334 = vpop.f32.mrb[0].mxu0
      %v2335 = vadd.f32 %v2034, %v2334
      %v2336 = vpop.f32.mrb[0].mxu0
      %2337 = vmatprep.mubr.f32.mxu0 0.0
      %2338 = vmatmul.mubr.f32.gmra.mrb[0].mxu0 %v2122
      %v2339 = vpop.f32.mrb[0].mxu0
      %v2340 = vadd.f32 %v2034, %v2339
      %v2341 = vpop.f32.mrb[0].mxu0
      %2342 = vmatprep.mubr.f32.mxu0 0.0
      %2343 = vmatmul.mubr.f32.gmra.mrb[0].mxu0 %v2125
      %v2344 = vpop.f32.mrb[0].mxu0
      %v2345 = vadd.f32 %v2034, %v2344
      %v2346 = vpop.f32.mrb[0].mxu0
      %2347 = vmatprep.mubr.f32.mxu0 0.0
      %2348 = vmatmul.mubr.f32.gmra.mrb[0].mxu0 %v2128
      %v2349 = vpop.f32.mrb[0].mxu0
      %v2350 = vadd.f32 %v2034, %v2349
      %v2351 = vpop.f32.mrb[0].mxu0
      %2352 = vmatprep.mubr.f32.mxu0 0.0
      %2353 = vmatmul.mubr.f32.gmra.mrb[0].mxu0 %v2131
      %v2354 = vpop.f32.mrb[0].mxu0
      %v2355 = vadd.f32 %v2034, %v2354
      %v2356 = vpop.f32.mrb[0].mxu0
      %2357 = vdwg.mxu0
      %v2358 = vmax.f32 %v2200, 0.0
      %v2359 = vmax.f32 %v2205, 0.0
      %v2360 = vmax.f32 %v2210, 0.0
      %v2361 = vmax.f32 %v2215, 0.0
      %v2362 = vmax.f32 %v2220, 0.0
      %v2363 = vmax.f32 %v2225, 0.0
      %v2364 = vmax.f32 %v2230, 0.0
      %v2365 = vmax.f32 %v2235, 0.0
      %v2366 = vmax.f32 %v2240, 0.0
      %v2367 = vmax.f32 %v2245, 0.0
      %v2368 = vmax.f32 %v2250, 0.0
      %v2369 = vmax.f32 %v2255, 0.0
      %v2370 = vmax.f32 %v2260, 0.0
      %v2371 = vmax.f32 %v2265, 0.0
      %v2372 = vmax.f32 %v2270, 0.0
      %v2373 = vmax.f32 %v2275, 0.0
      %v2374 = vmax.f32 %v2280, 0.0
      %v2375 = vmax.f32 %v2285, 0.0
      %v2376 = vmax.f32 %v2290, 0.0
      %v2377 = vmax.f32 %v2295, 0.0
      %v2378 = vmax.f32 %v2300, 0.0
      %v2379 = vmax.f32 %v2305, 0.0
      %v2380 = vmax.f32 %v2310, 0.0
      %v2381 = vmax.f32 %v2315, 0.0
      %v2382 = vmax.f32 %v2320, 0.0
      %v2383 = vmax.f32 %v2325, 0.0
      %v2384 = vmax.f32 %v2330, 0.0
      %v2385 = vmax.f32 %v2335, 0.0
      %v2386 = vmax.f32 %v2340, 0.0
      %v2387 = vmax.f32 %v2345, 0.0
      %v2388 = vmax.f32 %v2350, 0.0
      %v2389 = vmax.f32 %v2355, 0.0
      %2422 = vrot.lane.b32.xlu0 %v2358, 8
      %v2423 = vpop.permute.xlu0 %2422
      %2424 = vrot.lane.b32.xlu0 %v2359, 8
      %v2425 = vpop.permute.xlu0 %2424
      %2426 = vrot.lane.b32.xlu0 %v2360, 8
      %v2427 = vpop.permute.xlu0 %2426
      %2428 = vrot.lane.b32.xlu0 %v2361, 8
      %v2429 = vpop.permute.xlu0 %2428
      %2430 = vrot.lane.b32.xlu0 %v2362, 8
      %v2431 = vpop.permute.xlu0 %2430
      %2432 = vrot.lane.b32.xlu0 %v2363, 8
      %v2433 = vpop.permute.xlu0 %2432
      %2434 = vrot.lane.b32.xlu0 %v2364, 8
      %v2435 = vpop.permute.xlu0 %2434
      %2436 = vrot.lane.b32.xlu0 %v2365, 8
      %v2437 = vpop.permute.xlu0 %2436
      %2438 = vrot.lane.b32.xlu0 %v2366, 8
      %v2439 = vpop.permute.xlu0 %2438
      %2440 = vrot.lane.b32.xlu0 %v2367, 8
      %v2441 = vpop.permute.xlu0 %2440
      %2442 = vrot.lane.b32.xlu0 %v2368, 8
      %v2443 = vpop.permute.xlu0 %2442
      %2444 = vrot.lane.b32.xlu0 %v2369, 8
      %v2445 = vpop.permute.xlu0 %2444
      %2446 = vrot.lane.b32.xlu0 %v2370, 8
      %v2447 = vpop.permute.xlu0 %2446
      %2448 = vrot.lane.b32.xlu0 %v2371, 8
      %v2449 = vpop.permute.xlu0 %2448
      %2450 = vrot.lane.b32.xlu0 %v2372, 8
      %v2451 = vpop.permute.xlu0 %2450
      %2452 = vrot.lane.b32.xlu0 %v2373, 8
      %v2453 = vpop.permute.xlu0 %2452
      %2454 = vrot.lane.b32.xlu0 %v2374, 8
      %v2455 = vpop.permute.xlu0 %2454
      %2456 = vrot.lane.b32.xlu0 %v2375, 8
      %v2457 = vpop.permute.xlu0 %2456
      %2458 = vrot.lane.b32.xlu0 %v2376, 8
      %v2459 = vpop.permute.xlu0 %2458
      %2460 = vrot.lane.b32.xlu0 %v2377, 8
      %v2461 = vpop.permute.xlu0 %2460
      %2462 = vrot.lane.b32.xlu0 %v2378, 8
      %v2463 = vpop.permute.xlu0 %2462
      %2464 = vrot.lane.b32.xlu0 %v2379, 8
      %v2465 = vpop.permute.xlu0 %2464
      %2466 = vrot.lane.b32.xlu0 %v2380, 8
      %v2467 = vpop.permute.xlu0 %2466
      %2468 = vrot.lane.b32.xlu0 %v2381, 8
      %v2469 = vpop.permute.xlu0 %2468
      %2470 = vrot.lane.b32.xlu0 %v2382, 8
      %v2471 = vpop.permute.xlu0 %2470
      %2472 = vrot.lane.b32.xlu0 %v2383, 8
      %v2473 = vpop.permute.xlu0 %2472
      %2474 = vrot.lane.b32.xlu0 %v2384, 8
      %v2475 = vpop.permute.xlu0 %2474
      %2476 = vrot.lane.b32.xlu0 %v2385, 8
      %v2477 = vpop.permute.xlu0 %2476
      %2478 = vrot.lane.b32.xlu0 %v2386, 8
      %v2479 = vpop.permute.xlu0 %2478
      %2480 = vrot.lane.b32.xlu0 %v2387, 8
      %v2481 = vpop.permute.xlu0 %2480
      %2482 = vrot.lane.b32.xlu0 %v2388, 8
      %v2483 = vpop.permute.xlu0 %2482
      %2484 = vrot.lane.b32.xlu0 %v2389, 8
      %v2485 = vpop.permute.xlu0 %2484
      %vm2518 = vcmask 130112
      %2519 = vst.msk [vmem:[%s411 + $0x1] sm:$0xff] %vm2518, %v2423
      %2520 = vst.msk [vmem:[%s411 + $0x9] sm:$0xff] %vm2518, %v2425
      %2521 = vst.msk [vmem:[%s411 + $0x19] sm:$0xff] %vm2518, %v2427
      %2522 = vst.msk [vmem:[%s411 + $0x21] sm:$0xff] %vm2518, %v2429
      %2523 = vst.msk [vmem:[%s411 + $0x31] sm:$0xff] %vm2518, %v2431
      %2524 = vst.msk [vmem:[%s411 + $0x39] sm:$0xff] %vm2518, %v2433
      %2525 = vst.msk [vmem:[%s411 + $0x49] sm:$0xff] %vm2518, %v2435
      %2526 = vst.msk [vmem:[%s411 + $0x51] sm:$0xff] %vm2518, %v2437
      %2527 = vst.msk [vmem:[%s411 + $0x61] sm:$0xff] %vm2518, %v2439
      %2528 = vst.msk [vmem:[%s411 + $0x69] sm:$0xff] %vm2518, %v2441
      %2529 = vst.msk [vmem:[%s411 + $0x79] sm:$0xff] %vm2518, %v2443
      %2530 = vst.msk [vmem:[%s411 + $0x81] sm:$0xff] %vm2518, %v2445
      %2531 = vst.msk [vmem:[%s411 + $0x91] sm:$0xff] %vm2518, %v2447
      %2532 = vst.msk [vmem:[%s411 + $0x99] sm:$0xff] %vm2518, %v2449
      %2533 = vst.msk [vmem:[%s411 + $0xa9] sm:$0xff] %vm2518, %v2451
      %2534 = vst.msk [vmem:[%s411 + $0xb1] sm:$0xff] %vm2518, %v2453
      %2535 = vst.msk [vmem:[%s411 + $0xc1] sm:$0xff] %vm2518, %v2455
      %2536 = vst.msk [vmem:[%s411 + $0xc9] sm:$0xff] %vm2518, %v2457
      %2537 = vst.msk [vmem:[%s411 + $0xd9] sm:$0xff] %vm2518, %v2459
      %2538 = vst.msk [vmem:[%s411 + $0xe1] sm:$0xff] %vm2518, %v2461
      %2539 = vst.msk [vmem:[%s411 + $0xf1] sm:$0xff] %vm2518, %v2463
      %2540 = vst.msk [vmem:[%s411 + $0xf9] sm:$0xff] %vm2518, %v2465
      %2541 = vst.msk [vmem:[%s411 + $0x109] sm:$0xff] %vm2518, %v2467
      %2542 = vst.msk [vmem:[%s411 + $0x111] sm:$0xff] %vm2518, %v2469
      %2543 = vst.msk [vmem:[%s411 + $0x121] sm:$0xff] %vm2518, %v2471
      %2544 = vst.msk [vmem:[%s411 + $0x129] sm:$0xff] %vm2518, %v2473
      %2545 = vst.msk [vmem:[%s411 + $0x139] sm:$0xff] %vm2518, %v2475
      %2546 = vst.msk [vmem:[%s411 + $0x141] sm:$0xff] %vm2518, %v2477
      %2547 = vst.msk [vmem:[%s411 + $0x151] sm:$0xff] %vm2518, %v2479
      %2548 = vst.msk [vmem:[%s411 + $0x159] sm:$0xff] %vm2518, %v2481
      %2549 = vst.msk [vmem:[%s411 + $0x169] sm:$0xff] %vm2518, %v2483
      %2550 = vst.msk [vmem:[%s411 + $0x171] sm:$0xff] %vm2518, %v2485
      %v2551 = vld [vmem:[#allocation2] sm:$0xff]
      %v2552 = vld [vmem:[#allocation2 + $0x8] sm:$0xff]
      %v2553 = vld [vmem:[#allocation2 + $0x18] sm:$0xff]
      %v2554 = vld [vmem:[#allocation2 + $0x20] sm:$0xff]
      %v2555 = vld [vmem:[#allocation2 + $0x30] sm:$0xff]
      %v2556 = vld [vmem:[#allocation2 + $0x38] sm:$0xff]
      %v2557 = vld [vmem:[#allocation2 + $0x48] sm:$0xff]
      %v2558 = vld [vmem:[#allocation2 + $0x50] sm:$0xff]
      %v2559 = vld [vmem:[#allocation2 + $0x60] sm:$0xff]
      %v2560 = vld [vmem:[#allocation2 + $0x68] sm:$0xff]
      %v2561 = vld [vmem:[#allocation2 + $0x78] sm:$0xff]
      %v2562 = vld [vmem:[#allocation2 + $0x80] sm:$0xff]
      %v2563 = vld [vmem:[#allocation2 + $0x90] sm:$0xff]
      %v2564 = vld [vmem:[#allocation2 + $0x98] sm:$0xff]
      %v2565 = vld [vmem:[#allocation2 + $0xa8] sm:$0xff]
      %v2566 = vld [vmem:[#allocation2 + $0xb0] sm:$0xff]
      %v2567 = vld [vmem:[#allocation2 + $0xc0] sm:$0xff]
      %v2568 = vld [vmem:[#allocation2 + $0xc8] sm:$0xff]
      %v2569 = vld [vmem:[#allocation2 + $0xd8] sm:$0xff]
      %v2570 = vld [vmem:[#allocation2 + $0xe0] sm:$0xff]
      %v2571 = vld [vmem:[#allocation2 + $0xf0] sm:$0xff]
      %v2572 = vld [vmem:[#allocation2 + $0xf8] sm:$0xff]
      %v2573 = vld [vmem:[#allocation2 + $0x108] sm:$0xff]
      %v2574 = vld [vmem:[#allocation2 + $0x110] sm:$0xff]
      %v2575 = vld [vmem:[#allocation2 + $0x120] sm:$0xff]
      %v2576 = vld [vmem:[#allocation2 + $0x128] sm:$0xff]
      %v2577 = vld [vmem:[#allocation2 + $0x138] sm:$0xff]
      %v2578 = vld [vmem:[#allocation2 + $0x140] sm:$0xff]
      %v2579 = vld [vmem:[#allocation2 + $0x150] sm:$0xff]
      %v2580 = vld [vmem:[#allocation2 + $0x158] sm:$0xff]
      %v2581 = vld [vmem:[#allocation2 + $0x168] sm:$0xff]
      %v2582 = vld [vmem:[#allocation2 + $0x170] sm:$0xff]
      %v2583 = vld [vmem:[#allocation2 + $0x1] sm:$0xff]
      %v2584 = vld [vmem:[#allocation2 + $0x9] sm:$0xff]
      %v2585 = vld [vmem:[#allocation2 + $0x19] sm:$0xff]
      %v2586 = vld [vmem:[#allocation2 + $0x21] sm:$0xff]
      %v2587 = vld [vmem:[#allocation2 + $0x31] sm:$0xff]
      %v2588 = vld [vmem:[#allocation2 + $0x39] sm:$0xff]
      %v2589 = vld [vmem:[#allocation2 + $0x49] sm:$0xff]
      %v2590 = vld [vmem:[#allocation2 + $0x51] sm:$0xff]
      %v2591 = vld [vmem:[#allocation2 + $0x61] sm:$0xff]
      %v2592 = vld [vmem:[#allocation2 + $0x69] sm:$0xff]
      %v2593 = vld [vmem:[#allocation2 + $0x79] sm:$0xff]
      %v2594 = vld [vmem:[#allocation2 + $0x81] sm:$0xff]
      %v2595 = vld [vmem:[#allocation2 + $0x91] sm:$0xff]
      %v2596 = vld [vmem:[#allocation2 + $0x99] sm:$0xff]
      %v2597 = vld [vmem:[#allocation2 + $0xa9] sm:$0xff]
      %v2598 = vld [vmem:[#allocation2 + $0xb1] sm:$0xff]
      %v2599 = vld [vmem:[#allocation2 + $0xc1] sm:$0xff]
      %v2600 = vld [vmem:[#allocation2 + $0xc9] sm:$0xff]
      %v2601 = vld [vmem:[#allocation2 + $0xd9] sm:$0xff]
      %v2602 = vld [vmem:[#allocation2 + $0xe1] sm:$0xff]
      %v2603 = vld [vmem:[#allocation2 + $0xf1] sm:$0xff]
      %v2604 = vld [vmem:[#allocation2 + $0xf9] sm:$0xff]
      %v2605 = vld [vmem:[#allocation2 + $0x109] sm:$0xff]
      %v2606 = vld [vmem:[#allocation2 + $0x111] sm:$0xff]
      %v2607 = vld [vmem:[#allocation2 + $0x121] sm:$0xff]
      %v2608 = vld [vmem:[#allocation2 + $0x129] sm:$0xff]
      %v2609 = vld [vmem:[#allocation2 + $0x139] sm:$0xff]
      %v2610 = vld [vmem:[#allocation2 + $0x141] sm:$0xff]
      %v2611 = vld [vmem:[#allocation2 + $0x151] sm:$0xff]
      %v2612 = vld [vmem:[#allocation2 + $0x159] sm:$0xff]
      %v2613 = vld [vmem:[#allocation2 + $0x169] sm:$0xff]
      %v2614 = vld [vmem:[#allocation2 + $0x171] sm:$0xff]
      %v2615 = vld [vmem:[#allocation2 + $0x2] sm:$0xff]
      %v2616 = vld [vmem:[#allocation2 + $0xa] sm:$0xff]
      %v2617 = vld [vmem:[#allocation2 + $0x1a] sm:$0xff]
      %v2618 = vld [vmem:[#allocation2 + $0x22] sm:$0xff]
      %v2619 = vld [vmem:[#allocation2 + $0x32] sm:$0xff]
      %v2620 = vld [vmem:[#allocation2 + $0x3a] sm:$0xff]
      %v2621 = vld [vmem:[#allocation2 + $0x4a] sm:$0xff]
      %v2622 = vld [vmem:[#allocation2 + $0x52] sm:$0xff]
      %v2623 = vld [vmem:[#allocation2 + $0x62] sm:$0xff]
      %v2624 = vld [vmem:[#allocation2 + $0x6a] sm:$0xff]
      %v2625 = vld [vmem:[#allocation2 + $0x7a] sm:$0xff]
      %v2626 = vld [vmem:[#allocation2 + $0x82] sm:$0xff]
      %v2627 = vld [vmem:[#allocation2 + $0x92] sm:$0xff]
      %v2628 = vld [vmem:[#allocation2 + $0x9a] sm:$0xff]
      %v2629 = vld [vmem:[#allocation2 + $0xaa] sm:$0xff]
      %v2630 = vld [vmem:[#allocation2 + $0xb2] sm:$0xff]
      %v2631 = vld [vmem:[#allocation2 + $0xc2] sm:$0xff]
      %v2632 = vld [vmem:[#allocation2 + $0xca] sm:$0xff]
      %v2633 = vld [vmem:[#allocation2 + $0xda] sm:$0xff]
      %v2634 = vld [vmem:[#allocation2 + $0xe2] sm:$0xff]
      %v2635 = vld [vmem:[#allocation2 + $0xf2] sm:$0xff]
      %v2636 = vld [vmem:[#allocation2 + $0xfa] sm:$0xff]
      %v2637 = vld [vmem:[#allocation2 + $0x10a] sm:$0xff]
      %v2638 = vld [vmem:[#allocation2 + $0x112] sm:$0xff]
      %v2639 = vld [vmem:[#allocation2 + $0x122] sm:$0xff]
      %v2640 = vld [vmem:[#allocation2 + $0x12a] sm:$0xff]
      %v2641 = vld [vmem:[#allocation2 + $0x13a] sm:$0xff]
      %v2642 = vld [vmem:[#allocation2 + $0x142] sm:$0xff]
      %v2643 = vld [vmem:[#allocation2 + $0x152] sm:$0xff]
      %v2644 = vld [vmem:[#allocation2 + $0x15a] sm:$0xff]
      %v2645 = vld [vmem:[#allocation2 + $0x16a] sm:$0xff]
      %v2646 = vld [vmem:[#allocation2 + $0x172] sm:$0xff]
      %v2647 = vld [vmem:[%s411] sm:$0xff]
      %v2648 = vld [vmem:[%s411 + $0x8] sm:$0xff]
      %v2649 = vld [vmem:[%s411 + $0x18] sm:$0xff]
      %v2650 = vld [vmem:[%s411 + $0x20] sm:$0xff]
      %v2651 = vld [vmem:[%s411 + $0x30] sm:$0xff]
      %v2652 = vld [vmem:[%s411 + $0x38] sm:$0xff]
      %v2653 = vld [vmem:[%s411 + $0x48] sm:$0xff]
      %v2654 = vld [vmem:[%s411 + $0x50] sm:$0xff]
      %v2655 = vld [vmem:[%s411 + $0x60] sm:$0xff]
      %v2656 = vld [vmem:[%s411 + $0x68] sm:$0xff]
      %v2657 = vld [vmem:[%s411 + $0x78] sm:$0xff]
      %v2658 = vld [vmem:[%s411 + $0x80] sm:$0xff]
      %v2659 = vld [vmem:[%s411 + $0x90] sm:$0xff]
      %v2660 = vld [vmem:[%s411 + $0x98] sm:$0xff]
      %v2661 = vld [vmem:[%s411 + $0xa8] sm:$0xff]
      %v2662 = vld [vmem:[%s411 + $0xb0] sm:$0xff]
      %v2663 = vld [vmem:[%s411 + $0xc0] sm:$0xff]
      %v2664 = vld [vmem:[%s411 + $0xc8] sm:$0xff]
      %v2665 = vld [vmem:[%s411 + $0xd8] sm:$0xff]
      %v2666 = vld [vmem:[%s411 + $0xe0] sm:$0xff]
      %v2667 = vld [vmem:[%s411 + $0xf0] sm:$0xff]
      %v2668 = vld [vmem:[%s411 + $0xf8] sm:$0xff]
      %v2669 = vld [vmem:[%s411 + $0x108] sm:$0xff]
      %v2670 = vld [vmem:[%s411 + $0x110] sm:$0xff]
      %v2671 = vld [vmem:[%s411 + $0x120] sm:$0xff]
      %v2672 = vld [vmem:[%s411 + $0x128] sm:$0xff]
      %v2673 = vld [vmem:[%s411 + $0x138] sm:$0xff]
      %v2674 = vld [vmem:[%s411 + $0x140] sm:$0xff]
      %v2675 = vld [vmem:[%s411 + $0x150] sm:$0xff]
      %v2676 = vld [vmem:[%s411 + $0x158] sm:$0xff]
      %v2677 = vld [vmem:[%s411 + $0x168] sm:$0xff]
      %v2678 = vld [vmem:[%s411 + $0x170] sm:$0xff]
      %v2679 = vld [vmem:[%s411 + $0x1] sm:$0xff]
      %v2680 = vld [vmem:[%s411 + $0x9] sm:$0xff]
      %v2681 = vld [vmem:[%s411 + $0x19] sm:$0xff]
      %v2682 = vld [vmem:[%s411 + $0x21] sm:$0xff]
      %v2683 = vld [vmem:[%s411 + $0x31] sm:$0xff]
      %v2684 = vld [vmem:[%s411 + $0x39] sm:$0xff]
      %v2685 = vld [vmem:[%s411 + $0x49] sm:$0xff]
      %v2686 = vld [vmem:[%s411 + $0x51] sm:$0xff]
      %v2687 = vld [vmem:[%s411 + $0x61] sm:$0xff]
      %v2688 = vld [vmem:[%s411 + $0x69] sm:$0xff]
      %v2689 = vld [vmem:[%s411 + $0x79] sm:$0xff]
      %v2690 = vld [vmem:[%s411 + $0x81] sm:$0xff]
      %v2691 = vld [vmem:[%s411 + $0x91] sm:$0xff]
      %v2692 = vld [vmem:[%s411 + $0x99] sm:$0xff]
      %v2693 = vld [vmem:[%s411 + $0xa9] sm:$0xff]
      %v2694 = vld [vmem:[%s411 + $0xb1] sm:$0xff]
      %v2695 = vld [vmem:[%s411 + $0xc1] sm:$0xff]
      %v2696 = vld [vmem:[%s411 + $0xc9] sm:$0xff]
      %v2697 = vld [vmem:[%s411 + $0xd9] sm:$0xff]
      %v2698 = vld [vmem:[%s411 + $0xe1] sm:$0xff]
      %v2699 = vld [vmem:[%s411 + $0xf1] sm:$0xff]
      %v2700 = vld [vmem:[%s411 + $0xf9] sm:$0xff]
      %v2701 = vld [vmem:[%s411 + $0x109] sm:$0xff]
      %v2702 = vld [vmem:[%s411 + $0x111] sm:$0xff]
      %v2703 = vld [vmem:[%s411 + $0x121] sm:$0xff]
      %v2704 = vld [vmem:[%s411 + $0x129] sm:$0xff]
      %v2705 = vld [vmem:[%s411 + $0x139] sm:$0xff]
      %v2706 = vld [vmem:[%s411 + $0x141] sm:$0xff]
      %v2707 = vld [vmem:[%s411 + $0x151] sm:$0xff]
      %v2708 = vld [vmem:[%s411 + $0x159] sm:$0xff]
      %v2709 = vld [vmem:[%s411 + $0x169] sm:$0xff]
      %v2710 = vld [vmem:[%s411 + $0x171] sm:$0xff]
      %v2711 = vld [vmem:[%s411 + $0x2] sm:$0xff]
      %v2712 = vld [vmem:[%s411 + $0xa] sm:$0xff]
      %v2713 = vld [vmem:[%s411 + $0x1a] sm:$0xff]
      %v2714 = vld [vmem:[%s411 + $0x22] sm:$0xff]
      %v2715 = vld [vmem:[%s411 + $0x32] sm:$0xff]
      %v2716 = vld [vmem:[%s411 + $0x3a] sm:$0xff]
      %v2717 = vld [vmem:[%s411 + $0x4a] sm:$0xff]
      %v2718 = vld [vmem:[%s411 + $0x52] sm:$0xff]
      %v2719 = vld [vmem:[%s411 + $0x62] sm:$0xff]
      %v2720 = vld [vmem:[%s411 + $0x6a] sm:$0xff]
      %v2721 = vld [vmem:[%s411 + $0x7a] sm:$0xff]
      %v2722 = vld [vmem:[%s411 + $0x82] sm:$0xff]
      %v2723 = vld [vmem:[%s411 + $0x92] sm:$0xff]
      %v2724 = vld [vmem:[%s411 + $0x9a] sm:$0xff]
      %v2725 = vld [vmem:[%s411 + $0xaa] sm:$0xff]
      %v2726 = vld [vmem:[%s411 + $0xb2] sm:$0xff]
      %v2727 = vld [vmem:[%s411 + $0xc2] sm:$0xff]
      %v2728 = vld [vmem:[%s411 + $0xca] sm:$0xff]
      %v2729 = vld [vmem:[%s411 + $0xda] sm:$0xff]
      %v2730 = vld [vmem:[%s411 + $0xe2] sm:$0xff]
      %v2731 = vld [vmem:[%s411 + $0xf2] sm:$0xff]
      %v2732 = vld [vmem:[%s411 + $0xfa] sm:$0xff]
      %v2733 = vld [vmem:[%s411 + $0x10a] sm:$0xff]
      %v2734 = vld [vmem:[%s411 + $0x112] sm:$0xff]
      %v2735 = vld [vmem:[%s411 + $0x122] sm:$0xff]
      %v2736 = vld [vmem:[%s411 + $0x12a] sm:$0xff]
      %v2737 = vld [vmem:[%s411 + $0x13a] sm:$0xff]
      %v2738 = vld [vmem:[%s411 + $0x142] sm:$0xff]
      %v2739 = vld [vmem:[%s411 + $0x152] sm:$0xff]
      %v2740 = vld [vmem:[%s411 + $0x15a] sm:$0xff]
      %v2741 = vld [vmem:[%s411 + $0x16a] sm:$0xff]
      %v2742 = vld [vmem:[%s411 + $0x172] sm:$0xff]
      %v2743 = vld [vmem:[%s637] sm:$0xff]
      %v2744 = vld [vmem:[%s637 + $0x8] sm:$0xff]
      %v2745 = vld [vmem:[%s637 + $0x18] sm:$0xff]
      %v2746 = vld [vmem:[%s637 + $0x20] sm:$0xff]
      %v2747 = vld [vmem:[%s637 + $0x30] sm:$0xff]
      %v2748 = vld [vmem:[%s637 + $0x38] sm:$0xff]
      %v2749 = vld [vmem:[%s637 + $0x48] sm:$0xff]
      %v2750 = vld [vmem:[%s637 + $0x50] sm:$0xff]
      %v2751 = vld [vmem:[%s637 + $0x60] sm:$0xff]
      %v2752 = vld [vmem:[%s637 + $0x68] sm:$0xff]
      %v2753 = vld [vmem:[%s637 + $0x78] sm:$0xff]
      %v2754 = vld [vmem:[%s637 + $0x80] sm:$0xff]
      %v2755 = vld [vmem:[%s637 + $0x90] sm:$0xff]
      %v2756 = vld [vmem:[%s637 + $0x98] sm:$0xff]
      %v2757 = vld [vmem:[%s637 + $0xa8] sm:$0xff]
      %v2758 = vld [vmem:[%s637 + $0xb0] sm:$0xff]
      %v2759 = vld [vmem:[%s637 + $0xc0] sm:$0xff]
      %v2760 = vld [vmem:[%s637 + $0xc8] sm:$0xff]
      %v2761 = vld [vmem:[%s637 + $0xd8] sm:$0xff]
      %v2762 = vld [vmem:[%s637 + $0xe0] sm:$0xff]
      %v2763 = vld [vmem:[%s637 + $0xf0] sm:$0xff]
      %v2764 = vld [vmem:[%s637 + $0xf8] sm:$0xff]
      %v2765 = vld [vmem:[%s637 + $0x108] sm:$0xff]
      %v2766 = vld [vmem:[%s637 + $0x110] sm:$0xff]
      %v2767 = vld [vmem:[%s637 + $0x120] sm:$0xff]
      %v2768 = vld [vmem:[%s637 + $0x128] sm:$0xff]
      %v2769 = vld [vmem:[%s637 + $0x138] sm:$0xff]
      %v2770 = vld [vmem:[%s637 + $0x140] sm:$0xff]
      %v2771 = vld [vmem:[%s637 + $0x150] sm:$0xff]
      %v2772 = vld [vmem:[%s637 + $0x158] sm:$0xff]
      %v2773 = vld [vmem:[%s637 + $0x168] sm:$0xff]
      %v2774 = vld [vmem:[%s637 + $0x170] sm:$0xff]
      %v2775 = vld [vmem:[%s637 + $0x1] sm:$0xff]
      %v2776 = vld [vmem:[%s637 + $0x9] sm:$0xff]
      %v2777 = vld [vmem:[%s637 + $0x19] sm:$0xff]
      %v2778 = vld [vmem:[%s637 + $0x21] sm:$0xff]
      %v2779 = vld [vmem:[%s637 + $0x31] sm:$0xff]
      %v2780 = vld [vmem:[%s637 + $0x39] sm:$0xff]
      %v2781 = vld [vmem:[%s637 + $0x49] sm:$0xff]
      %v2782 = vld [vmem:[%s637 + $0x51] sm:$0xff]
      %v2783 = vld [vmem:[%s637 + $0x61] sm:$0xff]
      %v2784 = vld [vmem:[%s637 + $0x69] sm:$0xff]
      %v2785 = vld [vmem:[%s637 + $0x79] sm:$0xff]
      %v2786 = vld [vmem:[%s637 + $0x81] sm:$0xff]
      %v2787 = vld [vmem:[%s637 + $0x91] sm:$0xff]
      %v2788 = vld [vmem:[%s637 + $0x99] sm:$0xff]
      %v2789 = vld [vmem:[%s637 + $0xa9] sm:$0xff]
      %v2790 = vld [vmem:[%s637 + $0xb1] sm:$0xff]
      %v2791 = vld [vmem:[%s637 + $0xc1] sm:$0xff]
      %v2792 = vld [vmem:[%s637 + $0xc9] sm:$0xff]
      %v2793 = vld [vmem:[%s637 + $0xd9] sm:$0xff]
      %v2794 = vld [vmem:[%s637 + $0xe1] sm:$0xff]
      %v2795 = vld [vmem:[%s637 + $0xf1] sm:$0xff]
      %v2796 = vld [vmem:[%s637 + $0xf9] sm:$0xff]
      %v2797 = vld [vmem:[%s637 + $0x109] sm:$0xff]
      %v2798 = vld [vmem:[%s637 + $0x111] sm:$0xff]
      %v2799 = vld [vmem:[%s637 + $0x121] sm:$0xff]
      %v2800 = vld [vmem:[%s637 + $0x129] sm:$0xff]
      %v2801 = vld [vmem:[%s637 + $0x139] sm:$0xff]
      %v2802 = vld [vmem:[%s637 + $0x141] sm:$0xff]
      %v2803 = vld [vmem:[%s637 + $0x151] sm:$0xff]
      %v2804 = vld [vmem:[%s637 + $0x159] sm:$0xff]
      %v2805 = vld [vmem:[%s637 + $0x169] sm:$0xff]
      %v2806 = vld [vmem:[%s637 + $0x171] sm:$0xff]
      %v2807 = vld [vmem:[%s637 + $0x2] sm:$0xff]
      %v2808 = vld [vmem:[%s637 + $0xa] sm:$0xff]
      %v2809 = vld [vmem:[%s637 + $0x1a] sm:$0xff]
      %v2810 = vld [vmem:[%s637 + $0x22] sm:$0xff]
      %v2811 = vld [vmem:[%s637 + $0x32] sm:$0xff]
      %v2812 = vld [vmem:[%s637 + $0x3a] sm:$0xff]
      %v2813 = vld [vmem:[%s637 + $0x4a] sm:$0xff]
      %v2814 = vld [vmem:[%s637 + $0x52] sm:$0xff]
      %v2815 = vld [vmem:[%s637 + $0x62] sm:$0xff]
      %v2816 = vld [vmem:[%s637 + $0x6a] sm:$0xff]
      %v2817 = vld [vmem:[%s637 + $0x7a] sm:$0xff]
      %v2818 = vld [vmem:[%s637 + $0x82] sm:$0xff]
      %v2819 = vld [vmem:[%s637 + $0x92] sm:$0xff]
      %v2820 = vld [vmem:[%s637 + $0x9a] sm:$0xff]
      %v2821 = vld [vmem:[%s637 + $0xaa] sm:$0xff]
      %v2822 = vld [vmem:[%s637 + $0xb2] sm:$0xff]
      %v2823 = vld [vmem:[%s637 + $0xc2] sm:$0xff]
      %v2824 = vld [vmem:[%s637 + $0xca] sm:$0xff]
      %v2825 = vld [vmem:[%s637 + $0xda] sm:$0xff]
      %v2826 = vld [vmem:[%s637 + $0xe2] sm:$0xff]
      %v2827 = vld [vmem:[%s637 + $0xf2] sm:$0xff]
      %v2828 = vld [vmem:[%s637 + $0xfa] sm:$0xff]
      %v2829 = vld [vmem:[%s637 + $0x10a] sm:$0xff]
      %v2830 = vld [vmem:[%s637 + $0x112] sm:$0xff]
      %v2831 = vld [vmem:[%s637 + $0x122] sm:$0xff]
      %v2832 = vld [vmem:[%s637 + $0x12a] sm:$0xff]
      %v2833 = vld [vmem:[%s637 + $0x13a] sm:$0xff]
      %v2834 = vld [vmem:[%s637 + $0x142] sm:$0xff]
      %v2835 = vld [vmem:[%s637 + $0x152] sm:$0xff]
      %v2836 = vld [vmem:[%s637 + $0x15a] sm:$0xff]
      %v2837 = vld [vmem:[%s637 + $0x16a] sm:$0xff]
      %v2838 = vld [vmem:[%s637 + $0x172] sm:$0xff]
      %2871 = vrot.lane.b32.xlu0 %v2583, 16
      %v2872 = vpop.permute.xlu0 %2871
      %2873 = vrot.lane.b32.xlu0 %v2584, 16
      %v2874 = vpop.permute.xlu0 %2873
      %2875 = vrot.lane.b32.xlu0 %v2585, 16
      %v2876 = vpop.permute.xlu0 %2875
      %2877 = vrot.lane.b32.xlu0 %v2586, 16
      %v2878 = vpop.permute.xlu0 %2877
      %2879 = vrot.lane.b32.xlu0 %v2587, 16
      %v2880 = vpop.permute.xlu0 %2879
      %2881 = vrot.lane.b32.xlu0 %v2588, 16
      %v2882 = vpop.permute.xlu0 %2881
      %2883 = vrot.lane.b32.xlu0 %v2589, 16
      %v2884 = vpop.permute.xlu0 %2883
      %2885 = vrot.lane.b32.xlu0 %v2590, 16
      %v2886 = vpop.permute.xlu0 %2885
      %2887 = vrot.lane.b32.xlu0 %v2591, 16
      %v2888 = vpop.permute.xlu0 %2887
      %2889 = vrot.lane.b32.xlu0 %v2592, 16
      %v2890 = vpop.permute.xlu0 %2889
      %2891 = vrot.lane.b32.xlu0 %v2593, 16
      %v2892 = vpop.permute.xlu0 %2891
      %2893 = vrot.lane.b32.xlu0 %v2594, 16
      %v2894 = vpop.permute.xlu0 %2893
      %2895 = vrot.lane.b32.xlu0 %v2595, 16
      %v2896 = vpop.permute.xlu0 %2895
      %2897 = vrot.lane.b32.xlu0 %v2596, 16
      %v2898 = vpop.permute.xlu0 %2897
      %2899 = vrot.lane.b32.xlu0 %v2597, 16
      %v2900 = vpop.permute.xlu0 %2899
      %2901 = vrot.lane.b32.xlu0 %v2598, 16
      %v2902 = vpop.permute.xlu0 %2901
      %2903 = vrot.lane.b32.xlu0 %v2599, 16
      %v2904 = vpop.permute.xlu0 %2903
      %2905 = vrot.lane.b32.xlu0 %v2600, 16
      %v2906 = vpop.permute.xlu0 %2905
      %2907 = vrot.lane.b32.xlu0 %v2601, 16
      %v2908 = vpop.permute.xlu0 %2907
      %2909 = vrot.lane.b32.xlu0 %v2602, 16
      %v2910 = vpop.permute.xlu0 %2909
      %2911 = vrot.lane.b32.xlu0 %v2603, 16
      %v2912 = vpop.permute.xlu0 %2911
      %2913 = vrot.lane.b32.xlu0 %v2604, 16
      %v2914 = vpop.permute.xlu0 %2913
      %2915 = vrot.lane.b32.xlu0 %v2605, 16
      %v2916 = vpop.permute.xlu0 %2915
      %2917 = vrot.lane.b32.xlu0 %v2606, 16
      %v2918 = vpop.permute.xlu0 %2917
      %2919 = vrot.lane.b32.xlu0 %v2607, 16
      %v2920 = vpop.permute.xlu0 %2919
      %2921 = vrot.lane.b32.xlu0 %v2608, 16
      %v2922 = vpop.permute.xlu0 %2921
      %2923 = vrot.lane.b32.xlu0 %v2609, 16
      %v2924 = vpop.permute.xlu0 %2923
      %2925 = vrot.lane.b32.xlu0 %v2610, 16
      %v2926 = vpop.permute.xlu0 %2925
      %2927 = vrot.lane.b32.xlu0 %v2611, 16
      %v2928 = vpop.permute.xlu0 %2927
      %2929 = vrot.lane.b32.xlu0 %v2612, 16
      %v2930 = vpop.permute.xlu0 %2929
      %2931 = vrot.lane.b32.xlu0 %v2613, 16
      %v2932 = vpop.permute.xlu0 %2931
      %2933 = vrot.lane.b32.xlu0 %v2614, 16
      %v2934 = vpop.permute.xlu0 %2933
      %2999 = vrot.lane.b32.xlu0 %v2615, 32
      %v3000 = vpop.permute.xlu0 %2999
      %3001 = vrot.lane.b32.xlu0 %v2616, 32
      %v3002 = vpop.permute.xlu0 %3001
      %3003 = vrot.lane.b32.xlu0 %v2617, 32
      %v3004 = vpop.permute.xlu0 %3003
      %3005 = vrot.lane.b32.xlu0 %v2618, 32
      %v3006 = vpop.permute.xlu0 %3005
      %3007 = vrot.lane.b32.xlu0 %v2619, 32
      %v3008 = vpop.permute.xlu0 %3007
      %3009 = vrot.lane.b32.xlu0 %v2620, 32
      %v3010 = vpop.permute.xlu0 %3009
      %3011 = vrot.lane.b32.xlu0 %v2621, 32
      %v3012 = vpop.permute.xlu0 %3011
      %3013 = vrot.lane.b32.xlu0 %v2622, 32
      %v3014 = vpop.permute.xlu0 %3013
      %3015 = vrot.lane.b32.xlu0 %v2623, 32
      %v3016 = vpop.permute.xlu0 %3015
      %3017 = vrot.lane.b32.xlu0 %v2624, 32
      %v3018 = vpop.permute.xlu0 %3017
      %3019 = vrot.lane.b32.xlu0 %v2625, 32
      %v3020 = vpop.permute.xlu0 %3019
      %3021 = vrot.lane.b32.xlu0 %v2626, 32
      %v3022 = vpop.permute.xlu0 %3021
      %3023 = vrot.lane.b32.xlu0 %v2627, 32
      %v3024 = vpop.permute.xlu0 %3023
      %3025 = vrot.lane.b32.xlu0 %v2628, 32
      %v3026 = vpop.permute.xlu0 %3025
      %3027 = vrot.lane.b32.xlu0 %v2629, 32
      %v3028 = vpop.permute.xlu0 %3027
      %3029 = vrot.lane.b32.xlu0 %v2630, 32
      %v3030 = vpop.permute.xlu0 %3029
      %3031 = vrot.lane.b32.xlu0 %v2631, 32
      %v3032 = vpop.permute.xlu0 %3031
      %3033 = vrot.lane.b32.xlu0 %v2632, 32
      %v3034 = vpop.permute.xlu0 %3033
      %3035 = vrot.lane.b32.xlu0 %v2633, 32
      %v3036 = vpop.permute.xlu0 %3035
      %3037 = vrot.lane.b32.xlu0 %v2634, 32
      %v3038 = vpop.permute.xlu0 %3037
      %3039 = vrot.lane.b32.xlu0 %v2635, 32
      %v3040 = vpop.permute.xlu0 %3039
      %3041 = vrot.lane.b32.xlu0 %v2636, 32
      %v3042 = vpop.permute.xlu0 %3041
      %3043 = vrot.lane.b32.xlu0 %v2637, 32
      %v3044 = vpop.permute.xlu0 %3043
      %3045 = vrot.lane.b32.xlu0 %v2638, 32
      %v3046 = vpop.permute.xlu0 %3045
      %3047 = vrot.lane.b32.xlu0 %v2639, 32
      %v3048 = vpop.permute.xlu0 %3047
      %3049 = vrot.lane.b32.xlu0 %v2640, 32
      %v3050 = vpop.permute.xlu0 %3049
      %3051 = vrot.lane.b32.xlu0 %v2641, 32
      %v3052 = vpop.permute.xlu0 %3051
      %3053 = vrot.lane.b32.xlu0 %v2642, 32
      %v3054 = vpop.permute.xlu0 %3053
      %3055 = vrot.lane.b32.xlu0 %v2643, 32
      %v3056 = vpop.permute.xlu0 %3055
      %3057 = vrot.lane.b32.xlu0 %v2644, 32
      %v3058 = vpop.permute.xlu0 %3057
      %3059 = vrot.lane.b32.xlu0 %v2645, 32
      %v3060 = vpop.permute.xlu0 %3059
      %3061 = vrot.lane.b32.xlu0 %v2646, 32
      %v3062 = vpop.permute.xlu0 %3061
      %3127 = vrot.lane.b32.xlu0 %v2647, 48
      %v3128 = vpop.permute.xlu0 %3127
      %3129 = vrot.lane.b32.xlu0 %v2648, 48
      %v3130 = vpop.permute.xlu0 %3129
      %3131 = vrot.lane.b32.xlu0 %v2649, 48
      %v3132 = vpop.permute.xlu0 %3131
      %3133 = vrot.lane.b32.xlu0 %v2650, 48
      %v3134 = vpop.permute.xlu0 %3133
      %3135 = vrot.lane.b32.xlu0 %v2651, 48
      %v3136 = vpop.permute.xlu0 %3135
      %3137 = vrot.lane.b32.xlu0 %v2652, 48
      %v3138 = vpop.permute.xlu0 %3137
      %3139 = vrot.lane.b32.xlu0 %v2653, 48
      %v3140 = vpop.permute.xlu0 %3139
      %3141 = vrot.lane.b32.xlu0 %v2654, 48
      %v3142 = vpop.permute.xlu0 %3141
      %3143 = vrot.lane.b32.xlu0 %v2655, 48
      %v3144 = vpop.permute.xlu0 %3143
      %3145 = vrot.lane.b32.xlu0 %v2656, 48
      %v3146 = vpop.permute.xlu0 %3145
      %3147 = vrot.lane.b32.xlu0 %v2657, 48
      %v3148 = vpop.permute.xlu0 %3147
      %3149 = vrot.lane.b32.xlu0 %v2658, 48
      %v3150 = vpop.permute.xlu0 %3149
      %3151 = vrot.lane.b32.xlu0 %v2659, 48
      %v3152 = vpop.permute.xlu0 %3151
      %3153 = vrot.lane.b32.xlu0 %v2660, 48
      %v3154 = vpop.permute.xlu0 %3153
      %3155 = vrot.lane.b32.xlu0 %v2661, 48
      %v3156 = vpop.permute.xlu0 %3155
      %3157 = vrot.lane.b32.xlu0 %v2662, 48
      %v3158 = vpop.permute.xlu0 %3157
      %3159 = vrot.lane.b32.xlu0 %v2663, 48
      %v3160 = vpop.permute.xlu0 %3159
      %3161 = vrot.lane.b32.xlu0 %v2664, 48
      %v3162 = vpop.permute.xlu0 %3161
      %3163 = vrot.lane.b32.xlu0 %v2665, 48
      %v3164 = vpop.permute.xlu0 %3163
      %3165 = vrot.lane.b32.xlu0 %v2666, 48
      %v3166 = vpop.permute.xlu0 %3165
      %3167 = vrot.lane.b32.xlu0 %v2667, 48
      %v3168 = vpop.permute.xlu0 %3167
      %3169 = vrot.lane.b32.xlu0 %v2668, 48
      %v3170 = vpop.permute.xlu0 %3169
      %3171 = vrot.lane.b32.xlu0 %v2669, 48
      %v3172 = vpop.permute.xlu0 %3171
      %3173 = vrot.lane.b32.xlu0 %v2670, 48
      %v3174 = vpop.permute.xlu0 %3173
      %3175 = vrot.lane.b32.xlu0 %v2671, 48
      %v3176 = vpop.permute.xlu0 %3175
      %3177 = vrot.lane.b32.xlu0 %v2672, 48
      %v3178 = vpop.permute.xlu0 %3177
      %3179 = vrot.lane.b32.xlu0 %v2673, 48
      %v3180 = vpop.permute.xlu0 %3179
      %3181 = vrot.lane.b32.xlu0 %v2674, 48
      %v3182 = vpop.permute.xlu0 %3181
      %3183 = vrot.lane.b32.xlu0 %v2675, 48
      %v3184 = vpop.permute.xlu0 %3183
      %3185 = vrot.lane.b32.xlu0 %v2676, 48
      %v3186 = vpop.permute.xlu0 %3185
      %3187 = vrot.lane.b32.xlu0 %v2677, 48
      %v3188 = vpop.permute.xlu0 %3187
      %3189 = vrot.lane.b32.xlu0 %v2678, 48
      %v3190 = vpop.permute.xlu0 %3189
      %3255 = vrot.lane.b32.xlu0 %v2679, 64
      %v3256 = vpop.permute.xlu0 %3255
      %3257 = vrot.lane.b32.xlu0 %v2680, 64
      %v3258 = vpop.permute.xlu0 %3257
      %3259 = vrot.lane.b32.xlu0 %v2681, 64
      %v3260 = vpop.permute.xlu0 %3259
      %3261 = vrot.lane.b32.xlu0 %v2682, 64
      %v3262 = vpop.permute.xlu0 %3261
      %3263 = vrot.lane.b32.xlu0 %v2683, 64
      %v3264 = vpop.permute.xlu0 %3263
      %3265 = vrot.lane.b32.xlu0 %v2684, 64
      %v3266 = vpop.permute.xlu0 %3265
      %3267 = vrot.lane.b32.xlu0 %v2685, 64
      %v3268 = vpop.permute.xlu0 %3267
      %3269 = vrot.lane.b32.xlu0 %v2686, 64
      %v3270 = vpop.permute.xlu0 %3269
      %3271 = vrot.lane.b32.xlu0 %v2687, 64
      %v3272 = vpop.permute.xlu0 %3271
      %3273 = vrot.lane.b32.xlu0 %v2688, 64
      %v3274 = vpop.permute.xlu0 %3273
      %3275 = vrot.lane.b32.xlu0 %v2689, 64
      %v3276 = vpop.permute.xlu0 %3275
      %3277 = vrot.lane.b32.xlu0 %v2690, 64
      %v3278 = vpop.permute.xlu0 %3277
      %3279 = vrot.lane.b32.xlu0 %v2691, 64
      %v3280 = vpop.permute.xlu0 %3279
      %3281 = vrot.lane.b32.xlu0 %v2692, 64
      %v3282 = vpop.permute.xlu0 %3281
      %3283 = vrot.lane.b32.xlu0 %v2693, 64
      %v3284 = vpop.permute.xlu0 %3283
      %3285 = vrot.lane.b32.xlu0 %v2694, 64
      %v3286 = vpop.permute.xlu0 %3285
      %3287 = vrot.lane.b32.xlu0 %v2695, 64
      %v3288 = vpop.permute.xlu0 %3287
      %3289 = vrot.lane.b32.xlu0 %v2696, 64
      %v3290 = vpop.permute.xlu0 %3289
      %3291 = vrot.lane.b32.xlu0 %v2697, 64
      %v3292 = vpop.permute.xlu0 %3291
      %3293 = vrot.lane.b32.xlu0 %v2698, 64
      %v3294 = vpop.permute.xlu0 %3293
      %3295 = vrot.lane.b32.xlu0 %v2699, 64
      %v3296 = vpop.permute.xlu0 %3295
      %3297 = vrot.lane.b32.xlu0 %v2700, 64
      %v3298 = vpop.permute.xlu0 %3297
      %3299 = vrot.lane.b32.xlu0 %v2701, 64
      %v3300 = vpop.permute.xlu0 %3299
      %3301 = vrot.lane.b32.xlu0 %v2702, 64
      %v3302 = vpop.permute.xlu0 %3301
      %3303 = vrot.lane.b32.xlu0 %v2703, 64
      %v3304 = vpop.permute.xlu0 %3303
      %3305 = vrot.lane.b32.xlu0 %v2704, 64
      %v3306 = vpop.permute.xlu0 %3305
      %3307 = vrot.lane.b32.xlu0 %v2705, 64
      %v3308 = vpop.permute.xlu0 %3307
      %3309 = vrot.lane.b32.xlu0 %v2706, 64
      %v3310 = vpop.permute.xlu0 %3309
      %3311 = vrot.lane.b32.xlu0 %v2707, 64
      %v3312 = vpop.permute.xlu0 %3311
      %3313 = vrot.lane.b32.xlu0 %v2708, 64
      %v3314 = vpop.permute.xlu0 %3313
      %3315 = vrot.lane.b32.xlu0 %v2709, 64
      %v3316 = vpop.permute.xlu0 %3315
      %3317 = vrot.lane.b32.xlu0 %v2710, 64
      %v3318 = vpop.permute.xlu0 %3317
      %3383 = vrot.lane.b32.xlu0 %v2711, 80
      %v3384 = vpop.permute.xlu0 %3383
      %3385 = vrot.lane.b32.xlu0 %v2712, 80
      %v3386 = vpop.permute.xlu0 %3385
      %3387 = vrot.lane.b32.xlu0 %v2713, 80
      %v3388 = vpop.permute.xlu0 %3387
      %3389 = vrot.lane.b32.xlu0 %v2714, 80
      %v3390 = vpop.permute.xlu0 %3389
      %3391 = vrot.lane.b32.xlu0 %v2715, 80
      %v3392 = vpop.permute.xlu0 %3391
      %3393 = vrot.lane.b32.xlu0 %v2716, 80
      %v3394 = vpop.permute.xlu0 %3393
      %3395 = vrot.lane.b32.xlu0 %v2717, 80
      %v3396 = vpop.permute.xlu0 %3395
      %3397 = vrot.lane.b32.xlu0 %v2718, 80
      %v3398 = vpop.permute.xlu0 %3397
      %3399 = vrot.lane.b32.xlu0 %v2719, 80
      %v3400 = vpop.permute.xlu0 %3399
      %3401 = vrot.lane.b32.xlu0 %v2720, 80
      %v3402 = vpop.permute.xlu0 %3401
      %3403 = vrot.lane.b32.xlu0 %v2721, 80
      %v3404 = vpop.permute.xlu0 %3403
      %3405 = vrot.lane.b32.xlu0 %v2722, 80
      %v3406 = vpop.permute.xlu0 %3405
      %3407 = vrot.lane.b32.xlu0 %v2723, 80
      %v3408 = vpop.permute.xlu0 %3407
      %3409 = vrot.lane.b32.xlu0 %v2724, 80
      %v3410 = vpop.permute.xlu0 %3409
      %3411 = vrot.lane.b32.xlu0 %v2725, 80
      %v3412 = vpop.permute.xlu0 %3411
      %3413 = vrot.lane.b32.xlu0 %v2726, 80
      %v3414 = vpop.permute.xlu0 %3413
      %3415 = vrot.lane.b32.xlu0 %v2727, 80
      %v3416 = vpop.permute.xlu0 %3415
      %3417 = vrot.lane.b32.xlu0 %v2728, 80
      %v3418 = vpop.permute.xlu0 %3417
      %3419 = vrot.lane.b32.xlu0 %v2729, 80
      %v3420 = vpop.permute.xlu0 %3419
      %3421 = vrot.lane.b32.xlu0 %v2730, 80
      %v3422 = vpop.permute.xlu0 %3421
      %3423 = vrot.lane.b32.xlu0 %v2731, 80
      %v3424 = vpop.permute.xlu0 %3423
      %3425 = vrot.lane.b32.xlu0 %v2732, 80
      %v3426 = vpop.permute.xlu0 %3425
      %3427 = vrot.lane.b32.xlu0 %v2733, 80
      %v3428 = vpop.permute.xlu0 %3427
      %3429 = vrot.lane.b32.xlu0 %v2734, 80
      %v3430 = vpop.permute.xlu0 %3429
      %3431 = vrot.lane.b32.xlu0 %v2735, 80
      %v3432 = vpop.permute.xlu0 %3431
      %3433 = vrot.lane.b32.xlu0 %v2736, 80
      %v3434 = vpop.permute.xlu0 %3433
      %3435 = vrot.lane.b32.xlu0 %v2737, 80
      %v3436 = vpop.permute.xlu0 %3435
      %3437 = vrot.lane.b32.xlu0 %v2738, 80
      %v3438 = vpop.permute.xlu0 %3437
      %3439 = vrot.lane.b32.xlu0 %v2739, 80
      %v3440 = vpop.permute.xlu0 %3439
      %3441 = vrot.lane.b32.xlu0 %v2740, 80
      %v3442 = vpop.permute.xlu0 %3441
      %3443 = vrot.lane.b32.xlu0 %v2741, 80
      %v3444 = vpop.permute.xlu0 %3443
      %3445 = vrot.lane.b32.xlu0 %v2742, 80
      %v3446 = vpop.permute.xlu0 %3445
      %3511 = vrot.lane.b32.xlu0 %v2743, 96
      %v3512 = vpop.permute.xlu0 %3511
      %3513 = vrot.lane.b32.xlu0 %v2744, 96
      %v3514 = vpop.permute.xlu0 %3513
      %3515 = vrot.lane.b32.xlu0 %v2745, 96
      %v3516 = vpop.permute.xlu0 %3515
      %3517 = vrot.lane.b32.xlu0 %v2746, 96
      %v3518 = vpop.permute.xlu0 %3517
      %3519 = vrot.lane.b32.xlu0 %v2747, 96
      %v3520 = vpop.permute.xlu0 %3519
      %3521 = vrot.lane.b32.xlu0 %v2748, 96
      %v3522 = vpop.permute.xlu0 %3521
      %3523 = vrot.lane.b32.xlu0 %v2749, 96
      %v3524 = vpop.permute.xlu0 %3523
      %3525 = vrot.lane.b32.xlu0 %v2750, 96
      %v3526 = vpop.permute.xlu0 %3525
      %3527 = vrot.lane.b32.xlu0 %v2751, 96
      %v3528 = vpop.permute.xlu0 %3527
      %3529 = vrot.lane.b32.xlu0 %v2752, 96
      %v3530 = vpop.permute.xlu0 %3529
      %3531 = vrot.lane.b32.xlu0 %v2753, 96
      %v3532 = vpop.permute.xlu0 %3531
      %3533 = vrot.lane.b32.xlu0 %v2754, 96
      %v3534 = vpop.permute.xlu0 %3533
      %3535 = vrot.lane.b32.xlu0 %v2755, 96
      %v3536 = vpop.permute.xlu0 %3535
      %3537 = vrot.lane.b32.xlu0 %v2756, 96
      %v3538 = vpop.permute.xlu0 %3537
      %3539 = vrot.lane.b32.xlu0 %v2757, 96
      %v3540 = vpop.permute.xlu0 %3539
      %3541 = vrot.lane.b32.xlu0 %v2758, 96
      %v3542 = vpop.permute.xlu0 %3541
      %3543 = vrot.lane.b32.xlu0 %v2759, 96
      %v3544 = vpop.permute.xlu0 %3543
      %3545 = vrot.lane.b32.xlu0 %v2760, 96
      %v3546 = vpop.permute.xlu0 %3545
      %3547 = vrot.lane.b32.xlu0 %v2761, 96
      %v3548 = vpop.permute.xlu0 %3547
      %3549 = vrot.lane.b32.xlu0 %v2762, 96
      %v3550 = vpop.permute.xlu0 %3549
      %3551 = vrot.lane.b32.xlu0 %v2763, 96
      %v3552 = vpop.permute.xlu0 %3551
      %3553 = vrot.lane.b32.xlu0 %v2764, 96
      %v3554 = vpop.permute.xlu0 %3553
      %3555 = vrot.lane.b32.xlu0 %v2765, 96
      %v3556 = vpop.permute.xlu0 %3555
      %3557 = vrot.lane.b32.xlu0 %v2766, 96
      %v3558 = vpop.permute.xlu0 %3557
      %3559 = vrot.lane.b32.xlu0 %v2767, 96
      %v3560 = vpop.permute.xlu0 %3559
      %3561 = vrot.lane.b32.xlu0 %v2768, 96
      %v3562 = vpop.permute.xlu0 %3561
      %3563 = vrot.lane.b32.xlu0 %v2769, 96
      %v3564 = vpop.permute.xlu0 %3563
      %3565 = vrot.lane.b32.xlu0 %v2770, 96
      %v3566 = vpop.permute.xlu0 %3565
      %3567 = vrot.lane.b32.xlu0 %v2771, 96
      %v3568 = vpop.permute.xlu0 %3567
      %3569 = vrot.lane.b32.xlu0 %v2772, 96
      %v3570 = vpop.permute.xlu0 %3569
      %3571 = vrot.lane.b32.xlu0 %v2773, 96
      %v3572 = vpop.permute.xlu0 %3571
      %3573 = vrot.lane.b32.xlu0 %v2774, 96
      %v3574 = vpop.permute.xlu0 %3573
      %3639 = vrot.lane.b32.xlu0 %v2775, 112
      %v3640 = vpop.permute.xlu0 %3639
      %3641 = vrot.lane.b32.xlu0 %v2776, 112
      %v3642 = vpop.permute.xlu0 %3641
      %3643 = vrot.lane.b32.xlu0 %v2777, 112
      %v3644 = vpop.permute.xlu0 %3643
      %3645 = vrot.lane.b32.xlu0 %v2778, 112
      %v3646 = vpop.permute.xlu0 %3645
      %3647 = vrot.lane.b32.xlu0 %v2779, 112
      %v3648 = vpop.permute.xlu0 %3647
      %3649 = vrot.lane.b32.xlu0 %v2780, 112
      %v3650 = vpop.permute.xlu0 %3649
      %3651 = vrot.lane.b32.xlu0 %v2781, 112
      %v3652 = vpop.permute.xlu0 %3651
      %3653 = vrot.lane.b32.xlu0 %v2782, 112
      %v3654 = vpop.permute.xlu0 %3653
      %3655 = vrot.lane.b32.xlu0 %v2783, 112
      %v3656 = vpop.permute.xlu0 %3655
      %3657 = vrot.lane.b32.xlu0 %v2784, 112
      %v3658 = vpop.permute.xlu0 %3657
      %3659 = vrot.lane.b32.xlu0 %v2785, 112
      %v3660 = vpop.permute.xlu0 %3659
      %3661 = vrot.lane.b32.xlu0 %v2786, 112
      %v3662 = vpop.permute.xlu0 %3661
      %3663 = vrot.lane.b32.xlu0 %v2787, 112
      %v3664 = vpop.permute.xlu0 %3663
      %3665 = vrot.lane.b32.xlu0 %v2788, 112
      %v3666 = vpop.permute.xlu0 %3665
      %3667 = vrot.lane.b32.xlu0 %v2789, 112
      %v3668 = vpop.permute.xlu0 %3667
      %3669 = vrot.lane.b32.xlu0 %v2790, 112
      %v3670 = vpop.permute.xlu0 %3669
      %3671 = vrot.lane.b32.xlu0 %v2791, 112
      %v3672 = vpop.permute.xlu0 %3671
      %3673 = vrot.lane.b32.xlu0 %v2792, 112
      %v3674 = vpop.permute.xlu0 %3673
      %3675 = vrot.lane.b32.xlu0 %v2793, 112
      %v3676 = vpop.permute.xlu0 %3675
      %3677 = vrot.lane.b32.xlu0 %v2794, 112
      %v3678 = vpop.permute.xlu0 %3677
      %3679 = vrot.lane.b32.xlu0 %v2795, 112
      %v3680 = vpop.permute.xlu0 %3679
      %3681 = vrot.lane.b32.xlu0 %v2796, 112
      %v3682 = vpop.permute.xlu0 %3681
      %3683 = vrot.lane.b32.xlu0 %v2797, 112
      %v3684 = vpop.permute.xlu0 %3683
      %3685 = vrot.lane.b32.xlu0 %v2798, 112
      %v3686 = vpop.permute.xlu0 %3685
      %3687 = vrot.lane.b32.xlu0 %v2799, 112
      %v3688 = vpop.permute.xlu0 %3687
      %3689 = vrot.lane.b32.xlu0 %v2800, 112
      %v3690 = vpop.permute.xlu0 %3689
      %3691 = vrot.lane.b32.xlu0 %v2801, 112
      %v3692 = vpop.permute.xlu0 %3691
      %3693 = vrot.lane.b32.xlu0 %v2802, 112
      %v3694 = vpop.permute.xlu0 %3693
      %3695 = vrot.lane.b32.xlu0 %v2803, 112
      %v3696 = vpop.permute.xlu0 %3695
      %3697 = vrot.lane.b32.xlu0 %v2804, 112
      %v3698 = vpop.permute.xlu0 %3697
      %3699 = vrot.lane.b32.xlu0 %v2805, 112
      %v3700 = vpop.permute.xlu0 %3699
      %3701 = vrot.lane.b32.xlu0 %v2806, 112
      %v3702 = vpop.permute.xlu0 %3701
      %v3735 = vsel %vm1790, %v2551, %v2872
      %v3736 = vsel %vm1790, %v2552, %v2874
      %v3737 = vsel %vm1790, %v2553, %v2876
      %v3738 = vsel %vm1790, %v2554, %v2878
      %v3739 = vsel %vm1790, %v2555, %v2880
      %v3740 = vsel %vm1790, %v2556, %v2882
      %v3741 = vsel %vm1790, %v2557, %v2884
      %v3742 = vsel %vm1790, %v2558, %v2886
      %v3743 = vsel %vm1790, %v2559, %v2888
      %v3744 = vsel %vm1790, %v2560, %v2890
      %v3745 = vsel %vm1790, %v2561, %v2892
      %v3746 = vsel %vm1790, %v2562, %v2894
      %v3747 = vsel %vm1790, %v2563, %v2896
      %v3748 = vsel %vm1790, %v2564, %v2898
      %v3749 = vsel %vm1790, %v2565, %v2900
      %v3750 = vsel %vm1790, %v2566, %v2902
      %v3751 = vsel %vm1790, %v2567, %v2904
      %v3752 = vsel %vm1790, %v2568, %v2906
      %v3753 = vsel %vm1790, %v2569, %v2908
      %v3754 = vsel %vm1790, %v2570, %v2910
      %v3755 = vsel %vm1790, %v2571, %v2912
      %v3756 = vsel %vm1790, %v2572, %v2914
      %v3757 = vsel %vm1790, %v2573, %v2916
      %v3758 = vsel %vm1790, %v2574, %v2918
      %v3759 = vsel %vm1790, %v2575, %v2920
      %v3760 = vsel %vm1790, %v2576, %v2922
      %v3761 = vsel %vm1790, %v2577, %v2924
      %v3762 = vsel %vm1790, %v2578, %v2926
      %v3763 = vsel %vm1790, %v2579, %v2928
      %v3764 = vsel %vm1790, %v2580, %v2930
      %v3765 = vsel %vm1790, %v2581, %v2932
      %v3766 = vsel %vm1790, %v2582, %v2934
      %v3767 = vsel %vm333, %v3735, %v3000
      %v3768 = vsel %vm333, %v3736, %v3002
      %v3769 = vsel %vm333, %v3737, %v3004
      %v3770 = vsel %vm333, %v3738, %v3006
      %v3771 = vsel %vm333, %v3739, %v3008
      %v3772 = vsel %vm333, %v3740, %v3010
      %v3773 = vsel %vm333, %v3741, %v3012
      %v3774 = vsel %vm333, %v3742, %v3014
      %v3775 = vsel %vm333, %v3743, %v3016
      %v3776 = vsel %vm333, %v3744, %v3018
      %v3777 = vsel %vm333, %v3745, %v3020
      %v3778 = vsel %vm333, %v3746, %v3022
      %v3779 = vsel %vm333, %v3747, %v3024
      %v3780 = vsel %vm333, %v3748, %v3026
      %v3781 = vsel %vm333, %v3749, %v3028
      %v3782 = vsel %vm333, %v3750, %v3030
      %v3783 = vsel %vm333, %v3751, %v3032
      %v3784 = vsel %vm333, %v3752, %v3034
      %v3785 = vsel %vm333, %v3753, %v3036
      %v3786 = vsel %vm333, %v3754, %v3038
      %v3787 = vsel %vm333, %v3755, %v3040
      %v3788 = vsel %vm333, %v3756, %v3042
      %v3789 = vsel %vm333, %v3757, %v3044
      %v3790 = vsel %vm333, %v3758, %v3046
      %v3791 = vsel %vm333, %v3759, %v3048
      %v3792 = vsel %vm333, %v3760, %v3050
      %v3793 = vsel %vm333, %v3761, %v3052
      %v3794 = vsel %vm333, %v3762, %v3054
      %v3795 = vsel %vm333, %v3763, %v3056
      %v3796 = vsel %vm333, %v3764, %v3058
      %v3797 = vsel %vm333, %v3765, %v3060
      %v3798 = vsel %vm333, %v3766, %v3062
      %v3799 = vsel %vm1921, %v3767, %v3128
      %v3800 = vsel %vm1921, %v3768, %v3130
      %v3801 = vsel %vm1921, %v3769, %v3132
      %v3802 = vsel %vm1921, %v3770, %v3134
      %v3803 = vsel %vm1921, %v3771, %v3136
      %v3804 = vsel %vm1921, %v3772, %v3138
      %v3805 = vsel %vm1921, %v3773, %v3140
      %v3806 = vsel %vm1921, %v3774, %v3142
      %v3807 = vsel %vm1921, %v3775, %v3144
      %v3808 = vsel %vm1921, %v3776, %v3146
      %v3809 = vsel %vm1921, %v3777, %v3148
      %v3810 = vsel %vm1921, %v3778, %v3150
      %v3811 = vsel %vm1921, %v3779, %v3152
      %v3812 = vsel %vm1921, %v3780, %v3154
      %v3813 = vsel %vm1921, %v3781, %v3156
      %v3814 = vsel %vm1921, %v3782, %v3158
      %v3815 = vsel %vm1921, %v3783, %v3160
      %v3816 = vsel %vm1921, %v3784, %v3162
      %v3817 = vsel %vm1921, %v3785, %v3164
      %v3818 = vsel %vm1921, %v3786, %v3166
      %v3819 = vsel %vm1921, %v3787, %v3168
      %v3820 = vsel %vm1921, %v3788, %v3170
      %v3821 = vsel %vm1921, %v3789, %v3172
      %v3822 = vsel %vm1921, %v3790, %v3174
      %v3823 = vsel %vm1921, %v3791, %v3176
      %v3824 = vsel %vm1921, %v3792, %v3178
      %v3825 = vsel %vm1921, %v3793, %v3180
      %v3826 = vsel %vm1921, %v3794, %v3182
      %v3827 = vsel %vm1921, %v3795, %v3184
      %v3828 = vsel %vm1921, %v3796, %v3186
      %v3829 = vsel %vm1921, %v3797, %v3188
      %v3830 = vsel %vm1921, %v3798, %v3190
      %v3831 = vsel %vm1987, %v3799, %v3256
      %v3832 = vsel %vm1987, %v3800, %v3258
      %v3833 = vsel %vm1987, %v3801, %v3260
      %v3834 = vsel %vm1987, %v3802, %v3262
      %v3835 = vsel %vm1987, %v3803, %v3264
      %v3836 = vsel %vm1987, %v3804, %v3266
      %v3837 = vsel %vm1987, %v3805, %v3268
      %v3838 = vsel %vm1987, %v3806, %v3270
      %v3839 = vsel %vm1987, %v3807, %v3272
      %v3840 = vsel %vm1987, %v3808, %v3274
      %v3841 = vsel %vm1987, %v3809, %v3276
      %v3842 = vsel %vm1987, %v3810, %v3278
      %v3843 = vsel %vm1987, %v3811, %v3280
      %v3844 = vsel %vm1987, %v3812, %v3282
      %v3845 = vsel %vm1987, %v3813, %v3284
      %v3846 = vsel %vm1987, %v3814, %v3286
      %v3847 = vsel %vm1987, %v3815, %v3288
      %v3848 = vsel %vm1987, %v3816, %v3290
      %v3849 = vsel %vm1987, %v3817, %v3292
      %v3850 = vsel %vm1987, %v3818, %v3294
      %v3851 = vsel %vm1987, %v3819, %v3296
      %v3852 = vsel %vm1987, %v3820, %v3298
      %v3853 = vsel %vm1987, %v3821, %v3300
      %v3854 = vsel %vm1987, %v3822, %v3302
      %v3855 = vsel %vm1987, %v3823, %v3304
      %v3856 = vsel %vm1987, %v3824, %v3306
      %v3857 = vsel %vm1987, %v3825, %v3308
      %v3858 = vsel %vm1987, %v3826, %v3310
      %v3859 = vsel %vm1987, %v3827, %v3312
      %v3860 = vsel %vm1987, %v3828, %v3314
      %v3861 = vsel %vm1987, %v3829, %v3316
      %v3862 = vsel %vm1987, %v3830, %v3318
      %vm3863 = vcmask 654336
      %v3864 = vsel %vm3863, %v3831, %v3384
      %v3865 = vsel %vm3863, %v3832, %v3386
      %v3866 = vsel %vm3863, %v3833, %v3388
      %v3867 = vsel %vm3863, %v3834, %v3390
      %v3868 = vsel %vm3863, %v3835, %v3392
      %v3869 = vsel %vm3863, %v3836, %v3394
      %v3870 = vsel %vm3863, %v3837, %v3396
      %v3871 = vsel %vm3863, %v3838, %v3398
      %v3872 = vsel %vm3863, %v3839, %v3400
      %v3873 = vsel %vm3863, %v3840, %v3402
      %v3874 = vsel %vm3863, %v3841, %v3404
      %v3875 = vsel %vm3863, %v3842, %v3406
      %v3876 = vsel %vm3863, %v3843, %v3408
      %v3877 = vsel %vm3863, %v3844, %v3410
      %v3878 = vsel %vm3863, %v3845, %v3412
      %v3879 = vsel %vm3863, %v3846, %v3414
      %v3880 = vsel %vm3863, %v3847, %v3416
      %v3881 = vsel %vm3863, %v3848, %v3418
      %v3882 = vsel %vm3863, %v3849, %v3420
      %v3883 = vsel %vm3863, %v3850, %v3422
      %v3884 = vsel %vm3863, %v3851, %v3424
      %v3885 = vsel %vm3863, %v3852, %v3426
      %v3886 = vsel %vm3863, %v3853, %v3428
      %v3887 = vsel %vm3863, %v3854, %v3430
      %v3888 = vsel %vm3863, %v3855, %v3432
      %v3889 = vsel %vm3863, %v3856, %v3434
      %v3890 = vsel %vm3863, %v3857, %v3436
      %v3891 = vsel %vm3863, %v3858, %v3438
      %v3892 = vsel %vm3863, %v3859, %v3440
      %v3893 = vsel %vm3863, %v3860, %v3442
      %v3894 = vsel %vm3863, %v3861, %v3444
      %v3895 = vsel %vm3863, %v3862, %v3446
      %vm3896 = vcmask 785408
      %v3897 = vsel %vm3896, %v3864, %v3512
      %v3898 = vsel %vm3896, %v3865, %v3514
      %v3899 = vsel %vm3896, %v3866, %v3516
      %v3900 = vsel %vm3896, %v3867, %v3518
      %v3901 = vsel %vm3896, %v3868, %v3520
      %v3902 = vsel %vm3896, %v3869, %v3522
      %v3903 = vsel %vm3896, %v3870, %v3524
      %v3904 = vsel %vm3896, %v3871, %v3526
      %v3905 = vsel %vm3896, %v3872, %v3528
      %v3906 = vsel %vm3896, %v3873, %v3530
      %v3907 = vsel %vm3896, %v3874, %v3532
      %v3908 = vsel %vm3896, %v3875, %v3534
      %v3909 = vsel %vm3896, %v3876, %v3536
      %v3910 = vsel %vm3896, %v3877, %v3538
      %v3911 = vsel %vm3896, %v3878, %v3540
      %v3912 = vsel %vm3896, %v3879, %v3542
      %v3913 = vsel %vm3896, %v3880, %v3544
      %v3914 = vsel %vm3896, %v3881, %v3546
      %v3915 = vsel %vm3896, %v3882, %v3548
      %v3916 = vsel %vm3896, %v3883, %v3550
      %v3917 = vsel %vm3896, %v3884, %v3552
      %v3918 = vsel %vm3896, %v3885, %v3554
      %v3919 = vsel %vm3896, %v3886, %v3556
      %v3920 = vsel %vm3896, %v3887, %v3558
      %v3921 = vsel %vm3896, %v3888, %v3560
      %v3922 = vsel %vm3896, %v3889, %v3562
      %v3923 = vsel %vm3896, %v3890, %v3564
      %v3924 = vsel %vm3896, %v3891, %v3566
      %v3925 = vsel %vm3896, %v3892, %v3568
      %v3926 = vsel %vm3896, %v3893, %v3570
      %v3927 = vsel %vm3896, %v3894, %v3572
      %v3928 = vsel %vm3896, %v3895, %v3574
      %vm3929 = vcmask 916480
      %v3930 = vsel %vm3929, %v3897, %v3640
      %v3931 = vsel %vm3929, %v3898, %v3642
      %v3932 = vsel %vm3929, %v3899, %v3644
      %v3933 = vsel %vm3929, %v3900, %v3646
      %v3934 = vsel %vm3929, %v3901, %v3648
      %v3935 = vsel %vm3929, %v3902, %v3650
      %v3936 = vsel %vm3929, %v3903, %v3652
      %v3937 = vsel %vm3929, %v3904, %v3654
      %v3938 = vsel %vm3929, %v3905, %v3656
      %v3939 = vsel %vm3929, %v3906, %v3658
      %v3940 = vsel %vm3929, %v3907, %v3660
      %v3941 = vsel %vm3929, %v3908, %v3662
      %v3942 = vsel %vm3929, %v3909, %v3664
      %v3943 = vsel %vm3929, %v3910, %v3666
      %v3944 = vsel %vm3929, %v3911, %v3668
      %v3945 = vsel %vm3929, %v3912, %v3670
      %v3946 = vsel %vm3929, %v3913, %v3672
      %v3947 = vsel %vm3929, %v3914, %v3674
      %v3948 = vsel %vm3929, %v3915, %v3676
      %v3949 = vsel %vm3929, %v3916, %v3678
      %v3950 = vsel %vm3929, %v3917, %v3680
      %v3951 = vsel %vm3929, %v3918, %v3682
      %v3952 = vsel %vm3929, %v3919, %v3684
      %v3953 = vsel %vm3929, %v3920, %v3686
      %v3954 = vsel %vm3929, %v3921, %v3688
      %v3955 = vsel %vm3929, %v3922, %v3690
      %v3956 = vsel %vm3929, %v3923, %v3692
      %v3957 = vsel %vm3929, %v3924, %v3694
      %v3958 = vsel %vm3929, %v3925, %v3696
      %v3959 = vsel %vm3929, %v3926, %v3698
      %v3960 = vsel %vm3929, %v3927, %v3700
      %v3961 = vsel %vm3929, %v3928, %v3702
      %v3962 = vld [vmem:[%s3] sm:$0xff]
      %v3963 = vld [vmem:[%s3 + $0x8] sm:$0xff]
      %v3964 = vld [vmem:[%s3 + $0x10] sm:$0xff]
      %v3965 = vld [vmem:[%s3 + $0x18] sm:$0xff]
      %v3966 = vld [vmem:[%s3 + $0x20] sm:$0xff]
      %v3967 = vld [vmem:[%s3 + $0x28] sm:$0xff]
      %v3968 = vld [vmem:[%s3 + $0x30] sm:$0xff]
      %v3969 = vld [vmem:[%s3 + $0x38] sm:$0xff]
      %v3970 = vld [vmem:[%s3 + $0x40] sm:$0xff]
      %v3971 = vld [vmem:[%s3 + $0x48] sm:$0xff]
      %v3972 = vld [vmem:[%s3 + $0x50] sm:$0xff]
      %v3973 = vld [vmem:[%s3 + $0x58] sm:$0xff]
      %v3974 = vld [vmem:[%s3 + $0x60] sm:$0xff]
      %v3975 = vld [vmem:[%s3 + $0x68] sm:$0xff]
      %v3976 = vld [vmem:[%s3 + $0x70] sm:$0xff]
      %v3977 = vld [vmem:[%s3 + $0x78] sm:$0xff]
      %v3978 = vld [vmem:[%s3 + $0x80] sm:$0xff]
      %v3979 = vld [vmem:[%s3 + $0x88] sm:$0xff]
      %v3980 = vld [vmem:[%s4] sm:$0x1]
      %v3982 = vlaneseq
      %v3983 = vshrl.u32 %v3982, 7
      %v3984 = vsub.s32 0, %v3983
      %v3985 = vrot.slane %v3980, %v3984
      %v3988 = vsel %vm1790, %v2807, 0
      %v3991 = vsel %vm1790, %v2808, 0
      %v3994 = vsel %vm1790, %v2809, 0
      %v3997 = vsel %vm1790, %v2810, 0
      %v4000 = vsel %vm1790, %v2811, 0
      %v4003 = vsel %vm1790, %v2812, 0
      %v4006 = vsel %vm1790, %v2813, 0
      %v4009 = vsel %vm1790, %v2814, 0
      %v4012 = vsel %vm1790, %v2815, 0
      %v4015 = vsel %vm1790, %v2816, 0
      %v4018 = vsel %vm1790, %v2817, 0
      %v4021 = vsel %vm1790, %v2818, 0
      %v4024 = vsel %vm1790, %v2819, 0
      %v4027 = vsel %vm1790, %v2820, 0
      %v4030 = vsel %vm1790, %v2821, 0
      %v4033 = vsel %vm1790, %v2822, 0
      %v4036 = vsel %vm1790, %v2823, 0
      %v4039 = vsel %vm1790, %v2824, 0
      %v4042 = vsel %vm1790, %v2825, 0
      %v4045 = vsel %vm1790, %v2826, 0
      %v4048 = vsel %vm1790, %v2827, 0
      %v4051 = vsel %vm1790, %v2828, 0
      %v4054 = vsel %vm1790, %v2829, 0
      %v4057 = vsel %vm1790, %v2830, 0
      %v4060 = vsel %vm1790, %v2831, 0
      %v4063 = vsel %vm1790, %v2832, 0
      %v4066 = vsel %vm1790, %v2833, 0
      %v4069 = vsel %vm1790, %v2834, 0
      %v4072 = vsel %vm1790, %v2835, 0
      %v4075 = vsel %vm1790, %v2836, 0
      %v4078 = vsel %vm1790, %v2837, 0
      %v4081 = vsel %vm1790, %v2838, 0
      %4083 = vmatprep.subr.mxu0 0.0
      %4084 = vmatpush1.msra.mxu0 %v3962
      %4085 = vmatprep.subr.mxu0 0.0
      %4086 = vmatpush1.msra.mxu0 %v3963
      %4087 = vmatprep.subr.mxu0 0.0
      %4088 = vmatpush1.msra.mxu0 %v3964
      %4089 = vmatprep.subr.mxu0 0.0
      %4090 = vmatpush1.msra.mxu0 %v3965
      %4091 = vmatprep.subr.mxu0 0.0
      %4092 = vmatpush1.msra.mxu0 %v3966
      %4093 = vmatprep.subr.mxu0 0.0
      %4094 = vmatpush1.msra.mxu0 %v3967
      %4095 = vmatprep.subr.mxu0 0.0
      %4096 = vmatpush1.msra.mxu0 %v3968
      %4097 = vmatprep.subr.mxu0 0.0
      %4098 = vmatpush1.msra.mxu0 %v3969
      %4099 = vmatprep.subr.mxu0 0.0
      %4100 = vmatpush1.msra.mxu0 %v3970
      %4101 = vmatprep.subr.mxu0 0.0
      %4102 = vmatpush1.msra.mxu0 %v3971
      %4103 = vmatprep.subr.mxu0 0.0
      %4104 = vmatpush1.msra.mxu0 %v3972
      %4105 = vmatprep.subr.mxu0 0.0
      %4106 = vmatpush1.msra.mxu0 %v3973
      %4107 = vmatprep.subr.mxu0 0.0
      %4108 = vmatpush1.msra.mxu0 %v3974
      %4109 = vmatprep.subr.mxu0 0.0
      %4110 = vmatpush1.msra.mxu0 %v3975
      %4111 = vmatprep.subr.mxu0 0.0
      %4112 = vmatpush1.msra.mxu0 %v3976
      %4113 = vmatprep.subr.mxu0 0.0
      %4114 = vmatpush1.msra.mxu0 %v3977
      %4115 = vmatprep.subr.mxu0 0.0
      %4116 = vmatpush1.msra.mxu0 %v3978
      %4117 = vmatprep.subr.mxu0 0.0
      %4118 = vmatpush1.msra.mxu0 %v3979
      %4119 = vmatprep.subr.mxu0 0.0
      %4120 = vmatpush1.msra.mxu0 0.0
      %4121 = vmatprep.subr.mxu0 0.0
      %4122 = vmatpush1.msra.mxu0 0.0
      %4123 = vmatprep.subr.mxu0 0.0
      %4124 = vmatpush1.msra.mxu0 0.0
      %4125 = vmatprep.subr.mxu0 0.0
      %4126 = vmatpush1.msra.mxu0 0.0
      %4127 = vmatprep.subr.mxu0 0.0
      %4128 = vmatpush1.msra.mxu0 0.0
      %4129 = vmatprep.subr.mxu0 0.0
      %4130 = vmatpush1.msra.mxu0 0.0
      %4131 = vmatprep.subr.mxu0 0.0
      %4132 = vmatpush1.msra.mxu0 0.0
      %4133 = vmatprep.subr.mxu0 0.0
      %4134 = vmatpush1.msra.mxu0 0.0
      %4135 = vmatprep.subr.mxu0 0.0
      %4136 = vmatpush1.msra.mxu0 0.0
      %4137 = vmatprep.subr.mxu0 0.0
      %4138 = vmatpush1.msra.mxu0 0.0
      %4139 = vmatprep.subr.mxu0 0.0
      %4140 = vmatpush1.msra.mxu0 0.0
      %4141 = vmatprep.subr.mxu0 0.0
      %4142 = vmatpush1.msra.mxu0 0.0
      %4143 = vmatprep.subr.mxu0 0.0
      %4144 = vmatpush1.msra.mxu0 0.0
      %4145 = vmatprep.subr.mxu0 0.0
      %4146 = vmatpush1.msra.mxu0 0.0
      %4147 = vmatprep.mubr.f32.mxu0 %v3988
      %4148 = vmatmul.mubr.f32.gmra.mrb[0].mxu0 %v3930
      %v4149 = vpop.f32.mrb[0].mxu0
      %v4150 = vadd.f32 %v3985, %v4149
      %v4151 = vpop.f32.mrb[0].mxu0
      %4152 = vmatprep.mubr.f32.mxu0 %v3991
      %4153 = vmatmul.mubr.f32.gmra.mrb[0].mxu0 %v3931
      %v4154 = vpop.f32.mrb[0].mxu0
      %v4155 = vadd.f32 %v3985, %v4154
      %v4156 = vpop.f32.mrb[0].mxu0
      %4157 = vmatprep.mubr.f32.mxu0 %v3994
      %4158 = vmatmul.mubr.f32.gmra.mrb[0].mxu0 %v3932
      %v4159 = vpop.f32.mrb[0].mxu0
      %v4160 = vadd.f32 %v3985, %v4159
      %v4161 = vpop.f32.mrb[0].mxu0
      %4162 = vmatprep.mubr.f32.mxu0 %v3997
      %4163 = vmatmul.mubr.f32.gmra.mrb[0].mxu0 %v3933
      %v4164 = vpop.f32.mrb[0].mxu0
      %v4165 = vadd.f32 %v3985, %v4164
      %v4166 = vpop.f32.mrb[0].mxu0
      %4167 = vmatprep.mubr.f32.mxu0 %v4000
      %4168 = vmatmul.mubr.f32.gmra.mrb[0].mxu0 %v3934
      %v4169 = vpop.f32.mrb[0].mxu0
      %v4170 = vadd.f32 %v3985, %v4169
      %v4171 = vpop.f32.mrb[0].mxu0
      %4172 = vmatprep.mubr.f32.mxu0 %v4003
      %4173 = vmatmul.mubr.f32.gmra.mrb[0].mxu0 %v3935
      %v4174 = vpop.f32.mrb[0].mxu0
      %v4175 = vadd.f32 %v3985, %v4174
      %v4176 = vpop.f32.mrb[0].mxu0
      %4177 = vmatprep.mubr.f32.mxu0 %v4006
      %4178 = vmatmul.mubr.f32.gmra.mrb[0].mxu0 %v3936
      %v4179 = vpop.f32.mrb[0].mxu0
      %v4180 = vadd.f32 %v3985, %v4179
      %v4181 = vpop.f32.mrb[0].mxu0
      %4182 = vmatprep.mubr.f32.mxu0 %v4009
      %4183 = vmatmul.mubr.f32.gmra.mrb[0].mxu0 %v3937
      %v4184 = vpop.f32.mrb[0].mxu0
      %v4185 = vadd.f32 %v3985, %v4184
      %v4186 = vpop.f32.mrb[0].mxu0
      %4187 = vmatprep.mubr.f32.mxu0 %v4012
      %4188 = vmatmul.mubr.f32.gmra.mrb[0].mxu0 %v3938
      %v4189 = vpop.f32.mrb[0].mxu0
      %v4190 = vadd.f32 %v3985, %v4189
      %v4191 = vpop.f32.mrb[0].mxu0
      %4192 = vmatprep.mubr.f32.mxu0 %v4015
      %4193 = vmatmul.mubr.f32.gmra.mrb[0].mxu0 %v3939
      %v4194 = vpop.f32.mrb[0].mxu0
      %v4195 = vadd.f32 %v3985, %v4194
      %v4196 = vpop.f32.mrb[0].mxu0
      %4197 = vmatprep.mubr.f32.mxu0 %v4018
      %4198 = vmatmul.mubr.f32.gmra.mrb[0].mxu0 %v3940
      %v4199 = vpop.f32.mrb[0].mxu0
      %v4200 = vadd.f32 %v3985, %v4199
      %v4201 = vpop.f32.mrb[0].mxu0
      %4202 = vmatprep.mubr.f32.mxu0 %v4021
      %4203 = vmatmul.mubr.f32.gmra.mrb[0].mxu0 %v3941
      %v4204 = vpop.f32.mrb[0].mxu0
      %v4205 = vadd.f32 %v3985, %v4204
      %v4206 = vpop.f32.mrb[0].mxu0
      %4207 = vmatprep.mubr.f32.mxu0 %v4024
      %4208 = vmatmul.mubr.f32.gmra.mrb[0].mxu0 %v3942
      %v4209 = vpop.f32.mrb[0].mxu0
      %v4210 = vadd.f32 %v3985, %v4209
      %v4211 = vpop.f32.mrb[0].mxu0
      %4212 = vmatprep.mubr.f32.mxu0 %v4027
      %4213 = vmatmul.mubr.f32.gmra.mrb[0].mxu0 %v3943
      %v4214 = vpop.f32.mrb[0].mxu0
      %v4215 = vadd.f32 %v3985, %v4214
      %v4216 = vpop.f32.mrb[0].mxu0
      %4217 = vmatprep.mubr.f32.mxu0 %v4030
      %4218 = vmatmul.mubr.f32.gmra.mrb[0].mxu0 %v3944
      %v4219 = vpop.f32.mrb[0].mxu0
      %v4220 = vadd.f32 %v3985, %v4219
      %v4221 = vpop.f32.mrb[0].mxu0
      %4222 = vmatprep.mubr.f32.mxu0 %v4033
      %4223 = vmatmul.mubr.f32.gmra.mrb[0].mxu0 %v3945
      %v4224 = vpop.f32.mrb[0].mxu0
      %v4225 = vadd.f32 %v3985, %v4224
      %v4226 = vpop.f32.mrb[0].mxu0
      %4227 = vmatprep.mubr.f32.mxu0 %v4036
      %4228 = vmatmul.mubr.f32.gmra.mrb[0].mxu0 %v3946
      %v4229 = vpop.f32.mrb[0].mxu0
      %v4230 = vadd.f32 %v3985, %v4229
      %v4231 = vpop.f32.mrb[0].mxu0
      %4232 = vmatprep.mubr.f32.mxu0 %v4039
      %4233 = vmatmul.mubr.f32.gmra.mrb[0].mxu0 %v3947
      %v4234 = vpop.f32.mrb[0].mxu0
      %v4235 = vadd.f32 %v3985, %v4234
      %v4236 = vpop.f32.mrb[0].mxu0
      %4237 = vmatprep.mubr.f32.mxu0 %v4042
      %4238 = vmatmul.mubr.f32.gmra.mrb[0].mxu0 %v3948
      %v4239 = vpop.f32.mrb[0].mxu0
      %v4240 = vadd.f32 %v3985, %v4239
      %v4241 = vpop.f32.mrb[0].mxu0
      %4242 = vmatprep.mubr.f32.mxu0 %v4045
      %4243 = vmatmul.mubr.f32.gmra.mrb[0].mxu0 %v3949
      %v4244 = vpop.f32.mrb[0].mxu0
      %v4245 = vadd.f32 %v3985, %v4244
      %v4246 = vpop.f32.mrb[0].mxu0
      %4247 = vmatprep.mubr.f32.mxu0 %v4048
      %4248 = vmatmul.mubr.f32.gmra.mrb[0].mxu0 %v3950
      %v4249 = vpop.f32.mrb[0].mxu0
      %v4250 = vadd.f32 %v3985, %v4249
      %v4251 = vpop.f32.mrb[0].mxu0
      %4252 = vmatprep.mubr.f32.mxu0 %v4051
      %4253 = vmatmul.mubr.f32.gmra.mrb[0].mxu0 %v3951
      %v4254 = vpop.f32.mrb[0].mxu0
      %v4255 = vadd.f32 %v3985, %v4254
      %v4256 = vpop.f32.mrb[0].mxu0
      %4257 = vmatprep.mubr.f32.mxu0 %v4054
      %4258 = vmatmul.mubr.f32.gmra.mrb[0].mxu0 %v3952
      %v4259 = vpop.f32.mrb[0].mxu0
      %v4260 = vadd.f32 %v3985, %v4259
      %v4261 = vpop.f32.mrb[0].mxu0
      %4262 = vmatprep.mubr.f32.mxu0 %v4057
      %4263 = vmatmul.mubr.f32.gmra.mrb[0].mxu0 %v3953
      %v4264 = vpop.f32.mrb[0].mxu0
      %v4265 = vadd.f32 %v3985, %v4264
      %v4266 = vpop.f32.mrb[0].mxu0
      %4267 = vmatprep.mubr.f32.mxu0 %v4060
      %4268 = vmatmul.mubr.f32.gmra.mrb[0].mxu0 %v3954
      %v4269 = vpop.f32.mrb[0].mxu0
      %v4270 = vadd.f32 %v3985, %v4269
      %v4271 = vpop.f32.mrb[0].mxu0
      %4272 = vmatprep.mubr.f32.mxu0 %v4063
      %4273 = vmatmul.mubr.f32.gmra.mrb[0].mxu0 %v3955
      %v4274 = vpop.f32.mrb[0].mxu0
      %v4275 = vadd.f32 %v3985, %v4274
      %v4276 = vpop.f32.mrb[0].mxu0
      %4277 = vmatprep.mubr.f32.mxu0 %v4066
      %4278 = vmatmul.mubr.f32.gmra.mrb[0].mxu0 %v3956
      %v4279 = vpop.f32.mrb[0].mxu0
      %v4280 = vadd.f32 %v3985, %v4279
      %v4281 = vpop.f32.mrb[0].mxu0
      %4282 = vmatprep.mubr.f32.mxu0 %v4069
      %4283 = vmatmul.mubr.f32.gmra.mrb[0].mxu0 %v3957
      %v4284 = vpop.f32.mrb[0].mxu0
      %v4285 = vadd.f32 %v3985, %v4284
      %v4286 = vpop.f32.mrb[0].mxu0
      %4287 = vmatprep.mubr.f32.mxu0 %v4072
      %4288 = vmatmul.mubr.f32.gmra.mrb[0].mxu0 %v3958
      %v4289 = vpop.f32.mrb[0].mxu0
      %v4290 = vadd.f32 %v3985, %v4289
      %v4291 = vpop.f32.mrb[0].mxu0
      %4292 = vmatprep.mubr.f32.mxu0 %v4075
      %4293 = vmatmul.mubr.f32.gmra.mrb[0].mxu0 %v3959
      %v4294 = vpop.f32.mrb[0].mxu0
      %v4295 = vadd.f32 %v3985, %v4294
      %v4296 = vpop.f32.mrb[0].mxu0
      %4297 = vmatprep.mubr.f32.mxu0 %v4078
      %4298 = vmatmul.mubr.f32.gmra.mrb[0].mxu0 %v3960
      %v4299 = vpop.f32.mrb[0].mxu0
      %v4300 = vadd.f32 %v3985, %v4299
      %v4301 = vpop.f32.mrb[0].mxu0
      %4302 = vmatprep.mubr.f32.mxu0 %v4081
      %4303 = vmatmul.mubr.f32.gmra.mrb[0].mxu0 %v3961
      %v4304 = vpop.f32.mrb[0].mxu0
      %v4305 = vadd.f32 %v3985, %v4304
      %v4306 = vpop.f32.mrb[0].mxu0
      %4307 = vdwg.mxu0
      %v4308 = vmax.f32 %v4150, 0.0
      %v4309 = vmax.f32 %v4155, 0.0
      %v4310 = vmax.f32 %v4160, 0.0
      %v4311 = vmax.f32 %v4165, 0.0
      %v4312 = vmax.f32 %v4170, 0.0
      %v4313 = vmax.f32 %v4175, 0.0
      %v4314 = vmax.f32 %v4180, 0.0
      %v4315 = vmax.f32 %v4185, 0.0
      %v4316 = vmax.f32 %v4190, 0.0
      %v4317 = vmax.f32 %v4195, 0.0
      %v4318 = vmax.f32 %v4200, 0.0
      %v4319 = vmax.f32 %v4205, 0.0
      %v4320 = vmax.f32 %v4210, 0.0
      %v4321 = vmax.f32 %v4215, 0.0
      %v4322 = vmax.f32 %v4220, 0.0
      %v4323 = vmax.f32 %v4225, 0.0
      %v4324 = vmax.f32 %v4230, 0.0
      %v4325 = vmax.f32 %v4235, 0.0
      %v4326 = vmax.f32 %v4240, 0.0
      %v4327 = vmax.f32 %v4245, 0.0
      %v4328 = vmax.f32 %v4250, 0.0
      %v4329 = vmax.f32 %v4255, 0.0
      %v4330 = vmax.f32 %v4260, 0.0
      %v4331 = vmax.f32 %v4265, 0.0
      %v4332 = vmax.f32 %v4270, 0.0
      %v4333 = vmax.f32 %v4275, 0.0
      %v4334 = vmax.f32 %v4280, 0.0
      %v4335 = vmax.f32 %v4285, 0.0
      %v4336 = vmax.f32 %v4290, 0.0
      %v4337 = vmax.f32 %v4295, 0.0
      %v4338 = vmax.f32 %v4300, 0.0
      %v4339 = vmax.f32 %v4305, 0.0
      %4372 = vrot.lane.b32.xlu0 %v4308, 16
      %v4373 = vpop.permute.xlu0 %4372
      %4374 = vrot.lane.b32.xlu0 %v4309, 16
      %v4375 = vpop.permute.xlu0 %4374
      %4376 = vrot.lane.b32.xlu0 %v4310, 16
      %v4377 = vpop.permute.xlu0 %4376
      %4378 = vrot.lane.b32.xlu0 %v4311, 16
      %v4379 = vpop.permute.xlu0 %4378
      %4380 = vrot.lane.b32.xlu0 %v4312, 16
      %v4381 = vpop.permute.xlu0 %4380
      %4382 = vrot.lane.b32.xlu0 %v4313, 16
      %v4383 = vpop.permute.xlu0 %4382
      %4384 = vrot.lane.b32.xlu0 %v4314, 16
      %v4385 = vpop.permute.xlu0 %4384
      %4386 = vrot.lane.b32.xlu0 %v4315, 16
      %v4387 = vpop.permute.xlu0 %4386
      %4388 = vrot.lane.b32.xlu0 %v4316, 16
      %v4389 = vpop.permute.xlu0 %4388
      %4390 = vrot.lane.b32.xlu0 %v4317, 16
      %v4391 = vpop.permute.xlu0 %4390
      %4392 = vrot.lane.b32.xlu0 %v4318, 16
      %v4393 = vpop.permute.xlu0 %4392
      %4394 = vrot.lane.b32.xlu0 %v4319, 16
      %v4395 = vpop.permute.xlu0 %4394
      %4396 = vrot.lane.b32.xlu0 %v4320, 16
      %v4397 = vpop.permute.xlu0 %4396
      %4398 = vrot.lane.b32.xlu0 %v4321, 16
      %v4399 = vpop.permute.xlu0 %4398
      %4400 = vrot.lane.b32.xlu0 %v4322, 16
      %v4401 = vpop.permute.xlu0 %4400
      %4402 = vrot.lane.b32.xlu0 %v4323, 16
      %v4403 = vpop.permute.xlu0 %4402
      %4404 = vrot.lane.b32.xlu0 %v4324, 16
      %v4405 = vpop.permute.xlu0 %4404
      %4406 = vrot.lane.b32.xlu0 %v4325, 16
      %v4407 = vpop.permute.xlu0 %4406
      %4408 = vrot.lane.b32.xlu0 %v4326, 16
      %v4409 = vpop.permute.xlu0 %4408
      %4410 = vrot.lane.b32.xlu0 %v4327, 16
      %v4411 = vpop.permute.xlu0 %4410
      %4412 = vrot.lane.b32.xlu0 %v4328, 16
      %v4413 = vpop.permute.xlu0 %4412
      %4414 = vrot.lane.b32.xlu0 %v4329, 16
      %v4415 = vpop.permute.xlu0 %4414
      %4416 = vrot.lane.b32.xlu0 %v4330, 16
      %v4417 = vpop.permute.xlu0 %4416
      %4418 = vrot.lane.b32.xlu0 %v4331, 16
      %v4419 = vpop.permute.xlu0 %4418
      %4420 = vrot.lane.b32.xlu0 %v4332, 16
      %v4421 = vpop.permute.xlu0 %4420
      %4422 = vrot.lane.b32.xlu0 %v4333, 16
      %v4423 = vpop.permute.xlu0 %4422
      %4424 = vrot.lane.b32.xlu0 %v4334, 16
      %v4425 = vpop.permute.xlu0 %4424
      %4426 = vrot.lane.b32.xlu0 %v4335, 16
      %v4427 = vpop.permute.xlu0 %4426
      %4428 = vrot.lane.b32.xlu0 %v4336, 16
      %v4429 = vpop.permute.xlu0 %4428
      %4430 = vrot.lane.b32.xlu0 %v4337, 16
      %v4431 = vpop.permute.xlu0 %4430
      %4432 = vrot.lane.b32.xlu0 %v4338, 16
      %v4433 = vpop.permute.xlu0 %4432
      %4434 = vrot.lane.b32.xlu0 %v4339, 16
      %v4435 = vpop.permute.xlu0 %4434
      %vm4468 = vcmask 195712
      %4469 = vst.msk [vmem:[%s411 + $0x1] sm:$0xff] %vm4468, %v4373
      %4470 = vst.msk [vmem:[%s411 + $0x9] sm:$0xff] %vm4468, %v4375
      %4471 = vst.msk [vmem:[%s411 + $0x19] sm:$0xff] %vm4468, %v4377
      %4472 = vst.msk [vmem:[%s411 + $0x21] sm:$0xff] %vm4468, %v4379
      %4473 = vst.msk [vmem:[%s411 + $0x31] sm:$0xff] %vm4468, %v4381
      %4474 = vst.msk [vmem:[%s411 + $0x39] sm:$0xff] %vm4468, %v4383
      %4475 = vst.msk [vmem:[%s411 + $0x49] sm:$0xff] %vm4468, %v4385
      %4476 = vst.msk [vmem:[%s411 + $0x51] sm:$0xff] %vm4468, %v4387
      %4477 = vst.msk [vmem:[%s411 + $0x61] sm:$0xff] %vm4468, %v4389
      %4478 = vst.msk [vmem:[%s411 + $0x69] sm:$0xff] %vm4468, %v4391
      %4479 = vst.msk [vmem:[%s411 + $0x79] sm:$0xff] %vm4468, %v4393
      %4480 = vst.msk [vmem:[%s411 + $0x81] sm:$0xff] %vm4468, %v4395
      %4481 = vst.msk [vmem:[%s411 + $0x91] sm:$0xff] %vm4468, %v4397
      %4482 = vst.msk [vmem:[%s411 + $0x99] sm:$0xff] %vm4468, %v4399
      %4483 = vst.msk [vmem:[%s411 + $0xa9] sm:$0xff] %vm4468, %v4401
      %4484 = vst.msk [vmem:[%s411 + $0xb1] sm:$0xff] %vm4468, %v4403
      %4485 = vst.msk [vmem:[%s411 + $0xc1] sm:$0xff] %vm4468, %v4405
      %4486 = vst.msk [vmem:[%s411 + $0xc9] sm:$0xff] %vm4468, %v4407
      %4487 = vst.msk [vmem:[%s411 + $0xd9] sm:$0xff] %vm4468, %v4409
      %4488 = vst.msk [vmem:[%s411 + $0xe1] sm:$0xff] %vm4468, %v4411
      %4489 = vst.msk [vmem:[%s411 + $0xf1] sm:$0xff] %vm4468, %v4413
      %4490 = vst.msk [vmem:[%s411 + $0xf9] sm:$0xff] %vm4468, %v4415
      %4491 = vst.msk [vmem:[%s411 + $0x109] sm:$0xff] %vm4468, %v4417
      %4492 = vst.msk [vmem:[%s411 + $0x111] sm:$0xff] %vm4468, %v4419
      %4493 = vst.msk [vmem:[%s411 + $0x121] sm:$0xff] %vm4468, %v4421
      %4494 = vst.msk [vmem:[%s411 + $0x129] sm:$0xff] %vm4468, %v4423
      %4495 = vst.msk [vmem:[%s411 + $0x139] sm:$0xff] %vm4468, %v4425
      %4496 = vst.msk [vmem:[%s411 + $0x141] sm:$0xff] %vm4468, %v4427
      %4497 = vst.msk [vmem:[%s411 + $0x151] sm:$0xff] %vm4468, %v4429
      %4498 = vst.msk [vmem:[%s411 + $0x159] sm:$0xff] %vm4468, %v4431
      %4499 = vst.msk [vmem:[%s411 + $0x169] sm:$0xff] %vm4468, %v4433
      %4500 = vst.msk [vmem:[%s411 + $0x171] sm:$0xff] %vm4468, %v4435
      %v4501 = vld [vmem:[#allocation2] sm:$0xff]
      %v4502 = vld [vmem:[#allocation2 + $0x8] sm:$0xff]
      %v4503 = vld [vmem:[#allocation2 + $0x18] sm:$0xff]
      %v4504 = vld [vmem:[#allocation2 + $0x20] sm:$0xff]
      %v4505 = vld [vmem:[#allocation2 + $0x30] sm:$0xff]
      %v4506 = vld [vmem:[#allocation2 + $0x38] sm:$0xff]
      %v4507 = vld [vmem:[#allocation2 + $0x48] sm:$0xff]
      %v4508 = vld [vmem:[#allocation2 + $0x50] sm:$0xff]
      %v4509 = vld [vmem:[#allocation2 + $0x60] sm:$0xff]
      %v4510 = vld [vmem:[#allocation2 + $0x68] sm:$0xff]
      %v4511 = vld [vmem:[#allocation2 + $0x78] sm:$0xff]
      %v4512 = vld [vmem:[#allocation2 + $0x80] sm:$0xff]
      %v4513 = vld [vmem:[#allocation2 + $0x90] sm:$0xff]
      %v4514 = vld [vmem:[#allocation2 + $0x98] sm:$0xff]
      %v4515 = vld [vmem:[#allocation2 + $0xa8] sm:$0xff]
      %v4516 = vld [vmem:[#allocation2 + $0xb0] sm:$0xff]
      %v4517 = vld [vmem:[#allocation2 + $0xc0] sm:$0xff]
      %v4518 = vld [vmem:[#allocation2 + $0xc8] sm:$0xff]
      %v4519 = vld [vmem:[#allocation2 + $0xd8] sm:$0xff]
      %v4520 = vld [vmem:[#allocation2 + $0xe0] sm:$0xff]
      %v4521 = vld [vmem:[#allocation2 + $0xf0] sm:$0xff]
      %v4522 = vld [vmem:[#allocation2 + $0xf8] sm:$0xff]
      %v4523 = vld [vmem:[#allocation2 + $0x108] sm:$0xff]
      %v4524 = vld [vmem:[#allocation2 + $0x110] sm:$0xff]
      %v4525 = vld [vmem:[#allocation2 + $0x120] sm:$0xff]
      %v4526 = vld [vmem:[#allocation2 + $0x128] sm:$0xff]
      %v4527 = vld [vmem:[#allocation2 + $0x138] sm:$0xff]
      %v4528 = vld [vmem:[#allocation2 + $0x140] sm:$0xff]
      %v4529 = vld [vmem:[#allocation2 + $0x150] sm:$0xff]
      %v4530 = vld [vmem:[#allocation2 + $0x158] sm:$0xff]
      %v4531 = vld [vmem:[#allocation2 + $0x168] sm:$0xff]
      %v4532 = vld [vmem:[#allocation2 + $0x170] sm:$0xff]
      %v4533 = vld [vmem:[#allocation2 + $0x1] sm:$0xff]
      %v4534 = vld [vmem:[#allocation2 + $0x9] sm:$0xff]
      %v4535 = vld [vmem:[#allocation2 + $0x19] sm:$0xff]
      %v4536 = vld [vmem:[#allocation2 + $0x21] sm:$0xff]
      %v4537 = vld [vmem:[#allocation2 + $0x31] sm:$0xff]
      %v4538 = vld [vmem:[#allocation2 + $0x39] sm:$0xff]
      %v4539 = vld [vmem:[#allocation2 + $0x49] sm:$0xff]
      %v4540 = vld [vmem:[#allocation2 + $0x51] sm:$0xff]
      %v4541 = vld [vmem:[#allocation2 + $0x61] sm:$0xff]
      %v4542 = vld [vmem:[#allocation2 + $0x69] sm:$0xff]
      %v4543 = vld [vmem:[#allocation2 + $0x79] sm:$0xff]
      %v4544 = vld [vmem:[#allocation2 + $0x81] sm:$0xff]
      %v4545 = vld [vmem:[#allocation2 + $0x91] sm:$0xff]
      %v4546 = vld [vmem:[#allocation2 + $0x99] sm:$0xff]
      %v4547 = vld [vmem:[#allocation2 + $0xa9] sm:$0xff]
      %v4548 = vld [vmem:[#allocation2 + $0xb1] sm:$0xff]
      %v4549 = vld [vmem:[#allocation2 + $0xc1] sm:$0xff]
      %v4550 = vld [vmem:[#allocation2 + $0xc9] sm:$0xff]
      %v4551 = vld [vmem:[#allocation2 + $0xd9] sm:$0xff]
      %v4552 = vld [vmem:[#allocation2 + $0xe1] sm:$0xff]
      %v4553 = vld [vmem:[#allocation2 + $0xf1] sm:$0xff]
      %v4554 = vld [vmem:[#allocation2 + $0xf9] sm:$0xff]
      %v4555 = vld [vmem:[#allocation2 + $0x109] sm:$0xff]
      %v4556 = vld [vmem:[#allocation2 + $0x111] sm:$0xff]
      %v4557 = vld [vmem:[#allocation2 + $0x121] sm:$0xff]
      %v4558 = vld [vmem:[#allocation2 + $0x129] sm:$0xff]
      %v4559 = vld [vmem:[#allocation2 + $0x139] sm:$0xff]
      %v4560 = vld [vmem:[#allocation2 + $0x141] sm:$0xff]
      %v4561 = vld [vmem:[#allocation2 + $0x151] sm:$0xff]
      %v4562 = vld [vmem:[#allocation2 + $0x159] sm:$0xff]
      %v4563 = vld [vmem:[#allocation2 + $0x169] sm:$0xff]
      %v4564 = vld [vmem:[#allocation2 + $0x171] sm:$0xff]
      %v4565 = vld [vmem:[#allocation2 + $0x2] sm:$0xff]
      %v4566 = vld [vmem:[#allocation2 + $0xa] sm:$0xff]
      %v4567 = vld [vmem:[#allocation2 + $0x1a] sm:$0xff]
      %v4568 = vld [vmem:[#allocation2 + $0x22] sm:$0xff]
      %v4569 = vld [vmem:[#allocation2 + $0x32] sm:$0xff]
      %v4570 = vld [vmem:[#allocation2 + $0x3a] sm:$0xff]
      %v4571 = vld [vmem:[#allocation2 + $0x4a] sm:$0xff]
      %v4572 = vld [vmem:[#allocation2 + $0x52] sm:$0xff]
      %v4573 = vld [vmem:[#allocation2 + $0x62] sm:$0xff]
      %v4574 = vld [vmem:[#allocation2 + $0x6a] sm:$0xff]
      %v4575 = vld [vmem:[#allocation2 + $0x7a] sm:$0xff]
      %v4576 = vld [vmem:[#allocation2 + $0x82] sm:$0xff]
      %v4577 = vld [vmem:[#allocation2 + $0x92] sm:$0xff]
      %v4578 = vld [vmem:[#allocation2 + $0x9a] sm:$0xff]
      %v4579 = vld [vmem:[#allocation2 + $0xaa] sm:$0xff]
      %v4580 = vld [vmem:[#allocation2 + $0xb2] sm:$0xff]
      %v4581 = vld [vmem:[#allocation2 + $0xc2] sm:$0xff]
      %v4582 = vld [vmem:[#allocation2 + $0xca] sm:$0xff]
      %v4583 = vld [vmem:[#allocation2 + $0xda] sm:$0xff]
      %v4584 = vld [vmem:[#allocation2 + $0xe2] sm:$0xff]
      %v4585 = vld [vmem:[#allocation2 + $0xf2] sm:$0xff]
      %v4586 = vld [vmem:[#allocation2 + $0xfa] sm:$0xff]
      %v4587 = vld [vmem:[#allocation2 + $0x10a] sm:$0xff]
      %v4588 = vld [vmem:[#allocation2 + $0x112] sm:$0xff]
      %v4589 = vld [vmem:[#allocation2 + $0x122] sm:$0xff]
      %v4590 = vld [vmem:[#allocation2 + $0x12a] sm:$0xff]
      %v4591 = vld [vmem:[#allocation2 + $0x13a] sm:$0xff]
      %v4592 = vld [vmem:[#allocation2 + $0x142] sm:$0xff]
      %v4593 = vld [vmem:[#allocation2 + $0x152] sm:$0xff]
      %v4594 = vld [vmem:[#allocation2 + $0x15a] sm:$0xff]
      %v4595 = vld [vmem:[#allocation2 + $0x16a] sm:$0xff]
      %v4596 = vld [vmem:[#allocation2 + $0x172] sm:$0xff]
      %v4597 = vld [vmem:[%s411] sm:$0xff]
      %v4598 = vld [vmem:[%s411 + $0x8] sm:$0xff]
      %v4599 = vld [vmem:[%s411 + $0x18] sm:$0xff]
      %v4600 = vld [vmem:[%s411 + $0x20] sm:$0xff]
      %v4601 = vld [vmem:[%s411 + $0x30] sm:$0xff]
      %v4602 = vld [vmem:[%s411 + $0x38] sm:$0xff]
      %v4603 = vld [vmem:[%s411 + $0x48] sm:$0xff]
      %v4604 = vld [vmem:[%s411 + $0x50] sm:$0xff]
      %v4605 = vld [vmem:[%s411 + $0x60] sm:$0xff]
      %v4606 = vld [vmem:[%s411 + $0x68] sm:$0xff]
      %v4607 = vld [vmem:[%s411 + $0x78] sm:$0xff]
      %v4608 = vld [vmem:[%s411 + $0x80] sm:$0xff]
      %v4609 = vld [vmem:[%s411 + $0x90] sm:$0xff]
      %v4610 = vld [vmem:[%s411 + $0x98] sm:$0xff]
      %v4611 = vld [vmem:[%s411 + $0xa8] sm:$0xff]
      %v4612 = vld [vmem:[%s411 + $0xb0] sm:$0xff]
      %v4613 = vld [vmem:[%s411 + $0xc0] sm:$0xff]
      %v4614 = vld [vmem:[%s411 + $0xc8] sm:$0xff]
      %v4615 = vld [vmem:[%s411 + $0xd8] sm:$0xff]
      %v4616 = vld [vmem:[%s411 + $0xe0] sm:$0xff]
      %v4617 = vld [vmem:[%s411 + $0xf0] sm:$0xff]
      %v4618 = vld [vmem:[%s411 + $0xf8] sm:$0xff]
      %v4619 = vld [vmem:[%s411 + $0x108] sm:$0xff]
      %v4620 = vld [vmem:[%s411 + $0x110] sm:$0xff]
      %v4621 = vld [vmem:[%s411 + $0x120] sm:$0xff]
      %v4622 = vld [vmem:[%s411 + $0x128] sm:$0xff]
      %v4623 = vld [vmem:[%s411 + $0x138] sm:$0xff]
      %v4624 = vld [vmem:[%s411 + $0x140] sm:$0xff]
      %v4625 = vld [vmem:[%s411 + $0x150] sm:$0xff]
      %v4626 = vld [vmem:[%s411 + $0x158] sm:$0xff]
      %v4627 = vld [vmem:[%s411 + $0x168] sm:$0xff]
      %v4628 = vld [vmem:[%s411 + $0x170] sm:$0xff]
      %v4629 = vld [vmem:[%s411 + $0x1] sm:$0xff]
      %v4630 = vld [vmem:[%s411 + $0x9] sm:$0xff]
      %v4631 = vld [vmem:[%s411 + $0x19] sm:$0xff]
      %v4632 = vld [vmem:[%s411 + $0x21] sm:$0xff]
      %v4633 = vld [vmem:[%s411 + $0x31] sm:$0xff]
      %v4634 = vld [vmem:[%s411 + $0x39] sm:$0xff]
      %v4635 = vld [vmem:[%s411 + $0x49] sm:$0xff]
      %v4636 = vld [vmem:[%s411 + $0x51] sm:$0xff]
      %v4637 = vld [vmem:[%s411 + $0x61] sm:$0xff]
      %v4638 = vld [vmem:[%s411 + $0x69] sm:$0xff]
      %v4639 = vld [vmem:[%s411 + $0x79] sm:$0xff]
      %v4640 = vld [vmem:[%s411 + $0x81] sm:$0xff]
      %v4641 = vld [vmem:[%s411 + $0x91] sm:$0xff]
      %v4642 = vld [vmem:[%s411 + $0x99] sm:$0xff]
      %v4643 = vld [vmem:[%s411 + $0xa9] sm:$0xff]
      %v4644 = vld [vmem:[%s411 + $0xb1] sm:$0xff]
      %v4645 = vld [vmem:[%s411 + $0xc1] sm:$0xff]
      %v4646 = vld [vmem:[%s411 + $0xc9] sm:$0xff]
      %v4647 = vld [vmem:[%s411 + $0xd9] sm:$0xff]
      %v4648 = vld [vmem:[%s411 + $0xe1] sm:$0xff]
      %v4649 = vld [vmem:[%s411 + $0xf1] sm:$0xff]
      %v4650 = vld [vmem:[%s411 + $0xf9] sm:$0xff]
      %v4651 = vld [vmem:[%s411 + $0x109] sm:$0xff]
      %v4652 = vld [vmem:[%s411 + $0x111] sm:$0xff]
      %v4653 = vld [vmem:[%s411 + $0x121] sm:$0xff]
      %v4654 = vld [vmem:[%s411 + $0x129] sm:$0xff]
      %v4655 = vld [vmem:[%s411 + $0x139] sm:$0xff]
      %v4656 = vld [vmem:[%s411 + $0x141] sm:$0xff]
      %v4657 = vld [vmem:[%s411 + $0x151] sm:$0xff]
      %v4658 = vld [vmem:[%s411 + $0x159] sm:$0xff]
      %v4659 = vld [vmem:[%s411 + $0x169] sm:$0xff]
      %v4660 = vld [vmem:[%s411 + $0x171] sm:$0xff]
      %v4661 = vld [vmem:[%s411 + $0x2] sm:$0xff]
      %v4662 = vld [vmem:[%s411 + $0xa] sm:$0xff]
      %v4663 = vld [vmem:[%s411 + $0x1a] sm:$0xff]
      %v4664 = vld [vmem:[%s411 + $0x22] sm:$0xff]
      %v4665 = vld [vmem:[%s411 + $0x32] sm:$0xff]
      %v4666 = vld [vmem:[%s411 + $0x3a] sm:$0xff]
      %v4667 = vld [vmem:[%s411 + $0x4a] sm:$0xff]
      %v4668 = vld [vmem:[%s411 + $0x52] sm:$0xff]
      %v4669 = vld [vmem:[%s411 + $0x62] sm:$0xff]
      %v4670 = vld [vmem:[%s411 + $0x6a] sm:$0xff]
      %v4671 = vld [vmem:[%s411 + $0x7a] sm:$0xff]
      %v4672 = vld [vmem:[%s411 + $0x82] sm:$0xff]
      %v4673 = vld [vmem:[%s411 + $0x92] sm:$0xff]
      %v4674 = vld [vmem:[%s411 + $0x9a] sm:$0xff]
      %v4675 = vld [vmem:[%s411 + $0xaa] sm:$0xff]
      %v4676 = vld [vmem:[%s411 + $0xb2] sm:$0xff]
      %v4677 = vld [vmem:[%s411 + $0xc2] sm:$0xff]
      %v4678 = vld [vmem:[%s411 + $0xca] sm:$0xff]
      %v4679 = vld [vmem:[%s411 + $0xda] sm:$0xff]
      %v4680 = vld [vmem:[%s411 + $0xe2] sm:$0xff]
      %v4681 = vld [vmem:[%s411 + $0xf2] sm:$0xff]
      %v4682 = vld [vmem:[%s411 + $0xfa] sm:$0xff]
      %v4683 = vld [vmem:[%s411 + $0x10a] sm:$0xff]
      %v4684 = vld [vmem:[%s411 + $0x112] sm:$0xff]
      %v4685 = vld [vmem:[%s411 + $0x122] sm:$0xff]
      %v4686 = vld [vmem:[%s411 + $0x12a] sm:$0xff]
      %v4687 = vld [vmem:[%s411 + $0x13a] sm:$0xff]
      %v4688 = vld [vmem:[%s411 + $0x142] sm:$0xff]
      %v4689 = vld [vmem:[%s411 + $0x152] sm:$0xff]
      %v4690 = vld [vmem:[%s411 + $0x15a] sm:$0xff]
      %v4691 = vld [vmem:[%s411 + $0x16a] sm:$0xff]
      %v4692 = vld [vmem:[%s411 + $0x172] sm:$0xff]
      %v4693 = vld [vmem:[%s637] sm:$0xff]
      %v4694 = vld [vmem:[%s637 + $0x8] sm:$0xff]
      %v4695 = vld [vmem:[%s637 + $0x18] sm:$0xff]
      %v4696 = vld [vmem:[%s637 + $0x20] sm:$0xff]
      %v4697 = vld [vmem:[%s637 + $0x30] sm:$0xff]
      %v4698 = vld [vmem:[%s637 + $0x38] sm:$0xff]
      %v4699 = vld [vmem:[%s637 + $0x48] sm:$0xff]
      %v4700 = vld [vmem:[%s637 + $0x50] sm:$0xff]
      %v4701 = vld [vmem:[%s637 + $0x60] sm:$0xff]
      %v4702 = vld [vmem:[%s637 + $0x68] sm:$0xff]
      %v4703 = vld [vmem:[%s637 + $0x78] sm:$0xff]
      %v4704 = vld [vmem:[%s637 + $0x80] sm:$0xff]
      %v4705 = vld [vmem:[%s637 + $0x90] sm:$0xff]
      %v4706 = vld [vmem:[%s637 + $0x98] sm:$0xff]
      %v4707 = vld [vmem:[%s637 + $0xa8] sm:$0xff]
      %v4708 = vld [vmem:[%s637 + $0xb0] sm:$0xff]
      %v4709 = vld [vmem:[%s637 + $0xc0] sm:$0xff]
      %v4710 = vld [vmem:[%s637 + $0xc8] sm:$0xff]
      %v4711 = vld [vmem:[%s637 + $0xd8] sm:$0xff]
      %v4712 = vld [vmem:[%s637 + $0xe0] sm:$0xff]
      %v4713 = vld [vmem:[%s637 + $0xf0] sm:$0xff]
      %v4714 = vld [vmem:[%s637 + $0xf8] sm:$0xff]
      %v4715 = vld [vmem:[%s637 + $0x108] sm:$0xff]
      %v4716 = vld [vmem:[%s637 + $0x110] sm:$0xff]
      %v4717 = vld [vmem:[%s637 + $0x120] sm:$0xff]
      %v4718 = vld [vmem:[%s637 + $0x128] sm:$0xff]
      %v4719 = vld [vmem:[%s637 + $0x138] sm:$0xff]
      %v4720 = vld [vmem:[%s637 + $0x140] sm:$0xff]
      %v4721 = vld [vmem:[%s637 + $0x150] sm:$0xff]
      %v4722 = vld [vmem:[%s637 + $0x158] sm:$0xff]
      %v4723 = vld [vmem:[%s637 + $0x168] sm:$0xff]
      %v4724 = vld [vmem:[%s637 + $0x170] sm:$0xff]
      %v4725 = vld [vmem:[%s637 + $0x1] sm:$0xff]
      %v4726 = vld [vmem:[%s637 + $0x9] sm:$0xff]
      %v4727 = vld [vmem:[%s637 + $0x19] sm:$0xff]
      %v4728 = vld [vmem:[%s637 + $0x21] sm:$0xff]
      %v4729 = vld [vmem:[%s637 + $0x31] sm:$0xff]
      %v4730 = vld [vmem:[%s637 + $0x39] sm:$0xff]
      %v4731 = vld [vmem:[%s637 + $0x49] sm:$0xff]
      %v4732 = vld [vmem:[%s637 + $0x51] sm:$0xff]
      %v4733 = vld [vmem:[%s637 + $0x61] sm:$0xff]
      %v4734 = vld [vmem:[%s637 + $0x69] sm:$0xff]
      %v4735 = vld [vmem:[%s637 + $0x79] sm:$0xff]
      %v4736 = vld [vmem:[%s637 + $0x81] sm:$0xff]
      %v4737 = vld [vmem:[%s637 + $0x91] sm:$0xff]
      %v4738 = vld [vmem:[%s637 + $0x99] sm:$0xff]
      %v4739 = vld [vmem:[%s637 + $0xa9] sm:$0xff]
      %v4740 = vld [vmem:[%s637 + $0xb1] sm:$0xff]
      %v4741 = vld [vmem:[%s637 + $0xc1] sm:$0xff]
      %v4742 = vld [vmem:[%s637 + $0xc9] sm:$0xff]
      %v4743 = vld [vmem:[%s637 + $0xd9] sm:$0xff]
      %v4744 = vld [vmem:[%s637 + $0xe1] sm:$0xff]
      %v4745 = vld [vmem:[%s637 + $0xf1] sm:$0xff]
      %v4746 = vld [vmem:[%s637 + $0xf9] sm:$0xff]
      %v4747 = vld [vmem:[%s637 + $0x109] sm:$0xff]
      %v4748 = vld [vmem:[%s637 + $0x111] sm:$0xff]
      %v4749 = vld [vmem:[%s637 + $0x121] sm:$0xff]
      %v4750 = vld [vmem:[%s637 + $0x129] sm:$0xff]
      %v4751 = vld [vmem:[%s637 + $0x139] sm:$0xff]
      %v4752 = vld [vmem:[%s637 + $0x141] sm:$0xff]
      %v4753 = vld [vmem:[%s637 + $0x151] sm:$0xff]
      %v4754 = vld [vmem:[%s637 + $0x159] sm:$0xff]
      %v4755 = vld [vmem:[%s637 + $0x169] sm:$0xff]
      %v4756 = vld [vmem:[%s637 + $0x171] sm:$0xff]
      %v4757 = vld [vmem:[%s637 + $0x2] sm:$0xff]
      %v4758 = vld [vmem:[%s637 + $0xa] sm:$0xff]
      %v4759 = vld [vmem:[%s637 + $0x1a] sm:$0xff]
      %v4760 = vld [vmem:[%s637 + $0x22] sm:$0xff]
      %v4761 = vld [vmem:[%s637 + $0x32] sm:$0xff]
      %v4762 = vld [vmem:[%s637 + $0x3a] sm:$0xff]
      %v4763 = vld [vmem:[%s637 + $0x4a] sm:$0xff]
      %v4764 = vld [vmem:[%s637 + $0x52] sm:$0xff]
      %v4765 = vld [vmem:[%s637 + $0x62] sm:$0xff]
      %v4766 = vld [vmem:[%s637 + $0x6a] sm:$0xff]
      %v4767 = vld [vmem:[%s637 + $0x7a] sm:$0xff]
      %v4768 = vld [vmem:[%s637 + $0x82] sm:$0xff]
      %v4769 = vld [vmem:[%s637 + $0x92] sm:$0xff]
      %v4770 = vld [vmem:[%s637 + $0x9a] sm:$0xff]
      %v4771 = vld [vmem:[%s637 + $0xaa] sm:$0xff]
      %v4772 = vld [vmem:[%s637 + $0xb2] sm:$0xff]
      %v4773 = vld [vmem:[%s637 + $0xc2] sm:$0xff]
      %v4774 = vld [vmem:[%s637 + $0xca] sm:$0xff]
      %v4775 = vld [vmem:[%s637 + $0xda] sm:$0xff]
      %v4776 = vld [vmem:[%s637 + $0xe2] sm:$0xff]
      %v4777 = vld [vmem:[%s637 + $0xf2] sm:$0xff]
      %v4778 = vld [vmem:[%s637 + $0xfa] sm:$0xff]
      %v4779 = vld [vmem:[%s637 + $0x10a] sm:$0xff]
      %v4780 = vld [vmem:[%s637 + $0x112] sm:$0xff]
      %v4781 = vld [vmem:[%s637 + $0x122] sm:$0xff]
      %v4782 = vld [vmem:[%s637 + $0x12a] sm:$0xff]
      %v4783 = vld [vmem:[%s637 + $0x13a] sm:$0xff]
      %v4784 = vld [vmem:[%s637 + $0x142] sm:$0xff]
      %v4785 = vld [vmem:[%s637 + $0x152] sm:$0xff]
      %v4786 = vld [vmem:[%s637 + $0x15a] sm:$0xff]
      %v4787 = vld [vmem:[%s637 + $0x16a] sm:$0xff]
      %v4788 = vld [vmem:[%s637 + $0x172] sm:$0xff]
      %4821 = vrot.lane.b32.xlu0 %v4533, 24
      %v4822 = vpop.permute.xlu0 %4821
      %4823 = vrot.lane.b32.xlu0 %v4534, 24
      %v4824 = vpop.permute.xlu0 %4823
      %4825 = vrot.lane.b32.xlu0 %v4535, 24
      %v4826 = vpop.permute.xlu0 %4825
      %4827 = vrot.lane.b32.xlu0 %v4536, 24
      %v4828 = vpop.permute.xlu0 %4827
      %4829 = vrot.lane.b32.xlu0 %v4537, 24
      %v4830 = vpop.permute.xlu0 %4829
      %4831 = vrot.lane.b32.xlu0 %v4538, 24
      %v4832 = vpop.permute.xlu0 %4831
      %4833 = vrot.lane.b32.xlu0 %v4539, 24
      %v4834 = vpop.permute.xlu0 %4833
      %4835 = vrot.lane.b32.xlu0 %v4540, 24
      %v4836 = vpop.permute.xlu0 %4835
      %4837 = vrot.lane.b32.xlu0 %v4541, 24
      %v4838 = vpop.permute.xlu0 %4837
      %4839 = vrot.lane.b32.xlu0 %v4542, 24
      %v4840 = vpop.permute.xlu0 %4839
      %4841 = vrot.lane.b32.xlu0 %v4543, 24
      %v4842 = vpop.permute.xlu0 %4841
      %4843 = vrot.lane.b32.xlu0 %v4544, 24
      %v4844 = vpop.permute.xlu0 %4843
      %4845 = vrot.lane.b32.xlu0 %v4545, 24
      %v4846 = vpop.permute.xlu0 %4845
      %4847 = vrot.lane.b32.xlu0 %v4546, 24
      %v4848 = vpop.permute.xlu0 %4847
      %4849 = vrot.lane.b32.xlu0 %v4547, 24
      %v4850 = vpop.permute.xlu0 %4849
      %4851 = vrot.lane.b32.xlu0 %v4548, 24
      %v4852 = vpop.permute.xlu0 %4851
      %4853 = vrot.lane.b32.xlu0 %v4549, 24
      %v4854 = vpop.permute.xlu0 %4853
      %4855 = vrot.lane.b32.xlu0 %v4550, 24
      %v4856 = vpop.permute.xlu0 %4855
      %4857 = vrot.lane.b32.xlu0 %v4551, 24
      %v4858 = vpop.permute.xlu0 %4857
      %4859 = vrot.lane.b32.xlu0 %v4552, 24
      %v4860 = vpop.permute.xlu0 %4859
      %4861 = vrot.lane.b32.xlu0 %v4553, 24
      %v4862 = vpop.permute.xlu0 %4861
      %4863 = vrot.lane.b32.xlu0 %v4554, 24
      %v4864 = vpop.permute.xlu0 %4863
      %4865 = vrot.lane.b32.xlu0 %v4555, 24
      %v4866 = vpop.permute.xlu0 %4865
      %4867 = vrot.lane.b32.xlu0 %v4556, 24
      %v4868 = vpop.permute.xlu0 %4867
      %4869 = vrot.lane.b32.xlu0 %v4557, 24
      %v4870 = vpop.permute.xlu0 %4869
      %4871 = vrot.lane.b32.xlu0 %v4558, 24
      %v4872 = vpop.permute.xlu0 %4871
      %4873 = vrot.lane.b32.xlu0 %v4559, 24
      %v4874 = vpop.permute.xlu0 %4873
      %4875 = vrot.lane.b32.xlu0 %v4560, 24
      %v4876 = vpop.permute.xlu0 %4875
      %4877 = vrot.lane.b32.xlu0 %v4561, 24
      %v4878 = vpop.permute.xlu0 %4877
      %4879 = vrot.lane.b32.xlu0 %v4562, 24
      %v4880 = vpop.permute.xlu0 %4879
      %4881 = vrot.lane.b32.xlu0 %v4563, 24
      %v4882 = vpop.permute.xlu0 %4881
      %4883 = vrot.lane.b32.xlu0 %v4564, 24
      %v4884 = vpop.permute.xlu0 %4883
      %4949 = vrot.lane.b32.xlu0 %v4565, 48
      %v4950 = vpop.permute.xlu0 %4949
      %4951 = vrot.lane.b32.xlu0 %v4566, 48
      %v4952 = vpop.permute.xlu0 %4951
      %4953 = vrot.lane.b32.xlu0 %v4567, 48
      %v4954 = vpop.permute.xlu0 %4953
      %4955 = vrot.lane.b32.xlu0 %v4568, 48
      %v4956 = vpop.permute.xlu0 %4955
      %4957 = vrot.lane.b32.xlu0 %v4569, 48
      %v4958 = vpop.permute.xlu0 %4957
      %4959 = vrot.lane.b32.xlu0 %v4570, 48
      %v4960 = vpop.permute.xlu0 %4959
      %4961 = vrot.lane.b32.xlu0 %v4571, 48
      %v4962 = vpop.permute.xlu0 %4961
      %4963 = vrot.lane.b32.xlu0 %v4572, 48
      %v4964 = vpop.permute.xlu0 %4963
      %4965 = vrot.lane.b32.xlu0 %v4573, 48
      %v4966 = vpop.permute.xlu0 %4965
      %4967 = vrot.lane.b32.xlu0 %v4574, 48
      %v4968 = vpop.permute.xlu0 %4967
      %4969 = vrot.lane.b32.xlu0 %v4575, 48
      %v4970 = vpop.permute.xlu0 %4969
      %4971 = vrot.lane.b32.xlu0 %v4576, 48
      %v4972 = vpop.permute.xlu0 %4971
      %4973 = vrot.lane.b32.xlu0 %v4577, 48
      %v4974 = vpop.permute.xlu0 %4973
      %4975 = vrot.lane.b32.xlu0 %v4578, 48
      %v4976 = vpop.permute.xlu0 %4975
      %4977 = vrot.lane.b32.xlu0 %v4579, 48
      %v4978 = vpop.permute.xlu0 %4977
      %4979 = vrot.lane.b32.xlu0 %v4580, 48
      %v4980 = vpop.permute.xlu0 %4979
      %4981 = vrot.lane.b32.xlu0 %v4581, 48
      %v4982 = vpop.permute.xlu0 %4981
      %4983 = vrot.lane.b32.xlu0 %v4582, 48
      %v4984 = vpop.permute.xlu0 %4983
      %4985 = vrot.lane.b32.xlu0 %v4583, 48
      %v4986 = vpop.permute.xlu0 %4985
      %4987 = vrot.lane.b32.xlu0 %v4584, 48
      %v4988 = vpop.permute.xlu0 %4987
      %4989 = vrot.lane.b32.xlu0 %v4585, 48
      %v4990 = vpop.permute.xlu0 %4989
      %4991 = vrot.lane.b32.xlu0 %v4586, 48
      %v4992 = vpop.permute.xlu0 %4991
      %4993 = vrot.lane.b32.xlu0 %v4587, 48
      %v4994 = vpop.permute.xlu0 %4993
      %4995 = vrot.lane.b32.xlu0 %v4588, 48
      %v4996 = vpop.permute.xlu0 %4995
      %4997 = vrot.lane.b32.xlu0 %v4589, 48
      %v4998 = vpop.permute.xlu0 %4997
      %4999 = vrot.lane.b32.xlu0 %v4590, 48
      %v5000 = vpop.permute.xlu0 %4999
      %5001 = vrot.lane.b32.xlu0 %v4591, 48
      %v5002 = vpop.permute.xlu0 %5001
      %5003 = vrot.lane.b32.xlu0 %v4592, 48
      %v5004 = vpop.permute.xlu0 %5003
      %5005 = vrot.lane.b32.xlu0 %v4593, 48
      %v5006 = vpop.permute.xlu0 %5005
      %5007 = vrot.lane.b32.xlu0 %v4594, 48
      %v5008 = vpop.permute.xlu0 %5007
      %5009 = vrot.lane.b32.xlu0 %v4595, 48
      %v5010 = vpop.permute.xlu0 %5009
      %5011 = vrot.lane.b32.xlu0 %v4596, 48
      %v5012 = vpop.permute.xlu0 %5011
      %5077 = vrot.lane.b32.xlu0 %v4597, 72
      %v5078 = vpop.permute.xlu0 %5077
      %5079 = vrot.lane.b32.xlu0 %v4598, 72
      %v5080 = vpop.permute.xlu0 %5079
      %5081 = vrot.lane.b32.xlu0 %v4599, 72
      %v5082 = vpop.permute.xlu0 %5081
      %5083 = vrot.lane.b32.xlu0 %v4600, 72
      %v5084 = vpop.permute.xlu0 %5083
      %5085 = vrot.lane.b32.xlu0 %v4601, 72
      %v5086 = vpop.permute.xlu0 %5085
      %5087 = vrot.lane.b32.xlu0 %v4602, 72
      %v5088 = vpop.permute.xlu0 %5087
      %5089 = vrot.lane.b32.xlu0 %v4603, 72
      %v5090 = vpop.permute.xlu0 %5089
      %5091 = vrot.lane.b32.xlu0 %v4604, 72
      %v5092 = vpop.permute.xlu0 %5091
      %5093 = vrot.lane.b32.xlu0 %v4605, 72
      %v5094 = vpop.permute.xlu0 %5093
      %5095 = vrot.lane.b32.xlu0 %v4606, 72
      %v5096 = vpop.permute.xlu0 %5095
      %5097 = vrot.lane.b32.xlu0 %v4607, 72
      %v5098 = vpop.permute.xlu0 %5097
      %5099 = vrot.lane.b32.xlu0 %v4608, 72
      %v5100 = vpop.permute.xlu0 %5099
      %5101 = vrot.lane.b32.xlu0 %v4609, 72
      %v5102 = vpop.permute.xlu0 %5101
      %5103 = vrot.lane.b32.xlu0 %v4610, 72
      %v5104 = vpop.permute.xlu0 %5103
      %5105 = vrot.lane.b32.xlu0 %v4611, 72
      %v5106 = vpop.permute.xlu0 %5105
      %5107 = vrot.lane.b32.xlu0 %v4612, 72
      %v5108 = vpop.permute.xlu0 %5107
      %5109 = vrot.lane.b32.xlu0 %v4613, 72
      %v5110 = vpop.permute.xlu0 %5109
      %5111 = vrot.lane.b32.xlu0 %v4614, 72
      %v5112 = vpop.permute.xlu0 %5111
      %5113 = vrot.lane.b32.xlu0 %v4615, 72
      %v5114 = vpop.permute.xlu0 %5113
      %5115 = vrot.lane.b32.xlu0 %v4616, 72
      %v5116 = vpop.permute.xlu0 %5115
      %5117 = vrot.lane.b32.xlu0 %v4617, 72
      %v5118 = vpop.permute.xlu0 %5117
      %5119 = vrot.lane.b32.xlu0 %v4618, 72
      %v5120 = vpop.permute.xlu0 %5119
      %5121 = vrot.lane.b32.xlu0 %v4619, 72
      %v5122 = vpop.permute.xlu0 %5121
      %5123 = vrot.lane.b32.xlu0 %v4620, 72
      %v5124 = vpop.permute.xlu0 %5123
      %5125 = vrot.lane.b32.xlu0 %v4621, 72
      %v5126 = vpop.permute.xlu0 %5125
      %5127 = vrot.lane.b32.xlu0 %v4622, 72
      %v5128 = vpop.permute.xlu0 %5127
      %5129 = vrot.lane.b32.xlu0 %v4623, 72
      %v5130 = vpop.permute.xlu0 %5129
      %5131 = vrot.lane.b32.xlu0 %v4624, 72
      %v5132 = vpop.permute.xlu0 %5131
      %5133 = vrot.lane.b32.xlu0 %v4625, 72
      %v5134 = vpop.permute.xlu0 %5133
      %5135 = vrot.lane.b32.xlu0 %v4626, 72
      %v5136 = vpop.permute.xlu0 %5135
      %5137 = vrot.lane.b32.xlu0 %v4627, 72
      %v5138 = vpop.permute.xlu0 %5137
      %5139 = vrot.lane.b32.xlu0 %v4628, 72
      %v5140 = vpop.permute.xlu0 %5139
      %5205 = vrot.lane.b32.xlu0 %v4629, 96
      %v5206 = vpop.permute.xlu0 %5205
      %5207 = vrot.lane.b32.xlu0 %v4630, 96
      %v5208 = vpop.permute.xlu0 %5207
      %5209 = vrot.lane.b32.xlu0 %v4631, 96
      %v5210 = vpop.permute.xlu0 %5209
      %5211 = vrot.lane.b32.xlu0 %v4632, 96
      %v5212 = vpop.permute.xlu0 %5211
      %5213 = vrot.lane.b32.xlu0 %v4633, 96
      %v5214 = vpop.permute.xlu0 %5213
      %5215 = vrot.lane.b32.xlu0 %v4634, 96
      %v5216 = vpop.permute.xlu0 %5215
      %5217 = vrot.lane.b32.xlu0 %v4635, 96
      %v5218 = vpop.permute.xlu0 %5217
      %5219 = vrot.lane.b32.xlu0 %v4636, 96
      %v5220 = vpop.permute.xlu0 %5219
      %5221 = vrot.lane.b32.xlu0 %v4637, 96
      %v5222 = vpop.permute.xlu0 %5221
      %5223 = vrot.lane.b32.xlu0 %v4638, 96
      %v5224 = vpop.permute.xlu0 %5223
      %5225 = vrot.lane.b32.xlu0 %v4639, 96
      %v5226 = vpop.permute.xlu0 %5225
      %5227 = vrot.lane.b32.xlu0 %v4640, 96
      %v5228 = vpop.permute.xlu0 %5227
      %5229 = vrot.lane.b32.xlu0 %v4641, 96
      %v5230 = vpop.permute.xlu0 %5229
      %5231 = vrot.lane.b32.xlu0 %v4642, 96
      %v5232 = vpop.permute.xlu0 %5231
      %5233 = vrot.lane.b32.xlu0 %v4643, 96
      %v5234 = vpop.permute.xlu0 %5233
      %5235 = vrot.lane.b32.xlu0 %v4644, 96
      %v5236 = vpop.permute.xlu0 %5235
      %5237 = vrot.lane.b32.xlu0 %v4645, 96
      %v5238 = vpop.permute.xlu0 %5237
      %5239 = vrot.lane.b32.xlu0 %v4646, 96
      %v5240 = vpop.permute.xlu0 %5239
      %5241 = vrot.lane.b32.xlu0 %v4647, 96
      %v5242 = vpop.permute.xlu0 %5241
      %5243 = vrot.lane.b32.xlu0 %v4648, 96
      %v5244 = vpop.permute.xlu0 %5243
      %5245 = vrot.lane.b32.xlu0 %v4649, 96
      %v5246 = vpop.permute.xlu0 %5245
      %5247 = vrot.lane.b32.xlu0 %v4650, 96
      %v5248 = vpop.permute.xlu0 %5247
      %5249 = vrot.lane.b32.xlu0 %v4651, 96
      %v5250 = vpop.permute.xlu0 %5249
      %5251 = vrot.lane.b32.xlu0 %v4652, 96
      %v5252 = vpop.permute.xlu0 %5251
      %5253 = vrot.lane.b32.xlu0 %v4653, 96
      %v5254 = vpop.permute.xlu0 %5253
      %5255 = vrot.lane.b32.xlu0 %v4654, 96
      %v5256 = vpop.permute.xlu0 %5255
      %5257 = vrot.lane.b32.xlu0 %v4655, 96
      %v5258 = vpop.permute.xlu0 %5257
      %5259 = vrot.lane.b32.xlu0 %v4656, 96
      %v5260 = vpop.permute.xlu0 %5259
      %5261 = vrot.lane.b32.xlu0 %v4657, 96
      %v5262 = vpop.permute.xlu0 %5261
      %5263 = vrot.lane.b32.xlu0 %v4658, 96
      %v5264 = vpop.permute.xlu0 %5263
      %5265 = vrot.lane.b32.xlu0 %v4659, 96
      %v5266 = vpop.permute.xlu0 %5265
      %5267 = vrot.lane.b32.xlu0 %v4660, 96
      %v5268 = vpop.permute.xlu0 %5267
      %5333 = vrot.lane.b32.xlu0 %v4661, 120
      %v5334 = vpop.permute.xlu0 %5333
      %5335 = vrot.lane.b32.xlu0 %v4662, 120
      %v5336 = vpop.permute.xlu0 %5335
      %5337 = vrot.lane.b32.xlu0 %v4663, 120
      %v5338 = vpop.permute.xlu0 %5337
      %5339 = vrot.lane.b32.xlu0 %v4664, 120
      %v5340 = vpop.permute.xlu0 %5339
      %5341 = vrot.lane.b32.xlu0 %v4665, 120
      %v5342 = vpop.permute.xlu0 %5341
      %5343 = vrot.lane.b32.xlu0 %v4666, 120
      %v5344 = vpop.permute.xlu0 %5343
      %5345 = vrot.lane.b32.xlu0 %v4667, 120
      %v5346 = vpop.permute.xlu0 %5345
      %5347 = vrot.lane.b32.xlu0 %v4668, 120
      %v5348 = vpop.permute.xlu0 %5347
      %5349 = vrot.lane.b32.xlu0 %v4669, 120
      %v5350 = vpop.permute.xlu0 %5349
      %5351 = vrot.lane.b32.xlu0 %v4670, 120
      %v5352 = vpop.permute.xlu0 %5351
      %5353 = vrot.lane.b32.xlu0 %v4671, 120
      %v5354 = vpop.permute.xlu0 %5353
      %5355 = vrot.lane.b32.xlu0 %v4672, 120
      %v5356 = vpop.permute.xlu0 %5355
      %5357 = vrot.lane.b32.xlu0 %v4673, 120
      %v5358 = vpop.permute.xlu0 %5357
      %5359 = vrot.lane.b32.xlu0 %v4674, 120
      %v5360 = vpop.permute.xlu0 %5359
      %5361 = vrot.lane.b32.xlu0 %v4675, 120
      %v5362 = vpop.permute.xlu0 %5361
      %5363 = vrot.lane.b32.xlu0 %v4676, 120
      %v5364 = vpop.permute.xlu0 %5363
      %5365 = vrot.lane.b32.xlu0 %v4677, 120
      %v5366 = vpop.permute.xlu0 %5365
      %5367 = vrot.lane.b32.xlu0 %v4678, 120
      %v5368 = vpop.permute.xlu0 %5367
      %5369 = vrot.lane.b32.xlu0 %v4679, 120
      %v5370 = vpop.permute.xlu0 %5369
      %5371 = vrot.lane.b32.xlu0 %v4680, 120
      %v5372 = vpop.permute.xlu0 %5371
      %5373 = vrot.lane.b32.xlu0 %v4681, 120
      %v5374 = vpop.permute.xlu0 %5373
      %5375 = vrot.lane.b32.xlu0 %v4682, 120
      %v5376 = vpop.permute.xlu0 %5375
      %5377 = vrot.lane.b32.xlu0 %v4683, 120
      %v5378 = vpop.permute.xlu0 %5377
      %5379 = vrot.lane.b32.xlu0 %v4684, 120
      %v5380 = vpop.permute.xlu0 %5379
      %5381 = vrot.lane.b32.xlu0 %v4685, 120
      %v5382 = vpop.permute.xlu0 %5381
      %5383 = vrot.lane.b32.xlu0 %v4686, 120
      %v5384 = vpop.permute.xlu0 %5383
      %5385 = vrot.lane.b32.xlu0 %v4687, 120
      %v5386 = vpop.permute.xlu0 %5385
      %5387 = vrot.lane.b32.xlu0 %v4688, 120
      %v5388 = vpop.permute.xlu0 %5387
      %5389 = vrot.lane.b32.xlu0 %v4689, 120
      %v5390 = vpop.permute.xlu0 %5389
      %5391 = vrot.lane.b32.xlu0 %v4690, 120
      %v5392 = vpop.permute.xlu0 %5391
      %5393 = vrot.lane.b32.xlu0 %v4691, 120
      %v5394 = vpop.permute.xlu0 %5393
      %5395 = vrot.lane.b32.xlu0 %v4692, 120
      %v5396 = vpop.permute.xlu0 %5395
      %5461 = vrot.lane.b32.xlu0 %v4693, 16
      %v5462 = vpop.permute.xlu0 %5461
      %5463 = vrot.lane.b32.xlu0 %v4694, 16
      %v5464 = vpop.permute.xlu0 %5463
      %5465 = vrot.lane.b32.xlu0 %v4695, 16
      %v5466 = vpop.permute.xlu0 %5465
      %5467 = vrot.lane.b32.xlu0 %v4696, 16
      %v5468 = vpop.permute.xlu0 %5467
      %5469 = vrot.lane.b32.xlu0 %v4697, 16
      %v5470 = vpop.permute.xlu0 %5469
      %5471 = vrot.lane.b32.xlu0 %v4698, 16
      %v5472 = vpop.permute.xlu0 %5471
      %5473 = vrot.lane.b32.xlu0 %v4699, 16
      %v5474 = vpop.permute.xlu0 %5473
      %5475 = vrot.lane.b32.xlu0 %v4700, 16
      %v5476 = vpop.permute.xlu0 %5475
      %5477 = vrot.lane.b32.xlu0 %v4701, 16
      %v5478 = vpop.permute.xlu0 %5477
      %5479 = vrot.lane.b32.xlu0 %v4702, 16
      %v5480 = vpop.permute.xlu0 %5479
      %5481 = vrot.lane.b32.xlu0 %v4703, 16
      %v5482 = vpop.permute.xlu0 %5481
      %5483 = vrot.lane.b32.xlu0 %v4704, 16
      %v5484 = vpop.permute.xlu0 %5483
      %5485 = vrot.lane.b32.xlu0 %v4705, 16
      %v5486 = vpop.permute.xlu0 %5485
      %5487 = vrot.lane.b32.xlu0 %v4706, 16
      %v5488 = vpop.permute.xlu0 %5487
      %5489 = vrot.lane.b32.xlu0 %v4707, 16
      %v5490 = vpop.permute.xlu0 %5489
      %5491 = vrot.lane.b32.xlu0 %v4708, 16
      %v5492 = vpop.permute.xlu0 %5491
      %5493 = vrot.lane.b32.xlu0 %v4709, 16
      %v5494 = vpop.permute.xlu0 %5493
      %5495 = vrot.lane.b32.xlu0 %v4710, 16
      %v5496 = vpop.permute.xlu0 %5495
      %5497 = vrot.lane.b32.xlu0 %v4711, 16
      %v5498 = vpop.permute.xlu0 %5497
      %5499 = vrot.lane.b32.xlu0 %v4712, 16
      %v5500 = vpop.permute.xlu0 %5499
      %5501 = vrot.lane.b32.xlu0 %v4713, 16
      %v5502 = vpop.permute.xlu0 %5501
      %5503 = vrot.lane.b32.xlu0 %v4714, 16
      %v5504 = vpop.permute.xlu0 %5503
      %5505 = vrot.lane.b32.xlu0 %v4715, 16
      %v5506 = vpop.permute.xlu0 %5505
      %5507 = vrot.lane.b32.xlu0 %v4716, 16
      %v5508 = vpop.permute.xlu0 %5507
      %5509 = vrot.lane.b32.xlu0 %v4717, 16
      %v5510 = vpop.permute.xlu0 %5509
      %5511 = vrot.lane.b32.xlu0 %v4718, 16
      %v5512 = vpop.permute.xlu0 %5511
      %5513 = vrot.lane.b32.xlu0 %v4719, 16
      %v5514 = vpop.permute.xlu0 %5513
      %5515 = vrot.lane.b32.xlu0 %v4720, 16
      %v5516 = vpop.permute.xlu0 %5515
      %5517 = vrot.lane.b32.xlu0 %v4721, 16
      %v5518 = vpop.permute.xlu0 %5517
      %5519 = vrot.lane.b32.xlu0 %v4722, 16
      %v5520 = vpop.permute.xlu0 %5519
      %5521 = vrot.lane.b32.xlu0 %v4723, 16
      %v5522 = vpop.permute.xlu0 %5521
      %5523 = vrot.lane.b32.xlu0 %v4724, 16
      %v5524 = vpop.permute.xlu0 %5523
      %5589 = vrot.lane.b32.xlu0 %v4725, 40
      %v5590 = vpop.permute.xlu0 %5589
      %5591 = vrot.lane.b32.xlu0 %v4726, 40
      %v5592 = vpop.permute.xlu0 %5591
      %5593 = vrot.lane.b32.xlu0 %v4727, 40
      %v5594 = vpop.permute.xlu0 %5593
      %5595 = vrot.lane.b32.xlu0 %v4728, 40
      %v5596 = vpop.permute.xlu0 %5595
      %5597 = vrot.lane.b32.xlu0 %v4729, 40
      %v5598 = vpop.permute.xlu0 %5597
      %5599 = vrot.lane.b32.xlu0 %v4730, 40
      %v5600 = vpop.permute.xlu0 %5599
      %5601 = vrot.lane.b32.xlu0 %v4731, 40
      %v5602 = vpop.permute.xlu0 %5601
      %5603 = vrot.lane.b32.xlu0 %v4732, 40
      %v5604 = vpop.permute.xlu0 %5603
      %5605 = vrot.lane.b32.xlu0 %v4733, 40
      %v5606 = vpop.permute.xlu0 %5605
      %5607 = vrot.lane.b32.xlu0 %v4734, 40
      %v5608 = vpop.permute.xlu0 %5607
      %5609 = vrot.lane.b32.xlu0 %v4735, 40
      %v5610 = vpop.permute.xlu0 %5609
      %5611 = vrot.lane.b32.xlu0 %v4736, 40
      %v5612 = vpop.permute.xlu0 %5611
      %5613 = vrot.lane.b32.xlu0 %v4737, 40
      %v5614 = vpop.permute.xlu0 %5613
      %5615 = vrot.lane.b32.xlu0 %v4738, 40
      %v5616 = vpop.permute.xlu0 %5615
      %5617 = vrot.lane.b32.xlu0 %v4739, 40
      %v5618 = vpop.permute.xlu0 %5617
      %5619 = vrot.lane.b32.xlu0 %v4740, 40
      %v5620 = vpop.permute.xlu0 %5619
      %5621 = vrot.lane.b32.xlu0 %v4741, 40
      %v5622 = vpop.permute.xlu0 %5621
      %5623 = vrot.lane.b32.xlu0 %v4742, 40
      %v5624 = vpop.permute.xlu0 %5623
      %5625 = vrot.lane.b32.xlu0 %v4743, 40
      %v5626 = vpop.permute.xlu0 %5625
      %5627 = vrot.lane.b32.xlu0 %v4744, 40
      %v5628 = vpop.permute.xlu0 %5627
      %5629 = vrot.lane.b32.xlu0 %v4745, 40
      %v5630 = vpop.permute.xlu0 %5629
      %5631 = vrot.lane.b32.xlu0 %v4746, 40
      %v5632 = vpop.permute.xlu0 %5631
      %5633 = vrot.lane.b32.xlu0 %v4747, 40
      %v5634 = vpop.permute.xlu0 %5633
      %5635 = vrot.lane.b32.xlu0 %v4748, 40
      %v5636 = vpop.permute.xlu0 %5635
      %5637 = vrot.lane.b32.xlu0 %v4749, 40
      %v5638 = vpop.permute.xlu0 %5637
      %5639 = vrot.lane.b32.xlu0 %v4750, 40
      %v5640 = vpop.permute.xlu0 %5639
      %5641 = vrot.lane.b32.xlu0 %v4751, 40
      %v5642 = vpop.permute.xlu0 %5641
      %5643 = vrot.lane.b32.xlu0 %v4752, 40
      %v5644 = vpop.permute.xlu0 %5643
      %5645 = vrot.lane.b32.xlu0 %v4753, 40
      %v5646 = vpop.permute.xlu0 %5645
      %5647 = vrot.lane.b32.xlu0 %v4754, 40
      %v5648 = vpop.permute.xlu0 %5647
      %5649 = vrot.lane.b32.xlu0 %v4755, 40
      %v5650 = vpop.permute.xlu0 %5649
      %5651 = vrot.lane.b32.xlu0 %v4756, 40
      %v5652 = vpop.permute.xlu0 %5651
      %5717 = vrot.lane.b32.xlu0 %v4757, 64
      %v5718 = vpop.permute.xlu0 %5717
      %5719 = vrot.lane.b32.xlu0 %v4758, 64
      %v5720 = vpop.permute.xlu0 %5719
      %5721 = vrot.lane.b32.xlu0 %v4759, 64
      %v5722 = vpop.permute.xlu0 %5721
      %5723 = vrot.lane.b32.xlu0 %v4760, 64
      %v5724 = vpop.permute.xlu0 %5723
      %5725 = vrot.lane.b32.xlu0 %v4761, 64
      %v5726 = vpop.permute.xlu0 %5725
      %5727 = vrot.lane.b32.xlu0 %v4762, 64
      %v5728 = vpop.permute.xlu0 %5727
      %5729 = vrot.lane.b32.xlu0 %v4763, 64
      %v5730 = vpop.permute.xlu0 %5729
      %5731 = vrot.lane.b32.xlu0 %v4764, 64
      %v5732 = vpop.permute.xlu0 %5731
      %5733 = vrot.lane.b32.xlu0 %v4765, 64
      %v5734 = vpop.permute.xlu0 %5733
      %5735 = vrot.lane.b32.xlu0 %v4766, 64
      %v5736 = vpop.permute.xlu0 %5735
      %5737 = vrot.lane.b32.xlu0 %v4767, 64
      %v5738 = vpop.permute.xlu0 %5737
      %5739 = vrot.lane.b32.xlu0 %v4768, 64
      %v5740 = vpop.permute.xlu0 %5739
      %5741 = vrot.lane.b32.xlu0 %v4769, 64
      %v5742 = vpop.permute.xlu0 %5741
      %5743 = vrot.lane.b32.xlu0 %v4770, 64
      %v5744 = vpop.permute.xlu0 %5743
      %5745 = vrot.lane.b32.xlu0 %v4771, 64
      %v5746 = vpop.permute.xlu0 %5745
      %5747 = vrot.lane.b32.xlu0 %v4772, 64
      %v5748 = vpop.permute.xlu0 %5747
      %5749 = vrot.lane.b32.xlu0 %v4773, 64
      %v5750 = vpop.permute.xlu0 %5749
      %5751 = vrot.lane.b32.xlu0 %v4774, 64
      %v5752 = vpop.permute.xlu0 %5751
      %5753 = vrot.lane.b32.xlu0 %v4775, 64
      %v5754 = vpop.permute.xlu0 %5753
      %5755 = vrot.lane.b32.xlu0 %v4776, 64
      %v5756 = vpop.permute.xlu0 %5755
      %5757 = vrot.lane.b32.xlu0 %v4777, 64
      %v5758 = vpop.permute.xlu0 %5757
      %5759 = vrot.lane.b32.xlu0 %v4778, 64
      %v5760 = vpop.permute.xlu0 %5759
      %5761 = vrot.lane.b32.xlu0 %v4779, 64
      %v5762 = vpop.permute.xlu0 %5761
      %5763 = vrot.lane.b32.xlu0 %v4780, 64
      %v5764 = vpop.permute.xlu0 %5763
      %5765 = vrot.lane.b32.xlu0 %v4781, 64
      %v5766 = vpop.permute.xlu0 %5765
      %5767 = vrot.lane.b32.xlu0 %v4782, 64
      %v5768 = vpop.permute.xlu0 %5767
      %5769 = vrot.lane.b32.xlu0 %v4783, 64
      %v5770 = vpop.permute.xlu0 %5769
      %5771 = vrot.lane.b32.xlu0 %v4784, 64
      %v5772 = vpop.permute.xlu0 %5771
      %5773 = vrot.lane.b32.xlu0 %v4785, 64
      %v5774 = vpop.permute.xlu0 %5773
      %5775 = vrot.lane.b32.xlu0 %v4786, 64
      %v5776 = vpop.permute.xlu0 %5775
      %5777 = vrot.lane.b32.xlu0 %v4787, 64
      %v5778 = vpop.permute.xlu0 %5777
      %5779 = vrot.lane.b32.xlu0 %v4788, 64
      %v5780 = vpop.permute.xlu0 %5779
      %v5813 = vsel %vm1823, %v4501, %v4822
      %v5814 = vsel %vm1823, %v4502, %v4824
      %v5815 = vsel %vm1823, %v4503, %v4826
      %v5816 = vsel %vm1823, %v4504, %v4828
      %v5817 = vsel %vm1823, %v4505, %v4830
      %v5818 = vsel %vm1823, %v4506, %v4832
      %v5819 = vsel %vm1823, %v4507, %v4834
      %v5820 = vsel %vm1823, %v4508, %v4836
      %v5821 = vsel %vm1823, %v4509, %v4838
      %v5822 = vsel %vm1823, %v4510, %v4840
      %v5823 = vsel %vm1823, %v4511, %v4842
      %v5824 = vsel %vm1823, %v4512, %v4844
      %v5825 = vsel %vm1823, %v4513, %v4846
      %v5826 = vsel %vm1823, %v4514, %v4848
      %v5827 = vsel %vm1823, %v4515, %v4850
      %v5828 = vsel %vm1823, %v4516, %v4852
      %v5829 = vsel %vm1823, %v4517, %v4854
      %v5830 = vsel %vm1823, %v4518, %v4856
      %v5831 = vsel %vm1823, %v4519, %v4858
      %v5832 = vsel %vm1823, %v4520, %v4860
      %v5833 = vsel %vm1823, %v4521, %v4862
      %v5834 = vsel %vm1823, %v4522, %v4864
      %v5835 = vsel %vm1823, %v4523, %v4866
      %v5836 = vsel %vm1823, %v4524, %v4868
      %v5837 = vsel %vm1823, %v4525, %v4870
      %v5838 = vsel %vm1823, %v4526, %v4872
      %v5839 = vsel %vm1823, %v4527, %v4874
      %v5840 = vsel %vm1823, %v4528, %v4876
      %v5841 = vsel %vm1823, %v4529, %v4878
      %v5842 = vsel %vm1823, %v4530, %v4880
      %v5843 = vsel %vm1823, %v4531, %v4882
      %v5844 = vsel %vm1823, %v4532, %v4884
      %v5845 = vsel %vm1921, %v5813, %v4950
      %v5846 = vsel %vm1921, %v5814, %v4952
      %v5847 = vsel %vm1921, %v5815, %v4954
      %v5848 = vsel %vm1921, %v5816, %v4956
      %v5849 = vsel %vm1921, %v5817, %v4958
      %v5850 = vsel %vm1921, %v5818, %v4960
      %v5851 = vsel %vm1921, %v5819, %v4962
      %v5852 = vsel %vm1921, %v5820, %v4964
      %v5853 = vsel %vm1921, %v5821, %v4966
      %v5854 = vsel %vm1921, %v5822, %v4968
      %v5855 = vsel %vm1921, %v5823, %v4970
      %v5856 = vsel %vm1921, %v5824, %v4972
      %v5857 = vsel %vm1921, %v5825, %v4974
      %v5858 = vsel %vm1921, %v5826, %v4976
      %v5859 = vsel %vm1921, %v5827, %v4978
      %v5860 = vsel %vm1921, %v5828, %v4980
      %v5861 = vsel %vm1921, %v5829, %v4982
      %v5862 = vsel %vm1921, %v5830, %v4984
      %v5863 = vsel %vm1921, %v5831, %v4986
      %v5864 = vsel %vm1921, %v5832, %v4988
      %v5865 = vsel %vm1921, %v5833, %v4990
      %v5866 = vsel %vm1921, %v5834, %v4992
      %v5867 = vsel %vm1921, %v5835, %v4994
      %v5868 = vsel %vm1921, %v5836, %v4996
      %v5869 = vsel %vm1921, %v5837, %v4998
      %v5870 = vsel %vm1921, %v5838, %v5000
      %v5871 = vsel %vm1921, %v5839, %v5002
      %v5872 = vsel %vm1921, %v5840, %v5004
      %v5873 = vsel %vm1921, %v5841, %v5006
      %v5874 = vsel %vm1921, %v5842, %v5008
      %v5875 = vsel %vm1921, %v5843, %v5010
      %v5876 = vsel %vm1921, %v5844, %v5012
      %v5877 = vsel %vm2036, %v5845, %v5078
      %v5878 = vsel %vm2036, %v5846, %v5080
      %v5879 = vsel %vm2036, %v5847, %v5082
      %v5880 = vsel %vm2036, %v5848, %v5084
      %v5881 = vsel %vm2036, %v5849, %v5086
      %v5882 = vsel %vm2036, %v5850, %v5088
      %v5883 = vsel %vm2036, %v5851, %v5090
      %v5884 = vsel %vm2036, %v5852, %v5092
      %v5885 = vsel %vm2036, %v5853, %v5094
      %v5886 = vsel %vm2036, %v5854, %v5096
      %v5887 = vsel %vm2036, %v5855, %v5098
      %v5888 = vsel %vm2036, %v5856, %v5100
      %v5889 = vsel %vm2036, %v5857, %v5102
      %v5890 = vsel %vm2036, %v5858, %v5104
      %v5891 = vsel %vm2036, %v5859, %v5106
      %v5892 = vsel %vm2036, %v5860, %v5108
      %v5893 = vsel %vm2036, %v5861, %v5110
      %v5894 = vsel %vm2036, %v5862, %v5112
      %v5895 = vsel %vm2036, %v5863, %v5114
      %v5896 = vsel %vm2036, %v5864, %v5116
      %v5897 = vsel %vm2036, %v5865, %v5118
      %v5898 = vsel %vm2036, %v5866, %v5120
      %v5899 = vsel %vm2036, %v5867, %v5122
      %v5900 = vsel %vm2036, %v5868, %v5124
      %v5901 = vsel %vm2036, %v5869, %v5126
      %v5902 = vsel %vm2036, %v5870, %v5128
      %v5903 = vsel %vm2036, %v5871, %v5130
      %v5904 = vsel %vm2036, %v5872, %v5132
      %v5905 = vsel %vm2036, %v5873, %v5134
      %v5906 = vsel %vm2036, %v5874, %v5136
      %v5907 = vsel %vm2036, %v5875, %v5138
      %v5908 = vsel %vm2036, %v5876, %v5140
      %v5909 = vsel %vm3896, %v5877, %v5206
      %v5910 = vsel %vm3896, %v5878, %v5208
      %v5911 = vsel %vm3896, %v5879, %v5210
      %v5912 = vsel %vm3896, %v5880, %v5212
      %v5913 = vsel %vm3896, %v5881, %v5214
      %v5914 = vsel %vm3896, %v5882, %v5216
      %v5915 = vsel %vm3896, %v5883, %v5218
      %v5916 = vsel %vm3896, %v5884, %v5220
      %v5917 = vsel %vm3896, %v5885, %v5222
      %v5918 = vsel %vm3896, %v5886, %v5224
      %v5919 = vsel %vm3896, %v5887, %v5226
      %v5920 = vsel %vm3896, %v5888, %v5228
      %v5921 = vsel %vm3896, %v5889, %v5230
      %v5922 = vsel %vm3896, %v5890, %v5232
      %v5923 = vsel %vm3896, %v5891, %v5234
      %v5924 = vsel %vm3896, %v5892, %v5236
      %v5925 = vsel %vm3896, %v5893, %v5238
      %v5926 = vsel %vm3896, %v5894, %v5240
      %v5927 = vsel %vm3896, %v5895, %v5242
      %v5928 = vsel %vm3896, %v5896, %v5244
      %v5929 = vsel %vm3896, %v5897, %v5246
      %v5930 = vsel %vm3896, %v5898, %v5248
      %v5931 = vsel %vm3896, %v5899, %v5250
      %v5932 = vsel %vm3896, %v5900, %v5252
      %v5933 = vsel %vm3896, %v5901, %v5254
      %v5934 = vsel %vm3896, %v5902, %v5256
      %v5935 = vsel %vm3896, %v5903, %v5258
      %v5936 = vsel %vm3896, %v5904, %v5260
      %v5937 = vsel %vm3896, %v5905, %v5262
      %v5938 = vsel %vm3896, %v5906, %v5264
      %v5939 = vsel %vm3896, %v5907, %v5266
      %v5940 = vsel %vm3896, %v5908, %v5268
      %vm5941 = vcmask 982016
      %v5942 = vsel %vm5941, %v5909, %v5334
      %v5943 = vsel %vm5941, %v5910, %v5336
      %v5944 = vsel %vm5941, %v5911, %v5338
      %v5945 = vsel %vm5941, %v5912, %v5340
      %v5946 = vsel %vm5941, %v5913, %v5342
      %v5947 = vsel %vm5941, %v5914, %v5344
      %v5948 = vsel %vm5941, %v5915, %v5346
      %v5949 = vsel %vm5941, %v5916, %v5348
      %v5950 = vsel %vm5941, %v5917, %v5350
      %v5951 = vsel %vm5941, %v5918, %v5352
      %v5952 = vsel %vm5941, %v5919, %v5354
      %v5953 = vsel %vm5941, %v5920, %v5356
      %v5954 = vsel %vm5941, %v5921, %v5358
      %v5955 = vsel %vm5941, %v5922, %v5360
      %v5956 = vsel %vm5941, %v5923, %v5362
      %v5957 = vsel %vm5941, %v5924, %v5364
      %v5958 = vsel %vm5941, %v5925, %v5366
      %v5959 = vsel %vm5941, %v5926, %v5368
      %v5960 = vsel %vm5941, %v5927, %v5370
      %v5961 = vsel %vm5941, %v5928, %v5372
      %v5962 = vsel %vm5941, %v5929, %v5374
      %v5963 = vsel %vm5941, %v5930, %v5376
      %v5964 = vsel %vm5941, %v5931, %v5378
      %v5965 = vsel %vm5941, %v5932, %v5380
      %v5966 = vsel %vm5941, %v5933, %v5382
      %v5967 = vsel %vm5941, %v5934, %v5384
      %v5968 = vsel %vm5941, %v5935, %v5386
      %v5969 = vsel %vm5941, %v5936, %v5388
      %v5970 = vsel %vm5941, %v5937, %v5390
      %v5971 = vsel %vm5941, %v5938, %v5392
      %v5972 = vsel %vm5941, %v5939, %v5394
      %v5973 = vsel %vm5941, %v5940, %v5396
      %v5974 = vsel %vm1790, %v5334, %v5462
      %v5975 = vsel %vm1790, %v5336, %v5464
      %v5976 = vsel %vm1790, %v5338, %v5466
      %v5977 = vsel %vm1790, %v5340, %v5468
      %v5978 = vsel %vm1790, %v5342, %v5470
      %v5979 = vsel %vm1790, %v5344, %v5472
      %v5980 = vsel %vm1790, %v5346, %v5474
      %v5981 = vsel %vm1790, %v5348, %v5476
      %v5982 = vsel %vm1790, %v5350, %v5478
      %v5983 = vsel %vm1790, %v5352, %v5480
      %v5984 = vsel %vm1790, %v5354, %v5482
      %v5985 = vsel %vm1790, %v5356, %v5484
      %v5986 = vsel %vm1790, %v5358, %v5486
      %v5987 = vsel %vm1790, %v5360, %v5488
      %v5988 = vsel %vm1790, %v5362, %v5490
      %v5989 = vsel %vm1790, %v5364, %v5492
      %v5990 = vsel %vm1790, %v5366, %v5494
      %v5991 = vsel %vm1790, %v5368, %v5496
      %v5992 = vsel %vm1790, %v5370, %v5498
      %v5993 = vsel %vm1790, %v5372, %v5500
      %v5994 = vsel %vm1790, %v5374, %v5502
      %v5995 = vsel %vm1790, %v5376, %v5504
      %v5996 = vsel %vm1790, %v5378, %v5506
      %v5997 = vsel %vm1790, %v5380, %v5508
      %v5998 = vsel %vm1790, %v5382, %v5510
      %v5999 = vsel %vm1790, %v5384, %v5512
      %v6000 = vsel %vm1790, %v5386, %v5514
      %v6001 = vsel %vm1790, %v5388, %v5516
      %v6002 = vsel %vm1790, %v5390, %v5518
      %v6003 = vsel %vm1790, %v5392, %v5520
      %v6004 = vsel %vm1790, %v5394, %v5522
      %v6005 = vsel %vm1790, %v5396, %v5524
      %v6006 = vsel %vm1888, %v5974, %v5590
      %v6007 = vsel %vm1888, %v5975, %v5592
      %v6008 = vsel %vm1888, %v5976, %v5594
      %v6009 = vsel %vm1888, %v5977, %v5596
      %v6010 = vsel %vm1888, %v5978, %v5598
      %v6011 = vsel %vm1888, %v5979, %v5600
      %v6012 = vsel %vm1888, %v5980, %v5602
      %v6013 = vsel %vm1888, %v5981, %v5604
      %v6014 = vsel %vm1888, %v5982, %v5606
      %v6015 = vsel %vm1888, %v5983, %v5608
      %v6016 = vsel %vm1888, %v5984, %v5610
      %v6017 = vsel %vm1888, %v5985, %v5612
      %v6018 = vsel %vm1888, %v5986, %v5614
      %v6019 = vsel %vm1888, %v5987, %v5616
      %v6020 = vsel %vm1888, %v5988, %v5618
      %v6021 = vsel %vm1888, %v5989, %v5620
      %v6022 = vsel %vm1888, %v5990, %v5622
      %v6023 = vsel %vm1888, %v5991, %v5624
      %v6024 = vsel %vm1888, %v5992, %v5626
      %v6025 = vsel %vm1888, %v5993, %v5628
      %v6026 = vsel %vm1888, %v5994, %v5630
      %v6027 = vsel %vm1888, %v5995, %v5632
      %v6028 = vsel %vm1888, %v5996, %v5634
      %v6029 = vsel %vm1888, %v5997, %v5636
      %v6030 = vsel %vm1888, %v5998, %v5638
      %v6031 = vsel %vm1888, %v5999, %v5640
      %v6032 = vsel %vm1888, %v6000, %v5642
      %v6033 = vsel %vm1888, %v6001, %v5644
      %v6034 = vsel %vm1888, %v6002, %v5646
      %v6035 = vsel %vm1888, %v6003, %v5648
      %v6036 = vsel %vm1888, %v6004, %v5650
      %v6037 = vsel %vm1888, %v6005, %v5652
      %v6038 = vsel %vm1987, %v6006, %v5718
      %v6039 = vsel %vm1987, %v6007, %v5720
      %v6040 = vsel %vm1987, %v6008, %v5722
      %v6041 = vsel %vm1987, %v6009, %v5724
      %v6042 = vsel %vm1987, %v6010, %v5726
      %v6043 = vsel %vm1987, %v6011, %v5728
      %v6044 = vsel %vm1987, %v6012, %v5730
      %v6045 = vsel %vm1987, %v6013, %v5732
      %v6046 = vsel %vm1987, %v6014, %v5734
      %v6047 = vsel %vm1987, %v6015, %v5736
      %v6048 = vsel %vm1987, %v6016, %v5738
      %v6049 = vsel %vm1987, %v6017, %v5740
      %v6050 = vsel %vm1987, %v6018, %v5742
      %v6051 = vsel %vm1987, %v6019, %v5744
      %v6052 = vsel %vm1987, %v6020, %v5746
      %v6053 = vsel %vm1987, %v6021, %v5748
      %v6054 = vsel %vm1987, %v6022, %v5750
      %v6055 = vsel %vm1987, %v6023, %v5752
      %v6056 = vsel %vm1987, %v6024, %v5754
      %v6057 = vsel %vm1987, %v6025, %v5756
      %v6058 = vsel %vm1987, %v6026, %v5758
      %v6059 = vsel %vm1987, %v6027, %v5760
      %v6060 = vsel %vm1987, %v6028, %v5762
      %v6061 = vsel %vm1987, %v6029, %v5764
      %v6062 = vsel %vm1987, %v6030, %v5766
      %v6063 = vsel %vm1987, %v6031, %v5768
      %v6064 = vsel %vm1987, %v6032, %v5770
      %v6065 = vsel %vm1987, %v6033, %v5772
      %v6066 = vsel %vm1987, %v6034, %v5774
      %v6067 = vsel %vm1987, %v6035, %v5776
      %v6068 = vsel %vm1987, %v6036, %v5778
      %v6069 = vsel %vm1987, %v6037, %v5780
      %v6070 = vld [vmem:[%s5] sm:$0xff]
      %v6071 = vld [vmem:[%s5 + $0x8] sm:$0xff]
      %v6072 = vld [vmem:[%s5 + $0x10] sm:$0xff]
      %v6073 = vld [vmem:[%s5 + $0x18] sm:$0xff]
      %v6074 = vld [vmem:[%s5 + $0x20] sm:$0xff]
      %v6075 = vld [vmem:[%s5 + $0x28] sm:$0xff]
      %v6076 = vld [vmem:[%s5 + $0x30] sm:$0xff]
      %v6077 = vld [vmem:[%s5 + $0x38] sm:$0xff]
      %v6078 = vld [vmem:[%s5 + $0x40] sm:$0xff]
      %v6079 = vld [vmem:[%s5 + $0x48] sm:$0xff]
      %v6080 = vld [vmem:[%s5 + $0x50] sm:$0xff]
      %v6081 = vld [vmem:[%s5 + $0x58] sm:$0xff]
      %v6082 = vld [vmem:[%s5 + $0x60] sm:$0xff]
      %v6083 = vld [vmem:[%s5 + $0x68] sm:$0xff]
      %v6084 = vld [vmem:[%s5 + $0x70] sm:$0xff]
      %v6085 = vld [vmem:[%s5 + $0x78] sm:$0xff]
      %v6086 = vld [vmem:[%s5 + $0x80] sm:$0xff]
      %v6087 = vld [vmem:[%s5 + $0x88] sm:$0xff]
      %v6088 = vld [vmem:[%s5 + $0x90] sm:$0xff]
      %v6089 = vld [vmem:[%s5 + $0x98] sm:$0xff]
      %v6090 = vld [vmem:[%s5 + $0xa0] sm:$0xff]
      %v6091 = vld [vmem:[%s5 + $0xa8] sm:$0xff]
      %v6092 = vld [vmem:[%s5 + $0xb0] sm:$0xff]
      %v6093 = vld [vmem:[%s5 + $0xb8] sm:$0xff]
      %v6094 = vld [vmem:[%s5 + $0xc0] sm:$0xff]
      %v6095 = vld [vmem:[%s5 + $0xc8] sm:$0xff]
      %v6096 = vld [vmem:[%s5 + $0xd0] sm:$0xff]
      %v6097 = vld [vmem:[%s6] sm:$0x1]
      %v6099 = vlaneseq
      %v6100 = vshrl.u32 %v6099, 7
      %v6101 = vsub.s32 0, %v6100
      %v6102 = vrot.slane %v6097, %v6101
      %vm6104 = vcmask 719872
      %v6106 = vsel %vm6104, %v6038, 0
      %v6109 = vsel %vm6104, %v6039, 0
      %v6112 = vsel %vm6104, %v6040, 0
      %v6115 = vsel %vm6104, %v6041, 0
      %v6118 = vsel %vm6104, %v6042, 0
      %v6121 = vsel %vm6104, %v6043, 0
      %v6124 = vsel %vm6104, %v6044, 0
      %v6127 = vsel %vm6104, %v6045, 0
      %v6130 = vsel %vm6104, %v6046, 0
      %v6133 = vsel %vm6104, %v6047, 0
      %v6136 = vsel %vm6104, %v6048, 0
      %v6139 = vsel %vm6104, %v6049, 0
      %v6142 = vsel %vm6104, %v6050, 0
      %v6145 = vsel %vm6104, %v6051, 0
      %v6148 = vsel %vm6104, %v6052, 0
      %v6151 = vsel %vm6104, %v6053, 0
      %v6154 = vsel %vm6104, %v6054, 0
      %v6157 = vsel %vm6104, %v6055, 0
      %v6160 = vsel %vm6104, %v6056, 0
      %v6163 = vsel %vm6104, %v6057, 0
      %v6166 = vsel %vm6104, %v6058, 0
      %v6169 = vsel %vm6104, %v6059, 0
      %v6172 = vsel %vm6104, %v6060, 0
      %v6175 = vsel %vm6104, %v6061, 0
      %v6178 = vsel %vm6104, %v6062, 0
      %v6181 = vsel %vm6104, %v6063, 0
      %v6184 = vsel %vm6104, %v6064, 0
      %v6187 = vsel %vm6104, %v6065, 0
      %v6190 = vsel %vm6104, %v6066, 0
      %v6193 = vsel %vm6104, %v6067, 0
      %v6196 = vsel %vm6104, %v6068, 0
      %v6199 = vsel %vm6104, %v6069, 0
      %6201 = vmatprep.subr.mxu0 0.0
      %6202 = vmatpush1.msra.mxu0 %v6070
      %6203 = vmatprep.subr.mxu0 0.0
      %6204 = vmatpush1.msra.mxu0 %v6071
      %6205 = vmatprep.subr.mxu0 0.0
      %6206 = vmatpush1.msra.mxu0 %v6072
      %6207 = vmatprep.subr.mxu0 0.0
      %6208 = vmatpush1.msra.mxu0 %v6073
      %6209 = vmatprep.subr.mxu0 0.0
      %6210 = vmatpush1.msra.mxu0 %v6074
      %6211 = vmatprep.subr.mxu0 0.0
      %6212 = vmatpush1.msra.mxu0 %v6075
      %6213 = vmatprep.subr.mxu0 0.0
      %6214 = vmatpush1.msra.mxu0 %v6076
      %6215 = vmatprep.subr.mxu0 0.0
      %6216 = vmatpush1.msra.mxu0 %v6077
      %6217 = vmatprep.subr.mxu0 0.0
      %6218 = vmatpush1.msra.mxu0 %v6078
      %6219 = vmatprep.subr.mxu0 0.0
      %6220 = vmatpush1.msra.mxu0 %v6079
      %6221 = vmatprep.subr.mxu0 0.0
      %6222 = vmatpush1.msra.mxu0 %v6080
      %6223 = vmatprep.subr.mxu0 0.0
      %6224 = vmatpush1.msra.mxu0 %v6081
      %6225 = vmatprep.subr.mxu0 0.0
      %6226 = vmatpush1.msra.mxu0 %v6082
      %6227 = vmatprep.subr.mxu0 0.0
      %6228 = vmatpush1.msra.mxu0 %v6083
      %6229 = vmatprep.subr.mxu0 0.0
      %6230 = vmatpush1.msra.mxu0 %v6084
      %6231 = vmatprep.subr.mxu0 0.0
      %6232 = vmatpush1.msra.mxu0 %v6085
      %6233 = vmatprep.subr.mxu0 0.0
      %6234 = vmatpush1.msra.mxu0 %v6086
      %6235 = vmatprep.subr.mxu0 0.0
      %6236 = vmatpush1.msra.mxu0 %v6087
      %6237 = vmatprep.subr.mxu0 0.0
      %6238 = vmatpush1.msra.mxu0 %v6088
      %6239 = vmatprep.subr.mxu0 0.0
      %6240 = vmatpush1.msra.mxu0 %v6089
      %6241 = vmatprep.subr.mxu0 0.0
      %6242 = vmatpush1.msra.mxu0 %v6090
      %6243 = vmatprep.subr.mxu0 0.0
      %6244 = vmatpush1.msra.mxu0 %v6091
      %6245 = vmatprep.subr.mxu0 0.0
      %6246 = vmatpush1.msra.mxu0 %v6092
      %6247 = vmatprep.subr.mxu0 0.0
      %6248 = vmatpush1.msra.mxu0 %v6093
      %6249 = vmatprep.subr.mxu0 0.0
      %6250 = vmatpush1.msra.mxu0 %v6094
      %6251 = vmatprep.subr.mxu0 0.0
      %6252 = vmatpush1.msra.mxu0 %v6095
      %6253 = vmatprep.subr.mxu0 0.0
      %6254 = vmatpush1.msra.mxu0 %v6096
      %6255 = vmatprep.subr.mxu0 0.0
      %6256 = vmatpush1.msra.mxu0 0.0
      %6257 = vmatprep.subr.mxu0 0.0
      %6258 = vmatpush1.msra.mxu0 0.0
      %6259 = vmatprep.subr.mxu0 0.0
      %6260 = vmatpush1.msra.mxu0 0.0
      %6261 = vmatprep.subr.mxu0 0.0
      %6262 = vmatpush1.msra.mxu0 0.0
      %6263 = vmatprep.subr.mxu0 0.0
      %6264 = vmatpush1.msra.mxu0 0.0
      %6265 = vmatprep.mubr.f32.mxu0 %v6106
      %6266 = vmatmul.mubr.f32.gmra.mrb[0].mxu0 %v5942
      %v6267 = vpop.f32.mrb[0].mxu0
      %v6268 = vadd.f32 %v6102, %v6267
      %v6269 = vpop.f32.mrb[0].mxu0
      %6270 = vmatprep.mubr.f32.mxu0 %v6109
      %6271 = vmatmul.mubr.f32.gmra.mrb[0].mxu0 %v5943
      %v6272 = vpop.f32.mrb[0].mxu0
      %v6273 = vadd.f32 %v6102, %v6272
      %v6274 = vpop.f32.mrb[0].mxu0
      %6275 = vmatprep.mubr.f32.mxu0 %v6112
      %6276 = vmatmul.mubr.f32.gmra.mrb[0].mxu0 %v5944
      %v6277 = vpop.f32.mrb[0].mxu0
      %v6278 = vadd.f32 %v6102, %v6277
      %v6279 = vpop.f32.mrb[0].mxu0
      %6280 = vmatprep.mubr.f32.mxu0 %v6115
      %6281 = vmatmul.mubr.f32.gmra.mrb[0].mxu0 %v5945
      %v6282 = vpop.f32.mrb[0].mxu0
      %v6283 = vadd.f32 %v6102, %v6282
      %v6284 = vpop.f32.mrb[0].mxu0
      %6285 = vmatprep.mubr.f32.mxu0 %v6118
      %6286 = vmatmul.mubr.f32.gmra.mrb[0].mxu0 %v5946
      %v6287 = vpop.f32.mrb[0].mxu0
      %v6288 = vadd.f32 %v6102, %v6287
      %v6289 = vpop.f32.mrb[0].mxu0
      %6290 = vmatprep.mubr.f32.mxu0 %v6121
      %6291 = vmatmul.mubr.f32.gmra.mrb[0].mxu0 %v5947
      %v6292 = vpop.f32.mrb[0].mxu0
      %v6293 = vadd.f32 %v6102, %v6292
      %v6294 = vpop.f32.mrb[0].mxu0
      %6295 = vmatprep.mubr.f32.mxu0 %v6124
      %6296 = vmatmul.mubr.f32.gmra.mrb[0].mxu0 %v5948
      %v6297 = vpop.f32.mrb[0].mxu0
      %v6298 = vadd.f32 %v6102, %v6297
      %v6299 = vpop.f32.mrb[0].mxu0
      %6300 = vmatprep.mubr.f32.mxu0 %v6127
      %6301 = vmatmul.mubr.f32.gmra.mrb[0].mxu0 %v5949
      %v6302 = vpop.f32.mrb[0].mxu0
      %v6303 = vadd.f32 %v6102, %v6302
      %v6304 = vpop.f32.mrb[0].mxu0
      %6305 = vmatprep.mubr.f32.mxu0 %v6130
      %6306 = vmatmul.mubr.f32.gmra.mrb[0].mxu0 %v5950
      %v6307 = vpop.f32.mrb[0].mxu0
      %v6308 = vadd.f32 %v6102, %v6307
      %v6309 = vpop.f32.mrb[0].mxu0
      %6310 = vmatprep.mubr.f32.mxu0 %v6133
      %6311 = vmatmul.mubr.f32.gmra.mrb[0].mxu0 %v5951
      %v6312 = vpop.f32.mrb[0].mxu0
      %v6313 = vadd.f32 %v6102, %v6312
      %v6314 = vpop.f32.mrb[0].mxu0
      %6315 = vmatprep.mubr.f32.mxu0 %v6136
      %6316 = vmatmul.mubr.f32.gmra.mrb[0].mxu0 %v5952
      %v6317 = vpop.f32.mrb[0].mxu0
      %v6318 = vadd.f32 %v6102, %v6317
      %v6319 = vpop.f32.mrb[0].mxu0
      %6320 = vmatprep.mubr.f32.mxu0 %v6139
      %6321 = vmatmul.mubr.f32.gmra.mrb[0].mxu0 %v5953
      %v6322 = vpop.f32.mrb[0].mxu0
      %v6323 = vadd.f32 %v6102, %v6322
      %v6324 = vpop.f32.mrb[0].mxu0
      %6325 = vmatprep.mubr.f32.mxu0 %v6142
      %6326 = vmatmul.mubr.f32.gmra.mrb[0].mxu0 %v5954
      %v6327 = vpop.f32.mrb[0].mxu0
      %v6328 = vadd.f32 %v6102, %v6327
      %v6329 = vpop.f32.mrb[0].mxu0
      %6330 = vmatprep.mubr.f32.mxu0 %v6145
      %6331 = vmatmul.mubr.f32.gmra.mrb[0].mxu0 %v5955
      %v6332 = vpop.f32.mrb[0].mxu0
      %v6333 = vadd.f32 %v6102, %v6332
      %v6334 = vpop.f32.mrb[0].mxu0
      %6335 = vmatprep.mubr.f32.mxu0 %v6148
      %6336 = vmatmul.mubr.f32.gmra.mrb[0].mxu0 %v5956
      %v6337 = vpop.f32.mrb[0].mxu0
      %v6338 = vadd.f32 %v6102, %v6337
      %v6339 = vpop.f32.mrb[0].mxu0
      %6340 = vmatprep.mubr.f32.mxu0 %v6151
      %6341 = vmatmul.mubr.f32.gmra.mrb[0].mxu0 %v5957
      %v6342 = vpop.f32.mrb[0].mxu0
      %v6343 = vadd.f32 %v6102, %v6342
      %v6344 = vpop.f32.mrb[0].mxu0
      %6345 = vmatprep.mubr.f32.mxu0 %v6154
      %6346 = vmatmul.mubr.f32.gmra.mrb[0].mxu0 %v5958
      %v6347 = vpop.f32.mrb[0].mxu0
      %v6348 = vadd.f32 %v6102, %v6347
      %v6349 = vpop.f32.mrb[0].mxu0
      %6350 = vmatprep.mubr.f32.mxu0 %v6157
      %6351 = vmatmul.mubr.f32.gmra.mrb[0].mxu0 %v5959
      %v6352 = vpop.f32.mrb[0].mxu0
      %v6353 = vadd.f32 %v6102, %v6352
      %v6354 = vpop.f32.mrb[0].mxu0
      %6355 = vmatprep.mubr.f32.mxu0 %v6160
      %6356 = vmatmul.mubr.f32.gmra.mrb[0].mxu0 %v5960
      %v6357 = vpop.f32.mrb[0].mxu0
      %v6358 = vadd.f32 %v6102, %v6357
      %v6359 = vpop.f32.mrb[0].mxu0
      %6360 = vmatprep.mubr.f32.mxu0 %v6163
      %6361 = vmatmul.mubr.f32.gmra.mrb[0].mxu0 %v5961
      %v6362 = vpop.f32.mrb[0].mxu0
      %v6363 = vadd.f32 %v6102, %v6362
      %v6364 = vpop.f32.mrb[0].mxu0
      %6365 = vmatprep.mubr.f32.mxu0 %v6166
      %6366 = vmatmul.mubr.f32.gmra.mrb[0].mxu0 %v5962
      %v6367 = vpop.f32.mrb[0].mxu0
      %v6368 = vadd.f32 %v6102, %v6367
      %v6369 = vpop.f32.mrb[0].mxu0
      %6370 = vmatprep.mubr.f32.mxu0 %v6169
      %6371 = vmatmul.mubr.f32.gmra.mrb[0].mxu0 %v5963
      %v6372 = vpop.f32.mrb[0].mxu0
      %v6373 = vadd.f32 %v6102, %v6372
      %v6374 = vpop.f32.mrb[0].mxu0
      %6375 = vmatprep.mubr.f32.mxu0 %v6172
      %6376 = vmatmul.mubr.f32.gmra.mrb[0].mxu0 %v5964
      %v6377 = vpop.f32.mrb[0].mxu0
      %v6378 = vadd.f32 %v6102, %v6377
      %v6379 = vpop.f32.mrb[0].mxu0
      %6380 = vmatprep.mubr.f32.mxu0 %v6175
      %6381 = vmatmul.mubr.f32.gmra.mrb[0].mxu0 %v5965
      %v6382 = vpop.f32.mrb[0].mxu0
      %v6383 = vadd.f32 %v6102, %v6382
      %v6384 = vpop.f32.mrb[0].mxu0
      %6385 = vmatprep.mubr.f32.mxu0 %v6178
      %6386 = vmatmul.mubr.f32.gmra.mrb[0].mxu0 %v5966
      %v6387 = vpop.f32.mrb[0].mxu0
      %v6388 = vadd.f32 %v6102, %v6387
      %v6389 = vpop.f32.mrb[0].mxu0
      %6390 = vmatprep.mubr.f32.mxu0 %v6181
      %6391 = vmatmul.mubr.f32.gmra.mrb[0].mxu0 %v5967
      %v6392 = vpop.f32.mrb[0].mxu0
      %v6393 = vadd.f32 %v6102, %v6392
      %v6394 = vpop.f32.mrb[0].mxu0
      %6395 = vmatprep.mubr.f32.mxu0 %v6184
      %6396 = vmatmul.mubr.f32.gmra.mrb[0].mxu0 %v5968
      %v6397 = vpop.f32.mrb[0].mxu0
      %v6398 = vadd.f32 %v6102, %v6397
      %v6399 = vpop.f32.mrb[0].mxu0
      %6400 = vmatprep.mubr.f32.mxu0 %v6187
      %6401 = vmatmul.mubr.f32.gmra.mrb[0].mxu0 %v5969
      %v6402 = vpop.f32.mrb[0].mxu0
      %v6403 = vadd.f32 %v6102, %v6402
      %v6404 = vpop.f32.mrb[0].mxu0
      %6405 = vmatprep.mubr.f32.mxu0 %v6190
      %6406 = vmatmul.mubr.f32.gmra.mrb[0].mxu0 %v5970
      %v6407 = vpop.f32.mrb[0].mxu0
      %v6408 = vadd.f32 %v6102, %v6407
      %v6409 = vpop.f32.mrb[0].mxu0
      %6410 = vmatprep.mubr.f32.mxu0 %v6193
      %6411 = vmatmul.mubr.f32.gmra.mrb[0].mxu0 %v5971
      %v6412 = vpop.f32.mrb[0].mxu0
      %v6413 = vadd.f32 %v6102, %v6412
      %v6414 = vpop.f32.mrb[0].mxu0
      %6415 = vmatprep.mubr.f32.mxu0 %v6196
      %6416 = vmatmul.mubr.f32.gmra.mrb[0].mxu0 %v5972
      %v6417 = vpop.f32.mrb[0].mxu0
      %v6418 = vadd.f32 %v6102, %v6417
      %v6419 = vpop.f32.mrb[0].mxu0
      %6420 = vmatprep.mubr.f32.mxu0 %v6199
      %6421 = vmatmul.mubr.f32.gmra.mrb[0].mxu0 %v5973
      %v6422 = vpop.f32.mrb[0].mxu0
      %v6423 = vadd.f32 %v6102, %v6422
      %v6424 = vpop.f32.mrb[0].mxu0
      %6425 = vdwg.mxu0
      %v6426 = vmax.f32 %v6268, 0.0
      %v6427 = vmax.f32 %v6273, 0.0
      %v6428 = vmax.f32 %v6278, 0.0
      %v6429 = vmax.f32 %v6283, 0.0
      %v6430 = vmax.f32 %v6288, 0.0
      %v6431 = vmax.f32 %v6293, 0.0
      %v6432 = vmax.f32 %v6298, 0.0
      %v6433 = vmax.f32 %v6303, 0.0
      %v6434 = vmax.f32 %v6308, 0.0
      %v6435 = vmax.f32 %v6313, 0.0
      %v6436 = vmax.f32 %v6318, 0.0
      %v6437 = vmax.f32 %v6323, 0.0
      %v6438 = vmax.f32 %v6328, 0.0
      %v6439 = vmax.f32 %v6333, 0.0
      %v6440 = vmax.f32 %v6338, 0.0
      %v6441 = vmax.f32 %v6343, 0.0
      %v6442 = vmax.f32 %v6348, 0.0
      %v6443 = vmax.f32 %v6353, 0.0
      %v6444 = vmax.f32 %v6358, 0.0
      %v6445 = vmax.f32 %v6363, 0.0
      %v6446 = vmax.f32 %v6368, 0.0
      %v6447 = vmax.f32 %v6373, 0.0
      %v6448 = vmax.f32 %v6378, 0.0
      %v6449 = vmax.f32 %v6383, 0.0
      %v6450 = vmax.f32 %v6388, 0.0
      %v6451 = vmax.f32 %v6393, 0.0
      %v6452 = vmax.f32 %v6398, 0.0
      %v6453 = vmax.f32 %v6403, 0.0
      %v6454 = vmax.f32 %v6408, 0.0
      %v6455 = vmax.f32 %v6413, 0.0
      %v6456 = vmax.f32 %v6418, 0.0
      %v6457 = vmax.f32 %v6423, 0.0
      %6490 = vrot.lane.b32.xlu0 %v6426, 24
      %v6491 = vpop.permute.xlu0 %6490
      %6492 = vrot.lane.b32.xlu0 %v6427, 24
      %v6493 = vpop.permute.xlu0 %6492
      %6494 = vrot.lane.b32.xlu0 %v6428, 24
      %v6495 = vpop.permute.xlu0 %6494
      %6496 = vrot.lane.b32.xlu0 %v6429, 24
      %v6497 = vpop.permute.xlu0 %6496
      %6498 = vrot.lane.b32.xlu0 %v6430, 24
      %v6499 = vpop.permute.xlu0 %6498
      %6500 = vrot.lane.b32.xlu0 %v6431, 24
      %v6501 = vpop.permute.xlu0 %6500
      %6502 = vrot.lane.b32.xlu0 %v6432, 24
      %v6503 = vpop.permute.xlu0 %6502
      %6504 = vrot.lane.b32.xlu0 %v6433, 24
      %v6505 = vpop.permute.xlu0 %6504
      %6506 = vrot.lane.b32.xlu0 %v6434, 24
      %v6507 = vpop.permute.xlu0 %6506
      %6508 = vrot.lane.b32.xlu0 %v6435, 24
      %v6509 = vpop.permute.xlu0 %6508
      %6510 = vrot.lane.b32.xlu0 %v6436, 24
      %v6511 = vpop.permute.xlu0 %6510
      %6512 = vrot.lane.b32.xlu0 %v6437, 24
      %v6513 = vpop.permute.xlu0 %6512
      %6514 = vrot.lane.b32.xlu0 %v6438, 24
      %v6515 = vpop.permute.xlu0 %6514
      %6516 = vrot.lane.b32.xlu0 %v6439, 24
      %v6517 = vpop.permute.xlu0 %6516
      %6518 = vrot.lane.b32.xlu0 %v6440, 24
      %v6519 = vpop.permute.xlu0 %6518
      %6520 = vrot.lane.b32.xlu0 %v6441, 24
      %v6521 = vpop.permute.xlu0 %6520
      %6522 = vrot.lane.b32.xlu0 %v6442, 24
      %v6523 = vpop.permute.xlu0 %6522
      %6524 = vrot.lane.b32.xlu0 %v6443, 24
      %v6525 = vpop.permute.xlu0 %6524
      %6526 = vrot.lane.b32.xlu0 %v6444, 24
      %v6527 = vpop.permute.xlu0 %6526
      %6528 = vrot.lane.b32.xlu0 %v6445, 24
      %v6529 = vpop.permute.xlu0 %6528
      %6530 = vrot.lane.b32.xlu0 %v6446, 24
      %v6531 = vpop.permute.xlu0 %6530
      %6532 = vrot.lane.b32.xlu0 %v6447, 24
      %v6533 = vpop.permute.xlu0 %6532
      %6534 = vrot.lane.b32.xlu0 %v6448, 24
      %v6535 = vpop.permute.xlu0 %6534
      %6536 = vrot.lane.b32.xlu0 %v6449, 24
      %v6537 = vpop.permute.xlu0 %6536
      %6538 = vrot.lane.b32.xlu0 %v6450, 24
      %v6539 = vpop.permute.xlu0 %6538
      %6540 = vrot.lane.b32.xlu0 %v6451, 24
      %v6541 = vpop.permute.xlu0 %6540
      %6542 = vrot.lane.b32.xlu0 %v6452, 24
      %v6543 = vpop.permute.xlu0 %6542
      %6544 = vrot.lane.b32.xlu0 %v6453, 24
      %v6545 = vpop.permute.xlu0 %6544
      %6546 = vrot.lane.b32.xlu0 %v6454, 24
      %v6547 = vpop.permute.xlu0 %6546
      %6548 = vrot.lane.b32.xlu0 %v6455, 24
      %v6549 = vpop.permute.xlu0 %6548
      %6550 = vrot.lane.b32.xlu0 %v6456, 24
      %v6551 = vpop.permute.xlu0 %6550
      %6552 = vrot.lane.b32.xlu0 %v6457, 24
      %v6553 = vpop.permute.xlu0 %6552
      %vm6586 = vcmask 261312
      %6587 = vst.msk [vmem:[%s411 + $0x1] sm:$0xff] %vm6586, %v6491
      %6588 = vst.msk [vmem:[%s411 + $0x9] sm:$0xff] %vm6586, %v6493
      %6589 = vst.msk [vmem:[%s411 + $0x19] sm:$0xff] %vm6586, %v6495
      %6590 = vst.msk [vmem:[%s411 + $0x21] sm:$0xff] %vm6586, %v6497
      %6591 = vst.msk [vmem:[%s411 + $0x31] sm:$0xff] %vm6586, %v6499
      %6592 = vst.msk [vmem:[%s411 + $0x39] sm:$0xff] %vm6586, %v6501
      %6593 = vst.msk [vmem:[%s411 + $0x49] sm:$0xff] %vm6586, %v6503
      %6594 = vst.msk [vmem:[%s411 + $0x51] sm:$0xff] %vm6586, %v6505
      %6595 = vst.msk [vmem:[%s411 + $0x61] sm:$0xff] %vm6586, %v6507
      %6596 = vst.msk [vmem:[%s411 + $0x69] sm:$0xff] %vm6586, %v6509
      %6597 = vst.msk [vmem:[%s411 + $0x79] sm:$0xff] %vm6586, %v6511
      %6598 = vst.msk [vmem:[%s411 + $0x81] sm:$0xff] %vm6586, %v6513
      %6599 = vst.msk [vmem:[%s411 + $0x91] sm:$0xff] %vm6586, %v6515
      %6600 = vst.msk [vmem:[%s411 + $0x99] sm:$0xff] %vm6586, %v6517
      %6601 = vst.msk [vmem:[%s411 + $0xa9] sm:$0xff] %vm6586, %v6519
      %6602 = vst.msk [vmem:[%s411 + $0xb1] sm:$0xff] %vm6586, %v6521
      %6603 = vst.msk [vmem:[%s411 + $0xc1] sm:$0xff] %vm6586, %v6523
      %6604 = vst.msk [vmem:[%s411 + $0xc9] sm:$0xff] %vm6586, %v6525
      %6605 = vst.msk [vmem:[%s411 + $0xd9] sm:$0xff] %vm6586, %v6527
      %6606 = vst.msk [vmem:[%s411 + $0xe1] sm:$0xff] %vm6586, %v6529
      %6607 = vst.msk [vmem:[%s411 + $0xf1] sm:$0xff] %vm6586, %v6531
      %6608 = vst.msk [vmem:[%s411 + $0xf9] sm:$0xff] %vm6586, %v6533
      %6609 = vst.msk [vmem:[%s411 + $0x109] sm:$0xff] %vm6586, %v6535
      %6610 = vst.msk [vmem:[%s411 + $0x111] sm:$0xff] %vm6586, %v6537
      %6611 = vst.msk [vmem:[%s411 + $0x121] sm:$0xff] %vm6586, %v6539
      %6612 = vst.msk [vmem:[%s411 + $0x129] sm:$0xff] %vm6586, %v6541
      %6613 = vst.msk [vmem:[%s411 + $0x139] sm:$0xff] %vm6586, %v6543
      %6614 = vst.msk [vmem:[%s411 + $0x141] sm:$0xff] %vm6586, %v6545
      %6615 = vst.msk [vmem:[%s411 + $0x151] sm:$0xff] %vm6586, %v6547
      %6616 = vst.msk [vmem:[%s411 + $0x159] sm:$0xff] %vm6586, %v6549
      %6617 = vst.msk [vmem:[%s411 + $0x169] sm:$0xff] %vm6586, %v6551
      %6618 = vst.msk [vmem:[%s411 + $0x171] sm:$0xff] %vm6586, %v6553
      %v6619 = vld [vmem:[%s411 + $0x1] sm:$0xff]
      %v6620 = vld [vmem:[%s411 + $0x9] sm:$0xff]
      %v6621 = vld [vmem:[%s411 + $0x19] sm:$0xff]
      %v6622 = vld [vmem:[%s411 + $0x21] sm:$0xff]
      %v6623 = vld [vmem:[%s411 + $0x31] sm:$0xff]
      %v6624 = vld [vmem:[%s411 + $0x39] sm:$0xff]
      %v6625 = vld [vmem:[%s411 + $0x49] sm:$0xff]
      %v6626 = vld [vmem:[%s411 + $0x51] sm:$0xff]
      %v6627 = vld [vmem:[%s411 + $0x61] sm:$0xff]
      %v6628 = vld [vmem:[%s411 + $0x69] sm:$0xff]
      %v6629 = vld [vmem:[%s411 + $0x79] sm:$0xff]
      %v6630 = vld [vmem:[%s411 + $0x81] sm:$0xff]
      %v6631 = vld [vmem:[%s411 + $0x91] sm:$0xff]
      %v6632 = vld [vmem:[%s411 + $0x99] sm:$0xff]
      %v6633 = vld [vmem:[%s411 + $0xa9] sm:$0xff]
      %v6634 = vld [vmem:[%s411 + $0xb1] sm:$0xff]
      %v6635 = vld [vmem:[%s411 + $0xc1] sm:$0xff]
      %v6636 = vld [vmem:[%s411 + $0xc9] sm:$0xff]
      %v6637 = vld [vmem:[%s411 + $0xd9] sm:$0xff]
      %v6638 = vld [vmem:[%s411 + $0xe1] sm:$0xff]
      %v6639 = vld [vmem:[%s411 + $0xf1] sm:$0xff]
      %v6640 = vld [vmem:[%s411 + $0xf9] sm:$0xff]
      %v6641 = vld [vmem:[%s411 + $0x109] sm:$0xff]
      %v6642 = vld [vmem:[%s411 + $0x111] sm:$0xff]
      %v6643 = vld [vmem:[%s411 + $0x121] sm:$0xff]
      %v6644 = vld [vmem:[%s411 + $0x129] sm:$0xff]
      %v6645 = vld [vmem:[%s411 + $0x139] sm:$0xff]
      %v6646 = vld [vmem:[%s411 + $0x141] sm:$0xff]
      %v6647 = vld [vmem:[%s411 + $0x151] sm:$0xff]
      %v6648 = vld [vmem:[%s411 + $0x159] sm:$0xff]
      %v6649 = vld [vmem:[%s411 + $0x169] sm:$0xff]
      %v6650 = vld [vmem:[%s411 + $0x171] sm:$0xff]
      %v6651 = vld [vmem:[%s7] sm:$0xff]
      %v6652 = vld [vmem:[%s7 + $0x8] sm:$0xff]
      %6685 = vrot.lane.b32.xlu0 %v6619, 120
      %v6686 = vpop.permute.xlu0 %6685
      %6687 = vrot.lane.b32.xlu0 %v6620, 120
      %v6688 = vpop.permute.xlu0 %6687
      %6689 = vrot.lane.b32.xlu0 %v6621, 120
      %v6690 = vpop.permute.xlu0 %6689
      %6691 = vrot.lane.b32.xlu0 %v6622, 120
      %v6692 = vpop.permute.xlu0 %6691
      %6693 = vrot.lane.b32.xlu0 %v6623, 120
      %v6694 = vpop.permute.xlu0 %6693
      %6695 = vrot.lane.b32.xlu0 %v6624, 120
      %v6696 = vpop.permute.xlu0 %6695
      %6697 = vrot.lane.b32.xlu0 %v6625, 120
      %v6698 = vpop.permute.xlu0 %6697
      %6699 = vrot.lane.b32.xlu0 %v6626, 120
      %v6700 = vpop.permute.xlu0 %6699
      %6701 = vrot.lane.b32.xlu0 %v6627, 120
      %v6702 = vpop.permute.xlu0 %6701
      %6703 = vrot.lane.b32.xlu0 %v6628, 120
      %v6704 = vpop.permute.xlu0 %6703
      %6705 = vrot.lane.b32.xlu0 %v6629, 120
      %v6706 = vpop.permute.xlu0 %6705
      %6707 = vrot.lane.b32.xlu0 %v6630, 120
      %v6708 = vpop.permute.xlu0 %6707
      %6709 = vrot.lane.b32.xlu0 %v6631, 120
      %v6710 = vpop.permute.xlu0 %6709
      %6711 = vrot.lane.b32.xlu0 %v6632, 120
      %v6712 = vpop.permute.xlu0 %6711
      %6713 = vrot.lane.b32.xlu0 %v6633, 120
      %v6714 = vpop.permute.xlu0 %6713
      %6715 = vrot.lane.b32.xlu0 %v6634, 120
      %v6716 = vpop.permute.xlu0 %6715
      %6717 = vrot.lane.b32.xlu0 %v6635, 120
      %v6718 = vpop.permute.xlu0 %6717
      %6719 = vrot.lane.b32.xlu0 %v6636, 120
      %v6720 = vpop.permute.xlu0 %6719
      %6721 = vrot.lane.b32.xlu0 %v6637, 120
      %v6722 = vpop.permute.xlu0 %6721
      %6723 = vrot.lane.b32.xlu0 %v6638, 120
      %v6724 = vpop.permute.xlu0 %6723
      %6725 = vrot.lane.b32.xlu0 %v6639, 120
      %v6726 = vpop.permute.xlu0 %6725
      %6727 = vrot.lane.b32.xlu0 %v6640, 120
      %v6728 = vpop.permute.xlu0 %6727
      %6729 = vrot.lane.b32.xlu0 %v6641, 120
      %v6730 = vpop.permute.xlu0 %6729
      %6731 = vrot.lane.b32.xlu0 %v6642, 120
      %v6732 = vpop.permute.xlu0 %6731
      %6733 = vrot.lane.b32.xlu0 %v6643, 120
      %v6734 = vpop.permute.xlu0 %6733
      %6735 = vrot.lane.b32.xlu0 %v6644, 120
      %v6736 = vpop.permute.xlu0 %6735
      %6737 = vrot.lane.b32.xlu0 %v6645, 120
      %v6738 = vpop.permute.xlu0 %6737
      %6739 = vrot.lane.b32.xlu0 %v6646, 120
      %v6740 = vpop.permute.xlu0 %6739
      %6741 = vrot.lane.b32.xlu0 %v6647, 120
      %v6742 = vpop.permute.xlu0 %6741
      %6743 = vrot.lane.b32.xlu0 %v6648, 120
      %v6744 = vpop.permute.xlu0 %6743
      %6745 = vrot.lane.b32.xlu0 %v6649, 120
      %v6746 = vpop.permute.xlu0 %6745
      %6747 = vrot.lane.b32.xlu0 %v6650, 120
      %v6748 = vpop.permute.xlu0 %6747
      %v6749 = vsel %vm412, %v6686, 0
      %v6751 = vsel %vm412, %v6688, 0
      %v6753 = vsel %vm412, %v6690, 0
      %v6755 = vsel %vm412, %v6692, 0
      %v6757 = vsel %vm412, %v6694, 0
      %v6759 = vsel %vm412, %v6696, 0
      %v6761 = vsel %vm412, %v6698, 0
      %v6763 = vsel %vm412, %v6700, 0
      %v6765 = vsel %vm412, %v6702, 0
      %v6767 = vsel %vm412, %v6704, 0
      %v6769 = vsel %vm412, %v6706, 0
      %v6771 = vsel %vm412, %v6708, 0
      %v6773 = vsel %vm412, %v6710, 0
      %v6775 = vsel %vm412, %v6712, 0
      %v6777 = vsel %vm412, %v6714, 0
      %v6779 = vsel %vm412, %v6716, 0
      %v6781 = vsel %vm412, %v6718, 0
      %v6783 = vsel %vm412, %v6720, 0
      %v6785 = vsel %vm412, %v6722, 0
      %v6787 = vsel %vm412, %v6724, 0
      %v6789 = vsel %vm412, %v6726, 0
      %v6791 = vsel %vm412, %v6728, 0
      %v6793 = vsel %vm412, %v6730, 0
      %v6795 = vsel %vm412, %v6732, 0
      %v6797 = vsel %vm412, %v6734, 0
      %v6799 = vsel %vm412, %v6736, 0
      %v6801 = vsel %vm412, %v6738, 0
      %v6803 = vsel %vm412, %v6740, 0
      %v6805 = vsel %vm412, %v6742, 0
      %v6807 = vsel %vm412, %v6744, 0
      %v6809 = vsel %vm412, %v6746, 0
      %v6811 = vsel %vm412, %v6748, 0
      %6813 = vmatprep.subr.mxu0 0.0
      %6814 = vmatpush1.msra.mxu0 %v6652
      %6815 = vmatprep.subr.mxu0 0.0
      %6816 = vmatpush1.msra.mxu0 0.0
      %6817 = vmatprep.subr.mxu0 0.0
      %6818 = vmatpush1.msra.mxu0 0.0
      %6819 = vmatprep.subr.mxu0 0.0
      %6820 = vmatpush1.msra.mxu0 0.0
      %6821 = vmatprep.subr.mxu0 0.0
      %6822 = vmatpush1.msra.mxu0 0.0
      %6823 = vmatprep.subr.mxu0 0.0
      %6824 = vmatpush1.msra.mxu0 0.0
      %6825 = vmatprep.subr.mxu0 0.0
      %6826 = vmatpush1.msra.mxu0 0.0
      %6827 = vmatprep.subr.mxu0 0.0
      %6828 = vmatpush1.msra.mxu0 0.0
      %6829 = vmatprep.subr.mxu0 0.0
      %6830 = vmatpush1.msra.mxu0 0.0
      %6831 = vmatprep.subr.mxu0 0.0
      %6832 = vmatpush1.msra.mxu0 0.0
      %6833 = vmatprep.subr.mxu0 0.0
      %6834 = vmatpush1.msra.mxu0 0.0
      %6835 = vmatprep.subr.mxu0 0.0
      %6836 = vmatpush1.msra.mxu0 0.0
      %6837 = vmatprep.subr.mxu0 0.0
      %6838 = vmatpush1.msra.mxu0 0.0
      %6839 = vmatprep.subr.mxu0 0.0
      %6840 = vmatpush1.msra.mxu0 0.0
      %6841 = vmatprep.subr.mxu0 0.0
      %6842 = vmatpush1.msra.mxu0 0.0
      %6843 = vmatprep.subr.mxu0 0.0
      %6844 = vmatpush1.msra.mxu0 0.0
      %6845 = vmatprep.subr.mxu0 0.0
      %6846 = vmatpush1.msra.mxu0 0.0
      %6847 = vmatprep.subr.mxu0 0.0
      %6848 = vmatpush1.msra.mxu0 0.0
      %6849 = vmatprep.subr.mxu0 0.0
      %6850 = vmatpush1.msra.mxu0 0.0
      %6851 = vmatprep.subr.mxu0 0.0
      %6852 = vmatpush1.msra.mxu0 0.0
      %6853 = vmatprep.subr.mxu0 0.0
      %6854 = vmatpush1.msra.mxu0 0.0
      %6855 = vmatprep.subr.mxu0 0.0
      %6856 = vmatpush1.msra.mxu0 0.0
      %6857 = vmatprep.subr.mxu0 0.0
      %6858 = vmatpush1.msra.mxu0 0.0
      %6859 = vmatprep.subr.mxu0 0.0
      %6860 = vmatpush1.msra.mxu0 0.0
      %6861 = vmatprep.subr.mxu0 0.0
      %6862 = vmatpush1.msra.mxu0 0.0
      %6863 = vmatprep.subr.mxu0 0.0
      %6864 = vmatpush1.msra.mxu0 0.0
      %6865 = vmatprep.subr.mxu0 0.0
      %6866 = vmatpush1.msra.mxu0 0.0
      %6867 = vmatprep.subr.mxu0 0.0
      %6868 = vmatpush1.msra.mxu0 0.0
      %6869 = vmatprep.subr.mxu0 0.0
      %6870 = vmatpush1.msra.mxu0 0.0
      %6871 = vmatprep.subr.mxu0 0.0
      %6872 = vmatpush1.msra.mxu0 0.0
      %6873 = vmatprep.subr.mxu0 0.0
      %6874 = vmatpush1.msra.mxu0 0.0
      %6875 = vmatprep.subr.mxu0 0.0
      %6876 = vmatpush1.msra.mxu0 0.0
      %6877 = vmatprep.mubr.f32.mxu0 0.0
      %6878 = vmatmul.mubr.f32.gmra.mrb[0].mxu0 %v6749
      %v6879 = vpop.f32.mrb[0].mxu0
      %v6880 = vadd.f32 0.0, %v6879
      %v6881 = vpop.f32.mrb[0].mxu0
      %6882 = vmatprep.mubr.f32.mxu0 0.0
      %6883 = vmatmul.mubr.f32.gmra.mrb[0].mxu0 %v6751
      %v6884 = vpop.f32.mrb[0].mxu0
      %v6885 = vadd.f32 0.0, %v6884
      %v6886 = vpop.f32.mrb[0].mxu0
      %6887 = vmatprep.mubr.f32.mxu0 0.0
      %6888 = vmatmul.mubr.f32.gmra.mrb[0].mxu0 %v6753
      %v6889 = vpop.f32.mrb[0].mxu0
      %v6890 = vadd.f32 0.0, %v6889
      %v6891 = vpop.f32.mrb[0].mxu0
      %6892 = vmatprep.mubr.f32.mxu0 0.0
      %6893 = vmatmul.mubr.f32.gmra.mrb[0].mxu0 %v6755
      %v6894 = vpop.f32.mrb[0].mxu0
      %v6895 = vadd.f32 0.0, %v6894
      %v6896 = vpop.f32.mrb[0].mxu0
      %6897 = vmatprep.mubr.f32.mxu0 0.0
      %6898 = vmatmul.mubr.f32.gmra.mrb[0].mxu0 %v6757
      %v6899 = vpop.f32.mrb[0].mxu0
      %v6900 = vadd.f32 0.0, %v6899
      %v6901 = vpop.f32.mrb[0].mxu0
      %6902 = vmatprep.mubr.f32.mxu0 0.0
      %6903 = vmatmul.mubr.f32.gmra.mrb[0].mxu0 %v6759
      %v6904 = vpop.f32.mrb[0].mxu0
      %v6905 = vadd.f32 0.0, %v6904
      %v6906 = vpop.f32.mrb[0].mxu0
      %6907 = vmatprep.mubr.f32.mxu0 0.0
      %6908 = vmatmul.mubr.f32.gmra.mrb[0].mxu0 %v6761
      %v6909 = vpop.f32.mrb[0].mxu0
      %v6910 = vadd.f32 0.0, %v6909
      %v6911 = vpop.f32.mrb[0].mxu0
      %6912 = vmatprep.mubr.f32.mxu0 0.0
      %6913 = vmatmul.mubr.f32.gmra.mrb[0].mxu0 %v6763
      %v6914 = vpop.f32.mrb[0].mxu0
      %v6915 = vadd.f32 0.0, %v6914
      %v6916 = vpop.f32.mrb[0].mxu0
      %6917 = vmatprep.mubr.f32.mxu0 0.0
      %6918 = vmatmul.mubr.f32.gmra.mrb[0].mxu0 %v6765
      %v6919 = vpop.f32.mrb[0].mxu0
      %v6920 = vadd.f32 0.0, %v6919
      %v6921 = vpop.f32.mrb[0].mxu0
      %6922 = vmatprep.mubr.f32.mxu0 0.0
      %6923 = vmatmul.mubr.f32.gmra.mrb[0].mxu0 %v6767
      %v6924 = vpop.f32.mrb[0].mxu0
      %v6925 = vadd.f32 0.0, %v6924
      %v6926 = vpop.f32.mrb[0].mxu0
      %6927 = vmatprep.mubr.f32.mxu0 0.0
      %6928 = vmatmul.mubr.f32.gmra.mrb[0].mxu0 %v6769
      %v6929 = vpop.f32.mrb[0].mxu0
      %v6930 = vadd.f32 0.0, %v6929
      %v6931 = vpop.f32.mrb[0].mxu0
      %6932 = vmatprep.mubr.f32.mxu0 0.0
      %6933 = vmatmul.mubr.f32.gmra.mrb[0].mxu0 %v6771
      %v6934 = vpop.f32.mrb[0].mxu0
      %v6935 = vadd.f32 0.0, %v6934
      %v6936 = vpop.f32.mrb[0].mxu0
      %6937 = vmatprep.mubr.f32.mxu0 0.0
      %6938 = vmatmul.mubr.f32.gmra.mrb[0].mxu0 %v6773
      %v6939 = vpop.f32.mrb[0].mxu0
      %v6940 = vadd.f32 0.0, %v6939
      %v6941 = vpop.f32.mrb[0].mxu0
      %6942 = vmatprep.mubr.f32.mxu0 0.0
      %6943 = vmatmul.mubr.f32.gmra.mrb[0].mxu0 %v6775
      %v6944 = vpop.f32.mrb[0].mxu0
      %v6945 = vadd.f32 0.0, %v6944
      %v6946 = vpop.f32.mrb[0].mxu0
      %6947 = vmatprep.mubr.f32.mxu0 0.0
      %6948 = vmatmul.mubr.f32.gmra.mrb[0].mxu0 %v6777
      %v6949 = vpop.f32.mrb[0].mxu0
      %v6950 = vadd.f32 0.0, %v6949
      %v6951 = vpop.f32.mrb[0].mxu0
      %6952 = vmatprep.mubr.f32.mxu0 0.0
      %6953 = vmatmul.mubr.f32.gmra.mrb[0].mxu0 %v6779
      %v6954 = vpop.f32.mrb[0].mxu0
      %v6955 = vadd.f32 0.0, %v6954
      %v6956 = vpop.f32.mrb[0].mxu0
      %6957 = vmatprep.mubr.f32.mxu0 0.0
      %6958 = vmatmul.mubr.f32.gmra.mrb[0].mxu0 %v6781
      %v6959 = vpop.f32.mrb[0].mxu0
      %v6960 = vadd.f32 0.0, %v6959
      %v6961 = vpop.f32.mrb[0].mxu0
      %6962 = vmatprep.mubr.f32.mxu0 0.0
      %6963 = vmatmul.mubr.f32.gmra.mrb[0].mxu0 %v6783
      %v6964 = vpop.f32.mrb[0].mxu0
      %v6965 = vadd.f32 0.0, %v6964
      %v6966 = vpop.f32.mrb[0].mxu0
      %6967 = vmatprep.mubr.f32.mxu0 0.0
      %6968 = vmatmul.mubr.f32.gmra.mrb[0].mxu0 %v6785
      %v6969 = vpop.f32.mrb[0].mxu0
      %v6970 = vadd.f32 0.0, %v6969
      %v6971 = vpop.f32.mrb[0].mxu0
      %6972 = vmatprep.mubr.f32.mxu0 0.0
      %6973 = vmatmul.mubr.f32.gmra.mrb[0].mxu0 %v6787
      %v6974 = vpop.f32.mrb[0].mxu0
      %v6975 = vadd.f32 0.0, %v6974
      %v6976 = vpop.f32.mrb[0].mxu0
      %6977 = vmatprep.mubr.f32.mxu0 0.0
      %6978 = vmatmul.mubr.f32.gmra.mrb[0].mxu0 %v6789
      %v6979 = vpop.f32.mrb[0].mxu0
      %v6980 = vadd.f32 0.0, %v6979
      %v6981 = vpop.f32.mrb[0].mxu0
      %6982 = vmatprep.mubr.f32.mxu0 0.0
      %6983 = vmatmul.mubr.f32.gmra.mrb[0].mxu0 %v6791
      %v6984 = vpop.f32.mrb[0].mxu0
      %v6985 = vadd.f32 0.0, %v6984
      %v6986 = vpop.f32.mrb[0].mxu0
      %6987 = vmatprep.mubr.f32.mxu0 0.0
      %6988 = vmatmul.mubr.f32.gmra.mrb[0].mxu0 %v6793
      %v6989 = vpop.f32.mrb[0].mxu0
      %v6990 = vadd.f32 0.0, %v6989
      %v6991 = vpop.f32.mrb[0].mxu0
      %6992 = vmatprep.mubr.f32.mxu0 0.0
      %6993 = vmatmul.mubr.f32.gmra.mrb[0].mxu0 %v6795
      %v6994 = vpop.f32.mrb[0].mxu0
      %v6995 = vadd.f32 0.0, %v6994
      %v6996 = vpop.f32.mrb[0].mxu0
      %6997 = vmatprep.mubr.f32.mxu0 0.0
      %6998 = vmatmul.mubr.f32.gmra.mrb[0].mxu0 %v6797
      %v6999 = vpop.f32.mrb[0].mxu0
      %v7000 = vadd.f32 0.0, %v6999
      %v7001 = vpop.f32.mrb[0].mxu0
      %7002 = vmatprep.mubr.f32.mxu0 0.0
      %7003 = vmatmul.mubr.f32.gmra.mrb[0].mxu0 %v6799
      %v7004 = vpop.f32.mrb[0].mxu0
      %v7005 = vadd.f32 0.0, %v7004
      %v7006 = vpop.f32.mrb[0].mxu0
      %7007 = vmatprep.mubr.f32.mxu0 0.0
      %7008 = vmatmul.mubr.f32.gmra.mrb[0].mxu0 %v6801
      %v7009 = vpop.f32.mrb[0].mxu0
      %v7010 = vadd.f32 0.0, %v7009
      %v7011 = vpop.f32.mrb[0].mxu0
      %7012 = vmatprep.mubr.f32.mxu0 0.0
      %7013 = vmatmul.mubr.f32.gmra.mrb[0].mxu0 %v6803
      %v7014 = vpop.f32.mrb[0].mxu0
      %v7015 = vadd.f32 0.0, %v7014
      %v7016 = vpop.f32.mrb[0].mxu0
      %7017 = vmatprep.mubr.f32.mxu0 0.0
      %7018 = vmatmul.mubr.f32.gmra.mrb[0].mxu0 %v6805
      %v7019 = vpop.f32.mrb[0].mxu0
      %v7020 = vadd.f32 0.0, %v7019
      %v7021 = vpop.f32.mrb[0].mxu0
      %7022 = vmatprep.mubr.f32.mxu0 0.0
      %7023 = vmatmul.mubr.f32.gmra.mrb[0].mxu0 %v6807
      %v7024 = vpop.f32.mrb[0].mxu0
      %v7025 = vadd.f32 0.0, %v7024
      %v7026 = vpop.f32.mrb[0].mxu0
      %7027 = vmatprep.mubr.f32.mxu0 0.0
      %7028 = vmatmul.mubr.f32.gmra.mrb[0].mxu0 %v6809
      %v7029 = vpop.f32.mrb[0].mxu0
      %v7030 = vadd.f32 0.0, %v7029
      %v7031 = vpop.f32.mrb[0].mxu0
      %7032 = vmatprep.mubr.f32.mxu0 0.0
      %7033 = vmatmul.mubr.f32.gmra.mrb[0].mxu0 %v6811
      %v7034 = vpop.f32.mrb[0].mxu0
      %v7035 = vadd.f32 0.0, %v7034
      %v7036 = vpop.f32.mrb[0].mxu0
      %7037 = vdwg.mxu0
      %v7038 = vsel %vm412, %v6619, 0
      %v7040 = vsel %vm412, %v6620, 0
      %v7042 = vsel %vm412, %v6621, 0
      %v7044 = vsel %vm412, %v6622, 0
      %v7046 = vsel %vm412, %v6623, 0
      %v7048 = vsel %vm412, %v6624, 0
      %v7050 = vsel %vm412, %v6625, 0
      %v7052 = vsel %vm412, %v6626, 0
      %v7054 = vsel %vm412, %v6627, 0
      %v7056 = vsel %vm412, %v6628, 0
      %v7058 = vsel %vm412, %v6629, 0
      %v7060 = vsel %vm412, %v6630, 0
      %v7062 = vsel %vm412, %v6631, 0
      %v7064 = vsel %vm412, %v6632, 0
      %v7066 = vsel %vm412, %v6633, 0
      %v7068 = vsel %vm412, %v6634, 0
      %v7070 = vsel %vm412, %v6635, 0
      %v7072 = vsel %vm412, %v6636, 0
      %v7074 = vsel %vm412, %v6637, 0
      %v7076 = vsel %vm412, %v6638, 0
      %v7078 = vsel %vm412, %v6639, 0
      %v7080 = vsel %vm412, %v6640, 0
      %v7082 = vsel %vm412, %v6641, 0
      %v7084 = vsel %vm412, %v6642, 0
      %v7086 = vsel %vm412, %v6643, 0
      %v7088 = vsel %vm412, %v6644, 0
      %v7090 = vsel %vm412, %v6645, 0
      %v7092 = vsel %vm412, %v6646, 0
      %v7094 = vsel %vm412, %v6647, 0
      %v7096 = vsel %vm412, %v6648, 0
      %v7098 = vsel %vm412, %v6649, 0
      %v7100 = vsel %vm412, %v6650, 0
      %7102 = vmatprep.subr.mxu0 0.0
      %7103 = vmatpush1.msra.mxu0 %v6651
      %7104 = vmatprep.subr.mxu0 0.0
      %7105 = vmatpush1.msra.mxu0 0.0
      %7106 = vmatprep.subr.mxu0 0.0
      %7107 = vmatpush1.msra.mxu0 0.0
      %7108 = vmatprep.subr.mxu0 0.0
      %7109 = vmatpush1.msra.mxu0 0.0
      %7110 = vmatprep.subr.mxu0 0.0
      %7111 = vmatpush1.msra.mxu0 0.0
      %7112 = vmatprep.subr.mxu0 0.0
      %7113 = vmatpush1.msra.mxu0 0.0
      %7114 = vmatprep.subr.mxu0 0.0
      %7115 = vmatpush1.msra.mxu0 0.0
      %7116 = vmatprep.subr.mxu0 0.0
      %7117 = vmatpush1.msra.mxu0 0.0
      %7118 = vmatprep.subr.mxu0 0.0
      %7119 = vmatpush1.msra.mxu0 0.0
      %7120 = vmatprep.subr.mxu0 0.0
      %7121 = vmatpush1.msra.mxu0 0.0
      %7122 = vmatprep.subr.mxu0 0.0
      %7123 = vmatpush1.msra.mxu0 0.0
      %7124 = vmatprep.subr.mxu0 0.0
      %7125 = vmatpush1.msra.mxu0 0.0
      %7126 = vmatprep.subr.mxu0 0.0
      %7127 = vmatpush1.msra.mxu0 0.0
      %7128 = vmatprep.subr.mxu0 0.0
      %7129 = vmatpush1.msra.mxu0 0.0
      %7130 = vmatprep.subr.mxu0 0.0
      %7131 = vmatpush1.msra.mxu0 0.0
      %7132 = vmatprep.subr.mxu0 0.0
      %7133 = vmatpush1.msra.mxu0 0.0
      %7134 = vmatprep.subr.mxu0 0.0
      %7135 = vmatpush1.msra.mxu0 0.0
      %7136 = vmatprep.subr.mxu0 0.0
      %7137 = vmatpush1.msra.mxu0 0.0
      %7138 = vmatprep.subr.mxu0 0.0
      %7139 = vmatpush1.msra.mxu0 0.0
      %7140 = vmatprep.subr.mxu0 0.0
      %7141 = vmatpush1.msra.mxu0 0.0
      %7142 = vmatprep.subr.mxu0 0.0
      %7143 = vmatpush1.msra.mxu0 0.0
      %7144 = vmatprep.subr.mxu0 0.0
      %7145 = vmatpush1.msra.mxu0 0.0
      %7146 = vmatprep.subr.mxu0 0.0
      %7147 = vmatpush1.msra.mxu0 0.0
      %7148 = vmatprep.subr.mxu0 0.0
      %7149 = vmatpush1.msra.mxu0 0.0
      %7150 = vmatprep.subr.mxu0 0.0
      %7151 = vmatpush1.msra.mxu0 0.0
      %7152 = vmatprep.subr.mxu0 0.0
      %7153 = vmatpush1.msra.mxu0 0.0
      %7154 = vmatprep.subr.mxu0 0.0
      %7155 = vmatpush1.msra.mxu0 0.0
      %7156 = vmatprep.subr.mxu0 0.0
      %7157 = vmatpush1.msra.mxu0 0.0
      %7158 = vmatprep.subr.mxu0 0.0
      %7159 = vmatpush1.msra.mxu0 0.0
      %7160 = vmatprep.subr.mxu0 0.0
      %7161 = vmatpush1.msra.mxu0 0.0
      %7162 = vmatprep.subr.mxu0 0.0
      %7163 = vmatpush1.msra.mxu0 0.0
      %7164 = vmatprep.subr.mxu0 0.0
      %7165 = vmatpush1.msra.mxu0 0.0
      %7166 = vmatprep.mubr.f32.mxu0 0.0
      %7167 = vmatmul.mubr.f32.gmra.mrb[0].mxu0 %v7038
      %v7168 = vpop.f32.mrb[0].mxu0
      %v7169 = vadd.f32 %v6880, %v7168
      %v7170 = vpop.f32.mrb[0].mxu0
      %7171 = vmatprep.mubr.f32.mxu0 0.0
      %7172 = vmatmul.mubr.f32.gmra.mrb[0].mxu0 %v7040
      %v7173 = vpop.f32.mrb[0].mxu0
      %v7174 = vadd.f32 %v6885, %v7173
      %v7175 = vpop.f32.mrb[0].mxu0
      %7176 = vmatprep.mubr.f32.mxu0 0.0
      %7177 = vmatmul.mubr.f32.gmra.mrb[0].mxu0 %v7042
      %v7178 = vpop.f32.mrb[0].mxu0
      %v7179 = vadd.f32 %v6890, %v7178
      %v7180 = vpop.f32.mrb[0].mxu0
      %7181 = vmatprep.mubr.f32.mxu0 0.0
      %7182 = vmatmul.mubr.f32.gmra.mrb[0].mxu0 %v7044
      %v7183 = vpop.f32.mrb[0].mxu0
      %v7184 = vadd.f32 %v6895, %v7183
      %v7185 = vpop.f32.mrb[0].mxu0
      %7186 = vmatprep.mubr.f32.mxu0 0.0
      %7187 = vmatmul.mubr.f32.gmra.mrb[0].mxu0 %v7046
      %v7188 = vpop.f32.mrb[0].mxu0
      %v7189 = vadd.f32 %v6900, %v7188
      %v7190 = vpop.f32.mrb[0].mxu0
      %7191 = vmatprep.mubr.f32.mxu0 0.0
      %7192 = vmatmul.mubr.f32.gmra.mrb[0].mxu0 %v7048
      %v7193 = vpop.f32.mrb[0].mxu0
      %v7194 = vadd.f32 %v6905, %v7193
      %v7195 = vpop.f32.mrb[0].mxu0
      %7196 = vmatprep.mubr.f32.mxu0 0.0
      %7197 = vmatmul.mubr.f32.gmra.mrb[0].mxu0 %v7050
      %v7198 = vpop.f32.mrb[0].mxu0
      %v7199 = vadd.f32 %v6910, %v7198
      %v7200 = vpop.f32.mrb[0].mxu0
      %7201 = vmatprep.mubr.f32.mxu0 0.0
      %7202 = vmatmul.mubr.f32.gmra.mrb[0].mxu0 %v7052
      %v7203 = vpop.f32.mrb[0].mxu0
      %v7204 = vadd.f32 %v6915, %v7203
      %v7205 = vpop.f32.mrb[0].mxu0
      %7206 = vmatprep.mubr.f32.mxu0 0.0
      %7207 = vmatmul.mubr.f32.gmra.mrb[0].mxu0 %v7054
      %v7208 = vpop.f32.mrb[0].mxu0
      %v7209 = vadd.f32 %v6920, %v7208
      %v7210 = vpop.f32.mrb[0].mxu0
      %7211 = vmatprep.mubr.f32.mxu0 0.0
      %7212 = vmatmul.mubr.f32.gmra.mrb[0].mxu0 %v7056
      %v7213 = vpop.f32.mrb[0].mxu0
      %v7214 = vadd.f32 %v6925, %v7213
      %v7215 = vpop.f32.mrb[0].mxu0
      %7216 = vmatprep.mubr.f32.mxu0 0.0
      %7217 = vmatmul.mubr.f32.gmra.mrb[0].mxu0 %v7058
      %v7218 = vpop.f32.mrb[0].mxu0
      %v7219 = vadd.f32 %v6930, %v7218
      %v7220 = vpop.f32.mrb[0].mxu0
      %7221 = vmatprep.mubr.f32.mxu0 0.0
      %7222 = vmatmul.mubr.f32.gmra.mrb[0].mxu0 %v7060
      %v7223 = vpop.f32.mrb[0].mxu0
      %v7224 = vadd.f32 %v6935, %v7223
      %v7225 = vpop.f32.mrb[0].mxu0
      %7226 = vmatprep.mubr.f32.mxu0 0.0
      %7227 = vmatmul.mubr.f32.gmra.mrb[0].mxu0 %v7062
      %v7228 = vpop.f32.mrb[0].mxu0
      %v7229 = vadd.f32 %v6940, %v7228
      %v7230 = vpop.f32.mrb[0].mxu0
      %7231 = vmatprep.mubr.f32.mxu0 0.0
      %7232 = vmatmul.mubr.f32.gmra.mrb[0].mxu0 %v7064
      %v7233 = vpop.f32.mrb[0].mxu0
      %v7234 = vadd.f32 %v6945, %v7233
      %v7235 = vpop.f32.mrb[0].mxu0
      %7236 = vmatprep.mubr.f32.mxu0 0.0
      %7237 = vmatmul.mubr.f32.gmra.mrb[0].mxu0 %v7066
      %v7238 = vpop.f32.mrb[0].mxu0
      %v7239 = vadd.f32 %v6950, %v7238
      %v7240 = vpop.f32.mrb[0].mxu0
      %7241 = vmatprep.mubr.f32.mxu0 0.0
      %7242 = vmatmul.mubr.f32.gmra.mrb[0].mxu0 %v7068
      %v7243 = vpop.f32.mrb[0].mxu0
      %v7244 = vadd.f32 %v6955, %v7243
      %v7245 = vpop.f32.mrb[0].mxu0
      %7246 = vmatprep.mubr.f32.mxu0 0.0
      %7247 = vmatmul.mubr.f32.gmra.mrb[0].mxu0 %v7070
      %v7248 = vpop.f32.mrb[0].mxu0
      %v7249 = vadd.f32 %v6960, %v7248
      %v7250 = vpop.f32.mrb[0].mxu0
      %7251 = vmatprep.mubr.f32.mxu0 0.0
      %7252 = vmatmul.mubr.f32.gmra.mrb[0].mxu0 %v7072
      %v7253 = vpop.f32.mrb[0].mxu0
      %v7254 = vadd.f32 %v6965, %v7253
      %v7255 = vpop.f32.mrb[0].mxu0
      %7256 = vmatprep.mubr.f32.mxu0 0.0
      %7257 = vmatmul.mubr.f32.gmra.mrb[0].mxu0 %v7074
      %v7258 = vpop.f32.mrb[0].mxu0
      %v7259 = vadd.f32 %v6970, %v7258
      %v7260 = vpop.f32.mrb[0].mxu0
      %7261 = vmatprep.mubr.f32.mxu0 0.0
      %7262 = vmatmul.mubr.f32.gmra.mrb[0].mxu0 %v7076
      %v7263 = vpop.f32.mrb[0].mxu0
      %v7264 = vadd.f32 %v6975, %v7263
      %v7265 = vpop.f32.mrb[0].mxu0
      %7266 = vmatprep.mubr.f32.mxu0 0.0
      %7267 = vmatmul.mubr.f32.gmra.mrb[0].mxu0 %v7078
      %v7268 = vpop.f32.mrb[0].mxu0
      %v7269 = vadd.f32 %v6980, %v7268
      %v7270 = vpop.f32.mrb[0].mxu0
      %7271 = vmatprep.mubr.f32.mxu0 0.0
      %7272 = vmatmul.mubr.f32.gmra.mrb[0].mxu0 %v7080
      %v7273 = vpop.f32.mrb[0].mxu0
      %v7274 = vadd.f32 %v6985, %v7273
      %v7275 = vpop.f32.mrb[0].mxu0
      %7276 = vmatprep.mubr.f32.mxu0 0.0
      %7277 = vmatmul.mubr.f32.gmra.mrb[0].mxu0 %v7082
      %v7278 = vpop.f32.mrb[0].mxu0
      %v7279 = vadd.f32 %v6990, %v7278
      %v7280 = vpop.f32.mrb[0].mxu0
      %7281 = vmatprep.mubr.f32.mxu0 0.0
      %7282 = vmatmul.mubr.f32.gmra.mrb[0].mxu0 %v7084
      %v7283 = vpop.f32.mrb[0].mxu0
      %v7284 = vadd.f32 %v6995, %v7283
      %v7285 = vpop.f32.mrb[0].mxu0
      %7286 = vmatprep.mubr.f32.mxu0 0.0
      %7287 = vmatmul.mubr.f32.gmra.mrb[0].mxu0 %v7086
      %v7288 = vpop.f32.mrb[0].mxu0
      %v7289 = vadd.f32 %v7000, %v7288
      %v7290 = vpop.f32.mrb[0].mxu0
      %7291 = vmatprep.mubr.f32.mxu0 0.0
      %7292 = vmatmul.mubr.f32.gmra.mrb[0].mxu0 %v7088
      %v7293 = vpop.f32.mrb[0].mxu0
      %v7294 = vadd.f32 %v7005, %v7293
      %v7295 = vpop.f32.mrb[0].mxu0
      %7296 = vmatprep.mubr.f32.mxu0 0.0
      %7297 = vmatmul.mubr.f32.gmra.mrb[0].mxu0 %v7090
      %v7298 = vpop.f32.mrb[0].mxu0
      %v7299 = vadd.f32 %v7010, %v7298
      %v7300 = vpop.f32.mrb[0].mxu0
      %7301 = vmatprep.mubr.f32.mxu0 0.0
      %7302 = vmatmul.mubr.f32.gmra.mrb[0].mxu0 %v7092
      %v7303 = vpop.f32.mrb[0].mxu0
      %v7304 = vadd.f32 %v7015, %v7303
      %v7305 = vpop.f32.mrb[0].mxu0
      %7306 = vmatprep.mubr.f32.mxu0 0.0
      %7307 = vmatmul.mubr.f32.gmra.mrb[0].mxu0 %v7094
      %v7308 = vpop.f32.mrb[0].mxu0
      %v7309 = vadd.f32 %v7020, %v7308
      %v7310 = vpop.f32.mrb[0].mxu0
      %7311 = vmatprep.mubr.f32.mxu0 0.0
      %7312 = vmatmul.mubr.f32.gmra.mrb[0].mxu0 %v7096
      %v7313 = vpop.f32.mrb[0].mxu0
      %v7314 = vadd.f32 %v7025, %v7313
      %v7315 = vpop.f32.mrb[0].mxu0
      %7316 = vmatprep.mubr.f32.mxu0 0.0
      %7317 = vmatmul.mubr.f32.gmra.mrb[0].mxu0 %v7098
      %v7318 = vpop.f32.mrb[0].mxu0
      %v7319 = vadd.f32 %v7030, %v7318
      %v7320 = vpop.f32.mrb[0].mxu0
      %7321 = vmatprep.mubr.f32.mxu0 0.0
      %7322 = vmatmul.mubr.f32.gmra.mrb[0].mxu0 %v7100
      %v7323 = vpop.f32.mrb[0].mxu0
      %v7324 = vadd.f32 %v7035, %v7323
      %v7325 = vpop.f32.mrb[0].mxu0
      %7326 = vdwg.mxu0
      %v7327 = vld [vmem:[%s7 + $0x10] sm:$0xff]
      %7328 = vrot.lane.b32.xlu0 %v6619, 112
      %v7329 = vpop.permute.xlu0 %7328
      %7330 = vrot.lane.b32.xlu0 %v6620, 112
      %v7331 = vpop.permute.xlu0 %7330
      %7332 = vrot.lane.b32.xlu0 %v6621, 112
      %v7333 = vpop.permute.xlu0 %7332
      %7334 = vrot.lane.b32.xlu0 %v6622, 112
      %v7335 = vpop.permute.xlu0 %7334
      %7336 = vrot.lane.b32.xlu0 %v6623, 112
      %v7337 = vpop.permute.xlu0 %7336
      %7338 = vrot.lane.b32.xlu0 %v6624, 112
      %v7339 = vpop.permute.xlu0 %7338
      %7340 = vrot.lane.b32.xlu0 %v6625, 112
      %v7341 = vpop.permute.xlu0 %7340
      %7342 = vrot.lane.b32.xlu0 %v6626, 112
      %v7343 = vpop.permute.xlu0 %7342
      %7344 = vrot.lane.b32.xlu0 %v6627, 112
      %v7345 = vpop.permute.xlu0 %7344
      %7346 = vrot.lane.b32.xlu0 %v6628, 112
      %v7347 = vpop.permute.xlu0 %7346
      %7348 = vrot.lane.b32.xlu0 %v6629, 112
      %v7349 = vpop.permute.xlu0 %7348
      %7350 = vrot.lane.b32.xlu0 %v6630, 112
      %v7351 = vpop.permute.xlu0 %7350
      %7352 = vrot.lane.b32.xlu0 %v6631, 112
      %v7353 = vpop.permute.xlu0 %7352
      %7354 = vrot.lane.b32.xlu0 %v6632, 112
      %v7355 = vpop.permute.xlu0 %7354
      %7356 = vrot.lane.b32.xlu0 %v6633, 112
      %v7357 = vpop.permute.xlu0 %7356
      %7358 = vrot.lane.b32.xlu0 %v6634, 112
      %v7359 = vpop.permute.xlu0 %7358
      %7360 = vrot.lane.b32.xlu0 %v6635, 112
      %v7361 = vpop.permute.xlu0 %7360
      %7362 = vrot.lane.b32.xlu0 %v6636, 112
      %v7363 = vpop.permute.xlu0 %7362
      %7364 = vrot.lane.b32.xlu0 %v6637, 112
      %v7365 = vpop.permute.xlu0 %7364
      %7366 = vrot.lane.b32.xlu0 %v6638, 112
      %v7367 = vpop.permute.xlu0 %7366
      %7368 = vrot.lane.b32.xlu0 %v6639, 112
      %v7369 = vpop.permute.xlu0 %7368
      %7370 = vrot.lane.b32.xlu0 %v6640, 112
      %v7371 = vpop.permute.xlu0 %7370
      %7372 = vrot.lane.b32.xlu0 %v6641, 112
      %v7373 = vpop.permute.xlu0 %7372
      %7374 = vrot.lane.b32.xlu0 %v6642, 112
      %v7375 = vpop.permute.xlu0 %7374
      %7376 = vrot.lane.b32.xlu0 %v6643, 112
      %v7377 = vpop.permute.xlu0 %7376
      %7378 = vrot.lane.b32.xlu0 %v6644, 112
      %v7379 = vpop.permute.xlu0 %7378
      %7380 = vrot.lane.b32.xlu0 %v6645, 112
      %v7381 = vpop.permute.xlu0 %7380
      %7382 = vrot.lane.b32.xlu0 %v6646, 112
      %v7383 = vpop.permute.xlu0 %7382
      %7384 = vrot.lane.b32.xlu0 %v6647, 112
      %v7385 = vpop.permute.xlu0 %7384
      %7386 = vrot.lane.b32.xlu0 %v6648, 112
      %v7387 = vpop.permute.xlu0 %7386
      %7388 = vrot.lane.b32.xlu0 %v6649, 112
      %v7389 = vpop.permute.xlu0 %7388
      %7390 = vrot.lane.b32.xlu0 %v6650, 112
      %v7391 = vpop.permute.xlu0 %7390
      %v7392 = vsel %vm412, %v7329, 0
      %v7394 = vsel %vm412, %v7331, 0
      %v7396 = vsel %vm412, %v7333, 0
      %v7398 = vsel %vm412, %v7335, 0
      %v7400 = vsel %vm412, %v7337, 0
      %v7402 = vsel %vm412, %v7339, 0
      %v7404 = vsel %vm412, %v7341, 0
      %v7406 = vsel %vm412, %v7343, 0
      %v7408 = vsel %vm412, %v7345, 0
      %v7410 = vsel %vm412, %v7347, 0
      %v7412 = vsel %vm412, %v7349, 0
      %v7414 = vsel %vm412, %v7351, 0
      %v7416 = vsel %vm412, %v7353, 0
      %v7418 = vsel %vm412, %v7355, 0
      %v7420 = vsel %vm412, %v7357, 0
      %v7422 = vsel %vm412, %v7359, 0
      %v7424 = vsel %vm412, %v7361, 0
      %v7426 = vsel %vm412, %v7363, 0
      %v7428 = vsel %vm412, %v7365, 0
      %v7430 = vsel %vm412, %v7367, 0
      %v7432 = vsel %vm412, %v7369, 0
      %v7434 = vsel %vm412, %v7371, 0
      %v7436 = vsel %vm412, %v7373, 0
      %v7438 = vsel %vm412, %v7375, 0
      %v7440 = vsel %vm412, %v7377, 0
      %v7442 = vsel %vm412, %v7379, 0
      %v7444 = vsel %vm412, %v7381, 0
      %v7446 = vsel %vm412, %v7383, 0
      %v7448 = vsel %vm412, %v7385, 0
      %v7450 = vsel %vm412, %v7387, 0
      %v7452 = vsel %vm412, %v7389, 0
      %v7454 = vsel %vm412, %v7391, 0
      %7456 = vmatprep.subr.mxu0 0.0
      %7457 = vmatpush1.msra.mxu0 %v7327
      %7458 = vmatprep.subr.mxu0 0.0
      %7459 = vmatpush1.msra.mxu0 0.0
      %7460 = vmatprep.subr.mxu0 0.0
      %7461 = vmatpush1.msra.mxu0 0.0
      %7462 = vmatprep.subr.mxu0 0.0
      %7463 = vmatpush1.msra.mxu0 0.0
      %7464 = vmatprep.subr.mxu0 0.0
      %7465 = vmatpush1.msra.mxu0 0.0
      %7466 = vmatprep.subr.mxu0 0.0
      %7467 = vmatpush1.msra.mxu0 0.0
      %7468 = vmatprep.subr.mxu0 0.0
      %7469 = vmatpush1.msra.mxu0 0.0
      %7470 = vmatprep.subr.mxu0 0.0
      %7471 = vmatpush1.msra.mxu0 0.0
      %7472 = vmatprep.subr.mxu0 0.0
      %7473 = vmatpush1.msra.mxu0 0.0
      %7474 = vmatprep.subr.mxu0 0.0
      %7475 = vmatpush1.msra.mxu0 0.0
      %7476 = vmatprep.subr.mxu0 0.0
      %7477 = vmatpush1.msra.mxu0 0.0
      %7478 = vmatprep.subr.mxu0 0.0
      %7479 = vmatpush1.msra.mxu0 0.0
      %7480 = vmatprep.subr.mxu0 0.0
      %7481 = vmatpush1.msra.mxu0 0.0
      %7482 = vmatprep.subr.mxu0 0.0
      %7483 = vmatpush1.msra.mxu0 0.0
      %7484 = vmatprep.subr.mxu0 0.0
      %7485 = vmatpush1.msra.mxu0 0.0
      %7486 = vmatprep.subr.mxu0 0.0
      %7487 = vmatpush1.msra.mxu0 0.0
      %7488 = vmatprep.subr.mxu0 0.0
      %7489 = vmatpush1.msra.mxu0 0.0
      %7490 = vmatprep.subr.mxu0 0.0
      %7491 = vmatpush1.msra.mxu0 0.0
      %7492 = vmatprep.subr.mxu0 0.0
      %7493 = vmatpush1.msra.mxu0 0.0
      %7494 = vmatprep.subr.mxu0 0.0
      %7495 = vmatpush1.msra.mxu0 0.0
      %7496 = vmatprep.subr.mxu0 0.0
      %7497 = vmatpush1.msra.mxu0 0.0
      %7498 = vmatprep.subr.mxu0 0.0
      %7499 = vmatpush1.msra.mxu0 0.0
      %7500 = vmatprep.subr.mxu0 0.0
      %7501 = vmatpush1.msra.mxu0 0.0
      %7502 = vmatprep.subr.mxu0 0.0
      %7503 = vmatpush1.msra.mxu0 0.0
      %7504 = vmatprep.subr.mxu0 0.0
      %7505 = vmatpush1.msra.mxu0 0.0
      %7506 = vmatprep.subr.mxu0 0.0
      %7507 = vmatpush1.msra.mxu0 0.0
      %7508 = vmatprep.subr.mxu0 0.0
      %7509 = vmatpush1.msra.mxu0 0.0
      %7510 = vmatprep.subr.mxu0 0.0
      %7511 = vmatpush1.msra.mxu0 0.0
      %7512 = vmatprep.subr.mxu0 0.0
      %7513 = vmatpush1.msra.mxu0 0.0
      %7514 = vmatprep.subr.mxu0 0.0
      %7515 = vmatpush1.msra.mxu0 0.0
      %7516 = vmatprep.subr.mxu0 0.0
      %7517 = vmatpush1.msra.mxu0 0.0
      %7518 = vmatprep.subr.mxu0 0.0
      %7519 = vmatpush1.msra.mxu0 0.0
      %7520 = vmatprep.mubr.f32.mxu0 0.0
      %7521 = vmatmul.mubr.f32.gmra.mrb[0].mxu0 %v7392
      %v7522 = vpop.f32.mrb[0].mxu0
      %v7523 = vadd.f32 0.0, %v7522
      %v7524 = vpop.f32.mrb[0].mxu0
      %7525 = vmatprep.mubr.f32.mxu0 0.0
      %7526 = vmatmul.mubr.f32.gmra.mrb[0].mxu0 %v7394
      %v7527 = vpop.f32.mrb[0].mxu0
      %v7528 = vadd.f32 0.0, %v7527
      %v7529 = vpop.f32.mrb[0].mxu0
      %7530 = vmatprep.mubr.f32.mxu0 0.0
      %7531 = vmatmul.mubr.f32.gmra.mrb[0].mxu0 %v7396
      %v7532 = vpop.f32.mrb[0].mxu0
      %v7533 = vadd.f32 0.0, %v7532
      %v7534 = vpop.f32.mrb[0].mxu0
      %7535 = vmatprep.mubr.f32.mxu0 0.0
      %7536 = vmatmul.mubr.f32.gmra.mrb[0].mxu0 %v7398
      %v7537 = vpop.f32.mrb[0].mxu0
      %v7538 = vadd.f32 0.0, %v7537
      %v7539 = vpop.f32.mrb[0].mxu0
      %7540 = vmatprep.mubr.f32.mxu0 0.0
      %7541 = vmatmul.mubr.f32.gmra.mrb[0].mxu0 %v7400
      %v7542 = vpop.f32.mrb[0].mxu0
      %v7543 = vadd.f32 0.0, %v7542
      %v7544 = vpop.f32.mrb[0].mxu0
      %7545 = vmatprep.mubr.f32.mxu0 0.0
      %7546 = vmatmul.mubr.f32.gmra.mrb[0].mxu0 %v7402
      %v7547 = vpop.f32.mrb[0].mxu0
      %v7548 = vadd.f32 0.0, %v7547
      %v7549 = vpop.f32.mrb[0].mxu0
      %7550 = vmatprep.mubr.f32.mxu0 0.0
      %7551 = vmatmul.mubr.f32.gmra.mrb[0].mxu0 %v7404
      %v7552 = vpop.f32.mrb[0].mxu0
      %v7553 = vadd.f32 0.0, %v7552
      %v7554 = vpop.f32.mrb[0].mxu0
      %7555 = vmatprep.mubr.f32.mxu0 0.0
      %7556 = vmatmul.mubr.f32.gmra.mrb[0].mxu0 %v7406
      %v7557 = vpop.f32.mrb[0].mxu0
      %v7558 = vadd.f32 0.0, %v7557
      %v7559 = vpop.f32.mrb[0].mxu0
      %7560 = vmatprep.mubr.f32.mxu0 0.0
      %7561 = vmatmul.mubr.f32.gmra.mrb[0].mxu0 %v7408
      %v7562 = vpop.f32.mrb[0].mxu0
      %v7563 = vadd.f32 0.0, %v7562
      %v7564 = vpop.f32.mrb[0].mxu0
      %7565 = vmatprep.mubr.f32.mxu0 0.0
      %7566 = vmatmul.mubr.f32.gmra.mrb[0].mxu0 %v7410
      %v7567 = vpop.f32.mrb[0].mxu0
      %v7568 = vadd.f32 0.0, %v7567
      %v7569 = vpop.f32.mrb[0].mxu0
      %7570 = vmatprep.mubr.f32.mxu0 0.0
      %7571 = vmatmul.mubr.f32.gmra.mrb[0].mxu0 %v7412
      %v7572 = vpop.f32.mrb[0].mxu0
      %v7573 = vadd.f32 0.0, %v7572
      %v7574 = vpop.f32.mrb[0].mxu0
      %7575 = vmatprep.mubr.f32.mxu0 0.0
      %7576 = vmatmul.mubr.f32.gmra.mrb[0].mxu0 %v7414
      %v7577 = vpop.f32.mrb[0].mxu0
      %v7578 = vadd.f32 0.0, %v7577
      %v7579 = vpop.f32.mrb[0].mxu0
      %7580 = vmatprep.mubr.f32.mxu0 0.0
      %7581 = vmatmul.mubr.f32.gmra.mrb[0].mxu0 %v7416
      %v7582 = vpop.f32.mrb[0].mxu0
      %v7583 = vadd.f32 0.0, %v7582
      %v7584 = vpop.f32.mrb[0].mxu0
      %7585 = vmatprep.mubr.f32.mxu0 0.0
      %7586 = vmatmul.mubr.f32.gmra.mrb[0].mxu0 %v7418
      %v7587 = vpop.f32.mrb[0].mxu0
      %v7588 = vadd.f32 0.0, %v7587
      %v7589 = vpop.f32.mrb[0].mxu0
      %7590 = vmatprep.mubr.f32.mxu0 0.0
      %7591 = vmatmul.mubr.f32.gmra.mrb[0].mxu0 %v7420
      %v7592 = vpop.f32.mrb[0].mxu0
      %v7593 = vadd.f32 0.0, %v7592
      %v7594 = vpop.f32.mrb[0].mxu0
      %7595 = vmatprep.mubr.f32.mxu0 0.0
      %7596 = vmatmul.mubr.f32.gmra.mrb[0].mxu0 %v7422
      %v7597 = vpop.f32.mrb[0].mxu0
      %v7598 = vadd.f32 0.0, %v7597
      %v7599 = vpop.f32.mrb[0].mxu0
      %7600 = vmatprep.mubr.f32.mxu0 0.0
      %7601 = vmatmul.mubr.f32.gmra.mrb[0].mxu0 %v7424
      %v7602 = vpop.f32.mrb[0].mxu0
      %v7603 = vadd.f32 0.0, %v7602
      %v7604 = vpop.f32.mrb[0].mxu0
      %7605 = vmatprep.mubr.f32.mxu0 0.0
      %7606 = vmatmul.mubr.f32.gmra.mrb[0].mxu0 %v7426
      %v7607 = vpop.f32.mrb[0].mxu0
      %v7608 = vadd.f32 0.0, %v7607
      %v7609 = vpop.f32.mrb[0].mxu0
      %7610 = vmatprep.mubr.f32.mxu0 0.0
      %7611 = vmatmul.mubr.f32.gmra.mrb[0].mxu0 %v7428
      %v7612 = vpop.f32.mrb[0].mxu0
      %v7613 = vadd.f32 0.0, %v7612
      %v7614 = vpop.f32.mrb[0].mxu0
      %7615 = vmatprep.mubr.f32.mxu0 0.0
      %7616 = vmatmul.mubr.f32.gmra.mrb[0].mxu0 %v7430
      %v7617 = vpop.f32.mrb[0].mxu0
      %v7618 = vadd.f32 0.0, %v7617
      %v7619 = vpop.f32.mrb[0].mxu0
      %7620 = vmatprep.mubr.f32.mxu0 0.0
      %7621 = vmatmul.mubr.f32.gmra.mrb[0].mxu0 %v7432
      %v7622 = vpop.f32.mrb[0].mxu0
      %v7623 = vadd.f32 0.0, %v7622
      %v7624 = vpop.f32.mrb[0].mxu0
      %7625 = vmatprep.mubr.f32.mxu0 0.0
      %7626 = vmatmul.mubr.f32.gmra.mrb[0].mxu0 %v7434
      %v7627 = vpop.f32.mrb[0].mxu0
      %v7628 = vadd.f32 0.0, %v7627
      %v7629 = vpop.f32.mrb[0].mxu0
      %7630 = vmatprep.mubr.f32.mxu0 0.0
      %7631 = vmatmul.mubr.f32.gmra.mrb[0].mxu0 %v7436
      %v7632 = vpop.f32.mrb[0].mxu0
      %v7633 = vadd.f32 0.0, %v7632
      %v7634 = vpop.f32.mrb[0].mxu0
      %7635 = vmatprep.mubr.f32.mxu0 0.0
      %7636 = vmatmul.mubr.f32.gmra.mrb[0].mxu0 %v7438
      %v7637 = vpop.f32.mrb[0].mxu0
      %v7638 = vadd.f32 0.0, %v7637
      %v7639 = vpop.f32.mrb[0].mxu0
      %7640 = vmatprep.mubr.f32.mxu0 0.0
      %7641 = vmatmul.mubr.f32.gmra.mrb[0].mxu0 %v7440
      %v7642 = vpop.f32.mrb[0].mxu0
      %v7643 = vadd.f32 0.0, %v7642
      %v7644 = vpop.f32.mrb[0].mxu0
      %7645 = vmatprep.mubr.f32.mxu0 0.0
      %7646 = vmatmul.mubr.f32.gmra.mrb[0].mxu0 %v7442
      %v7647 = vpop.f32.mrb[0].mxu0
      %v7648 = vadd.f32 0.0, %v7647
      %v7649 = vpop.f32.mrb[0].mxu0
      %7650 = vmatprep.mubr.f32.mxu0 0.0
      %7651 = vmatmul.mubr.f32.gmra.mrb[0].mxu0 %v7444
      %v7652 = vpop.f32.mrb[0].mxu0
      %v7653 = vadd.f32 0.0, %v7652
      %v7654 = vpop.f32.mrb[0].mxu0
      %7655 = vmatprep.mubr.f32.mxu0 0.0
      %7656 = vmatmul.mubr.f32.gmra.mrb[0].mxu0 %v7446
      %v7657 = vpop.f32.mrb[0].mxu0
      %v7658 = vadd.f32 0.0, %v7657
      %v7659 = vpop.f32.mrb[0].mxu0
      %7660 = vmatprep.mubr.f32.mxu0 0.0
      %7661 = vmatmul.mubr.f32.gmra.mrb[0].mxu0 %v7448
      %v7662 = vpop.f32.mrb[0].mxu0
      %v7663 = vadd.f32 0.0, %v7662
      %v7664 = vpop.f32.mrb[0].mxu0
      %7665 = vmatprep.mubr.f32.mxu0 0.0
      %7666 = vmatmul.mubr.f32.gmra.mrb[0].mxu0 %v7450
      %v7667 = vpop.f32.mrb[0].mxu0
      %v7668 = vadd.f32 0.0, %v7667
      %v7669 = vpop.f32.mrb[0].mxu0
      %7670 = vmatprep.mubr.f32.mxu0 0.0
      %7671 = vmatmul.mubr.f32.gmra.mrb[0].mxu0 %v7452
      %v7672 = vpop.f32.mrb[0].mxu0
      %v7673 = vadd.f32 0.0, %v7672
      %v7674 = vpop.f32.mrb[0].mxu0
      %7675 = vmatprep.mubr.f32.mxu0 0.0
      %7676 = vmatmul.mubr.f32.gmra.mrb[0].mxu0 %v7454
      %v7677 = vpop.f32.mrb[0].mxu0
      %v7678 = vadd.f32 0.0, %v7677
      %v7679 = vpop.f32.mrb[0].mxu0
      %7680 = vdwg.mxu0
      %v7681 = vadd.f32 %v7169, %v7523
      %v7682 = vadd.f32 %v7174, %v7528
      %v7683 = vadd.f32 %v7179, %v7533
      %v7684 = vadd.f32 %v7184, %v7538
      %v7685 = vadd.f32 %v7189, %v7543
      %v7686 = vadd.f32 %v7194, %v7548
      %v7687 = vadd.f32 %v7199, %v7553
      %v7688 = vadd.f32 %v7204, %v7558
      %v7689 = vadd.f32 %v7209, %v7563
      %v7690 = vadd.f32 %v7214, %v7568
      %v7691 = vadd.f32 %v7219, %v7573
      %v7692 = vadd.f32 %v7224, %v7578
      %v7693 = vadd.f32 %v7229, %v7583
      %v7694 = vadd.f32 %v7234, %v7588
      %v7695 = vadd.f32 %v7239, %v7593
      %v7696 = vadd.f32 %v7244, %v7598
      %v7697 = vadd.f32 %v7249, %v7603
      %v7698 = vadd.f32 %v7254, %v7608
      %v7699 = vadd.f32 %v7259, %v7613
      %v7700 = vadd.f32 %v7264, %v7618
      %v7701 = vadd.f32 %v7269, %v7623
      %v7702 = vadd.f32 %v7274, %v7628
      %v7703 = vadd.f32 %v7279, %v7633
      %v7704 = vadd.f32 %v7284, %v7638
      %v7705 = vadd.f32 %v7289, %v7643
      %v7706 = vadd.f32 %v7294, %v7648
      %v7707 = vadd.f32 %v7299, %v7653
      %v7708 = vadd.f32 %v7304, %v7658
      %v7709 = vadd.f32 %v7309, %v7663
      %v7710 = vadd.f32 %v7314, %v7668
      %v7711 = vadd.f32 %v7319, %v7673
      %v7712 = vadd.f32 %v7324, %v7678
      %v7713 = vld [vmem:[%s7 + $0x18] sm:$0xff]
      %7714 = vrot.lane.b32.xlu0 %v6619, 104
      %v7715 = vpop.permute.xlu0 %7714
      %7716 = vrot.lane.b32.xlu0 %v6620, 104
      %v7717 = vpop.permute.xlu0 %7716
      %7718 = vrot.lane.b32.xlu0 %v6621, 104
      %v7719 = vpop.permute.xlu0 %7718
      %7720 = vrot.lane.b32.xlu0 %v6622, 104
      %v7721 = vpop.permute.xlu0 %7720
      %7722 = vrot.lane.b32.xlu0 %v6623, 104
      %v7723 = vpop.permute.xlu0 %7722
      %7724 = vrot.lane.b32.xlu0 %v6624, 104
      %v7725 = vpop.permute.xlu0 %7724
      %7726 = vrot.lane.b32.xlu0 %v6625, 104
      %v7727 = vpop.permute.xlu0 %7726
      %7728 = vrot.lane.b32.xlu0 %v6626, 104
      %v7729 = vpop.permute.xlu0 %7728
      %7730 = vrot.lane.b32.xlu0 %v6627, 104
      %v7731 = vpop.permute.xlu0 %7730
      %7732 = vrot.lane.b32.xlu0 %v6628, 104
      %v7733 = vpop.permute.xlu0 %7732
      %7734 = vrot.lane.b32.xlu0 %v6629, 104
      %v7735 = vpop.permute.xlu0 %7734
      %7736 = vrot.lane.b32.xlu0 %v6630, 104
      %v7737 = vpop.permute.xlu0 %7736
      %7738 = vrot.lane.b32.xlu0 %v6631, 104
      %v7739 = vpop.permute.xlu0 %7738
      %7740 = vrot.lane.b32.xlu0 %v6632, 104
      %v7741 = vpop.permute.xlu0 %7740
      %7742 = vrot.lane.b32.xlu0 %v6633, 104
      %v7743 = vpop.permute.xlu0 %7742
      %7744 = vrot.lane.b32.xlu0 %v6634, 104
      %v7745 = vpop.permute.xlu0 %7744
      %7746 = vrot.lane.b32.xlu0 %v6635, 104
      %v7747 = vpop.permute.xlu0 %7746
      %7748 = vrot.lane.b32.xlu0 %v6636, 104
      %v7749 = vpop.permute.xlu0 %7748
      %7750 = vrot.lane.b32.xlu0 %v6637, 104
      %v7751 = vpop.permute.xlu0 %7750
      %7752 = vrot.lane.b32.xlu0 %v6638, 104
      %v7753 = vpop.permute.xlu0 %7752
      %7754 = vrot.lane.b32.xlu0 %v6639, 104
      %v7755 = vpop.permute.xlu0 %7754
      %7756 = vrot.lane.b32.xlu0 %v6640, 104
      %v7757 = vpop.permute.xlu0 %7756
      %7758 = vrot.lane.b32.xlu0 %v6641, 104
      %v7759 = vpop.permute.xlu0 %7758
      %7760 = vrot.lane.b32.xlu0 %v6642, 104
      %v7761 = vpop.permute.xlu0 %7760
      %7762 = vrot.lane.b32.xlu0 %v6643, 104
      %v7763 = vpop.permute.xlu0 %7762
      %7764 = vrot.lane.b32.xlu0 %v6644, 104
      %v7765 = vpop.permute.xlu0 %7764
      %7766 = vrot.lane.b32.xlu0 %v6645, 104
      %v7767 = vpop.permute.xlu0 %7766
      %7768 = vrot.lane.b32.xlu0 %v6646, 104
      %v7769 = vpop.permute.xlu0 %7768
      %7770 = vrot.lane.b32.xlu0 %v6647, 104
      %v7771 = vpop.permute.xlu0 %7770
      %7772 = vrot.lane.b32.xlu0 %v6648, 104
      %v7773 = vpop.permute.xlu0 %7772
      %7774 = vrot.lane.b32.xlu0 %v6649, 104
      %v7775 = vpop.permute.xlu0 %7774
      %7776 = vrot.lane.b32.xlu0 %v6650, 104
      %v7777 = vpop.permute.xlu0 %7776
      %v7778 = vsel %vm412, %v7715, 0
      %v7780 = vsel %vm412, %v7717, 0
      %v7782 = vsel %vm412, %v7719, 0
      %v7784 = vsel %vm412, %v7721, 0
      %v7786 = vsel %vm412, %v7723, 0
      %v7788 = vsel %vm412, %v7725, 0
      %v7790 = vsel %vm412, %v7727, 0
      %v7792 = vsel %vm412, %v7729, 0
      %v7794 = vsel %vm412, %v7731, 0
      %v7796 = vsel %vm412, %v7733, 0
      %v7798 = vsel %vm412, %v7735, 0
      %v7800 = vsel %vm412, %v7737, 0
      %v7802 = vsel %vm412, %v7739, 0
      %v7804 = vsel %vm412, %v7741, 0
      %v7806 = vsel %vm412, %v7743, 0
      %v7808 = vsel %vm412, %v7745, 0
      %v7810 = vsel %vm412, %v7747, 0
      %v7812 = vsel %vm412, %v7749, 0
      %v7814 = vsel %vm412, %v7751, 0
      %v7816 = vsel %vm412, %v7753, 0
      %v7818 = vsel %vm412, %v7755, 0
      %v7820 = vsel %vm412, %v7757, 0
      %v7822 = vsel %vm412, %v7759, 0
      %v7824 = vsel %vm412, %v7761, 0
      %v7826 = vsel %vm412, %v7763, 0
      %v7828 = vsel %vm412, %v7765, 0
      %v7830 = vsel %vm412, %v7767, 0
      %v7832 = vsel %vm412, %v7769, 0
      %v7834 = vsel %vm412, %v7771, 0
      %v7836 = vsel %vm412, %v7773, 0
      %v7838 = vsel %vm412, %v7775, 0
      %v7840 = vsel %vm412, %v7777, 0
      %7842 = vmatprep.subr.mxu0 0.0
      %7843 = vmatpush1.msra.mxu0 %v7713
      %7844 = vmatprep.subr.mxu0 0.0
      %7845 = vmatpush1.msra.mxu0 0.0
      %7846 = vmatprep.subr.mxu0 0.0
      %7847 = vmatpush1.msra.mxu0 0.0
      %7848 = vmatprep.subr.mxu0 0.0
      %7849 = vmatpush1.msra.mxu0 0.0
      %7850 = vmatprep.subr.mxu0 0.0
      %7851 = vmatpush1.msra.mxu0 0.0
      %7852 = vmatprep.subr.mxu0 0.0
      %7853 = vmatpush1.msra.mxu0 0.0
      %7854 = vmatprep.subr.mxu0 0.0
      %7855 = vmatpush1.msra.mxu0 0.0
      %7856 = vmatprep.subr.mxu0 0.0
      %7857 = vmatpush1.msra.mxu0 0.0
      %7858 = vmatprep.subr.mxu0 0.0
      %7859 = vmatpush1.msra.mxu0 0.0
      %7860 = vmatprep.subr.mxu0 0.0
      %7861 = vmatpush1.msra.mxu0 0.0
      %7862 = vmatprep.subr.mxu0 0.0
      %7863 = vmatpush1.msra.mxu0 0.0
      %7864 = vmatprep.subr.mxu0 0.0
      %7865 = vmatpush1.msra.mxu0 0.0
      %7866 = vmatprep.subr.mxu0 0.0
      %7867 = vmatpush1.msra.mxu0 0.0
      %7868 = vmatprep.subr.mxu0 0.0
      %7869 = vmatpush1.msra.mxu0 0.0
      %7870 = vmatprep.subr.mxu0 0.0
      %7871 = vmatpush1.msra.mxu0 0.0
      %7872 = vmatprep.subr.mxu0 0.0
      %7873 = vmatpush1.msra.mxu0 0.0
      %7874 = vmatprep.subr.mxu0 0.0
      %7875 = vmatpush1.msra.mxu0 0.0
      %7876 = vmatprep.subr.mxu0 0.0
      %7877 = vmatpush1.msra.mxu0 0.0
      %7878 = vmatprep.subr.mxu0 0.0
      %7879 = vmatpush1.msra.mxu0 0.0
      %7880 = vmatprep.subr.mxu0 0.0
      %7881 = vmatpush1.msra.mxu0 0.0
      %7882 = vmatprep.subr.mxu0 0.0
      %7883 = vmatpush1.msra.mxu0 0.0
      %7884 = vmatprep.subr.mxu0 0.0
      %7885 = vmatpush1.msra.mxu0 0.0
      %7886 = vmatprep.subr.mxu0 0.0
      %7887 = vmatpush1.msra.mxu0 0.0
      %7888 = vmatprep.subr.mxu0 0.0
      %7889 = vmatpush1.msra.mxu0 0.0
      %7890 = vmatprep.subr.mxu0 0.0
      %7891 = vmatpush1.msra.mxu0 0.0
      %7892 = vmatprep.subr.mxu0 0.0
      %7893 = vmatpush1.msra.mxu0 0.0
      %7894 = vmatprep.subr.mxu0 0.0
      %7895 = vmatpush1.msra.mxu0 0.0
      %7896 = vmatprep.subr.mxu0 0.0
      %7897 = vmatpush1.msra.mxu0 0.0
      %7898 = vmatprep.subr.mxu0 0.0
      %7899 = vmatpush1.msra.mxu0 0.0
      %7900 = vmatprep.subr.mxu0 0.0
      %7901 = vmatpush1.msra.mxu0 0.0
      %7902 = vmatprep.subr.mxu0 0.0
      %7903 = vmatpush1.msra.mxu0 0.0
      %7904 = vmatprep.subr.mxu0 0.0
      %7905 = vmatpush1.msra.mxu0 0.0
      %7906 = vmatprep.mubr.f32.mxu0 0.0
      %7907 = vmatmul.mubr.f32.gmra.mrb[0].mxu0 %v7778
      %v7908 = vpop.f32.mrb[0].mxu0
      %v7909 = vadd.f32 0.0, %v7908
      %v7910 = vpop.f32.mrb[0].mxu0
      %7911 = vmatprep.mubr.f32.mxu0 0.0
      %7912 = vmatmul.mubr.f32.gmra.mrb[0].mxu0 %v7780
      %v7913 = vpop.f32.mrb[0].mxu0
      %v7914 = vadd.f32 0.0, %v7913
      %v7915 = vpop.f32.mrb[0].mxu0
      %7916 = vmatprep.mubr.f32.mxu0 0.0
      %7917 = vmatmul.mubr.f32.gmra.mrb[0].mxu0 %v7782
      %v7918 = vpop.f32.mrb[0].mxu0
      %v7919 = vadd.f32 0.0, %v7918
      %v7920 = vpop.f32.mrb[0].mxu0
      %7921 = vmatprep.mubr.f32.mxu0 0.0
      %7922 = vmatmul.mubr.f32.gmra.mrb[0].mxu0 %v7784
      %v7923 = vpop.f32.mrb[0].mxu0
      %v7924 = vadd.f32 0.0, %v7923
      %v7925 = vpop.f32.mrb[0].mxu0
      %7926 = vmatprep.mubr.f32.mxu0 0.0
      %7927 = vmatmul.mubr.f32.gmra.mrb[0].mxu0 %v7786
      %v7928 = vpop.f32.mrb[0].mxu0
      %v7929 = vadd.f32 0.0, %v7928
      %v7930 = vpop.f32.mrb[0].mxu0
      %7931 = vmatprep.mubr.f32.mxu0 0.0
      %7932 = vmatmul.mubr.f32.gmra.mrb[0].mxu0 %v7788
      %v7933 = vpop.f32.mrb[0].mxu0
      %v7934 = vadd.f32 0.0, %v7933
      %v7935 = vpop.f32.mrb[0].mxu0
      %7936 = vmatprep.mubr.f32.mxu0 0.0
      %7937 = vmatmul.mubr.f32.gmra.mrb[0].mxu0 %v7790
      %v7938 = vpop.f32.mrb[0].mxu0
      %v7939 = vadd.f32 0.0, %v7938
      %v7940 = vpop.f32.mrb[0].mxu0
      %7941 = vmatprep.mubr.f32.mxu0 0.0
      %7942 = vmatmul.mubr.f32.gmra.mrb[0].mxu0 %v7792
      %v7943 = vpop.f32.mrb[0].mxu0
      %v7944 = vadd.f32 0.0, %v7943
      %v7945 = vpop.f32.mrb[0].mxu0
      %7946 = vmatprep.mubr.f32.mxu0 0.0
      %7947 = vmatmul.mubr.f32.gmra.mrb[0].mxu0 %v7794
      %v7948 = vpop.f32.mrb[0].mxu0
      %v7949 = vadd.f32 0.0, %v7948
      %v7950 = vpop.f32.mrb[0].mxu0
      %7951 = vmatprep.mubr.f32.mxu0 0.0
      %7952 = vmatmul.mubr.f32.gmra.mrb[0].mxu0 %v7796
      %v7953 = vpop.f32.mrb[0].mxu0
      %v7954 = vadd.f32 0.0, %v7953
      %v7955 = vpop.f32.mrb[0].mxu0
      %7956 = vmatprep.mubr.f32.mxu0 0.0
      %7957 = vmatmul.mubr.f32.gmra.mrb[0].mxu0 %v7798
      %v7958 = vpop.f32.mrb[0].mxu0
      %v7959 = vadd.f32 0.0, %v7958
      %v7960 = vpop.f32.mrb[0].mxu0
      %7961 = vmatprep.mubr.f32.mxu0 0.0
      %7962 = vmatmul.mubr.f32.gmra.mrb[0].mxu0 %v7800
      %v7963 = vpop.f32.mrb[0].mxu0
      %v7964 = vadd.f32 0.0, %v7963
      %v7965 = vpop.f32.mrb[0].mxu0
      %7966 = vmatprep.mubr.f32.mxu0 0.0
      %7967 = vmatmul.mubr.f32.gmra.mrb[0].mxu0 %v7802
      %v7968 = vpop.f32.mrb[0].mxu0
      %v7969 = vadd.f32 0.0, %v7968
      %v7970 = vpop.f32.mrb[0].mxu0
      %7971 = vmatprep.mubr.f32.mxu0 0.0
      %7972 = vmatmul.mubr.f32.gmra.mrb[0].mxu0 %v7804
      %v7973 = vpop.f32.mrb[0].mxu0
      %v7974 = vadd.f32 0.0, %v7973
      %v7975 = vpop.f32.mrb[0].mxu0
      %7976 = vmatprep.mubr.f32.mxu0 0.0
      %7977 = vmatmul.mubr.f32.gmra.mrb[0].mxu0 %v7806
      %v7978 = vpop.f32.mrb[0].mxu0
      %v7979 = vadd.f32 0.0, %v7978
      %v7980 = vpop.f32.mrb[0].mxu0
      %7981 = vmatprep.mubr.f32.mxu0 0.0
      %7982 = vmatmul.mubr.f32.gmra.mrb[0].mxu0 %v7808
      %v7983 = vpop.f32.mrb[0].mxu0
      %v7984 = vadd.f32 0.0, %v7983
      %v7985 = vpop.f32.mrb[0].mxu0
      %7986 = vmatprep.mubr.f32.mxu0 0.0
      %7987 = vmatmul.mubr.f32.gmra.mrb[0].mxu0 %v7810
      %v7988 = vpop.f32.mrb[0].mxu0
      %v7989 = vadd.f32 0.0, %v7988
      %v7990 = vpop.f32.mrb[0].mxu0
      %7991 = vmatprep.mubr.f32.mxu0 0.0
      %7992 = vmatmul.mubr.f32.gmra.mrb[0].mxu0 %v7812
      %v7993 = vpop.f32.mrb[0].mxu0
      %v7994 = vadd.f32 0.0, %v7993
      %v7995 = vpop.f32.mrb[0].mxu0
      %7996 = vmatprep.mubr.f32.mxu0 0.0
      %7997 = vmatmul.mubr.f32.gmra.mrb[0].mxu0 %v7814
      %v7998 = vpop.f32.mrb[0].mxu0
      %v7999 = vadd.f32 0.0, %v7998
      %v8000 = vpop.f32.mrb[0].mxu0
      %8001 = vmatprep.mubr.f32.mxu0 0.0
      %8002 = vmatmul.mubr.f32.gmra.mrb[0].mxu0 %v7816
      %v8003 = vpop.f32.mrb[0].mxu0
      %v8004 = vadd.f32 0.0, %v8003
      %v8005 = vpop.f32.mrb[0].mxu0
      %8006 = vmatprep.mubr.f32.mxu0 0.0
      %8007 = vmatmul.mubr.f32.gmra.mrb[0].mxu0 %v7818
      %v8008 = vpop.f32.mrb[0].mxu0
      %v8009 = vadd.f32 0.0, %v8008
      %v8010 = vpop.f32.mrb[0].mxu0
      %8011 = vmatprep.mubr.f32.mxu0 0.0
      %8012 = vmatmul.mubr.f32.gmra.mrb[0].mxu0 %v7820
      %v8013 = vpop.f32.mrb[0].mxu0
      %v8014 = vadd.f32 0.0, %v8013
      %v8015 = vpop.f32.mrb[0].mxu0
      %8016 = vmatprep.mubr.f32.mxu0 0.0
      %8017 = vmatmul.mubr.f32.gmra.mrb[0].mxu0 %v7822
      %v8018 = vpop.f32.mrb[0].mxu0
      %v8019 = vadd.f32 0.0, %v8018
      %v8020 = vpop.f32.mrb[0].mxu0
      %8021 = vmatprep.mubr.f32.mxu0 0.0
      %8022 = vmatmul.mubr.f32.gmra.mrb[0].mxu0 %v7824
      %v8023 = vpop.f32.mrb[0].mxu0
      %v8024 = vadd.f32 0.0, %v8023
      %v8025 = vpop.f32.mrb[0].mxu0
      %8026 = vmatprep.mubr.f32.mxu0 0.0
      %8027 = vmatmul.mubr.f32.gmra.mrb[0].mxu0 %v7826
      %v8028 = vpop.f32.mrb[0].mxu0
      %v8029 = vadd.f32 0.0, %v8028
      %v8030 = vpop.f32.mrb[0].mxu0
      %8031 = vmatprep.mubr.f32.mxu0 0.0
      %8032 = vmatmul.mubr.f32.gmra.mrb[0].mxu0 %v7828
      %v8033 = vpop.f32.mrb[0].mxu0
      %v8034 = vadd.f32 0.0, %v8033
      %v8035 = vpop.f32.mrb[0].mxu0
      %8036 = vmatprep.mubr.f32.mxu0 0.0
      %8037 = vmatmul.mubr.f32.gmra.mrb[0].mxu0 %v7830
      %v8038 = vpop.f32.mrb[0].mxu0
      %v8039 = vadd.f32 0.0, %v8038
      %v8040 = vpop.f32.mrb[0].mxu0
      %8041 = vmatprep.mubr.f32.mxu0 0.0
      %8042 = vmatmul.mubr.f32.gmra.mrb[0].mxu0 %v7832
      %v8043 = vpop.f32.mrb[0].mxu0
      %v8044 = vadd.f32 0.0, %v8043
      %v8045 = vpop.f32.mrb[0].mxu0
      %8046 = vmatprep.mubr.f32.mxu0 0.0
      %8047 = vmatmul.mubr.f32.gmra.mrb[0].mxu0 %v7834
      %v8048 = vpop.f32.mrb[0].mxu0
      %v8049 = vadd.f32 0.0, %v8048
      %v8050 = vpop.f32.mrb[0].mxu0
      %8051 = vmatprep.mubr.f32.mxu0 0.0
      %8052 = vmatmul.mubr.f32.gmra.mrb[0].mxu0 %v7836
      %v8053 = vpop.f32.mrb[0].mxu0
      %v8054 = vadd.f32 0.0, %v8053
      %v8055 = vpop.f32.mrb[0].mxu0
      %8056 = vmatprep.mubr.f32.mxu0 0.0
      %8057 = vmatmul.mubr.f32.gmra.mrb[0].mxu0 %v7838
      %v8058 = vpop.f32.mrb[0].mxu0
      %v8059 = vadd.f32 0.0, %v8058
      %v8060 = vpop.f32.mrb[0].mxu0
      %8061 = vmatprep.mubr.f32.mxu0 0.0
      %8062 = vmatmul.mubr.f32.gmra.mrb[0].mxu0 %v7840
      %v8063 = vpop.f32.mrb[0].mxu0
      %v8064 = vadd.f32 0.0, %v8063
      %v8065 = vpop.f32.mrb[0].mxu0
      %8066 = vdwg.mxu0
      %v8067 = vadd.f32 %v7681, %v7909
      %v8068 = vadd.f32 %v7682, %v7914
      %v8069 = vadd.f32 %v7683, %v7919
      %v8070 = vadd.f32 %v7684, %v7924
      %v8071 = vadd.f32 %v7685, %v7929
      %v8072 = vadd.f32 %v7686, %v7934
      %v8073 = vadd.f32 %v7687, %v7939
      %v8074 = vadd.f32 %v7688, %v7944
      %v8075 = vadd.f32 %v7689, %v7949
      %v8076 = vadd.f32 %v7690, %v7954
      %v8077 = vadd.f32 %v7691, %v7959
      %v8078 = vadd.f32 %v7692, %v7964
      %v8079 = vadd.f32 %v7693, %v7969
      %v8080 = vadd.f32 %v7694, %v7974
      %v8081 = vadd.f32 %v7695, %v7979
      %v8082 = vadd.f32 %v7696, %v7984
      %v8083 = vadd.f32 %v7697, %v7989
      %v8084 = vadd.f32 %v7698, %v7994
      %v8085 = vadd.f32 %v7699, %v7999
      %v8086 = vadd.f32 %v7700, %v8004
      %v8087 = vadd.f32 %v7701, %v8009
      %v8088 = vadd.f32 %v7702, %v8014
      %v8089 = vadd.f32 %v7703, %v8019
      %v8090 = vadd.f32 %v7704, %v8024
      %v8091 = vadd.f32 %v7705, %v8029
      %v8092 = vadd.f32 %v7706, %v8034
      %v8093 = vadd.f32 %v7707, %v8039
      %v8094 = vadd.f32 %v7708, %v8044
      %v8095 = vadd.f32 %v7709, %v8049
      %v8096 = vadd.f32 %v7710, %v8054
      %v8097 = vadd.f32 %v7711, %v8059
      %v8098 = vadd.f32 %v7712, %v8064
      %v8099 = vld [vmem:[%s8] sm:$0x1]
      %v8101 = vlaneseq
      %v8102 = vshrl.u32 %v8101, 7
      %v8103 = vsub.s32 0, %v8102
      %v8104 = vrot.slane %v8099, %v8103
      %v8106 = vadd.f32 %v8067, %v8104
      %v8107 = vadd.f32 %v8068, %v8104
      %v8108 = vadd.f32 %v8069, %v8104
      %v8109 = vadd.f32 %v8070, %v8104
      %v8110 = vadd.f32 %v8071, %v8104
      %v8111 = vadd.f32 %v8072, %v8104
      %v8112 = vadd.f32 %v8073, %v8104
      %v8113 = vadd.f32 %v8074, %v8104
      %v8114 = vadd.f32 %v8075, %v8104
      %v8115 = vadd.f32 %v8076, %v8104
      %v8116 = vadd.f32 %v8077, %v8104
      %v8117 = vadd.f32 %v8078, %v8104
      %v8118 = vadd.f32 %v8079, %v8104
      %v8119 = vadd.f32 %v8080, %v8104
      %v8120 = vadd.f32 %v8081, %v8104
      %v8121 = vadd.f32 %v8082, %v8104
      %v8122 = vadd.f32 %v8083, %v8104
      %v8123 = vadd.f32 %v8084, %v8104
      %v8124 = vadd.f32 %v8085, %v8104
      %v8125 = vadd.f32 %v8086, %v8104
      %v8126 = vadd.f32 %v8087, %v8104
      %v8127 = vadd.f32 %v8088, %v8104
      %v8128 = vadd.f32 %v8089, %v8104
      %v8129 = vadd.f32 %v8090, %v8104
      %v8130 = vadd.f32 %v8091, %v8104
      %v8131 = vadd.f32 %v8092, %v8104
      %v8132 = vadd.f32 %v8093, %v8104
      %v8133 = vadd.f32 %v8094, %v8104
      %v8134 = vadd.f32 %v8095, %v8104
      %v8135 = vadd.f32 %v8096, %v8104
      %v8136 = vadd.f32 %v8097, %v8104
      %v8137 = vadd.f32 %v8098, %v8104
      %v8138 = vld [vmem:[%s327] sm:$0xff]
      %v8139 = vld [vmem:[%s327 + $0x8] sm:$0xff]
      %v8140 = vld [vmem:[%s327 + $0x10] sm:$0xff]
      %v8141 = vld [vmem:[%s327 + $0x18] sm:$0xff]
      %v8142 = vld [vmem:[%s327 + $0x20] sm:$0xff]
      %v8143 = vld [vmem:[%s327 + $0x28] sm:$0xff]
      %v8144 = vld [vmem:[%s327 + $0x30] sm:$0xff]
      %v8145 = vld [vmem:[%s327 + $0x38] sm:$0xff]
      %v8146 = vld [vmem:[%s327 + $0x40] sm:$0xff]
      %v8147 = vld [vmem:[%s327 + $0x48] sm:$0xff]
      %v8148 = vld [vmem:[%s327 + $0x50] sm:$0xff]
      %v8149 = vld [vmem:[%s327 + $0x58] sm:$0xff]
      %v8150 = vld [vmem:[%s327 + $0x60] sm:$0xff]
      %v8151 = vld [vmem:[%s327 + $0x68] sm:$0xff]
      %v8152 = vld [vmem:[%s327 + $0x70] sm:$0xff]
      %v8153 = vld [vmem:[%s327 + $0x78] sm:$0xff]
      %v8154 = vld [vmem:[%s327 + $0x80] sm:$0xff]
      %v8155 = vld [vmem:[%s327 + $0x88] sm:$0xff]
      %v8156 = vld [vmem:[%s327 + $0x90] sm:$0xff]
      %v8157 = vld [vmem:[%s327 + $0x98] sm:$0xff]
      %v8158 = vld [vmem:[%s327 + $0xa0] sm:$0xff]
      %v8159 = vld [vmem:[%s327 + $0xa8] sm:$0xff]
      %v8160 = vld [vmem:[%s327 + $0xb0] sm:$0xff]
      %v8161 = vld [vmem:[%s327 + $0xb8] sm:$0xff]
      %v8162 = vld [vmem:[%s327 + $0xc0] sm:$0xff]
      %v8163 = vld [vmem:[%s327 + $0xc8] sm:$0xff]
      %v8164 = vld [vmem:[%s327 + $0xd0] sm:$0xff]
      %v8165 = vld [vmem:[%s327 + $0xd8] sm:$0xff]
      %v8166 = vld [vmem:[%s327 + $0xe0] sm:$0xff]
      %v8167 = vld [vmem:[%s327 + $0xe8] sm:$0xff]
      %v8168 = vld [vmem:[%s327 + $0xf0] sm:$0xff]
      %v8169 = vld [vmem:[%s327 + $0xf8] sm:$0xff]
      %v8170 = vadd.f32 %v8106, %v8138
      %v8171 = vadd.f32 %v8107, %v8139
      %v8172 = vadd.f32 %v8108, %v8140
      %v8173 = vadd.f32 %v8109, %v8141
      %v8174 = vadd.f32 %v8110, %v8142
      %v8175 = vadd.f32 %v8111, %v8143
      %v8176 = vadd.f32 %v8112, %v8144
      %v8177 = vadd.f32 %v8113, %v8145
      %v8178 = vadd.f32 %v8114, %v8146
      %v8179 = vadd.f32 %v8115, %v8147
      %v8180 = vadd.f32 %v8116, %v8148
      %v8181 = vadd.f32 %v8117, %v8149
      %v8182 = vadd.f32 %v8118, %v8150
      %v8183 = vadd.f32 %v8119, %v8151
      %v8184 = vadd.f32 %v8120, %v8152
      %v8185 = vadd.f32 %v8121, %v8153
      %v8186 = vadd.f32 %v8122, %v8154
      %v8187 = vadd.f32 %v8123, %v8155
      %v8188 = vadd.f32 %v8124, %v8156
      %v8189 = vadd.f32 %v8125, %v8157
      %v8190 = vadd.f32 %v8126, %v8158
      %v8191 = vadd.f32 %v8127, %v8159
      %v8192 = vadd.f32 %v8128, %v8160
      %v8193 = vadd.f32 %v8129, %v8161
      %v8194 = vadd.f32 %v8130, %v8162
      %v8195 = vadd.f32 %v8131, %v8163
      %v8196 = vadd.f32 %v8132, %v8164
      %v8197 = vadd.f32 %v8133, %v8165
      %v8198 = vadd.f32 %v8134, %v8166
      %v8199 = vadd.f32 %v8135, %v8167
      %v8200 = vadd.f32 %v8136, %v8168
      %v8201 = vadd.f32 %v8137, %v8169
      %8202 = vst.msk [vmem:[%s332] sm:$0xff] %vm412, %v8170
      %8203 = vst.msk [vmem:[%s332 + $0x8] sm:$0xff] %vm412, %v8171
      %8204 = vst.msk [vmem:[%s332 + $0x10] sm:$0xff] %vm412, %v8172
      %8205 = vst.msk [vmem:[%s332 + $0x18] sm:$0xff] %vm412, %v8173
      %8206 = vst.msk [vmem:[%s332 + $0x20] sm:$0xff] %vm412, %v8174
      %8207 = vst.msk [vmem:[%s332 + $0x28] sm:$0xff] %vm412, %v8175
      %8208 = vst.msk [vmem:[%s332 + $0x30] sm:$0xff] %vm412, %v8176
      %8209 = vst.msk [vmem:[%s332 + $0x38] sm:$0xff] %vm412, %v8177
      %8210 = vst.msk [vmem:[%s332 + $0x40] sm:$0xff] %vm412, %v8178
      %8211 = vst.msk [vmem:[%s332 + $0x48] sm:$0xff] %vm412, %v8179
      %8212 = vst.msk [vmem:[%s332 + $0x50] sm:$0xff] %vm412, %v8180
      %8213 = vst.msk [vmem:[%s332 + $0x58] sm:$0xff] %vm412, %v8181
      %8214 = vst.msk [vmem:[%s332 + $0x60] sm:$0xff] %vm412, %v8182
      %8215 = vst.msk [vmem:[%s332 + $0x68] sm:$0xff] %vm412, %v8183
      %8216 = vst.msk [vmem:[%s332 + $0x70] sm:$0xff] %vm412, %v8184
      %8217 = vst.msk [vmem:[%s332 + $0x78] sm:$0xff] %vm412, %v8185
      %8218 = vst.msk [vmem:[%s332 + $0x80] sm:$0xff] %vm412, %v8186
      %8219 = vst.msk [vmem:[%s332 + $0x88] sm:$0xff] %vm412, %v8187
      %8220 = vst.msk [vmem:[%s332 + $0x90] sm:$0xff] %vm412, %v8188
      %8221 = vst.msk [vmem:[%s332 + $0x98] sm:$0xff] %vm412, %v8189
      %8222 = vst.msk [vmem:[%s332 + $0xa0] sm:$0xff] %vm412, %v8190
      %8223 = vst.msk [vmem:[%s332 + $0xa8] sm:$0xff] %vm412, %v8191
      %8224 = vst.msk [vmem:[%s332 + $0xb0] sm:$0xff] %vm412, %v8192
      %8225 = vst.msk [vmem:[%s332 + $0xb8] sm:$0xff] %vm412, %v8193
      %8226 = vst.msk [vmem:[%s332 + $0xc0] sm:$0xff] %vm412, %v8194
      %8227 = vst.msk [vmem:[%s332 + $0xc8] sm:$0xff] %vm412, %v8195
      %8228 = vst.msk [vmem:[%s332 + $0xd0] sm:$0xff] %vm412, %v8196
      %8229 = vst.msk [vmem:[%s332 + $0xd8] sm:$0xff] %vm412, %v8197
      %8230 = vst.msk [vmem:[%s332 + $0xe0] sm:$0xff] %vm412, %v8198
      %8231 = vst.msk [vmem:[%s332 + $0xe8] sm:$0xff] %vm412, %v8199
      %8232 = vst.msk [vmem:[%s332 + $0xf0] sm:$0xff] %vm412, %v8200
      %8233 = vst.msk [vmem:[%s332 + $0xf8] sm:$0xff] %vm412, %v8201
      %p8234 = scmp.lt.s32.totalorder %s20, 1
      %s8235 = scalar_select %p8234, %s20, 1
      %s8236 = smul.addr %s8235, 32
      %s8237 = smul.addr %s8236, 8
      %s8238 = scalar_lea.vmem %s9, %s8237
      // Predicated region
      $region57: #{tpu_custom_call.1} parent=55 // pred_check
        %p8239 = pneg %p232
      $region58: #{tpu_custom_call.1} parent=55 // pred_check_branch
        %8241 = sbr.rel (%p8239) target = $region60
      $region59: #{tpu_custom_call.1} parent=55 // pred_region
        _
      $region60: #{tpu_custom_call.1} parent=55 // pred_fallthru
        _
    $region56: #{tpu_custom_call.1} parent=5 // pred_fallthru
      _
    %p8242 = scmp.le.s32.totalorder 2, %s15
    // Predicated region
    $region61: #{tpu_custom_call.1} parent=5 // pred_check
      %p8243 = pneg %p8242
    $region62: #{tpu_custom_call.1} parent=5 // pred_check_branch
      %8245 = sbr.rel (%p8243) target = $region64
    $region63: #{tpu_custom_call.1} parent=5 // pred_region
      %s8246 = ssub.s32 %s15, 2
      // Predicated region
      $region65: #{tpu_custom_call.1} parent=63 // pred_check
        %p8247 = pneg %p238
      $region66: #{tpu_custom_call.1} parent=63 // pred_check_branch
        %8249 = sbr.rel (%p8247) target = $region68
      $region67: #{tpu_custom_call.1} parent=63 // pred_region
        %p8250 = scmp.lt.s32.totalorder %s21, 1
        %s8251 = scalar_select %p8250, %s21, 1
        %s8252 = smul.addr %s8251, 32
        %s8253 = smul.addr %s8252, 8
        %s8254 = scalar_lea.vmem %s9, %s8253
      $region68: #{tpu_custom_call.1} parent=63 // pred_fallthru
        _
    $region64: #{tpu_custom_call.1} parent=5 // pred_fallthru
      _
  $region6: #{tpu_custom_call.1} parent=0 // loop_footer
    %s19 = sadd.s32 1, %s15
  $region7: #{tpu_custom_call.1} parent=0 // loop_footer_branch
    %14 = sbr.rel target = $region3
  $region8: #{tpu_custom_call.1} parent=0 // loop_exit
    _

</llo_original>
